<compile_context>
chip_gen: v6e
topology: v6e:2x2x1
jax: 0.10.0
libtpu: 0.0.40
codegen_flags: <defaults>
</compile_context>

<pallas_src>
import functools
import numpy as np

import jax
import jax.numpy as jnp
from jax import lax
from jax.experimental import pallas as pl
from jax.experimental.pallas import tpu as pltpu


# ----------------------------------------------------------------------------
# small helpers
# ----------------------------------------------------------------------------
def _round_up(x, m):
    return (x + m - 1) // m * m


def _pick_tile(dim, candidates):
    for c in candidates:
        if dim % c == 0:
            return c
    return dim


_VMEM_LIMIT = None


def _vmem_limit_bytes():
    """Generation-aware scoped VMEM limit: 64 MiB on 128-MiB chips (v5e/v6e),
    ~half of physical VMEM on v7x (64 MiB physical)."""
    global _VMEM_LIMIT
    if _VMEM_LIMIT is None:
        limit = 64 * 1024 * 1024
        try:
            info = pltpu.get_tpu_info()
            cap = int(getattr(info, "vmem_capacity_bytes", 0) or 0)
            if cap > 0:
                limit = min(limit, max(32 * 1024 * 1024, cap // 2))
        except Exception:
            pass
        _VMEM_LIMIT = limit
    return _VMEM_LIMIT


# ----------------------------------------------------------------------------
# Tiled linear kernels
# ----------------------------------------------------------------------------
def _linear_kernel(x_ref, w_ref, b_ref, o_ref, acc_ref, *, activation):
    k = pl.program_id(2)

    @pl.when(k == 0)
    def _():
        acc_ref[...] = jnp.zeros_like(acc_ref)

    acc_ref[...] += jnp.dot(x_ref[...], w_ref[...],
                            preferred_element_type=jnp.float32)

    @pl.when(k == pl.num_programs(2) - 1)
    def _():
        y = acc_ref[...] + b_ref[...]
        if activation == "tanh":
            y = jnp.tanh(y)
        o_ref[...] = y.astype(o_ref.dtype)


def _linear_lse_kernel(x_ref, w_ref, b_ref, o_ref, lse_ref, acc_ref, m_sc, l_sc,
                       *, n_valid, tn):
    """Matmul + bias, emitting logits and a per-row running logsumexp so the
    vocab (N) axis can be tiled instead of kept resident."""
    j = pl.program_id(1)
    k = pl.program_id(2)

    @pl.when(k == 0)
    def _():
        acc_ref[...] = jnp.zeros_like(acc_ref)

    acc_ref[...] += jnp.dot(x_ref[...], w_ref[...],
                            preferred_element_type=jnp.float32)

    @pl.when(k == pl.num_programs(2) - 1)
    def _():
        y = acc_ref[...] + b_ref[...]
        o_ref[...] = y.astype(o_ref.dtype)
        # Online (branch-free) running max / sum over tiled N blocks.
        col = j * tn + lax.broadcasted_iota(jnp.int32, y.shape, 1)
        valid = col < n_valid
        ym = jnp.where(valid, y, -jnp.inf)
        bm = jnp.maximum(jnp.max(ym, axis=-1, keepdims=True), -1e30)
        be = jnp.where(valid, jnp.exp(y - bm), 0.0)
        bl = jnp.sum(be, axis=-1, keepdims=True)
        is_first = j == 0
        m_prev = jnp.where(is_first, jnp.full_like(bm, -1e30), m_sc[...])
        l_prev = jnp.where(is_first, jnp.zeros_like(bl), l_sc[...])
        m_new = jnp.maximum(m_prev, bm)
        l_sc[...] = l_prev * jnp.exp(m_prev - m_new) + bl * jnp.exp(bm - m_new)
        m_sc[...] = m_new

    @pl.when((k == pl.num_programs(2) - 1) & (j == pl.num_programs(1) - 1))
    def _():
        lse_ref[...] = m_sc[...] + jnp.log(l_sc[...])


def _sub_lse_kernel(x_ref, lse_ref, o_ref):
    o_ref[...] = (x_ref[...] - lse_ref[...]).astype(o_ref.dtype)


def prep_linear(w, b):
    """One-time padding / bf16 cast of a weight + bias (done outside jit)."""
    K, N = w.shape
    Kp, Np = _round_up(K, 128), _round_up(N, 128)
    wp = jnp.pad(w, ((0, Kp - K), (0, Np - N))).astype(jnp.bfloat16)
    bp = jnp.pad(b.astype(jnp.float32), (0, Np - N)).reshape(1, Np)
    return wp, bp


def apply_linear(x, wp, bp, n_valid=None, activation=None, out_dtype=jnp.float32):
    """y = act(x @ wp + bp) on pre-padded bf16 weights.  Pads only the activation
    x (M -> mult of 8, K -> wp's Kp), accumulates in fp32, tiles M/N/K."""
    M, K = x.shape
    Kp, Np = wp.shape
    N = Np if n_valid is None else n_valid
    Mp = _round_up(M, 8)
    xp = jnp.pad(x, ((0, Mp - M), (0, Kp - K))).astype(jnp.bfloat16)

    tm = _pick_tile(Mp, (256, 128, 64, 32, 16, 8))
    tk = _pick_tile(Kp, (512, 256, 128))
    tn = _pick_tile(Np, (512, 256, 128))
    grid = (Mp // tm, Np // tn, Kp // tk)
    vmem = _vmem_limit_bytes()

    if activation == "log_softmax":
        kernel = functools.partial(_linear_lse_kernel, n_valid=N, tn=tn)
        cost = pl.CostEstimate(
            flops=2 * Mp * Kp * Np,
            transcendentals=2 * Mp * Np,
            bytes_accessed=2 * Mp * Kp + 2 * Kp * Np + 8 * Mp * Np + 4 * Np + 8 * Mp)
        logits, lse = pl.pallas_call(
            kernel,
            out_shape=(jax.ShapeDtypeStruct((Mp, Np), jnp.float32),
                       jax.ShapeDtypeStruct((Mp, 1), jnp.float32)),
            grid=grid,
            in_specs=[
                pl.BlockSpec((tm, tk), lambda i, j, k: (i, k)),
                pl.BlockSpec((tk, tn), lambda i, j, k: (k, j)),
                pl.BlockSpec((1, tn), lambda i, j, k: (0, j)),
            ],
            out_specs=(pl.BlockSpec((tm, tn), lambda i, j, k: (i, j)),
                       pl.BlockSpec((tm, 1), lambda i, j, k: (i, 0))),
            scratch_shapes=[pltpu.VMEM((tm, tn), jnp.float32),
                            pltpu.VMEM((tm, 1), jnp.float32),
                            pltpu.VMEM((tm, 1), jnp.float32)],
            compiler_params=pltpu.CompilerParams(
                dimension_semantics=("parallel", "arbitrary", "arbitrary"),
                vmem_limit_bytes=vmem),
            cost_estimate=cost,
        )(xp, wp, bp)
        out = pl.pallas_call(
            _sub_lse_kernel,
            out_shape=jax.ShapeDtypeStruct((Mp, Np), out_dtype),
            grid=(Mp // tm, Np // tn),
            in_specs=[pl.BlockSpec((tm, tn), lambda i, j: (i, j)),
                      pl.BlockSpec((tm, 1), lambda i, j: (i, 0))],
            out_specs=pl.BlockSpec((tm, tn), lambda i, j: (i, j)),
            compiler_params=pltpu.CompilerParams(
                dimension_semantics=("parallel", "parallel"),
                vmem_limit_bytes=vmem),
        )(logits, lse)
        return out[:M, :N]

    kernel = functools.partial(_linear_kernel, activation=activation)
    cost = pl.CostEstimate(
        flops=2 * Mp * Kp * Np,
        transcendentals=Mp * Np if activation == "tanh" else 0,
        bytes_accessed=(2 * Mp * Kp + 2 * Kp * Np + 4 * Np
                        + Mp * Np * jnp.dtype(out_dtype).itemsize))
    out = pl.pallas_call(
        kernel,
        out_shape=jax.ShapeDtypeStruct((Mp, Np), out_dtype),
        grid=grid,
        in_specs=[
            pl.BlockSpec((tm, tk), lambda i, j, k: (i, k)),
            pl.BlockSpec((tk, tn), lambda i, j, k: (k, j)),
            pl.BlockSpec((1, tn), lambda i, j, k: (0, j)),
        ],
        out_specs=pl.BlockSpec((tm, tn), lambda i, j, k: (i, j)),
        scratch_shapes=[pltpu.VMEM((tm, tn), jnp.float32)],
        compiler_params=pltpu.CompilerParams(
            dimension_semantics=("parallel", "parallel", "arbitrary"),
            vmem_limit_bytes=vmem),
        cost_estimate=cost,
    )(xp, wp, bp)
    return out[:M, :N]


# ----------------------------------------------------------------------------
# Batched masked GRU scan.  Grid = (G // dirs_per_block, time_chunks).
#   gi   : (G, Tp, Bp, 3*Hp) bf16   precomputed x @ W_ih + b_ih (gate order
#          r, z, n, each gate in its own 128-lane-aligned slot)
#   h0   : (G, Bp, Hp)        f32
#   lens : (G, Bp, 1)         int32 (state frozen once t >= length)
#   w_hh : (G, Hp, 3*Hp) bf16, b_hh : (G, 1, 3*Hp) f32
# Multiple independent directions are interleaved per grid step to hide the
# serial-dependence latency of the tiny recurrent matmuls.
# ----------------------------------------------------------------------------
def _gru_kernel(gi_ref, h0_ref, len_ref, whh_ref, bhh_ref, out_ref, h_ref,
                *, t_chunk, dirs_per_block, return_sequences, unroll):
    c = pl.program_id(1)
    hp = h_ref.shape[-1]

    @pl.when(c == 0)
    def _():
        h_ref[...] = h0_ref[...]

    whh = [whh_ref[g] for g in range(dirs_per_block)]    # (Hp, 3Hp) bf16 each
    bhh = [bhh_ref[g] for g in range(dirs_per_block)]    # (1, 3Hp)  f32 each
    lens = [len_ref[g] for g in range(dirs_per_block)]   # (Bp, 1)   int32 each
    t0 = c * t_chunk

    def step(tt, hs):
        nhs = []
        for g in range(dirs_per_block):
            h = hs[g]
            gi = gi_ref[g, tt]                            # (Bp, 3Hp) bf16
            gh = jnp.dot(h.astype(whh[g].dtype), whh[g],
                         preferred_element_type=jnp.float32) + bhh[g]
            r = jax.nn.sigmoid(gi[:, :hp] + gh[:, :hp])
            z = jax.nn.sigmoid(gi[:, hp:2 * hp] + gh[:, hp:2 * hp])
            n = jnp.tanh(gi[:, 2 * hp:] + r * gh[:, 2 * hp:])
            h_new = (1.0 - z) * n + z * h
            valid = lens[g] > (t0 + tt)                   # (Bp,1) bool
            h_next = jnp.where(valid, h_new, h)
            if return_sequences:
                out_ref[g, tt] = h_next.astype(out_ref.dtype)
            nhs.append(h_next)
        return tuple(nhs)

    hs = lax.fori_loop(0, t_chunk, step,
                       tuple(h_ref[g] for g in range(dirs_per_block)),
                       unroll=unroll)
    for g in range(dirs_per_block):
        h_ref[g] = hs[g]
    if not return_sequences:
        out_ref[...] = h_ref[...]


def gru_scan(gi, h0, lens, w_hh, b_hh, *, t_chunk, dirs_per_block=1,
             return_sequences=False, out_dtype=jnp.float32):
    G, Tp, Bp, three_hp = gi.shape
    Hp = h0.shape[-1]
    assert G % dirs_per_block == 0 and Tp % t_chunk == 0
    dpb = dirs_per_block
    n_chunks = Tp // t_chunk
    unroll = max(1, min(t_chunk, 8))

    kernel = functools.partial(
        _gru_kernel, t_chunk=t_chunk, dirs_per_block=dpb,
        return_sequences=return_sequences, unroll=unroll)

    if return_sequences:
        out_shape = jax.ShapeDtypeStruct((G, Tp, Bp, Hp), out_dtype)
        out_spec = pl.BlockSpec((dpb, t_chunk, Bp, Hp), lambda g, c: (g, c, 0, 0))
        out_bytes = G * Tp * Bp * Hp * jnp.dtype(out_dtype).itemsize
    else:
        out_shape = jax.ShapeDtypeStruct((G, Bp, Hp), jnp.float32)
        out_spec = pl.BlockSpec((dpb, Bp, Hp), lambda g, c: (g, 0, 0))
        out_bytes = G * Bp * Hp * 4

    cost = pl.CostEstimate(
        flops=2 * G * Tp * Bp * Hp * 3 * Hp + 20 * G * Tp * Bp * Hp,
        transcendentals=3 * G * Tp * Bp * Hp,
        bytes_accessed=(gi.size * gi.dtype.itemsize + 2 * w_hh.size
                        + out_bytes + 4 * G * Bp * Hp))

    return pl.pallas_call(
        kernel,
        out_shape=out_shape,
        grid=(G // dpb, n_chunks),
        in_specs=[
            pl.BlockSpec((dpb, t_chunk, Bp, three_hp), lambda g, c: (g, c, 0, 0)),
            pl.BlockSpec((dpb, Bp, Hp), lambda g, c: (g, 0, 0)),
            pl.BlockSpec((dpb, Bp, 1), lambda g, c: (g, 0, 0)),
            pl.BlockSpec((dpb, Hp, three_hp), lambda g, c: (g, 0, 0)),
            pl.BlockSpec((dpb, 1, three_hp), lambda g, c: (g, 0, 0)),
        ],
        out_specs=out_spec,
        scratch_shapes=[pltpu.VMEM((dpb, Bp, Hp), jnp.float32)],
        compiler_params=pltpu.CompilerParams(
            dimension_semantics=("parallel", "arbitrary"),
            vmem_limit_bytes=_vmem_limit_bytes()),
        cost_estimate=cost,
    )(gi, h0, lens, w_hh, b_hh)


# ----------------------------------------------------------------------------
# weight preparation (outside jit): gate-slot padding, stacking, bf16 casting
# ----------------------------------------------------------------------------
def _pad_gates_cols(w, H, Hp):
    """(in, 3H) -> (in, 3Hp): each gate padded into a 128-lane-aligned slot."""
    i = w.shape[0]
    w3 = jnp.pad(w.reshape(i, 3, H), ((0, 0), (0, 0), (0, Hp - H)))
    return w3.reshape(i, 3 * Hp)


def _pad_gate_bias(b, H, Hp):
    return jnp.pad(b.reshape(3, H), ((0, 0), (0, Hp - H))).reshape(3 * Hp)


def _pad_whh(w_hh, H, Hp):
    return jnp.pad(_pad_gates_cols(w_hh, H, Hp), ((0, Hp - H), (0, 0)))


def prepare_params(params):
    """One-time padding / casting / stacking of weights (run eagerly, once)."""
    H = params["prompt_enc"]["w_hh_f"].shape[0]
    Hp = _round_up(H, 128)
    L = params["w_mean"].shape[1]
    V = params["dec_out_w"].shape[1]
    E = params["enc_emb"].shape[1]
    HL = params["dec_w_hh"].shape[0]
    HLp = _round_up(HL, 128)

    def enc(p):
        # fused fwd+bwd input projection: one matmul per encoder, N = 6*Hp
        w_fb = jnp.concatenate([_pad_gates_cols(p["w_ih_f"], H, Hp),
                                _pad_gates_cols(p["w_ih_b"], H, Hp)], axis=1)
        b_fb = jnp.concatenate([_pad_gate_bias(p["b_ih_f"], H, Hp),
                                _pad_gate_bias(p["b_ih_b"], H, Hp)])
        ih_w, ih_b = prep_linear(w_fb, b_fb)
        lin_w, lin_b = prep_linear(p["lin_w"], p["lin_b"])
        return ih_w, ih_b, lin_w, lin_b

    p_ih_w, p_ih_b, p_lin_w, p_lin_b = enc(params["prompt_enc"])
    r_ih_w, r_ih_b, r_lin_w, r_lin_b = enc(params["reply_enc"])

    pe, re = params["prompt_enc"], params["reply_enc"]
    enc_whh = jnp.stack([_pad_whh(pe["w_hh_f"], H, Hp),
                         _pad_whh(pe["w_hh_b"], H, Hp),
                         _pad_whh(re["w_hh_f"], H, Hp),
                         _pad_whh(re["w_hh_b"], H, Hp)]).astype(jnp.bfloat16)
    enc_bhh = jnp.stack([_pad_gate_bias(pe["b_hh_f"], H, Hp),
                         _pad_gate_bias(pe["b_hh_b"], H, Hp),
                         _pad_gate_bias(re["b_hh_f"], H, Hp),
                         _pad_gate_bias(re["b_hh_b"], H, Hp)])[:, None, :]

    ml_w, ml_b = prep_linear(
        jnp.concatenate([params["w_mean"], params["w_logvar"]], axis=1),
        jnp.concatenate([params["b_mean"], params["b_logvar"]]))

    dec_ih_w, dec_ih_b = prep_linear(_pad_gates_cols(params["dec_w_ih"], HL, HLp),
                                     _pad_gate_bias(params["dec_b_ih"], HL, HLp))
    dec_whh = _pad_whh(params["dec_w_hh"], HL, HLp)[None].astype(jnp.bfloat16)
    dec_bhh = _pad_gate_bias(params["dec_b_hh"], HL, HLp)[None, None, :]
    dec_out_w, dec_out_b = prep_linear(params["dec_out_w"], params["dec_out_b"])

    prepped = dict(
        enc_emb=params["enc_emb"], dec_emb=params["dec_emb"],
        prompt_ih_w=p_ih_w, prompt_ih_b=p_ih_b,
        prompt_lin_w=p_lin_w, prompt_lin_b=p_lin_b,
        reply_ih_w=r_ih_w, reply_ih_b=r_ih_b,
        reply_lin_w=r_lin_w, reply_lin_b=r_lin_b,
        enc_whh=enc_whh, enc_bhh=enc_bhh,
        ml_w=ml_w, ml_b=ml_b,
        dec_ih_w=dec_ih_w, dec_ih_b=dec_ih_b,
        dec_whh=dec_whh, dec_bhh=dec_bhh,
        dec_out_w=dec_out_w, dec_out_b=dec_out_b)
    dims = dict(H=H, L=L, V=V, E=E, HL=HL)
    return prepped, dims


# ----------------------------------------------------------------------------
# forward pass
# ----------------------------------------------------------------------------
def _reverse_valid_tmajor(x_tbe, lengths):
    """Reverse only the valid prefix of each sequence (time-major input)."""
    T = x_tbe.shape[0]
    t_idx = jnp.arange(T, dtype=jnp.int32)[:, None]
    rev = jnp.clip(lengths.astype(jnp.int32)[None, :] - 1 - t_idx, 0, T - 1)
    return jnp.take_along_axis(x_tbe, rev[:, :, None], axis=0)


def encode_both(prepped, dims, prompt_seq, prompt_len, reply_seq, reply_len,
                *, t_chunk, dirs_per_block):
    B, T = prompt_seq.shape
    H = dims["H"]
    Hp = _round_up(H, 128)
    Bp = _round_up(B, 8)
    tc = min(t_chunk, _round_up(T, 8))
    Tp = _round_up(T, tc)

    def enc_inputs(seq, lengths, ih_w, ih_b):
        x = jnp.take(prepped["enc_emb"], seq, axis=0).astype(jnp.float32)
        x_flat = jnp.transpose(x, (1, 0, 2)).reshape(T * B, -1)
        gi = apply_linear(x_flat, ih_w, ih_b, out_dtype=jnp.bfloat16)
        gi = gi.reshape(T, B, 6 * Hp)
        gi_f = gi[..., :3 * Hp]
        gi_b = _reverse_valid_tmajor(gi[..., 3 * Hp:], lengths)
        pad = ((0, Tp - T), (0, Bp - B), (0, 0))
        return jnp.pad(gi_f, pad), jnp.pad(gi_b, pad)

    gp_f, gp_b = enc_inputs(prompt_seq, prompt_len,
                            prepped["prompt_ih_w"], prepped["prompt_ih_b"])
    gr_f, gr_b = enc_inputs(reply_seq, reply_len,
                            prepped["reply_ih_w"], prepped["reply_ih_b"])
    gi = jnp.stack([gp_f, gp_b, gr_f, gr_b], axis=0)          # (4,Tp,Bp,3Hp) bf16

    lens = jnp.stack([prompt_len, prompt_len, reply_len, reply_len],
                     axis=0).astype(jnp.int32)
    lens = jnp.pad(lens, ((0, 0), (0, Bp - B)))[:, :, None]   # (4,Bp,1)

    h0 = jnp.zeros((4, Bp, Hp), jnp.float32)
    # Final-state-only scan: no per-timestep history written to HBM.
    h_last = gru_scan(gi, h0, lens, prepped["enc_whh"], prepped["enc_bhh"],
                      t_chunk=tc, dirs_per_block=dirs_per_block,
                      return_sequences=False)                  # (4,Bp,Hp) f32
    h_last = h_last[:, :B, :H]

    prompt_state = apply_linear(
        jnp.concatenate([h_last[0], h_last[1]], axis=-1),
        prepped["prompt_lin_w"], prepped["prompt_lin_b"],
        n_valid=H, activation="tanh")
    reply_state = apply_linear(
        jnp.concatenate([h_last[2], h_last[3]], axis=-1),
        prepped["reply_lin_w"], prepped["reply_lin_b"],
        n_valid=H, activation="tanh")
    return prompt_state, reply_state


def diallv_forward(prepped, prompt_seq, prompt_len, reply_seq, reply_len, z_noise,
                   *, dims, t_chunk=16, dirs_per_block=2):
    B, T = reply_seq.shape
    H, L, V = dims["H"], dims["L"], dims["V"]
    HL = H + L
    HLp = _round_up(HL, 128)
    Bp = _round_up(B, 8)
    tc = min(t_chunk, _round_up(T, 8))
    Tp = _round_up(T, tc)

    prompt_state, reply_state = encode_both(
        prepped, dims, prompt_seq, prompt_len, reply_seq, reply_len,
        t_chunk=t_chunk, dirs_per_block=dirs_per_block)

    # Latent: fused mean / log_var projection.
    state = jnp.concatenate([prompt_state, reply_state], axis=-1)     # (B, 2H)
    ml = apply_linear(state, prepped["ml_w"], prepped["ml_b"], n_valid=2 * L)
    means, log_var = ml[:, :L], ml[:, L:]
    std = jnp.exp(0.5 * log_var)
    z = z_noise * std + means

    # Decoder: sort by reply length descending (torch sorts before packing).
    idx = jnp.argsort(-reply_len)
    hx_s, z_s = prompt_state[idx], z[idx]
    seq_s, len_s = reply_seq[idx], reply_len[idx]

    h0 = jnp.concatenate([hx_s, z_s], axis=-1)                        # (B, H+L)
    h0 = jnp.pad(h0, ((0, Bp - B), (0, HLp - HL)))[None]              # (1,Bp,HLp)

    emb = jnp.take(prepped["dec_emb"], seq_s, axis=0).astype(jnp.float32)
    # TODO(synk): word_dropout treated as eval-mode identity (p = 0.0 here).
    x_flat = jnp.transpose(emb, (1, 0, 2)).reshape(T * B, -1)
    gi = apply_linear(x_flat, prepped["dec_ih_w"], prepped["dec_ih_b"],
                      out_dtype=jnp.bfloat16)
    gi = gi.reshape(T, B, 3 * HLp)
    gi = jnp.pad(gi, ((0, Tp - T), (0, Bp - B), (0, 0)))[None]        # (1,Tp,Bp,3HLp)

    lens = jnp.pad(len_s.astype(jnp.int32), (0, Bp - B))[None, :, None]

    # TODO(synk): when Bp >= 16, split the decoder batch across a parallel grid
    # axis so both v7x TensorCores work on the recurrence.
    out = gru_scan(gi, h0, lens, prepped["dec_whh"], prepped["dec_bhh"],
                   t_chunk=tc, dirs_per_block=1,
                   return_sequences=True, out_dtype=jnp.bfloat16)     # bf16 history
    dec_h = out[0, :T, :B, :].reshape(T * B, HLp)

    # Vocab projection + tiled (online-lse) log_softmax.
    log_probs = apply_linear(dec_h, prepped["dec_out_w"], prepped["dec_out_b"],
                             n_valid=V, activation="log_softmax")
    return log_probs.reshape(T, B, V), means, log_var, len_s


# ----------------------------------------------------------------------------
# Deterministic parameter init (synthetic; shapes follow the PyTorch module,
# weights stored as [in_features, out_features], gate order (r, z, n)).
# ----------------------------------------------------------------------------
def _init_gru_dir(key, E, H, scale=0.1):
    k = jax.random.split(key, 4)
    return {
        "w_ih": scale * jax.random.normal(k[0], (E, 3 * H), jnp.float32),
        "w_hh": scale * jax.random.normal(k[1], (H, 3 * H), jnp.float32),
        "b_ih": scale * jax.random.normal(k[2], (3 * H,), jnp.float32),
        "b_hh": scale * jax.random.normal(k[3], (3 * H,), jnp.float32),
    }


def _init_encoder(key, E, H, scale=0.1):
    k = jax.random.split(key, 4)
    f = _init_gru_dir(k[0], E, H, scale)
    b = _init_gru_dir(k[1], E, H, scale)
    return {
        "w_ih_f": f["w_ih"], "w_hh_f": f["w_hh"], "b_ih_f": f["b_ih"], "b_hh_f": f["b_hh"],
        "w_ih_b": b["w_ih"], "w_hh_b": b["w_hh"], "b_ih_b": b["b_ih"], "b_hh_b": b["b_hh"],
        "lin_w": scale * jax.random.normal(k[2], (2 * H, H), jnp.float32),
        "lin_b": scale * jax.random.normal(k[3], (H,), jnp.float32),
    }


def init_params(key, V, E, H, L, scale=0.1):
    ks = jax.random.split(key, 12)
    HL = H + L
    dec_gru = _init_gru_dir(ks[4], E, HL, scale)
    return {
        "enc_emb": scale * jax.random.normal(ks[0], (V, E), jnp.float32),
        "prompt_enc": _init_encoder(ks[1], E, H, scale),
        "reply_enc": _init_encoder(ks[2], E, H, scale),
        "w_mean": scale * jax.random.normal(ks[5], (2 * H, L), jnp.float32),
        "b_mean": scale * jax.random.normal(ks[6], (L,), jnp.float32),
        "w_logvar": scale * jax.random.normal(ks[7], (2 * H, L), jnp.float32),
        "b_logvar": scale * jax.random.normal(ks[8], (L,), jnp.float32),
        "dec_emb": scale * jax.random.normal(ks[3], (V, E), jnp.float32),
        "dec_w_ih": dec_gru["w_ih"], "dec_w_hh": dec_gru["w_hh"],
        "dec_b_ih": dec_gru["b_ih"], "dec_b_hh": dec_gru["b_hh"],
        "dec_out_w": scale * jax.random.normal(ks[9], (HL, V), jnp.float32),
        "dec_out_b": scale * jax.random.normal(ks[10], (V,), jnp.float32),
    }


# ----------------------------------------------------------------------------
if __name__ == "__main__":
    B, T = 2, 8
    V, E, H, L = 32, 16, 32, 8
    PAD = 0

    key = jax.random.PRNGKey(0)
    kp, kr, kz, kparam = jax.random.split(key, 4)

    prompt_len = jnp.array([8, 5], jnp.int32)
    reply_len = jnp.array([6, 8], jnp.int32)
    prompt_seq = jax.random.randint(kp, (B, T), 3, V, dtype=jnp.int32)
    reply_seq = jax.random.randint(kr, (B, T), 3, V, dtype=jnp.int32)
    t_range = jnp.arange(T)[None, :]
    prompt_seq = jnp.where(t_range < prompt_len[:, None], prompt_seq, PAD)
    reply_seq = jnp.where(t_range < reply_len[:, None], reply_seq, PAD)

    z_noise = jax.random.normal(kz, (B, L), jnp.float32)  # torch.randn equivalent
    params = init_params(kparam, V, E, H, L)
    prepped, dims = prepare_params(params)                # one-time, outside jit

    fwd = jax.jit(functools.partial(diallv_forward, dims=dims))
    log_probs, means, log_var, len_s = fwd(prepped, prompt_seq, prompt_len,
                                           reply_seq, reply_len, z_noise)
    jax.block_until_ready((log_probs, means, log_var, len_s))

    # Host-side gather to the exact pack_padded_sequence(...).data row order:
    # time-major, at each t only sequences (sorted desc by length) with length > t.
    lp = np.asarray(log_probs)            # (T, B, V), sorted-batch order
    ls = np.asarray(len_s)
    packed_out = np.concatenate(
        [lp[t, :int((ls > t).sum())] for t in range(T) if int((ls > t).sum()) > 0],
        axis=0,
    )
    assert packed_out.shape == (int(ls.sum()), V)
    assert means.shape == (B, L) and log_var.shape == (B, L)
    assert np.all(np.isfinite(packed_out))
    assert np.allclose(np.exp(packed_out).sum(-1), 1.0, atol=1e-3)

    print("KERNEL_OK")
</pallas_src>

<mosaic_0001>
module attributes {stable_mosaic.version = 11 : i64} {
  func.func @_linear_kernel(%arg0: i32, %arg1: i32, %arg2: i32, %arg3: memref<16x128xbf16, #tpu.memory_space<vmem>>, %arg4: memref<128x256xbf16, #tpu.memory_space<vmem>>, %arg5: memref<1x256xf32, #tpu.memory_space<vmem>>, %arg6: memref<16x256xbf16, #tpu.memory_space<vmem>>, %arg7: memref<16x256xf32, #tpu.memory_space<vmem>>) attributes {dimension_semantics = [#tpu.dimension_semantics<parallel>, #tpu.dimension_semantics<parallel>, #tpu.dimension_semantics<arbitrary>], iteration_bounds = array<i64: 1, 3, 1>, scalar_prefetch = 0 : i64, scratch_operands = 1 : i64, tpu.core_type = #tpu.core_type<tc>, window_params = [{transform_indices = @transform_0, window_bounds = array<i64: 16, 128>}, {transform_indices = @transform_1, window_bounds = array<i64: 128, 256>}, {transform_indices = @transform_2, window_bounds = array<i64: 1, 256>}, {transform_indices = @transform_3, window_bounds = array<i64: 16, 256>}]} {
    %c0_i32 = arith.constant 0 : i32
    %0 = arith.cmpi eq, %arg2, %c0_i32 : i32
    %1 = arith.extui %0 : i1 to i32
    %c0_i32_0 = arith.constant 0 : i32
    %2 = arith.cmpi ne, %1, %c0_i32_0 : i32
    scf.if %2 {
      %cst_10 = arith.constant 0.000000e+00 : f32
      %12 = vector.broadcast %cst_10 : f32 to vector<16x256xf32>
      %c0_11 = arith.constant 0 : index
      %c0_12 = arith.constant 0 : index
      %13 = vector.load %arg7[%c0_11, %c0_12] : memref<16x256xf32, #tpu.memory_space<vmem>>, vector<16x256xf32>
      tpu.vector_store %arg7[%c0_11, %c0_12], %12 {strides = array<i32>} : memref<16x256xf32, #tpu.memory_space<vmem>>, vector<16x256xf32>,
    } else {
    }
    %c0 = arith.constant 0 : index
    %c0_1 = arith.constant 0 : index
    %3 = vector.load %arg7[%c0, %c0_1] : memref<16x256xf32, #tpu.memory_space<vmem>>, vector<16x256xf32>
    %c0_2 = arith.constant 0 : index
    %c0_3 = arith.constant 0 : index
    %4 = vector.load %arg3[%c0_2, %c0_3] : memref<16x128xbf16, #tpu.memory_space<vmem>>, vector<16x128xbf16>
    %c0_4 = arith.constant 0 : index
    %c0_5 = arith.constant 0 : index
    %5 = vector.load %arg4[%c0_4, %c0_5] : memref<128x256xbf16, #tpu.memory_space<vmem>>, vector<128x256xbf16>
    %cst = arith.constant dense<0.000000e+00> : vector<16x256xf32>
    %6 = tpu.matmul %4, %5, %cst {dimension_numbers = #tpu.dot_dimension_numbers<[1], [0], [0], [1], [0, 0, 1, 1], [], []>} : vector<16x128xbf16>, vector<128x256xbf16>, vector<16x256xf32> -> vector<16x256xf32>
    %7 = arith.addf %3, %6 : vector<16x256xf32>
    %c0_6 = arith.constant 0 : index
    %c0_7 = arith.constant 0 : index
    %8 = vector.load %arg7[%c0_6, %c0_7] : memref<16x256xf32, #tpu.memory_space<vmem>>, vector<16x256xf32>
    tpu.vector_store %arg7[%c0_6, %c0_7], %7 {strides = array<i32>} : memref<16x256xf32, #tpu.memory_space<vmem>>, vector<16x256xf32>,
    %c0_i32_8 = arith.constant 0 : i32
    %9 = arith.cmpi eq, %arg2, %c0_i32_8 : i32
    %10 = arith.extui %9 : i1 to i32
    %c0_i32_9 = arith.constant 0 : i32
    %11 = arith.cmpi ne, %10, %c0_i32_9 : i32
    scf.if %11 {
      %c0_10 = arith.constant 0 : index
      %c0_11 = arith.constant 0 : index
      %12 = vector.load %arg7[%c0_10, %c0_11] : memref<16x256xf32, #tpu.memory_space<vmem>>, vector<16x256xf32>
      %c0_12 = arith.constant 0 : index
      %c0_13 = arith.constant 0 : index
      %13 = vector.load %arg5[%c0_12, %c0_13] : memref<1x256xf32, #tpu.memory_space<vmem>>, vector<1x256xf32>
      %14 = vector.broadcast %13 : vector<1x256xf32> to vector<16x256xf32>
      %15 = arith.addf %12, %14 : vector<16x256xf32>
      %16 = arith.truncf %15 : vector<16x256xf32> to vector<16x256xbf16>
      %c0_14 = arith.constant 0 : index
      %c0_15 = arith.constant 0 : index
      %17 = vector.load %arg6[%c0_14, %c0_15] : memref<16x256xbf16, #tpu.memory_space<vmem>>, vector<16x256xbf16>
      tpu.vector_store %arg6[%c0_14, %c0_15], %16 {strides = array<i32>} : memref<16x256xbf16, #tpu.memory_space<vmem>>, vector<16x256xbf16>,
    } else {
    }
    return
  }
  func.func @transform_0(%arg0: i32, %arg1: i32, %arg2: i32) -> (i32, i32) {
    %c0_i32 = arith.constant 0 : i32
    return %arg0, %arg2 : i32, i32
  }
  func.func @transform_1(%arg0: i32, %arg1: i32, %arg2: i32) -> (i32, i32) {
    %c0_i32 = arith.constant 0 : i32
    return %arg2, %arg1 : i32, i32
  }
  func.func @transform_2(%arg0: i32, %arg1: i32, %arg2: i32) -> (i32, i32) {
    %c0_i32 = arith.constant 0 : i32
    %c0_i32_0 = arith.constant 0 : i32
    return %c0_i32, %arg1 : i32, i32
  }
  func.func @transform_3(%arg0: i32, %arg1: i32, %arg2: i32) -> (i32, i32) {
    %c0_i32 = arith.constant 0 : i32
    return %arg0, %arg1 : i32, i32
  }
}

module attributes {stable_mosaic.version = 11 : i64} {
  func.func @_linear_kernel(%arg0: i32, %arg1: i32, %arg2: i32, %arg3: memref<16x128xbf16, #tpu.memory_space<vmem>>, %arg4: memref<128x256xbf16, #tpu.memory_space<vmem>>, %arg5: memref<1x256xf32, #tpu.memory_space<vmem>>, %arg6: memref<16x256xbf16, #tpu.memory_space<vmem>>, %arg7: memref<16x256xf32, #tpu.memory_space<vmem>>) attributes {dimension_semantics = [#tpu.dimension_semantics<parallel>, #tpu.dimension_semantics<parallel>, #tpu.dimension_semantics<arbitrary>], iteration_bounds = array<i64: 1, 3, 1>, scalar_prefetch = 0 : i64, scratch_operands = 1 : i64, tpu.core_type = #tpu.core_type<tc>, window_params = [{transform_indices = @transform_0, window_bounds = array<i64: 16, 128>}, {transform_indices = @transform_1, window_bounds = array<i64: 128, 256>}, {transform_indices = @transform_2, window_bounds = array<i64: 1, 256>}, {transform_indices = @transform_3, window_bounds = array<i64: 16, 256>}]} {
    %c0_i32 = arith.constant 0 : i32
    %0 = arith.cmpi eq, %arg2, %c0_i32 : i32
    %1 = arith.extui %0 : i1 to i32
    %c0_i32_0 = arith.constant 0 : i32
    %2 = arith.cmpi ne, %1, %c0_i32_0 : i32
    scf.if %2 {
      %cst_10 = arith.constant 0.000000e+00 : f32
      %12 = vector.broadcast %cst_10 : f32 to vector<16x256xf32>
      %c0_11 = arith.constant 0 : index
      %c0_12 = arith.constant 0 : index
      %13 = vector.load %arg7[%c0_11, %c0_12] : memref<16x256xf32, #tpu.memory_space<vmem>>, vector<16x256xf32>
      tpu.vector_store %arg7[%c0_11, %c0_12], %12 {strides = array<i32>} : memref<16x256xf32, #tpu.memory_space<vmem>>, vector<16x256xf32>,
    } else {
    }
    %c0 = arith.constant 0 : index
    %c0_1 = arith.constant 0 : index
    %3 = vector.load %arg7[%c0, %c0_1] : memref<16x256xf32, #tpu.memory_space<vmem>>, vector<16x256xf32>
    %c0_2 = arith.constant 0 : index
    %c0_3 = arith.constant 0 : index
    %4 = vector.load %arg3[%c0_2, %c0_3] : memref<16x128xbf16, #tpu.memory_space<vmem>>, vector<16x128xbf16>
    %c0_4 = arith.constant 0 : index
    %c0_5 = arith.constant 0 : index
    %5 = vector.load %arg4[%c0_4, %c0_5] : memref<128x256xbf16, #tpu.memory_space<vmem>>, vector<128x256xbf16>
    %cst = arith.constant dense<0.000000e+00> : vector<16x256xf32>
    %6 = tpu.matmul %4, %5, %cst {dimension_numbers = #tpu.dot_dimension_numbers<[1], [0], [0], [1], [0, 0, 1, 1], [], []>} : vector<16x128xbf16>, vector<128x256xbf16>, vector<16x256xf32> -> vector<16x256xf32>
    %7 = arith.addf %3, %6 : vector<16x256xf32>
    %c0_6 = arith.constant 0 : index
    %c0_7 = arith.constant 0 : index
    %8 = vector.load %arg7[%c0_6, %c0_7] : memref<16x256xf32, #tpu.memory_space<vmem>>, vector<16x256xf32>
    tpu.vector_store %arg7[%c0_6, %c0_7], %7 {strides = array<i32>} : memref<16x256xf32, #tpu.memory_space<vmem>>, vector<16x256xf32>,
    %c0_i32_8 = arith.constant 0 : i32
    %9 = arith.cmpi eq, %arg2, %c0_i32_8 : i32
    %10 = arith.extui %9 : i1 to i32
    %c0_i32_9 = arith.constant 0 : i32
    %11 = arith.cmpi ne, %10, %c0_i32_9 : i32
    scf.if %11 {
      %c0_10 = arith.constant 0 : index
      %c0_11 = arith.constant 0 : index
      %12 = vector.load %arg7[%c0_10, %c0_11] : memref<16x256xf32, #tpu.memory_space<vmem>>, vector<16x256xf32>
      %c0_12 = arith.constant 0 : index
      %c0_13 = arith.constant 0 : index
      %13 = vector.load %arg5[%c0_12, %c0_13] : memref<1x256xf32, #tpu.memory_space<vmem>>, vector<1x256xf32>
      %14 = vector.broadcast %13 : vector<1x256xf32> to vector<16x256xf32>
      %15 = arith.addf %12, %14 : vector<16x256xf32>
      %16 = arith.truncf %15 : vector<16x256xf32> to vector<16x256xbf16>
      %c0_14 = arith.constant 0 : index
      %c0_15 = arith.constant 0 : index
      %17 = vector.load %arg6[%c0_14, %c0_15] : memref<16x256xbf16, #tpu.memory_space<vmem>>, vector<16x256xbf16>
      tpu.vector_store %arg6[%c0_14, %c0_15], %16 {strides = array<i32>} : memref<16x256xbf16, #tpu.memory_space<vmem>>, vector<16x256xbf16>,
    } else {
    }
    return
  }
  func.func @transform_0(%arg0: i32, %arg1: i32, %arg2: i32) -> (i32, i32) {
    %c0_i32 = arith.constant 0 : i32
    return %arg0, %arg2 : i32, i32
  }
  func.func @transform_1(%arg0: i32, %arg1: i32, %arg2: i32) -> (i32, i32) {
    %c0_i32 = arith.constant 0 : i32
    return %arg2, %arg1 : i32, i32
  }
  func.func @transform_2(%arg0: i32, %arg1: i32, %arg2: i32) -> (i32, i32) {
    %c0_i32 = arith.constant 0 : i32
    %c0_i32_0 = arith.constant 0 : i32
    return %c0_i32, %arg1 : i32, i32
  }
  func.func @transform_3(%arg0: i32, %arg1: i32, %arg2: i32) -> (i32, i32) {
    %c0_i32 = arith.constant 0 : i32
    return %arg0, %arg1 : i32, i32
  }
}

module attributes {stable_mosaic.version = 11 : i64} {
  func.func @_linear_kernel(%arg0: i32, %arg1: i32, %arg2: i32, %arg3: memref<8x128xbf16, #tpu.memory_space<vmem>>, %arg4: memref<128x128xbf16, #tpu.memory_space<vmem>>, %arg5: memref<1x128xf32, #tpu.memory_space<vmem>>, %arg6: memref<8x128xf32, #tpu.memory_space<vmem>>, %arg7: memref<8x128xf32, #tpu.memory_space<vmem>>) attributes {dimension_semantics = [#tpu.dimension_semantics<parallel>, #tpu.dimension_semantics<parallel>, #tpu.dimension_semantics<arbitrary>], iteration_bounds = array<i64: 1, 1, 1>, scalar_prefetch = 0 : i64, scratch_operands = 1 : i64, tpu.core_type = #tpu.core_type<tc>, window_params = [{transform_indices = @transform_0, window_bounds = array<i64: 8, 128>}, {transform_indices = @transform_1, window_bounds = array<i64: 128, 128>}, {transform_indices = @transform_2, window_bounds = array<i64: 1, 128>}, {transform_indices = @transform_3, window_bounds = array<i64: 8, 128>}]} {
    %c0_i32 = arith.constant 0 : i32
    %0 = arith.cmpi eq, %arg2, %c0_i32 : i32
    %1 = arith.extui %0 : i1 to i32
    %c0_i32_0 = arith.constant 0 : i32
    %2 = arith.cmpi ne, %1, %c0_i32_0 : i32
    scf.if %2 {
      %cst_10 = arith.constant 0.000000e+00 : f32
      %12 = vector.broadcast %cst_10 : f32 to vector<8x128xf32>
      %c0_11 = arith.constant 0 : index
      %c0_12 = arith.constant 0 : index
      %13 = vector.load %arg7[%c0_11, %c0_12] : memref<8x128xf32, #tpu.memory_space<vmem>>, vector<8x128xf32>
      tpu.vector_store %arg7[%c0_11, %c0_12], %12 {strides = array<i32>} : memref<8x128xf32, #tpu.memory_space<vmem>>, vector<8x128xf32>,
    } else {
    }
    %c0 = arith.constant 0 : index
    %c0_1 = arith.constant 0 : index
    %3 = vector.load %arg7[%c0, %c0_1] : memref<8x128xf32, #tpu.memory_space<vmem>>, vector<8x128xf32>
    %c0_2 = arith.constant 0 : index
    %c0_3 = arith.constant 0 : index
    %4 = vector.load %arg3[%c0_2, %c0_3] : memref<8x128xbf16, #tpu.memory_space<vmem>>, vector<8x128xbf16>
    %c0_4 = arith.constant 0 : index
    %c0_5 = arith.constant 0 : index
    %5 = vector.load %arg4[%c0_4, %c0_5] : memref<128x128xbf16, #tpu.memory_space<vmem>>, vector<128x128xbf16>
    %cst = arith.constant dense<0.000000e+00> : vector<8x128xf32>
    %6 = tpu.matmul %4, %5, %cst {dimension_numbers = #tpu.dot_dimension_numbers<[1], [0], [0], [1], [0, 0, 1, 1], [], []>} : vector<8x128xbf16>, vector<128x128xbf16>, vector<8x128xf32> -> vector<8x128xf32>
    %7 = arith.addf %3, %6 : vector<8x128xf32>
    %c0_6 = arith.constant 0 : index
    %c0_7 = arith.constant 0 : index
    %8 = vector.load %arg7[%c0_6, %c0_7] : memref<8x128xf32, #tpu.memory_space<vmem>>, vector<8x128xf32>
    tpu.vector_store %arg7[%c0_6, %c0_7], %7 {strides = array<i32>} : memref<8x128xf32, #tpu.memory_space<vmem>>, vector<8x128xf32>,
    %c0_i32_8 = arith.constant 0 : i32
    %9 = arith.cmpi eq, %arg2, %c0_i32_8 : i32
    %10 = arith.extui %9 : i1 to i32
    %c0_i32_9 = arith.constant 0 : i32
    %11 = arith.cmpi ne, %10, %c0_i32_9 : i32
    scf.if %11 {
      %c0_10 = arith.constant 0 : index
      %c0_11 = arith.constant 0 : index
      %12 = vector.load %arg7[%c0_10, %c0_11] : memref<8x128xf32, #tpu.memory_space<vmem>>, vector<8x128xf32>
      %c0_12 = arith.constant 0 : index
      %c0_13 = arith.constant 0 : index
      %13 = vector.load %arg5[%c0_12, %c0_13] : memref<1x128xf32, #tpu.memory_space<vmem>>, vector<1x128xf32>
      %14 = vector.broadcast %13 : vector<1x128xf32> to vector<8x128xf32>
      %15 = arith.addf %12, %14 : vector<8x128xf32>
      %16 = math.tanh %15 : vector<8x128xf32>
      %c0_14 = arith.constant 0 : index
      %c0_15 = arith.constant 0 : index
      %17 = vector.load %arg6[%c0_14, %c0_15] : memref<8x128xf32, #tpu.memory_space<vmem>>, vector<8x128xf32>
      tpu.vector_store %arg6[%c0_14, %c0_15], %16 {strides = array<i32>} : memref<8x128xf32, #tpu.memory_space<vmem>>, vector<8x128xf32>,
    } else {
    }
    return
  }
  func.func @transform_0(%arg0: i32, %arg1: i32, %arg2: i32) -> (i32, i32) {
    %c0_i32 = arith.constant 0 : i32
    return %arg0, %arg2 : i32, i32
  }
  func.func @transform_1(%arg0: i32, %arg1: i32, %arg2: i32) -> (i32, i32) {
    %c0_i32 = arith.constant 0 : i32
    return %arg2, %arg1 : i32, i32
  }
  func.func @transform_2(%arg0: i32, %arg1: i32, %arg2: i32) -> (i32, i32) {
    %c0_i32 = arith.constant 0 : i32
    %c0_i32_0 = arith.constant 0 : i32
    return %c0_i32, %arg1 : i32, i32
  }
  func.func @transform_3(%arg0: i32, %arg1: i32, %arg2: i32) -> (i32, i32) {
    %c0_i32 = arith.constant 0 : i32
    return %arg0, %arg1 : i32, i32
  }
}

module attributes {stable_mosaic.version = 11 : i64} {
  func.func @_gru_kernel(%arg0: i32, %arg1: i32, %arg2: memref<2x8x8x384xbf16, #tpu.memory_space<vmem>>, %arg3: memref<2x8x128xf32, #tpu.memory_space<vmem>>, %arg4: memref<2x8x1xi32, #tpu.memory_space<vmem>>, %arg5: memref<2x128x384xbf16, #tpu.memory_space<vmem>>, %arg6: memref<2x1x384xf32, #tpu.memory_space<vmem>>, %arg7: memref<2x8x128xf32, #tpu.memory_space<vmem>>, %arg8: memref<2x8x128xf32, #tpu.memory_space<vmem>>) attributes {dimension_semantics = [#tpu.dimension_semantics<parallel>, #tpu.dimension_semantics<arbitrary>], iteration_bounds = array<i64: 2, 1>, scalar_prefetch = 0 : i64, scratch_operands = 1 : i64, tpu.core_type = #tpu.core_type<tc>, window_params = [{transform_indices = @transform_0, window_bounds = array<i64: 2, 8, 8, 384>}, {transform_indices = @transform_1, window_bounds = array<i64: 2, 8, 128>}, {transform_indices = @transform_2, window_bounds = array<i64: 2, 8, 1>}, {transform_indices = @transform_3, window_bounds = array<i64: 2, 128, 384>}, {transform_indices = @transform_4, window_bounds = array<i64: 2, 1, 384>}, {transform_indices = @transform_5, window_bounds = array<i64: 2, 8, 128>}]} {
    %c0_i32 = arith.constant 0 : i32
    %0 = arith.cmpi eq, %arg1, %c0_i32 : i32
    %1 = arith.extui %0 : i1 to i32
    %c0_i32_0 = arith.constant 0 : i32
    %2 = arith.cmpi ne, %1, %c0_i32_0 : i32
    scf.if %2 {
      %c0_148 = arith.constant 0 : index
      %c0_149 = arith.constant 0 : index
      %c0_150 = arith.constant 0 : index
      %700 = vector.load %arg3[%c0_148, %c0_149, %c0_150] : memref<2x8x128xf32, #tpu.memory_space<vmem>>, vector<2x8x128xf32>
      %c0_151 = arith.constant 0 : index
      %c0_152 = arith.constant 0 : index
      %c0_153 = arith.constant 0 : index
      %701 = vector.load %arg8[%c0_151, %c0_152, %c0_153] : memref<2x8x128xf32, #tpu.memory_space<vmem>>, vector<2x8x128xf32>
      tpu.vector_store %arg8[%c0_151, %c0_152, %c0_153], %700 {strides = array<i32>} : memref<2x8x128xf32, #tpu.memory_space<vmem>>, vector<2x8x128xf32>,
    } else {
    }
    %c0 = arith.constant 0 : index
    %c0_1 = arith.constant 0 : index
    %c0_2 = arith.constant 0 : index
    %3 = vector.load %arg5[%c0, %c0_1, %c0_2] : memref<2x128x384xbf16, #tpu.memory_space<vmem>>, vector<1x128x384xbf16>
    %4 = vector.shape_cast %3 : vector<1x128x384xbf16> to vector<128x384xbf16>
    %c1 = arith.constant 1 : index
    %c0_3 = arith.constant 0 : index
    %c0_4 = arith.constant 0 : index
    %5 = vector.load %arg5[%c1, %c0_3, %c0_4] : memref<2x128x384xbf16, #tpu.memory_space<vmem>>, vector<1x128x384xbf16>
    %6 = vector.shape_cast %5 : vector<1x128x384xbf16> to vector<128x384xbf16>
    %c0_5 = arith.constant 0 : index
    %c0_6 = arith.constant 0 : index
    %c0_7 = arith.constant 0 : index
    %7 = vector.load %arg6[%c0_5, %c0_6, %c0_7] : memref<2x1x384xf32, #tpu.memory_space<vmem>>, vector<1x1x384xf32>
    %8 = vector.shape_cast %7 : vector<1x1x384xf32> to vector<1x384xf32>
    %c1_8 = arith.constant 1 : index
    %c0_9 = arith.constant 0 : index
    %c0_10 = arith.constant 0 : index
    %9 = vector.load %arg6[%c1_8, %c0_9, %c0_10] : memref<2x1x384xf32, #tpu.memory_space<vmem>>, vector<1x1x384xf32>
    %10 = vector.shape_cast %9 : vector<1x1x384xf32> to vector<1x384xf32>
    %c0_11 = arith.constant 0 : index
    %c0_12 = arith.constant 0 : index
    %c0_13 = arith.constant 0 : index
    %11 = vector.load %arg4[%c0_11, %c0_12, %c0_13] : memref<2x8x1xi32, #tpu.memory_space<vmem>>, vector<1x8x1xi32>
    %12 = vector.shape_cast %11 : vector<1x8x1xi32> to vector<8x1xi32>
    %c1_14 = arith.constant 1 : index
    %c0_15 = arith.constant 0 : index
    %c0_16 = arith.constant 0 : index
    %13 = vector.load %arg4[%c1_14, %c0_15, %c0_16] : memref<2x8x1xi32, #tpu.memory_space<vmem>>, vector<1x8x1xi32>
    %14 = vector.shape_cast %13 : vector<1x8x1xi32> to vector<8x1xi32>
    %c8_i32 = arith.constant 8 : i32
    %15 = arith.muli %arg1, %c8_i32 : i32
    %c0_17 = arith.constant 0 : index
    %c0_18 = arith.constant 0 : index
    %c0_19 = arith.constant 0 : index
    %16 = vector.load %arg8[%c0_17, %c0_18, %c0_19] : memref<2x8x128xf32, #tpu.memory_space<vmem>>, vector<1x8x128xf32>
    %17 = vector.shape_cast %16 : vector<1x8x128xf32> to vector<8x128xf32>
    %c1_20 = arith.constant 1 : index
    %c0_21 = arith.constant 0 : index
    %c0_22 = arith.constant 0 : index
    %18 = vector.load %arg8[%c1_20, %c0_21, %c0_22] : memref<2x8x128xf32, #tpu.memory_space<vmem>>, vector<1x8x128xf32>
    %19 = vector.shape_cast %18 : vector<1x8x128xf32> to vector<8x128xf32>
    %c0_i32_23 = arith.constant 0 : i32
    %c0_24 = arith.constant 0 : index
    %20 = arith.index_cast %c0_i32_23 : i32 to index
    %c0_25 = arith.constant 0 : index
    %c0_26 = arith.constant 0 : index
    %21 = vector.load %arg2[%c0_24, %20, %c0_25, %c0_26] : memref<2x8x8x384xbf16, #tpu.memory_space<vmem>>, vector<1x1x8x384xbf16>
    %22 = vector.shape_cast %21 : vector<1x1x8x384xbf16> to vector<8x384xbf16>
    %23 = arith.truncf %17 : vector<8x128xf32> to vector<8x128xbf16>
    %cst = arith.constant dense<0.000000e+00> : vector<8x384xf32>
    %24 = tpu.matmul %23, %4, %cst {dimension_numbers = #tpu.dot_dimension_numbers<[1], [0], [0], [1], [0, 0, 1, 1], [], []>} : vector<8x128xbf16>, vector<128x384xbf16>, vector<8x384xf32> -> vector<8x384xf32>
    %25 = vector.broadcast %8 : vector<1x384xf32> to vector<8x384xf32>
    %26 = arith.addf %24, %25 : vector<8x384xf32>
    %27 = vector.extract_strided_slice %22 {offsets = [0, 0], sizes = [8, 128], strides = [1, 1]} : vector<8x384xbf16> to vector<8x128xbf16>
    %28 = vector.extract_strided_slice %26 {offsets = [0, 0], sizes = [8, 128], strides = [1, 1]} : vector<8x384xf32> to vector<8x128xf32>
    %29 = arith.extf %27 : vector<8x128xbf16> to vector<8x128xf32>
    %30 = arith.addf %29, %28 : vector<8x128xf32>
    %31 = arith.negf %30 : vector<8x128xf32>
    %32 = math.exp %31 : vector<8x128xf32>
    %cst_27 = arith.constant 1.000000e+00 : f32
    %33 = vector.broadcast %cst_27 : f32 to vector<8x128xf32>
    %34 = arith.addf %33, %32 : vector<8x128xf32>
    %35 = arith.divf %33, %34 : vector<8x128xf32>
    %36 = vector.extract_strided_slice %22 {offsets = [0, 128], sizes = [8, 128], strides = [1, 1]} : vector<8x384xbf16> to vector<8x128xbf16>
    %37 = vector.extract_strided_slice %26 {offsets = [0, 128], sizes = [8, 128], strides = [1, 1]} : vector<8x384xf32> to vector<8x128xf32>
    %38 = arith.extf %36 : vector<8x128xbf16> to vector<8x128xf32>
    %39 = arith.addf %38, %37 : vector<8x128xf32>
    %40 = arith.negf %39 : vector<8x128xf32>
    %41 = math.exp %40 : vector<8x128xf32>
    %cst_28 = arith.constant 1.000000e+00 : f32
    %42 = vector.broadcast %cst_28 : f32 to vector<8x128xf32>
    %43 = arith.addf %42, %41 : vector<8x128xf32>
    %44 = arith.divf %42, %43 : vector<8x128xf32>
    %45 = vector.extract_strided_slice %22 {offsets = [0, 256], sizes = [8, 128], strides = [1, 1]} : vector<8x384xbf16> to vector<8x128xbf16>
    %46 = vector.extract_strided_slice %26 {offsets = [0, 256], sizes = [8, 128], strides = [1, 1]} : vector<8x384xf32> to vector<8x128xf32>
    %47 = arith.mulf %35, %46 : vector<8x128xf32>
    %48 = arith.extf %45 : vector<8x128xbf16> to vector<8x128xf32>
    %49 = arith.addf %48, %47 : vector<8x128xf32>
    %50 = math.tanh %49 : vector<8x128xf32>
    %cst_29 = arith.constant 1.000000e+00 : f32
    %51 = vector.broadcast %cst_29 : f32 to vector<8x128xf32>
    %52 = arith.subf %51, %44 : vector<8x128xf32>
    %53 = arith.mulf %52, %50 : vector<8x128xf32>
    %54 = arith.mulf %44, %17 : vector<8x128xf32>
    %55 = arith.addf %53, %54 : vector<8x128xf32>
    %56 = arith.addi %15, %c0_i32_23 : i32
    %57 = vector.broadcast %56 : i32 to vector<8x1xi32>
    %58 = arith.cmpi sgt, %12, %57 : vector<8x1xi32>
    %59 = vector.shape_cast %58 : vector<8x1xi1> to vector<8x1xi1>
    %60 = vector.broadcast %59 : vector<8x1xi1> to vector<8x128xi1>
    %61 = arith.select %60, %55, %17 : vector<8x128xi1>, vector<8x128xf32>
    %c1_30 = arith.constant 1 : index
    %62 = arith.index_cast %c0_i32_23 : i32 to index
    %c0_31 = arith.constant 0 : index
    %c0_32 = arith.constant 0 : index
    %63 = vector.load %arg2[%c1_30, %62, %c0_31, %c0_32] : memref<2x8x8x384xbf16, #tpu.memory_space<vmem>>, vector<1x1x8x384xbf16>
    %64 = vector.shape_cast %63 : vector<1x1x8x384xbf16> to vector<8x384xbf16>
    %65 = arith.truncf %19 : vector<8x128xf32> to vector<8x128xbf16>
    %cst_33 = arith.constant dense<0.000000e+00> : vector<8x384xf32>
    %66 = tpu.matmul %65, %6, %cst_33 {dimension_numbers = #tpu.dot_dimension_numbers<[1], [0], [0], [1], [0, 0, 1, 1], [], []>} : vector<8x128xbf16>, vector<128x384xbf16>, vector<8x384xf32> -> vector<8x384xf32>
    %67 = vector.broadcast %10 : vector<1x384xf32> to vector<8x384xf32>
    %68 = arith.addf %66, %67 : vector<8x384xf32>
    %69 = vector.extract_strided_slice %64 {offsets = [0, 0], sizes = [8, 128], strides = [1, 1]} : vector<8x384xbf16> to vector<8x128xbf16>
    %70 = vector.extract_strided_slice %68 {offsets = [0, 0], sizes = [8, 128], strides = [1, 1]} : vector<8x384xf32> to vector<8x128xf32>
    %71 = arith.extf %69 : vector<8x128xbf16> to vector<8x128xf32>
    %72 = arith.addf %71, %70 : vector<8x128xf32>
    %73 = arith.negf %72 : vector<8x128xf32>
    %74 = math.exp %73 : vector<8x128xf32>
    %cst_34 = arith.constant 1.000000e+00 : f32
    %75 = vector.broadcast %cst_34 : f32 to vector<8x128xf32>
    %76 = arith.addf %75, %74 : vector<8x128xf32>
    %77 = arith.divf %75, %76 : vector<8x128xf32>
    %78 = vector.extract_strided_slice %64 {offsets = [0, 128], sizes = [8, 128], strides = [1, 1]} : vector<8x384xbf16> to vector<8x128xbf16>
    %79 = vector.extract_strided_slice %68 {offsets = [0, 128], sizes = [8, 128], strides = [1, 1]} : vector<8x384xf32> to vector<8x128xf32>
    %80 = arith.extf %78 : vector<8x128xbf16> to vector<8x128xf32>
    %81 = arith.addf %80, %79 : vector<8x128xf32>
    %82 = arith.negf %81 : vector<8x128xf32>
    %83 = math.exp %82 : vector<8x128xf32>
    %cst_35 = arith.constant 1.000000e+00 : f32
    %84 = vector.broadcast %cst_35 : f32 to vector<8x128xf32>
    %85 = arith.addf %84, %83 : vector<8x128xf32>
    %86 = arith.divf %84, %85 : vector<8x128xf32>
    %87 = vector.extract_strided_slice %64 {offsets = [0, 256], sizes = [8, 128], strides = [1, 1]} : vector<8x384xbf16> to vector<8x128xbf16>
    %88 = vector.extract_strided_slice %68 {offsets = [0, 256], sizes = [8, 128], strides = [1, 1]} : vector<8x384xf32> to vector<8x128xf32>
    %89 = arith.mulf %77, %88 : vector<8x128xf32>
    %90 = arith.extf %87 : vector<8x128xbf16> to vector<8x128xf32>
    %91 = arith.addf %90, %89 : vector<8x128xf32>
    %92 = math.tanh %91 : vector<8x128xf32>
    %cst_36 = arith.constant 1.000000e+00 : f32
    %93 = vector.broadcast %cst_36 : f32 to vector<8x128xf32>
    %94 = arith.subf %93, %86 : vector<8x128xf32>
    %95 = arith.mulf %94, %92 : vector<8x128xf32>
    %96 = arith.mulf %86, %19 : vector<8x128xf32>
    %97 = arith.addf %95, %96 : vector<8x128xf32>
    %98 = arith.addi %15, %c0_i32_23 : i32
    %99 = vector.broadcast %98 : i32 to vector<8x1xi32>
    %100 = arith.cmpi sgt, %14, %99 : vector<8x1xi32>
    %101 = vector.shape_cast %100 : vector<8x1xi1> to vector<8x1xi1>
    %102 = vector.broadcast %101 : vector<8x1xi1> to vector<8x128xi1>
    %103 = arith.select %102, %97, %19 : vector<8x128xi1>, vector<8x128xf32>
    %c1_i32 = arith.constant 1 : i32
    %c0_37 = arith.constant 0 : index
    %104 = arith.index_cast %c1_i32 : i32 to index
    %c0_38 = arith.constant 0 : index
    %c0_39 = arith.constant 0 : index
    %105 = vector.load %arg2[%c0_37, %104, %c0_38, %c0_39] : memref<2x8x8x384xbf16, #tpu.memory_space<vmem>>, vector<1x1x8x384xbf16>
    %106 = vector.shape_cast %105 : vector<1x1x8x384xbf16> to vector<8x384xbf16>
    %107 = arith.truncf %61 : vector<8x128xf32> to vector<8x128xbf16>
    %cst_40 = arith.constant dense<0.000000e+00> : vector<8x384xf32>
    %108 = tpu.matmul %107, %4, %cst_40 {dimension_numbers = #tpu.dot_dimension_numbers<[1], [0], [0], [1], [0, 0, 1, 1], [], []>} : vector<8x128xbf16>, vector<128x384xbf16>, vector<8x384xf32> -> vector<8x384xf32>
    %109 = vector.broadcast %8 : vector<1x384xf32> to vector<8x384xf32>
    %110 = arith.addf %108, %109 : vector<8x384xf32>
    %111 = vector.extract_strided_slice %106 {offsets = [0, 0], sizes = [8, 128], strides = [1, 1]} : vector<8x384xbf16> to vector<8x128xbf16>
    %112 = vector.extract_strided_slice %110 {offsets = [0, 0], sizes = [8, 128], strides = [1, 1]} : vector<8x384xf32> to vector<8x128xf32>
    %113 = arith.extf %111 : vector<8x128xbf16> to vector<8x128xf32>
    %114 = arith.addf %113, %112 : vector<8x128xf32>
    %115 = arith.negf %114 : vector<8x128xf32>
    %116 = math.exp %115 : vector<8x128xf32>
    %cst_41 = arith.constant 1.000000e+00 : f32
    %117 = vector.broadcast %cst_41 : f32 to vector<8x128xf32>
    %118 = arith.addf %117, %116 : vector<8x128xf32>
    %119 = arith.divf %117, %118 : vector<8x128xf32>
    %120 = vector.extract_strided_slice %106 {offsets = [0, 128], sizes = [8, 128], strides = [1, 1]} : vector<8x384xbf16> to vector<8x128xbf16>
    %121 = vector.extract_strided_slice %110 {offsets = [0, 128], sizes = [8, 128], strides = [1, 1]} : vector<8x384xf32> to vector<8x128xf32>
    %122 = arith.extf %120 : vector<8x128xbf16> to vector<8x128xf32>
    %123 = arith.addf %122, %121 : vector<8x128xf32>
    %124 = arith.negf %123 : vector<8x128xf32>
    %125 = math.exp %124 : vector<8x128xf32>
    %cst_42 = arith.constant 1.000000e+00 : f32
    %126 = vector.broadcast %cst_42 : f32 to vector<8x128xf32>
    %127 = arith.addf %126, %125 : vector<8x128xf32>
    %128 = arith.divf %126, %127 : vector<8x128xf32>
    %129 = vector.extract_strided_slice %106 {offsets = [0, 256], sizes = [8, 128], strides = [1, 1]} : vector<8x384xbf16> to vector<8x128xbf16>
    %130 = vector.extract_strided_slice %110 {offsets = [0, 256], sizes = [8, 128], strides = [1, 1]} : vector<8x384xf32> to vector<8x128xf32>
    %131 = arith.mulf %119, %130 : vector<8x128xf32>
    %132 = arith.extf %129 : vector<8x128xbf16> to vector<8x128xf32>
    %133 = arith.addf %132, %131 : vector<8x128xf32>
    %134 = math.tanh %133 : vector<8x128xf32>
    %cst_43 = arith.constant 1.000000e+00 : f32
    %135 = vector.broadcast %cst_43 : f32 to vector<8x128xf32>
    %136 = arith.subf %135, %128 : vector<8x128xf32>
    %137 = arith.mulf %136, %134 : vector<8x128xf32>
    %138 = arith.mulf %128, %61 : vector<8x128xf32>
    %139 = arith.addf %137, %138 : vector<8x128xf32>
    %140 = arith.addi %15, %c1_i32 : i32
    %141 = vector.broadcast %140 : i32 to vector<8x1xi32>
    %142 = arith.cmpi sgt, %12, %141 : vector<8x1xi32>
    %143 = vector.shape_cast %142 : vector<8x1xi1> to vector<8x1xi1>
    %144 = vector.broadcast %143 : vector<8x1xi1> to vector<8x128xi1>
    %145 = arith.select %144, %139, %61 : vector<8x128xi1>, vector<8x128xf32>
    %c1_44 = arith.constant 1 : index
    %146 = arith.index_cast %c1_i32 : i32 to index
    %c0_45 = arith.constant 0 : index
    %c0_46 = arith.constant 0 : index
    %147 = vector.load %arg2[%c1_44, %146, %c0_45, %c0_46] : memref<2x8x8x384xbf16, #tpu.memory_space<vmem>>, vector<1x1x8x384xbf16>
    %148 = vector.shape_cast %147 : vector<1x1x8x384xbf16> to vector<8x384xbf16>
    %149 = arith.truncf %103 : vector<8x128xf32> to vector<8x128xbf16>
    %cst_47 = arith.constant dense<0.000000e+00> : vector<8x384xf32>
    %150 = tpu.matmul %149, %6, %cst_47 {dimension_numbers = #tpu.dot_dimension_numbers<[1], [0], [0], [1], [0, 0, 1, 1], [], []>} : vector<8x128xbf16>, vector<128x384xbf16>, vector<8x384xf32> -> vector<8x384xf32>
    %151 = vector.broadcast %10 : vector<1x384xf32> to vector<8x384xf32>
    %152 = arith.addf %150, %151 : vector<8x384xf32>
    %153 = vector.extract_strided_slice %148 {offsets = [0, 0], sizes = [8, 128], strides = [1, 1]} : vector<8x384xbf16> to vector<8x128xbf16>
    %154 = vector.extract_strided_slice %152 {offsets = [0, 0], sizes = [8, 128], strides = [1, 1]} : vector<8x384xf32> to vector<8x128xf32>
    %155 = arith.extf %153 : vector<8x128xbf16> to vector<8x128xf32>
    %156 = arith.addf %155, %154 : vector<8x128xf32>
    %157 = arith.negf %156 : vector<8x128xf32>
    %158 = math.exp %157 : vector<8x128xf32>
    %cst_48 = arith.constant 1.000000e+00 : f32
    %159 = vector.broadcast %cst_48 : f32 to vector<8x128xf32>
    %160 = arith.addf %159, %158 : vector<8x128xf32>
    %161 = arith.divf %159, %160 : vector<8x128xf32>
    %162 = vector.extract_strided_slice %148 {offsets = [0, 128], sizes = [8, 128], strides = [1, 1]} : vector<8x384xbf16> to vector<8x128xbf16>
    %163 = vector.extract_strided_slice %152 {offsets = [0, 128], sizes = [8, 128], strides = [1, 1]} : vector<8x384xf32> to vector<8x128xf32>
    %164 = arith.extf %162 : vector<8x128xbf16> to vector<8x128xf32>
    %165 = arith.addf %164, %163 : vector<8x128xf32>
    %166 = arith.negf %165 : vector<8x128xf32>
    %167 = math.exp %166 : vector<8x128xf32>
    %cst_49 = arith.constant 1.000000e+00 : f32
    %168 = vector.broadcast %cst_49 : f32 to vector<8x128xf32>
    %169 = arith.addf %168, %167 : vector<8x128xf32>
    %170 = arith.divf %168, %169 : vector<8x128xf32>
    %171 = vector.extract_strided_slice %148 {offsets = [0, 256], sizes = [8, 128], strides = [1, 1]} : vector<8x384xbf16> to vector<8x128xbf16>
    %172 = vector.extract_strided_slice %152 {offsets = [0, 256], sizes = [8, 128], strides = [1, 1]} : vector<8x384xf32> to vector<8x128xf32>
    %173 = arith.mulf %161, %172 : vector<8x128xf32>
    %174 = arith.extf %171 : vector<8x128xbf16> to vector<8x128xf32>
    %175 = arith.addf %174, %173 : vector<8x128xf32>
    %176 = math.tanh %175 : vector<8x128xf32>
    %cst_50 = arith.constant 1.000000e+00 : f32
    %177 = vector.broadcast %cst_50 : f32 to vector<8x128xf32>
    %178 = arith.subf %177, %170 : vector<8x128xf32>
    %179 = arith.mulf %178, %176 : vector<8x128xf32>
    %180 = arith.mulf %170, %103 : vector<8x128xf32>
    %181 = arith.addf %179, %180 : vector<8x128xf32>
    %182 = arith.addi %15, %c1_i32 : i32
    %183 = vector.broadcast %182 : i32 to vector<8x1xi32>
    %184 = arith.cmpi sgt, %14, %183 : vector<8x1xi32>
    %185 = vector.shape_cast %184 : vector<8x1xi1> to vector<8x1xi1>
    %186 = vector.broadcast %185 : vector<8x1xi1> to vector<8x128xi1>
    %187 = arith.select %186, %181, %103 : vector<8x128xi1>, vector<8x128xf32>
    %c2_i32 = arith.constant 2 : i32
    %c0_51 = arith.constant 0 : index
    %188 = arith.index_cast %c2_i32 : i32 to index
    %c0_52 = arith.constant 0 : index
    %c0_53 = arith.constant 0 : index
    %189 = vector.load %arg2[%c0_51, %188, %c0_52, %c0_53] : memref<2x8x8x384xbf16, #tpu.memory_space<vmem>>, vector<1x1x8x384xbf16>
    %190 = vector.shape_cast %189 : vector<1x1x8x384xbf16> to vector<8x384xbf16>
    %191 = arith.truncf %145 : vector<8x128xf32> to vector<8x128xbf16>
    %cst_54 = arith.constant dense<0.000000e+00> : vector<8x384xf32>
    %192 = tpu.matmul %191, %4, %cst_54 {dimension_numbers = #tpu.dot_dimension_numbers<[1], [0], [0], [1], [0, 0, 1, 1], [], []>} : vector<8x128xbf16>, vector<128x384xbf16>, vector<8x384xf32> -> vector<8x384xf32>
    %193 = vector.broadcast %8 : vector<1x384xf32> to vector<8x384xf32>
    %194 = arith.addf %192, %193 : vector<8x384xf32>
    %195 = vector.extract_strided_slice %190 {offsets = [0, 0], sizes = [8, 128], strides = [1, 1]} : vector<8x384xbf16> to vector<8x128xbf16>
    %196 = vector.extract_strided_slice %194 {offsets = [0, 0], sizes = [8, 128], strides = [1, 1]} : vector<8x384xf32> to vector<8x128xf32>
    %197 = arith.extf %195 : vector<8x128xbf16> to vector<8x128xf32>
    %198 = arith.addf %197, %196 : vector<8x128xf32>
    %199 = arith.negf %198 : vector<8x128xf32>
    %200 = math.exp %199 : vector<8x128xf32>
    %cst_55 = arith.constant 1.000000e+00 : f32
    %201 = vector.broadcast %cst_55 : f32 to vector<8x128xf32>
    %202 = arith.addf %201, %200 : vector<8x128xf32>
    %203 = arith.divf %201, %202 : vector<8x128xf32>
    %204 = vector.extract_strided_slice %190 {offsets = [0, 128], sizes = [8, 128], strides = [1, 1]} : vector<8x384xbf16> to vector<8x128xbf16>
    %205 = vector.extract_strided_slice %194 {offsets = [0, 128], sizes = [8, 128], strides = [1, 1]} : vector<8x384xf32> to vector<8x128xf32>
    %206 = arith.extf %204 : vector<8x128xbf16> to vector<8x128xf32>
    %207 = arith.addf %206, %205 : vector<8x128xf32>
    %208 = arith.negf %207 : vector<8x128xf32>
    %209 = math.exp %208 : vector<8x128xf32>
    %cst_56 = arith.constant 1.000000e+00 : f32
    %210 = vector.broadcast %cst_56 : f32 to vector<8x128xf32>
    %211 = arith.addf %210, %209 : vector<8x128xf32>
    %212 = arith.divf %210, %211 : vector<8x128xf32>
    %213 = vector.extract_strided_slice %190 {offsets = [0, 256], sizes = [8, 128], strides = [1, 1]} : vector<8x384xbf16> to vector<8x128xbf16>
    %214 = vector.extract_strided_slice %194 {offsets = [0, 256], sizes = [8, 128], strides = [1, 1]} : vector<8x384xf32> to vector<8x128xf32>
    %215 = arith.mulf %203, %214 : vector<8x128xf32>
    %216 = arith.extf %213 : vector<8x128xbf16> to vector<8x128xf32>
    %217 = arith.addf %216, %215 : vector<8x128xf32>
    %218 = math.tanh %217 : vector<8x128xf32>
    %cst_57 = arith.constant 1.000000e+00 : f32
    %219 = vector.broadcast %cst_57 : f32 to vector<8x128xf32>
    %220 = arith.subf %219, %212 : vector<8x128xf32>
    %221 = arith.mulf %220, %218 : vector<8x128xf32>
    %222 = arith.mulf %212, %145 : vector<8x128xf32>
    %223 = arith.addf %221, %222 : vector<8x128xf32>
    %224 = arith.addi %15, %c2_i32 : i32
    %225 = vector.broadcast %224 : i32 to vector<8x1xi32>
    %226 = arith.cmpi sgt, %12, %225 : vector<8x1xi32>
    %227 = vector.shape_cast %226 : vector<8x1xi1> to vector<8x1xi1>
    %228 = vector.broadcast %227 : vector<8x1xi1> to vector<8x128xi1>
    %229 = arith.select %228, %223, %145 : vector<8x128xi1>, vector<8x128xf32>
    %c1_58 = arith.constant 1 : index
    %230 = arith.index_cast %c2_i32 : i32 to index
    %c0_59 = arith.constant 0 : index
    %c0_60 = arith.constant 0 : index
    %231 = vector.load %arg2[%c1_58, %230, %c0_59, %c0_60] : memref<2x8x8x384xbf16, #tpu.memory_space<vmem>>, vector<1x1x8x384xbf16>
    %232 = vector.shape_cast %231 : vector<1x1x8x384xbf16> to vector<8x384xbf16>
    %233 = arith.truncf %187 : vector<8x128xf32> to vector<8x128xbf16>
    %cst_61 = arith.constant dense<0.000000e+00> : vector<8x384xf32>
    %234 = tpu.matmul %233, %6, %cst_61 {dimension_numbers = #tpu.dot_dimension_numbers<[1], [0], [0], [1], [0, 0, 1, 1], [], []>} : vector<8x128xbf16>, vector<128x384xbf16>, vector<8x384xf32> -> vector<8x384xf32>
    %235 = vector.broadcast %10 : vector<1x384xf32> to vector<8x384xf32>
    %236 = arith.addf %234, %235 : vector<8x384xf32>
    %237 = vector.extract_strided_slice %232 {offsets = [0, 0], sizes = [8, 128], strides = [1, 1]} : vector<8x384xbf16> to vector<8x128xbf16>
    %238 = vector.extract_strided_slice %236 {offsets = [0, 0], sizes = [8, 128], strides = [1, 1]} : vector<8x384xf32> to vector<8x128xf32>
    %239 = arith.extf %237 : vector<8x128xbf16> to vector<8x128xf32>
    %240 = arith.addf %239, %238 : vector<8x128xf32>
    %241 = arith.negf %240 : vector<8x128xf32>
    %242 = math.exp %241 : vector<8x128xf32>
    %cst_62 = arith.constant 1.000000e+00 : f32
    %243 = vector.broadcast %cst_62 : f32 to vector<8x128xf32>
    %244 = arith.addf %243, %242 : vector<8x128xf32>
    %245 = arith.divf %243, %244 : vector<8x128xf32>
    %246 = vector.extract_strided_slice %232 {offsets = [0, 128], sizes = [8, 128], strides = [1, 1]} : vector<8x384xbf16> to vector<8x128xbf16>
    %247 = vector.extract_strided_slice %236 {offsets = [0, 128], sizes = [8, 128], strides = [1, 1]} : vector<8x384xf32> to vector<8x128xf32>
    %248 = arith.extf %246 : vector<8x128xbf16> to vector<8x128xf32>
    %249 = arith.addf %248, %247 : vector<8x128xf32>
    %250 = arith.negf %249 : vector<8x128xf32>
    %251 = math.exp %250 : vector<8x128xf32>
    %cst_63 = arith.constant 1.000000e+00 : f32
    %252 = vector.broadcast %cst_63 : f32 to vector<8x128xf32>
    %253 = arith.addf %252, %251 : vector<8x128xf32>
    %254 = arith.divf %252, %253 : vector<8x128xf32>
    %255 = vector.extract_strided_slice %232 {offsets = [0, 256], sizes = [8, 128], strides = [1, 1]} : vector<8x384xbf16> to vector<8x128xbf16>
    %256 = vector.extract_strided_slice %236 {offsets = [0, 256], sizes = [8, 128], strides = [1, 1]} : vector<8x384xf32> to vector<8x128xf32>
    %257 = arith.mulf %245, %256 : vector<8x128xf32>
    %258 = arith.extf %255 : vector<8x128xbf16> to vector<8x128xf32>
    %259 = arith.addf %258, %257 : vector<8x128xf32>
    %260 = math.tanh %259 : vector<8x128xf32>
    %cst_64 = arith.constant 1.000000e+00 : f32
    %261 = vector.broadcast %cst_64 : f32 to vector<8x128xf32>
    %262 = arith.subf %261, %254 : vector<8x128xf32>
    %263 = arith.mulf %262, %260 : vector<8x128xf32>
    %264 = arith.mulf %254, %187 : vector<8x128xf32>
    %265 = arith.addf %263, %264 : vector<8x128xf32>
    %266 = arith.addi %15, %c2_i32 : i32
    %267 = vector.broadcast %266 : i32 to vector<8x1xi32>
    %268 = arith.cmpi sgt, %14, %267 : vector<8x1xi32>
    %269 = vector.shape_cast %268 : vector<8x1xi1> to vector<8x1xi1>
    %270 = vector.broadcast %269 : vector<8x1xi1> to vector<8x128xi1>
    %271 = arith.select %270, %265, %187 : vector<8x128xi1>, vector<8x128xf32>
    %c3_i32 = arith.constant 3 : i32
    %c0_65 = arith.constant 0 : index
    %272 = arith.index_cast %c3_i32 : i32 to index
    %c0_66 = arith.constant 0 : index
    %c0_67 = arith.constant 0 : index
    %273 = vector.load %arg2[%c0_65, %272, %c0_66, %c0_67] : memref<2x8x8x384xbf16, #tpu.memory_space<vmem>>, vector<1x1x8x384xbf16>
    %274 = vector.shape_cast %273 : vector<1x1x8x384xbf16> to vector<8x384xbf16>
    %275 = arith.truncf %229 : vector<8x128xf32> to vector<8x128xbf16>
    %cst_68 = arith.constant dense<0.000000e+00> : vector<8x384xf32>
    %276 = tpu.matmul %275, %4, %cst_68 {dimension_numbers = #tpu.dot_dimension_numbers<[1], [0], [0], [1], [0, 0, 1, 1], [], []>} : vector<8x128xbf16>, vector<128x384xbf16>, vector<8x384xf32> -> vector<8x384xf32>
    %277 = vector.broadcast %8 : vector<1x384xf32> to vector<8x384xf32>
    %278 = arith.addf %276, %277 : vector<8x384xf32>
    %279 = vector.extract_strided_slice %274 {offsets = [0, 0], sizes = [8, 128], strides = [1, 1]} : vector<8x384xbf16> to vector<8x128xbf16>
    %280 = vector.extract_strided_slice %278 {offsets = [0, 0], sizes = [8, 128], strides = [1, 1]} : vector<8x384xf32> to vector<8x128xf32>
    %281 = arith.extf %279 : vector<8x128xbf16> to vector<8x128xf32>
    %282 = arith.addf %281, %280 : vector<8x128xf32>
    %283 = arith.negf %282 : vector<8x128xf32>
    %284 = math.exp %283 : vector<8x128xf32>
    %cst_69 = arith.constant 1.000000e+00 : f32
    %285 = vector.broadcast %cst_69 : f32 to vector<8x128xf32>
    %286 = arith.addf %285, %284 : vector<8x128xf32>
    %287 = arith.divf %285, %286 : vector<8x128xf32>
    %288 = vector.extract_strided_slice %274 {offsets = [0, 128], sizes = [8, 128], strides = [1, 1]} : vector<8x384xbf16> to vector<8x128xbf16>
    %289 = vector.extract_strided_slice %278 {offsets = [0, 128], sizes = [8, 128], strides = [1, 1]} : vector<8x384xf32> to vector<8x128xf32>
    %290 = arith.extf %288 : vector<8x128xbf16> to vector<8x128xf32>
    %291 = arith.addf %290, %289 : vector<8x128xf32>
    %292 = arith.negf %291 : vector<8x128xf32>
    %293 = math.exp %292 : vector<8x128xf32>
    %cst_70 = arith.constant 1.000000e+00 : f32
    %294 = vector.broadcast %cst_70 : f32 to vector<8x128xf32>
    %295 = arith.addf %294, %293 : vector<8x128xf32>
    %296 = arith.divf %294, %295 : vector<8x128xf32>
    %297 = vector.extract_strided_slice %274 {offsets = [0, 256], sizes = [8, 128], strides = [1, 1]} : vector<8x384xbf16> to vector<8x128xbf16>
    %298 = vector.extract_strided_slice %278 {offsets = [0, 256], sizes = [8, 128], strides = [1, 1]} : vector<8x384xf32> to vector<8x128xf32>
    %299 = arith.mulf %287, %298 : vector<8x128xf32>
    %300 = arith.extf %297 : vector<8x128xbf16> to vector<8x128xf32>
    %301 = arith.addf %300, %299 : vector<8x128xf32>
    %302 = math.tanh %301 : vector<8x128xf32>
    %cst_71 = arith.constant 1.000000e+00 : f32
    %303 = vector.broadcast %cst_71 : f32 to vector<8x128xf32>
    %304 = arith.subf %303, %296 : vector<8x128xf32>
    %305 = arith.mulf %304, %302 : vector<8x128xf32>
    %306 = arith.mulf %296, %229 : vector<8x128xf32>
    %307 = arith.addf %305, %306 : vector<8x128xf32>
    %308 = arith.addi %15, %c3_i32 : i32
    %309 = vector.broadcast %308 : i32 to vector<8x1xi32>
    %310 = arith.cmpi sgt, %12, %309 : vector<8x1xi32>
    %311 = vector.shape_cast %310 : vector<8x1xi1> to vector<8x1xi1>
    %312 = vector.broadcast %311 : vector<8x1xi1> to vector<8x128xi1>
    %313 = arith.select %312, %307, %229 : vector<8x128xi1>, vector<8x128xf32>
    %c1_72 = arith.constant 1 : index
    %314 = arith.index_cast %c3_i32 : i32 to index
    %c0_73 = arith.constant 0 : index
    %c0_74 = arith.constant 0 : index
    %315 = vector.load %arg2[%c1_72, %314, %c0_73, %c0_74] : memref<2x8x8x384xbf16, #tpu.memory_space<vmem>>, vector<1x1x8x384xbf16>
    %316 = vector.shape_cast %315 : vector<1x1x8x384xbf16> to vector<8x384xbf16>
    %317 = arith.truncf %271 : vector<8x128xf32> to vector<8x128xbf16>
    %cst_75 = arith.constant dense<0.000000e+00> : vector<8x384xf32>
    %318 = tpu.matmul %317, %6, %cst_75 {dimension_numbers = #tpu.dot_dimension_numbers<[1], [0], [0], [1], [0, 0, 1, 1], [], []>} : vector<8x128xbf16>, vector<128x384xbf16>, vector<8x384xf32> -> vector<8x384xf32>
    %319 = vector.broadcast %10 : vector<1x384xf32> to vector<8x384xf32>
    %320 = arith.addf %318, %319 : vector<8x384xf32>
    %321 = vector.extract_strided_slice %316 {offsets = [0, 0], sizes = [8, 128], strides = [1, 1]} : vector<8x384xbf16> to vector<8x128xbf16>
    %322 = vector.extract_strided_slice %320 {offsets = [0, 0], sizes = [8, 128], strides = [1, 1]} : vector<8x384xf32> to vector<8x128xf32>
    %323 = arith.extf %321 : vector<8x128xbf16> to vector<8x128xf32>
    %324 = arith.addf %323, %322 : vector<8x128xf32>
    %325 = arith.negf %324 : vector<8x128xf32>
    %326 = math.exp %325 : vector<8x128xf32>
    %cst_76 = arith.constant 1.000000e+00 : f32
    %327 = vector.broadcast %cst_76 : f32 to vector<8x128xf32>
    %328 = arith.addf %327, %326 : vector<8x128xf32>
    %329 = arith.divf %327, %328 : vector<8x128xf32>
    %330 = vector.extract_strided_slice %316 {offsets = [0, 128], sizes = [8, 128], strides = [1, 1]} : vector<8x384xbf16> to vector<8x128xbf16>
    %331 = vector.extract_strided_slice %320 {offsets = [0, 128], sizes = [8, 128], strides = [1, 1]} : vector<8x384xf32> to vector<8x128xf32>
    %332 = arith.extf %330 : vector<8x128xbf16> to vector<8x128xf32>
    %333 = arith.addf %332, %331 : vector<8x128xf32>
    %334 = arith.negf %333 : vector<8x128xf32>
    %335 = math.exp %334 : vector<8x128xf32>
    %cst_77 = arith.constant 1.000000e+00 : f32
    %336 = vector.broadcast %cst_77 : f32 to vector<8x128xf32>
    %337 = arith.addf %336, %335 : vector<8x128xf32>
    %338 = arith.divf %336, %337 : vector<8x128xf32>
    %339 = vector.extract_strided_slice %316 {offsets = [0, 256], sizes = [8, 128], strides = [1, 1]} : vector<8x384xbf16> to vector<8x128xbf16>
    %340 = vector.extract_strided_slice %320 {offsets = [0, 256], sizes = [8, 128], strides = [1, 1]} : vector<8x384xf32> to vector<8x128xf32>
    %341 = arith.mulf %329, %340 : vector<8x128xf32>
    %342 = arith.extf %339 : vector<8x128xbf16> to vector<8x128xf32>
    %343 = arith.addf %342, %341 : vector<8x128xf32>
    %344 = math.tanh %343 : vector<8x128xf32>
    %cst_78 = arith.constant 1.000000e+00 : f32
    %345 = vector.broadcast %cst_78 : f32 to vector<8x128xf32>
    %346 = arith.subf %345, %338 : vector<8x128xf32>
    %347 = arith.mulf %346, %344 : vector<8x128xf32>
    %348 = arith.mulf %338, %271 : vector<8x128xf32>
    %349 = arith.addf %347, %348 : vector<8x128xf32>
    %350 = arith.addi %15, %c3_i32 : i32
    %351 = vector.broadcast %350 : i32 to vector<8x1xi32>
    %352 = arith.cmpi sgt, %14, %351 : vector<8x1xi32>
    %353 = vector.shape_cast %352 : vector<8x1xi1> to vector<8x1xi1>
    %354 = vector.broadcast %353 : vector<8x1xi1> to vector<8x128xi1>
    %355 = arith.select %354, %349, %271 : vector<8x128xi1>, vector<8x128xf32>
    %c4_i32 = arith.constant 4 : i32
    %c0_79 = arith.constant 0 : index
    %356 = arith.index_cast %c4_i32 : i32 to index
    %c0_80 = arith.constant 0 : index
    %c0_81 = arith.constant 0 : index
    %357 = vector.load %arg2[%c0_79, %356, %c0_80, %c0_81] : memref<2x8x8x384xbf16, #tpu.memory_space<vmem>>, vector<1x1x8x384xbf16>
    %358 = vector.shape_cast %357 : vector<1x1x8x384xbf16> to vector<8x384xbf16>
    %359 = arith.truncf %313 : vector<8x128xf32> to vector<8x128xbf16>
    %cst_82 = arith.constant dense<0.000000e+00> : vector<8x384xf32>
    %360 = tpu.matmul %359, %4, %cst_82 {dimension_numbers = #tpu.dot_dimension_numbers<[1], [0], [0], [1], [0, 0, 1, 1], [], []>} : vector<8x128xbf16>, vector<128x384xbf16>, vector<8x384xf32> -> vector<8x384xf32>
    %361 = vector.broadcast %8 : vector<1x384xf32> to vector<8x384xf32>
    %362 = arith.addf %360, %361 : vector<8x384xf32>
    %363 = vector.extract_strided_slice %358 {offsets = [0, 0], sizes = [8, 128], strides = [1, 1]} : vector<8x384xbf16> to vector<8x128xbf16>
    %364 = vector.extract_strided_slice %362 {offsets = [0, 0], sizes = [8, 128], strides = [1, 1]} : vector<8x384xf32> to vector<8x128xf32>
    %365 = arith.extf %363 : vector<8x128xbf16> to vector<8x128xf32>
    %366 = arith.addf %365, %364 : vector<8x128xf32>
    %367 = arith.negf %366 : vector<8x128xf32>
    %368 = math.exp %367 : vector<8x128xf32>
    %cst_83 = arith.constant 1.000000e+00 : f32
    %369 = vector.broadcast %cst_83 : f32 to vector<8x128xf32>
    %370 = arith.addf %369, %368 : vector<8x128xf32>
    %371 = arith.divf %369, %370 : vector<8x128xf32>
    %372 = vector.extract_strided_slice %358 {offsets = [0, 128], sizes = [8, 128], strides = [1, 1]} : vector<8x384xbf16> to vector<8x128xbf16>
    %373 = vector.extract_strided_slice %362 {offsets = [0, 128], sizes = [8, 128], strides = [1, 1]} : vector<8x384xf32> to vector<8x128xf32>
    %374 = arith.extf %372 : vector<8x128xbf16> to vector<8x128xf32>
    %375 = arith.addf %374, %373 : vector<8x128xf32>
    %376 = arith.negf %375 : vector<8x128xf32>
    %377 = math.exp %376 : vector<8x128xf32>
    %cst_84 = arith.constant 1.000000e+00 : f32
    %378 = vector.broadcast %cst_84 : f32 to vector<8x128xf32>
    %379 = arith.addf %378, %377 : vector<8x128xf32>
    %380 = arith.divf %378, %379 : vector<8x128xf32>
    %381 = vector.extract_strided_slice %358 {offsets = [0, 256], sizes = [8, 128], strides = [1, 1]} : vector<8x384xbf16> to vector<8x128xbf16>
    %382 = vector.extract_strided_slice %362 {offsets = [0, 256], sizes = [8, 128], strides = [1, 1]} : vector<8x384xf32> to vector<8x128xf32>
    %383 = arith.mulf %371, %382 : vector<8x128xf32>
    %384 = arith.extf %381 : vector<8x128xbf16> to vector<8x128xf32>
    %385 = arith.addf %384, %383 : vector<8x128xf32>
    %386 = math.tanh %385 : vector<8x128xf32>
    %cst_85 = arith.constant 1.000000e+00 : f32
    %387 = vector.broadcast %cst_85 : f32 to vector<8x128xf32>
    %388 = arith.subf %387, %380 : vector<8x128xf32>
    %389 = arith.mulf %388, %386 : vector<8x128xf32>
    %390 = arith.mulf %380, %313 : vector<8x128xf32>
    %391 = arith.addf %389, %390 : vector<8x128xf32>
    %392 = arith.addi %15, %c4_i32 : i32
    %393 = vector.broadcast %392 : i32 to vector<8x1xi32>
    %394 = arith.cmpi sgt, %12, %393 : vector<8x1xi32>
    %395 = vector.shape_cast %394 : vector<8x1xi1> to vector<8x1xi1>
    %396 = vector.broadcast %395 : vector<8x1xi1> to vector<8x128xi1>
    %397 = arith.select %396, %391, %313 : vector<8x128xi1>, vector<8x128xf32>
    %c1_86 = arith.constant 1 : index
    %398 = arith.index_cast %c4_i32 : i32 to index
    %c0_87 = arith.constant 0 : index
    %c0_88 = arith.constant 0 : index
    %399 = vector.load %arg2[%c1_86, %398, %c0_87, %c0_88] : memref<2x8x8x384xbf16, #tpu.memory_space<vmem>>, vector<1x1x8x384xbf16>
    %400 = vector.shape_cast %399 : vector<1x1x8x384xbf16> to vector<8x384xbf16>
    %401 = arith.truncf %355 : vector<8x128xf32> to vector<8x128xbf16>
    %cst_89 = arith.constant dense<0.000000e+00> : vector<8x384xf32>
    %402 = tpu.matmul %401, %6, %cst_89 {dimension_numbers = #tpu.dot_dimension_numbers<[1], [0], [0], [1], [0, 0, 1, 1], [], []>} : vector<8x128xbf16>, vector<128x384xbf16>, vector<8x384xf32> -> vector<8x384xf32>
    %403 = vector.broadcast %10 : vector<1x384xf32> to vector<8x384xf32>
    %404 = arith.addf %402, %403 : vector<8x384xf32>
    %405 = vector.extract_strided_slice %400 {offsets = [0, 0], sizes = [8, 128], strides = [1, 1]} : vector<8x384xbf16> to vector<8x128xbf16>
    %406 = vector.extract_strided_slice %404 {offsets = [0, 0], sizes = [8, 128], strides = [1, 1]} : vector<8x384xf32> to vector<8x128xf32>
    %407 = arith.extf %405 : vector<8x128xbf16> to vector<8x128xf32>
    %408 = arith.addf %407, %406 : vector<8x128xf32>
    %409 = arith.negf %408 : vector<8x128xf32>
    %410 = math.exp %409 : vector<8x128xf32>
    %cst_90 = arith.constant 1.000000e+00 : f32
    %411 = vector.broadcast %cst_90 : f32 to vector<8x128xf32>
    %412 = arith.addf %411, %410 : vector<8x128xf32>
    %413 = arith.divf %411, %412 : vector<8x128xf32>
    %414 = vector.extract_strided_slice %400 {offsets = [0, 128], sizes = [8, 128], strides = [1, 1]} : vector<8x384xbf16> to vector<8x128xbf16>
    %415 = vector.extract_strided_slice %404 {offsets = [0, 128], sizes = [8, 128], strides = [1, 1]} : vector<8x384xf32> to vector<8x128xf32>
    %416 = arith.extf %414 : vector<8x128xbf16> to vector<8x128xf32>
    %417 = arith.addf %416, %415 : vector<8x128xf32>
    %418 = arith.negf %417 : vector<8x128xf32>
    %419 = math.exp %418 : vector<8x128xf32>
    %cst_91 = arith.constant 1.000000e+00 : f32
    %420 = vector.broadcast %cst_91 : f32 to vector<8x128xf32>
    %421 = arith.addf %420, %419 : vector<8x128xf32>
    %422 = arith.divf %420, %421 : vector<8x128xf32>
    %423 = vector.extract_strided_slice %400 {offsets = [0, 256], sizes = [8, 128], strides = [1, 1]} : vector<8x384xbf16> to vector<8x128xbf16>
    %424 = vector.extract_strided_slice %404 {offsets = [0, 256], sizes = [8, 128], strides = [1, 1]} : vector<8x384xf32> to vector<8x128xf32>
    %425 = arith.mulf %413, %424 : vector<8x128xf32>
    %426 = arith.extf %423 : vector<8x128xbf16> to vector<8x128xf32>
    %427 = arith.addf %426, %425 : vector<8x128xf32>
    %428 = math.tanh %427 : vector<8x128xf32>
    %cst_92 = arith.constant 1.000000e+00 : f32
    %429 = vector.broadcast %cst_92 : f32 to vector<8x128xf32>
    %430 = arith.subf %429, %422 : vector<8x128xf32>
    %431 = arith.mulf %430, %428 : vector<8x128xf32>
    %432 = arith.mulf %422, %355 : vector<8x128xf32>
    %433 = arith.addf %431, %432 : vector<8x128xf32>
    %434 = arith.addi %15, %c4_i32 : i32
    %435 = vector.broadcast %434 : i32 to vector<8x1xi32>
    %436 = arith.cmpi sgt, %14, %435 : vector<8x1xi32>
    %437 = vector.shape_cast %436 : vector<8x1xi1> to vector<8x1xi1>
    %438 = vector.broadcast %437 : vector<8x1xi1> to vector<8x128xi1>
    %439 = arith.select %438, %433, %355 : vector<8x128xi1>, vector<8x128xf32>
    %c5_i32 = arith.constant 5 : i32
    %c0_93 = arith.constant 0 : index
    %440 = arith.index_cast %c5_i32 : i32 to index
    %c0_94 = arith.constant 0 : index
    %c0_95 = arith.constant 0 : index
    %441 = vector.load %arg2[%c0_93, %440, %c0_94, %c0_95] : memref<2x8x8x384xbf16, #tpu.memory_space<vmem>>, vector<1x1x8x384xbf16>
    %442 = vector.shape_cast %441 : vector<1x1x8x384xbf16> to vector<8x384xbf16>
    %443 = arith.truncf %397 : vector<8x128xf32> to vector<8x128xbf16>
    %cst_96 = arith.constant dense<0.000000e+00> : vector<8x384xf32>
    %444 = tpu.matmul %443, %4, %cst_96 {dimension_numbers = #tpu.dot_dimension_numbers<[1], [0], [0], [1], [0, 0, 1, 1], [], []>} : vector<8x128xbf16>, vector<128x384xbf16>, vector<8x384xf32> -> vector<8x384xf32>
    %445 = vector.broadcast %8 : vector<1x384xf32> to vector<8x384xf32>
    %446 = arith.addf %444, %445 : vector<8x384xf32>
    %447 = vector.extract_strided_slice %442 {offsets = [0, 0], sizes = [8, 128], strides = [1, 1]} : vector<8x384xbf16> to vector<8x128xbf16>
    %448 = vector.extract_strided_slice %446 {offsets = [0, 0], sizes = [8, 128], strides = [1, 1]} : vector<8x384xf32> to vector<8x128xf32>
    %449 = arith.extf %447 : vector<8x128xbf16> to vector<8x128xf32>
    %450 = arith.addf %449, %448 : vector<8x128xf32>
    %451 = arith.negf %450 : vector<8x128xf32>
    %452 = math.exp %451 : vector<8x128xf32>
    %cst_97 = arith.constant 1.000000e+00 : f32
    %453 = vector.broadcast %cst_97 : f32 to vector<8x128xf32>
    %454 = arith.addf %453, %452 : vector<8x128xf32>
    %455 = arith.divf %453, %454 : vector<8x128xf32>
    %456 = vector.extract_strided_slice %442 {offsets = [0, 128], sizes = [8, 128], strides = [1, 1]} : vector<8x384xbf16> to vector<8x128xbf16>
    %457 = vector.extract_strided_slice %446 {offsets = [0, 128], sizes = [8, 128], strides = [1, 1]} : vector<8x384xf32> to vector<8x128xf32>
    %458 = arith.extf %456 : vector<8x128xbf16> to vector<8x128xf32>
    %459 = arith.addf %458, %457 : vector<8x128xf32>
    %460 = arith.negf %459 : vector<8x128xf32>
    %461 = math.exp %460 : vector<8x128xf32>
    %cst_98 = arith.constant 1.000000e+00 : f32
    %462 = vector.broadcast %cst_98 : f32 to vector<8x128xf32>
    %463 = arith.addf %462, %461 : vector<8x128xf32>
    %464 = arith.divf %462, %463 : vector<8x128xf32>
    %465 = vector.extract_strided_slice %442 {offsets = [0, 256], sizes = [8, 128], strides = [1, 1]} : vector<8x384xbf16> to vector<8x128xbf16>
    %466 = vector.extract_strided_slice %446 {offsets = [0, 256], sizes = [8, 128], strides = [1, 1]} : vector<8x384xf32> to vector<8x128xf32>
    %467 = arith.mulf %455, %466 : vector<8x128xf32>
    %468 = arith.extf %465 : vector<8x128xbf16> to vector<8x128xf32>
    %469 = arith.addf %468, %467 : vector<8x128xf32>
    %470 = math.tanh %469 : vector<8x128xf32>
    %cst_99 = arith.constant 1.000000e+00 : f32
    %471 = vector.broadcast %cst_99 : f32 to vector<8x128xf32>
    %472 = arith.subf %471, %464 : vector<8x128xf32>
    %473 = arith.mulf %472, %470 : vector<8x128xf32>
    %474 = arith.mulf %464, %397 : vector<8x128xf32>
    %475 = arith.addf %473, %474 : vector<8x128xf32>
    %476 = arith.addi %15, %c5_i32 : i32
    %477 = vector.broadcast %476 : i32 to vector<8x1xi32>
    %478 = arith.cmpi sgt, %12, %477 : vector<8x1xi32>
    %479 = vector.shape_cast %478 : vector<8x1xi1> to vector<8x1xi1>
    %480 = vector.broadcast %479 : vector<8x1xi1> to vector<8x128xi1>
    %481 = arith.select %480, %475, %397 : vector<8x128xi1>, vector<8x128xf32>
    %c1_100 = arith.constant 1 : index
    %482 = arith.index_cast %c5_i32 : i32 to index
    %c0_101 = arith.constant 0 : index
    %c0_102 = arith.constant 0 : index
    %483 = vector.load %arg2[%c1_100, %482, %c0_101, %c0_102] : memref<2x8x8x384xbf16, #tpu.memory_space<vmem>>, vector<1x1x8x384xbf16>
    %484 = vector.shape_cast %483 : vector<1x1x8x384xbf16> to vector<8x384xbf16>
    %485 = arith.truncf %439 : vector<8x128xf32> to vector<8x128xbf16>
    %cst_103 = arith.constant dense<0.000000e+00> : vector<8x384xf32>
    %486 = tpu.matmul %485, %6, %cst_103 {dimension_numbers = #tpu.dot_dimension_numbers<[1], [0], [0], [1], [0, 0, 1, 1], [], []>} : vector<8x128xbf16>, vector<128x384xbf16>, vector<8x384xf32> -> vector<8x384xf32>
    %487 = vector.broadcast %10 : vector<1x384xf32> to vector<8x384xf32>
    %488 = arith.addf %486, %487 : vector<8x384xf32>
    %489 = vector.extract_strided_slice %484 {offsets = [0, 0], sizes = [8, 128], strides = [1, 1]} : vector<8x384xbf16> to vector<8x128xbf16>
    %490 = vector.extract_strided_slice %488 {offsets = [0, 0], sizes = [8, 128], strides = [1, 1]} : vector<8x384xf32> to vector<8x128xf32>
    %491 = arith.extf %489 : vector<8x128xbf16> to vector<8x128xf32>
    %492 = arith.addf %491, %490 : vector<8x128xf32>
    %493 = arith.negf %492 : vector<8x128xf32>
    %494 = math.exp %493 : vector<8x128xf32>
    %cst_104 = arith.constant 1.000000e+00 : f32
    %495 = vector.broadcast %cst_104 : f32 to vector<8x128xf32>
    %496 = arith.addf %495, %494 : vector<8x128xf32>
    %497 = arith.divf %495, %496 : vector<8x128xf32>
    %498 = vector.extract_strided_slice %484 {offsets = [0, 128], sizes = [8, 128], strides = [1, 1]} : vector<8x384xbf16> to vector<8x128xbf16>
    %499 = vector.extract_strided_slice %488 {offsets = [0, 128], sizes = [8, 128], strides = [1, 1]} : vector<8x384xf32> to vector<8x128xf32>
    %500 = arith.extf %498 : vector<8x128xbf16> to vector<8x128xf32>
    %501 = arith.addf %500, %499 : vector<8x128xf32>
    %502 = arith.negf %501 : vector<8x128xf32>
    %503 = math.exp %502 : vector<8x128xf32>
    %cst_105 = arith.constant 1.000000e+00 : f32
    %504 = vector.broadcast %cst_105 : f32 to vector<8x128xf32>
    %505 = arith.addf %504, %503 : vector<8x128xf32>
    %506 = arith.divf %504, %505 : vector<8x128xf32>
    %507 = vector.extract_strided_slice %484 {offsets = [0, 256], sizes = [8, 128], strides = [1, 1]} : vector<8x384xbf16> to vector<8x128xbf16>
    %508 = vector.extract_strided_slice %488 {offsets = [0, 256], sizes = [8, 128], strides = [1, 1]} : vector<8x384xf32> to vector<8x128xf32>
    %509 = arith.mulf %497, %508 : vector<8x128xf32>
    %510 = arith.extf %507 : vector<8x128xbf16> to vector<8x128xf32>
    %511 = arith.addf %510, %509 : vector<8x128xf32>
    %512 = math.tanh %511 : vector<8x128xf32>
    %cst_106 = arith.constant 1.000000e+00 : f32
    %513 = vector.broadcast %cst_106 : f32 to vector<8x128xf32>
    %514 = arith.subf %513, %506 : vector<8x128xf32>
    %515 = arith.mulf %514, %512 : vector<8x128xf32>
    %516 = arith.mulf %506, %439 : vector<8x128xf32>
    %517 = arith.addf %515, %516 : vector<8x128xf32>
    %518 = arith.addi %15, %c5_i32 : i32
    %519 = vector.broadcast %518 : i32 to vector<8x1xi32>
    %520 = arith.cmpi sgt, %14, %519 : vector<8x1xi32>
    %521 = vector.shape_cast %520 : vector<8x1xi1> to vector<8x1xi1>
    %522 = vector.broadcast %521 : vector<8x1xi1> to vector<8x128xi1>
    %523 = arith.select %522, %517, %439 : vector<8x128xi1>, vector<8x128xf32>
    %c6_i32 = arith.constant 6 : i32
    %c0_107 = arith.constant 0 : index
    %524 = arith.index_cast %c6_i32 : i32 to index
    %c0_108 = arith.constant 0 : index
    %c0_109 = arith.constant 0 : index
    %525 = vector.load %arg2[%c0_107, %524, %c0_108, %c0_109] : memref<2x8x8x384xbf16, #tpu.memory_space<vmem>>, vector<1x1x8x384xbf16>
    %526 = vector.shape_cast %525 : vector<1x1x8x384xbf16> to vector<8x384xbf16>
    %527 = arith.truncf %481 : vector<8x128xf32> to vector<8x128xbf16>
    %cst_110 = arith.constant dense<0.000000e+00> : vector<8x384xf32>
    %528 = tpu.matmul %527, %4, %cst_110 {dimension_numbers = #tpu.dot_dimension_numbers<[1], [0], [0], [1], [0, 0, 1, 1], [], []>} : vector<8x128xbf16>, vector<128x384xbf16>, vector<8x384xf32> -> vector<8x384xf32>
    %529 = vector.broadcast %8 : vector<1x384xf32> to vector<8x384xf32>
    %530 = arith.addf %528, %529 : vector<8x384xf32>
    %531 = vector.extract_strided_slice %526 {offsets = [0, 0], sizes = [8, 128], strides = [1, 1]} : vector<8x384xbf16> to vector<8x128xbf16>
    %532 = vector.extract_strided_slice %530 {offsets = [0, 0], sizes = [8, 128], strides = [1, 1]} : vector<8x384xf32> to vector<8x128xf32>
    %533 = arith.extf %531 : vector<8x128xbf16> to vector<8x128xf32>
    %534 = arith.addf %533, %532 : vector<8x128xf32>
    %535 = arith.negf %534 : vector<8x128xf32>
    %536 = math.exp %535 : vector<8x128xf32>
    %cst_111 = arith.constant 1.000000e+00 : f32
    %537 = vector.broadcast %cst_111 : f32 to vector<8x128xf32>
    %538 = arith.addf %537, %536 : vector<8x128xf32>
    %539 = arith.divf %537, %538 : vector<8x128xf32>
    %540 = vector.extract_strided_slice %526 {offsets = [0, 128], sizes = [8, 128], strides = [1, 1]} : vector<8x384xbf16> to vector<8x128xbf16>
    %541 = vector.extract_strided_slice %530 {offsets = [0, 128], sizes = [8, 128], strides = [1, 1]} : vector<8x384xf32> to vector<8x128xf32>
    %542 = arith.extf %540 : vector<8x128xbf16> to vector<8x128xf32>
    %543 = arith.addf %542, %541 : vector<8x128xf32>
    %544 = arith.negf %543 : vector<8x128xf32>
    %545 = math.exp %544 : vector<8x128xf32>
    %cst_112 = arith.constant 1.000000e+00 : f32
    %546 = vector.broadcast %cst_112 : f32 to vector<8x128xf32>
    %547 = arith.addf %546, %545 : vector<8x128xf32>
    %548 = arith.divf %546, %547 : vector<8x128xf32>
    %549 = vector.extract_strided_slice %526 {offsets = [0, 256], sizes = [8, 128], strides = [1, 1]} : vector<8x384xbf16> to vector<8x128xbf16>
    %550 = vector.extract_strided_slice %530 {offsets = [0, 256], sizes = [8, 128], strides = [1, 1]} : vector<8x384xf32> to vector<8x128xf32>
    %551 = arith.mulf %539, %550 : vector<8x128xf32>
    %552 = arith.extf %549 : vector<8x128xbf16> to vector<8x128xf32>
    %553 = arith.addf %552, %551 : vector<8x128xf32>
    %554 = math.tanh %553 : vector<8x128xf32>
    %cst_113 = arith.constant 1.000000e+00 : f32
    %555 = vector.broadcast %cst_113 : f32 to vector<8x128xf32>
    %556 = arith.subf %555, %548 : vector<8x128xf32>
    %557 = arith.mulf %556, %554 : vector<8x128xf32>
    %558 = arith.mulf %548, %481 : vector<8x128xf32>
    %559 = arith.addf %557, %558 : vector<8x128xf32>
    %560 = arith.addi %15, %c6_i32 : i32
    %561 = vector.broadcast %560 : i32 to vector<8x1xi32>
    %562 = arith.cmpi sgt, %12, %561 : vector<8x1xi32>
    %563 = vector.shape_cast %562 : vector<8x1xi1> to vector<8x1xi1>
    %564 = vector.broadcast %563 : vector<8x1xi1> to vector<8x128xi1>
    %565 = arith.select %564, %559, %481 : vector<8x128xi1>, vector<8x128xf32>
    %c1_114 = arith.constant 1 : index
    %566 = arith.index_cast %c6_i32 : i32 to index
    %c0_115 = arith.constant 0 : index
    %c0_116 = arith.constant 0 : index
    %567 = vector.load %arg2[%c1_114, %566, %c0_115, %c0_116] : memref<2x8x8x384xbf16, #tpu.memory_space<vmem>>, vector<1x1x8x384xbf16>
    %568 = vector.shape_cast %567 : vector<1x1x8x384xbf16> to vector<8x384xbf16>
    %569 = arith.truncf %523 : vector<8x128xf32> to vector<8x128xbf16>
    %cst_117 = arith.constant dense<0.000000e+00> : vector<8x384xf32>
    %570 = tpu.matmul %569, %6, %cst_117 {dimension_numbers = #tpu.dot_dimension_numbers<[1], [0], [0], [1], [0, 0, 1, 1], [], []>} : vector<8x128xbf16>, vector<128x384xbf16>, vector<8x384xf32> -> vector<8x384xf32>
    %571 = vector.broadcast %10 : vector<1x384xf32> to vector<8x384xf32>
    %572 = arith.addf %570, %571 : vector<8x384xf32>
    %573 = vector.extract_strided_slice %568 {offsets = [0, 0], sizes = [8, 128], strides = [1, 1]} : vector<8x384xbf16> to vector<8x128xbf16>
    %574 = vector.extract_strided_slice %572 {offsets = [0, 0], sizes = [8, 128], strides = [1, 1]} : vector<8x384xf32> to vector<8x128xf32>
    %575 = arith.extf %573 : vector<8x128xbf16> to vector<8x128xf32>
    %576 = arith.addf %575, %574 : vector<8x128xf32>
    %577 = arith.negf %576 : vector<8x128xf32>
    %578 = math.exp %577 : vector<8x128xf32>
    %cst_118 = arith.constant 1.000000e+00 : f32
    %579 = vector.broadcast %cst_118 : f32 to vector<8x128xf32>
    %580 = arith.addf %579, %578 : vector<8x128xf32>
    %581 = arith.divf %579, %580 : vector<8x128xf32>
    %582 = vector.extract_strided_slice %568 {offsets = [0, 128], sizes = [8, 128], strides = [1, 1]} : vector<8x384xbf16> to vector<8x128xbf16>
    %583 = vector.extract_strided_slice %572 {offsets = [0, 128], sizes = [8, 128], strides = [1, 1]} : vector<8x384xf32> to vector<8x128xf32>
    %584 = arith.extf %582 : vector<8x128xbf16> to vector<8x128xf32>
    %585 = arith.addf %584, %583 : vector<8x128xf32>
    %586 = arith.negf %585 : vector<8x128xf32>
    %587 = math.exp %586 : vector<8x128xf32>
    %cst_119 = arith.constant 1.000000e+00 : f32
    %588 = vector.broadcast %cst_119 : f32 to vector<8x128xf32>
    %589 = arith.addf %588, %587 : vector<8x128xf32>
    %590 = arith.divf %588, %589 : vector<8x128xf32>
    %591 = vector.extract_strided_slice %568 {offsets = [0, 256], sizes = [8, 128], strides = [1, 1]} : vector<8x384xbf16> to vector<8x128xbf16>
    %592 = vector.extract_strided_slice %572 {offsets = [0, 256], sizes = [8, 128], strides = [1, 1]} : vector<8x384xf32> to vector<8x128xf32>
    %593 = arith.mulf %581, %592 : vector<8x128xf32>
    %594 = arith.extf %591 : vector<8x128xbf16> to vector<8x128xf32>
    %595 = arith.addf %594, %593 : vector<8x128xf32>
    %596 = math.tanh %595 : vector<8x128xf32>
    %cst_120 = arith.constant 1.000000e+00 : f32
    %597 = vector.broadcast %cst_120 : f32 to vector<8x128xf32>
    %598 = arith.subf %597, %590 : vector<8x128xf32>
    %599 = arith.mulf %598, %596 : vector<8x128xf32>
    %600 = arith.mulf %590, %523 : vector<8x128xf32>
    %601 = arith.addf %599, %600 : vector<8x128xf32>
    %602 = arith.addi %15, %c6_i32 : i32
    %603 = vector.broadcast %602 : i32 to vector<8x1xi32>
    %604 = arith.cmpi sgt, %14, %603 : vector<8x1xi32>
    %605 = vector.shape_cast %604 : vector<8x1xi1> to vector<8x1xi1>
    %606 = vector.broadcast %605 : vector<8x1xi1> to vector<8x128xi1>
    %607 = arith.select %606, %601, %523 : vector<8x128xi1>, vector<8x128xf32>
    %c7_i32 = arith.constant 7 : i32
    %c0_121 = arith.constant 0 : index
    %608 = arith.index_cast %c7_i32 : i32 to index
    %c0_122 = arith.constant 0 : index
    %c0_123 = arith.constant 0 : index
    %609 = vector.load %arg2[%c0_121, %608, %c0_122, %c0_123] : memref<2x8x8x384xbf16, #tpu.memory_space<vmem>>, vector<1x1x8x384xbf16>
    %610 = vector.shape_cast %609 : vector<1x1x8x384xbf16> to vector<8x384xbf16>
    %611 = arith.truncf %565 : vector<8x128xf32> to vector<8x128xbf16>
    %cst_124 = arith.constant dense<0.000000e+00> : vector<8x384xf32>
    %612 = tpu.matmul %611, %4, %cst_124 {dimension_numbers = #tpu.dot_dimension_numbers<[1], [0], [0], [1], [0, 0, 1, 1], [], []>} : vector<8x128xbf16>, vector<128x384xbf16>, vector<8x384xf32> -> vector<8x384xf32>
    %613 = vector.broadcast %8 : vector<1x384xf32> to vector<8x384xf32>
    %614 = arith.addf %612, %613 : vector<8x384xf32>
    %615 = vector.extract_strided_slice %610 {offsets = [0, 0], sizes = [8, 128], strides = [1, 1]} : vector<8x384xbf16> to vector<8x128xbf16>
    %616 = vector.extract_strided_slice %614 {offsets = [0, 0], sizes = [8, 128], strides = [1, 1]} : vector<8x384xf32> to vector<8x128xf32>
    %617 = arith.extf %615 : vector<8x128xbf16> to vector<8x128xf32>
    %618 = arith.addf %617, %616 : vector<8x128xf32>
    %619 = arith.negf %618 : vector<8x128xf32>
    %620 = math.exp %619 : vector<8x128xf32>
    %cst_125 = arith.constant 1.000000e+00 : f32
    %621 = vector.broadcast %cst_125 : f32 to vector<8x128xf32>
    %622 = arith.addf %621, %620 : vector<8x128xf32>
    %623 = arith.divf %621, %622 : vector<8x128xf32>
    %624 = vector.extract_strided_slice %610 {offsets = [0, 128], sizes = [8, 128], strides = [1, 1]} : vector<8x384xbf16> to vector<8x128xbf16>
    %625 = vector.extract_strided_slice %614 {offsets = [0, 128], sizes = [8, 128], strides = [1, 1]} : vector<8x384xf32> to vector<8x128xf32>
    %626 = arith.extf %624 : vector<8x128xbf16> to vector<8x128xf32>
    %627 = arith.addf %626, %625 : vector<8x128xf32>
    %628 = arith.negf %627 : vector<8x128xf32>
    %629 = math.exp %628 : vector<8x128xf32>
    %cst_126 = arith.constant 1.000000e+00 : f32
    %630 = vector.broadcast %cst_126 : f32 to vector<8x128xf32>
    %631 = arith.addf %630, %629 : vector<8x128xf32>
    %632 = arith.divf %630, %631 : vector<8x128xf32>
    %633 = vector.extract_strided_slice %610 {offsets = [0, 256], sizes = [8, 128], strides = [1, 1]} : vector<8x384xbf16> to vector<8x128xbf16>
    %634 = vector.extract_strided_slice %614 {offsets = [0, 256], sizes = [8, 128], strides = [1, 1]} : vector<8x384xf32> to vector<8x128xf32>
    %635 = arith.mulf %623, %634 : vector<8x128xf32>
    %636 = arith.extf %633 : vector<8x128xbf16> to vector<8x128xf32>
    %637 = arith.addf %636, %635 : vector<8x128xf32>
    %638 = math.tanh %637 : vector<8x128xf32>
    %cst_127 = arith.constant 1.000000e+00 : f32
    %639 = vector.broadcast %cst_127 : f32 to vector<8x128xf32>
    %640 = arith.subf %639, %632 : vector<8x128xf32>
    %641 = arith.mulf %640, %638 : vector<8x128xf32>
    %642 = arith.mulf %632, %565 : vector<8x128xf32>
    %643 = arith.addf %641, %642 : vector<8x128xf32>
    %644 = arith.addi %15, %c7_i32 : i32
    %645 = vector.broadcast %644 : i32 to vector<8x1xi32>
    %646 = arith.cmpi sgt, %12, %645 : vector<8x1xi32>
    %647 = vector.shape_cast %646 : vector<8x1xi1> to vector<8x1xi1>
    %648 = vector.broadcast %647 : vector<8x1xi1> to vector<8x128xi1>
    %649 = arith.select %648, %643, %565 : vector<8x128xi1>, vector<8x128xf32>
    %c1_128 = arith.constant 1 : index
    %650 = arith.index_cast %c7_i32 : i32 to index
    %c0_129 = arith.constant 0 : index
    %c0_130 = arith.constant 0 : index
    %651 = vector.load %arg2[%c1_128, %650, %c0_129, %c0_130] : memref<2x8x8x384xbf16, #tpu.memory_space<vmem>>, vector<1x1x8x384xbf16>
    %652 = vector.shape_cast %651 : vector<1x1x8x384xbf16> to vector<8x384xbf16>
    %653 = arith.truncf %607 : vector<8x128xf32> to vector<8x128xbf16>
    %cst_131 = arith.constant dense<0.000000e+00> : vector<8x384xf32>
    %654 = tpu.matmul %653, %6, %cst_131 {dimension_numbers = #tpu.dot_dimension_numbers<[1], [0], [0], [1], [0, 0, 1, 1], [], []>} : vector<8x128xbf16>, vector<128x384xbf16>, vector<8x384xf32> -> vector<8x384xf32>
    %655 = vector.broadcast %10 : vector<1x384xf32> to vector<8x384xf32>
    %656 = arith.addf %654, %655 : vector<8x384xf32>
    %657 = vector.extract_strided_slice %652 {offsets = [0, 0], sizes = [8, 128], strides = [1, 1]} : vector<8x384xbf16> to vector<8x128xbf16>
    %658 = vector.extract_strided_slice %656 {offsets = [0, 0], sizes = [8, 128], strides = [1, 1]} : vector<8x384xf32> to vector<8x128xf32>
    %659 = arith.extf %657 : vector<8x128xbf16> to vector<8x128xf32>
    %660 = arith.addf %659, %658 : vector<8x128xf32>
    %661 = arith.negf %660 : vector<8x128xf32>
    %662 = math.exp %661 : vector<8x128xf32>
    %cst_132 = arith.constant 1.000000e+00 : f32
    %663 = vector.broadcast %cst_132 : f32 to vector<8x128xf32>
    %664 = arith.addf %663, %662 : vector<8x128xf32>
    %665 = arith.divf %663, %664 : vector<8x128xf32>
    %666 = vector.extract_strided_slice %652 {offsets = [0, 128], sizes = [8, 128], strides = [1, 1]} : vector<8x384xbf16> to vector<8x128xbf16>
    %667 = vector.extract_strided_slice %656 {offsets = [0, 128], sizes = [8, 128], strides = [1, 1]} : vector<8x384xf32> to vector<8x128xf32>
    %668 = arith.extf %666 : vector<8x128xbf16> to vector<8x128xf32>
    %669 = arith.addf %668, %667 : vector<8x128xf32>
    %670 = arith.negf %669 : vector<8x128xf32>
    %671 = math.exp %670 : vector<8x128xf32>
    %cst_133 = arith.constant 1.000000e+00 : f32
    %672 = vector.broadcast %cst_133 : f32 to vector<8x128xf32>
    %673 = arith.addf %672, %671 : vector<8x128xf32>
    %674 = arith.divf %672, %673 : vector<8x128xf32>
    %675 = vector.extract_strided_slice %652 {offsets = [0, 256], sizes = [8, 128], strides = [1, 1]} : vector<8x384xbf16> to vector<8x128xbf16>
    %676 = vector.extract_strided_slice %656 {offsets = [0, 256], sizes = [8, 128], strides = [1, 1]} : vector<8x384xf32> to vector<8x128xf32>
    %677 = arith.mulf %665, %676 : vector<8x128xf32>
    %678 = arith.extf %675 : vector<8x128xbf16> to vector<8x128xf32>
    %679 = arith.addf %678, %677 : vector<8x128xf32>
    %680 = math.tanh %679 : vector<8x128xf32>
    %cst_134 = arith.constant 1.000000e+00 : f32
    %681 = vector.broadcast %cst_134 : f32 to vector<8x128xf32>
    %682 = arith.subf %681, %674 : vector<8x128xf32>
    %683 = arith.mulf %682, %680 : vector<8x128xf32>
    %684 = arith.mulf %674, %607 : vector<8x128xf32>
    %685 = arith.addf %683, %684 : vector<8x128xf32>
    %686 = arith.addi %15, %c7_i32 : i32
    %687 = vector.broadcast %686 : i32 to vector<8x1xi32>
    %688 = arith.cmpi sgt, %14, %687 : vector<8x1xi32>
    %689 = vector.shape_cast %688 : vector<8x1xi1> to vector<8x1xi1>
    %690 = vector.broadcast %689 : vector<8x1xi1> to vector<8x128xi1>
    %691 = arith.select %690, %685, %607 : vector<8x128xi1>, vector<8x128xf32>
    %c8_i32_135 = arith.constant 8 : i32
    %c0_136 = arith.constant 0 : index
    %c0_137 = arith.constant 0 : index
    %c0_138 = arith.constant 0 : index
    %692 = vector.load %arg8[%c0_136, %c0_137, %c0_138] : memref<2x8x128xf32, #tpu.memory_space<vmem>>, vector<1x8x128xf32>
    %693 = vector.shape_cast %692 : vector<1x8x128xf32> to vector<8x128xf32>
    %694 = vector.shape_cast %649 : vector<8x128xf32> to vector<1x8x128xf32>
    tpu.vector_store %arg8[%c0_136, %c0_137, %c0_138], %694 {strides = array<i32>} : memref<2x8x128xf32, #tpu.memory_space<vmem>>, vector<1x8x128xf32>,
    %c1_139 = arith.constant 1 : index
    %c0_140 = arith.constant 0 : index
    %c0_141 = arith.constant 0 : index
    %695 = vector.load %arg8[%c1_139, %c0_140, %c0_141] : memref<2x8x128xf32, #tpu.memory_space<vmem>>, vector<1x8x128xf32>
    %696 = vector.shape_cast %695 : vector<1x8x128xf32> to vector<8x128xf32>
    %697 = vector.shape_cast %691 : vector<8x128xf32> to vector<1x8x128xf32>
    tpu.vector_store %arg8[%c1_139, %c0_140, %c0_141], %697 {strides = array<i32>} : memref<2x8x128xf32, #tpu.memory_space<vmem>>, vector<1x8x128xf32>,
    %c0_142 = arith.constant 0 : index
    %c0_143 = arith.constant 0 : index
    %c0_144 = arith.constant 0 : index
    %698 = vector.load %arg8[%c0_142, %c0_143, %c0_144] : memref<2x8x128xf32, #tpu.memory_space<vmem>>, vector<2x8x128xf32>
    %c0_145 = arith.constant 0 : index
    %c0_146 = arith.constant 0 : index
    %c0_147 = arith.constant 0 : index
    %699 = vector.load %arg7[%c0_145, %c0_146, %c0_147] : memref<2x8x128xf32, #tpu.memory_space<vmem>>, vector<2x8x128xf32>
    tpu.vector_store %arg7[%c0_145, %c0_146, %c0_147], %698 {strides = array<i32>} : memref<2x8x128xf32, #tpu.memory_space<vmem>>, vector<2x8x128xf32>,
    return
  }
  func.func @transform_0(%arg0: i32, %arg1: i32) -> (i32, i32, i32, i32) {
    %c0_i32 = arith.constant 0 : i32
    %c0_i32_0 = arith.constant 0 : i32
    %c0_i32_1 = arith.constant 0 : i32
    return %arg0, %arg1, %c0_i32, %c0_i32_0 : i32, i32, i32, i32
  }
  func.func @transform_1(%arg0: i32, %arg1: i32) -> (i32, i32, i32) {
    %c0_i32 = arith.constant 0 : i32
    %c0_i32_0 = arith.constant 0 : i32
    %c0_i32_1 = arith.constant 0 : i32
    return %arg0, %c0_i32, %c0_i32_0 : i32, i32, i32
  }
  func.func @transform_2(%arg0: i32, %arg1: i32) -> (i32, i32, i32) {
    %c0_i32 = arith.constant 0 : i32
    %c0_i32_0 = arith.constant 0 : i32
    %c0_i32_1 = arith.constant 0 : i32
    return %arg0, %c0_i32, %c0_i32_0 : i32, i32, i32
  }
  func.func @transform_3(%arg0: i32, %arg1: i32) -> (i32, i32, i32) {
    %c0_i32 = arith.constant 0 : i32
    %c0_i32_0 = arith.constant 0 : i32
    %c0_i32_1 = arith.constant 0 : i32
    return %arg0, %c0_i32, %c0_i32_0 : i32, i32, i32
  }
  func.func @transform_4(%arg0: i32, %arg1: i32) -> (i32, i32, i32) {
    %c0_i32 = arith.constant 0 : i32
    %c0_i32_0 = arith.constant 0 : i32
    %c0_i32_1 = arith.constant 0 : i32
    return %arg0, %c0_i32, %c0_i32_0 : i32, i32, i32
  }
  func.func @transform_5(%arg0: i32, %arg1: i32) -> (i32, i32, i32) {
    %c0_i32 = arith.constant 0 : i32
    %c0_i32_0 = arith.constant 0 : i32
    %c0_i32_1 = arith.constant 0 : i32
    return %arg0, %c0_i32, %c0_i32_0 : i32, i32, i32
  }
}

module attributes {stable_mosaic.version = 11 : i64} {
  func.func @_linear_kernel(%arg0: i32, %arg1: i32, %arg2: i32, %arg3: memref<8x128xbf16, #tpu.memory_space<vmem>>, %arg4: memref<128x128xbf16, #tpu.memory_space<vmem>>, %arg5: memref<1x128xf32, #tpu.memory_space<vmem>>, %arg6: memref<8x128xf32, #tpu.memory_space<vmem>>, %arg7: memref<8x128xf32, #tpu.memory_space<vmem>>) attributes {dimension_semantics = [#tpu.dimension_semantics<parallel>, #tpu.dimension_semantics<parallel>, #tpu.dimension_semantics<arbitrary>], iteration_bounds = array<i64: 1, 1, 1>, scalar_prefetch = 0 : i64, scratch_operands = 1 : i64, tpu.core_type = #tpu.core_type<tc>, window_params = [{transform_indices = @transform_0, window_bounds = array<i64: 8, 128>}, {transform_indices = @transform_1, window_bounds = array<i64: 128, 128>}, {transform_indices = @transform_2, window_bounds = array<i64: 1, 128>}, {transform_indices = @transform_3, window_bounds = array<i64: 8, 128>}]} {
    %c0_i32 = arith.constant 0 : i32
    %0 = arith.cmpi eq, %arg2, %c0_i32 : i32
    %1 = arith.extui %0 : i1 to i32
    %c0_i32_0 = arith.constant 0 : i32
    %2 = arith.cmpi ne, %1, %c0_i32_0 : i32
    scf.if %2 {
      %cst_10 = arith.constant 0.000000e+00 : f32
      %12 = vector.broadcast %cst_10 : f32 to vector<8x128xf32>
      %c0_11 = arith.constant 0 : index
      %c0_12 = arith.constant 0 : index
      %13 = vector.load %arg7[%c0_11, %c0_12] : memref<8x128xf32, #tpu.memory_space<vmem>>, vector<8x128xf32>
      tpu.vector_store %arg7[%c0_11, %c0_12], %12 {strides = array<i32>} : memref<8x128xf32, #tpu.memory_space<vmem>>, vector<8x128xf32>,
    } else {
    }
    %c0 = arith.constant 0 : index
    %c0_1 = arith.constant 0 : index
    %3 = vector.load %arg7[%c0, %c0_1] : memref<8x128xf32, #tpu.memory_space<vmem>>, vector<8x128xf32>
    %c0_2 = arith.constant 0 : index
    %c0_3 = arith.constant 0 : index
    %4 = vector.load %arg3[%c0_2, %c0_3] : memref<8x128xbf16, #tpu.memory_space<vmem>>, vector<8x128xbf16>
    %c0_4 = arith.constant 0 : index
    %c0_5 = arith.constant 0 : index
    %5 = vector.load %arg4[%c0_4, %c0_5] : memref<128x128xbf16, #tpu.memory_space<vmem>>, vector<128x128xbf16>
    %cst = arith.constant dense<0.000000e+00> : vector<8x128xf32>
    %6 = tpu.matmul %4, %5, %cst {dimension_numbers = #tpu.dot_dimension_numbers<[1], [0], [0], [1], [0, 0, 1, 1], [], []>} : vector<8x128xbf16>, vector<128x128xbf16>, vector<8x128xf32> -> vector<8x128xf32>
    %7 = arith.addf %3, %6 : vector<8x128xf32>
    %c0_6 = arith.constant 0 : index
    %c0_7 = arith.constant 0 : index
    %8 = vector.load %arg7[%c0_6, %c0_7] : memref<8x128xf32, #tpu.memory_space<vmem>>, vector<8x128xf32>
    tpu.vector_store %arg7[%c0_6, %c0_7], %7 {strides = array<i32>} : memref<8x128xf32, #tpu.memory_space<vmem>>, vector<8x128xf32>,
    %c0_i32_8 = arith.constant 0 : i32
    %9 = arith.cmpi eq, %arg2, %c0_i32_8 : i32
    %10 = arith.extui %9 : i1 to i32
    %c0_i32_9 = arith.constant 0 : i32
    %11 = arith.cmpi ne, %10, %c0_i32_9 : i32
    scf.if %11 {
      %c0_10 = arith.constant 0 : index
      %c0_11 = arith.constant 0 : index
      %12 = vector.load %arg7[%c0_10, %c0_11] : memref<8x128xf32, #tpu.memory_space<vmem>>, vector<8x128xf32>
      %c0_12 = arith.constant 0 : index
      %c0_13 = arith.constant 0 : index
      %13 = vector.load %arg5[%c0_12, %c0_13] : memref<1x128xf32, #tpu.memory_space<vmem>>, vector<1x128xf32>
      %14 = vector.broadcast %13 : vector<1x128xf32> to vector<8x128xf32>
      %15 = arith.addf %12, %14 : vector<8x128xf32>
      %c0_14 = arith.constant 0 : index
      %c0_15 = arith.constant 0 : index
      %16 = vector.load %arg6[%c0_14, %c0_15] : memref<8x128xf32, #tpu.memory_space<vmem>>, vector<8x128xf32>
      tpu.vector_store %arg6[%c0_14, %c0_15], %15 {strides = array<i32>} : memref<8x128xf32, #tpu.memory_space<vmem>>, vector<8x128xf32>,
    } else {
    }
    return
  }
  func.func @transform_0(%arg0: i32, %arg1: i32, %arg2: i32) -> (i32, i32) {
    %c0_i32 = arith.constant 0 : i32
    return %arg0, %arg2 : i32, i32
  }
  func.func @transform_1(%arg0: i32, %arg1: i32, %arg2: i32) -> (i32, i32) {
    %c0_i32 = arith.constant 0 : i32
    return %arg2, %arg1 : i32, i32
  }
  func.func @transform_2(%arg0: i32, %arg1: i32, %arg2: i32) -> (i32, i32) {
    %c0_i32 = arith.constant 0 : i32
    %c0_i32_0 = arith.constant 0 : i32
    return %c0_i32, %arg1 : i32, i32
  }
  func.func @transform_3(%arg0: i32, %arg1: i32, %arg2: i32) -> (i32, i32) {
    %c0_i32 = arith.constant 0 : i32
    return %arg0, %arg1 : i32, i32
  }
}

module attributes {stable_mosaic.version = 11 : i64} {
  func.func @_linear_kernel(%arg0: i32, %arg1: i32, %arg2: i32, %arg3: memref<16x128xbf16, #tpu.memory_space<vmem>>, %arg4: memref<128x128xbf16, #tpu.memory_space<vmem>>, %arg5: memref<1x128xf32, #tpu.memory_space<vmem>>, %arg6: memref<16x128xbf16, #tpu.memory_space<vmem>>, %arg7: memref<16x128xf32, #tpu.memory_space<vmem>>) attributes {dimension_semantics = [#tpu.dimension_semantics<parallel>, #tpu.dimension_semantics<parallel>, #tpu.dimension_semantics<arbitrary>], iteration_bounds = array<i64: 1, 3, 1>, scalar_prefetch = 0 : i64, scratch_operands = 1 : i64, tpu.core_type = #tpu.core_type<tc>, window_params = [{transform_indices = @transform_0, window_bounds = array<i64: 16, 128>}, {transform_indices = @transform_1, window_bounds = array<i64: 128, 128>}, {transform_indices = @transform_2, window_bounds = array<i64: 1, 128>}, {transform_indices = @transform_3, window_bounds = array<i64: 16, 128>}]} {
    %c0_i32 = arith.constant 0 : i32
    %0 = arith.cmpi eq, %arg2, %c0_i32 : i32
    %1 = arith.extui %0 : i1 to i32
    %c0_i32_0 = arith.constant 0 : i32
    %2 = arith.cmpi ne, %1, %c0_i32_0 : i32
    scf.if %2 {
      %cst_10 = arith.constant 0.000000e+00 : f32
      %12 = vector.broadcast %cst_10 : f32 to vector<16x128xf32>
      %c0_11 = arith.constant 0 : index
      %c0_12 = arith.constant 0 : index
      %13 = vector.load %arg7[%c0_11, %c0_12] : memref<16x128xf32, #tpu.memory_space<vmem>>, vector<16x128xf32>
      tpu.vector_store %arg7[%c0_11, %c0_12], %12 {strides = array<i32>} : memref<16x128xf32, #tpu.memory_space<vmem>>, vector<16x128xf32>,
    } else {
    }
    %c0 = arith.constant 0 : index
    %c0_1 = arith.constant 0 : index
    %3 = vector.load %arg7[%c0, %c0_1] : memref<16x128xf32, #tpu.memory_space<vmem>>, vector<16x128xf32>
    %c0_2 = arith.constant 0 : index
    %c0_3 = arith.constant 0 : index
    %4 = vector.load %arg3[%c0_2, %c0_3] : memref<16x128xbf16, #tpu.memory_space<vmem>>, vector<16x128xbf16>
    %c0_4 = arith.constant 0 : index
    %c0_5 = arith.constant 0 : index
    %5 = vector.load %arg4[%c0_4, %c0_5] : memref<128x128xbf16, #tpu.memory_space<vmem>>, vector<128x128xbf16>
    %cst = arith.constant dense<0.000000e+00> : vector<16x128xf32>
    %6 = tpu.matmul %4, %5, %cst {dimension_numbers = #tpu.dot_dimension_numbers<[1], [0], [0], [1], [0, 0, 1, 1], [], []>} : vector<16x128xbf16>, vector<128x128xbf16>, vector<16x128xf32> -> vector<16x128xf32>
    %7 = arith.addf %3, %6 : vector<16x128xf32>
    %c0_6 = arith.constant 0 : index
    %c0_7 = arith.constant 0 : index
    %8 = vector.load %arg7[%c0_6, %c0_7] : memref<16x128xf32, #tpu.memory_space<vmem>>, vector<16x128xf32>
    tpu.vector_store %arg7[%c0_6, %c0_7], %7 {strides = array<i32>} : memref<16x128xf32, #tpu.memory_space<vmem>>, vector<16x128xf32>,
    %c0_i32_8 = arith.constant 0 : i32
    %9 = arith.cmpi eq, %arg2, %c0_i32_8 : i32
    %10 = arith.extui %9 : i1 to i32
    %c0_i32_9 = arith.constant 0 : i32
    %11 = arith.cmpi ne, %10, %c0_i32_9 : i32
    scf.if %11 {
      %c0_10 = arith.constant 0 : index
      %c0_11 = arith.constant 0 : index
      %12 = vector.load %arg7[%c0_10, %c0_11] : memref<16x128xf32, #tpu.memory_space<vmem>>, vector<16x128xf32>
      %c0_12 = arith.constant 0 : index
      %c0_13 = arith.constant 0 : index
      %13 = vector.load %arg5[%c0_12, %c0_13] : memref<1x128xf32, #tpu.memory_space<vmem>>, vector<1x128xf32>
      %14 = vector.broadcast %13 : vector<1x128xf32> to vector<16x128xf32>
      %15 = arith.addf %12, %14 : vector<16x128xf32>
      %16 = arith.truncf %15 : vector<16x128xf32> to vector<16x128xbf16>
      %c0_14 = arith.constant 0 : index
      %c0_15 = arith.constant 0 : index
      %17 = vector.load %arg6[%c0_14, %c0_15] : memref<16x128xbf16, #tpu.memory_space<vmem>>, vector<16x128xbf16>
      tpu.vector_store %arg6[%c0_14, %c0_15], %16 {strides = array<i32>} : memref<16x128xbf16, #tpu.memory_space<vmem>>, vector<16x128xbf16>,
    } else {
    }
    return
  }
  func.func @transform_0(%arg0: i32, %arg1: i32, %arg2: i32) -> (i32, i32) {
    %c0_i32 = arith.constant 0 : i32
    return %arg0, %arg2 : i32, i32
  }
  func.func @transform_1(%arg0: i32, %arg1: i32, %arg2: i32) -> (i32, i32) {
    %c0_i32 = arith.constant 0 : i32
    return %arg2, %arg1 : i32, i32
  }
  func.func @transform_2(%arg0: i32, %arg1: i32, %arg2: i32) -> (i32, i32) {
    %c0_i32 = arith.constant 0 : i32
    %c0_i32_0 = arith.constant 0 : i32
    return %c0_i32, %arg1 : i32, i32
  }
  func.func @transform_3(%arg0: i32, %arg1: i32, %arg2: i32) -> (i32, i32) {
    %c0_i32 = arith.constant 0 : i32
    return %arg0, %arg1 : i32, i32
  }
}

module attributes {stable_mosaic.version = 11 : i64} {
  func.func @_gru_kernel(%arg0: i32, %arg1: i32, %arg2: memref<1x8x8x384xbf16, #tpu.memory_space<vmem>>, %arg3: memref<1x8x128xf32, #tpu.memory_space<vmem>>, %arg4: memref<1x8x1xi32, #tpu.memory_space<vmem>>, %arg5: memref<1x128x384xbf16, #tpu.memory_space<vmem>>, %arg6: memref<1x1x384xf32, #tpu.memory_space<vmem>>, %arg7: memref<1x8x8x128xbf16, #tpu.memory_space<vmem>>, %arg8: memref<1x8x128xf32, #tpu.memory_space<vmem>>) attributes {dimension_semantics = [#tpu.dimension_semantics<parallel>, #tpu.dimension_semantics<arbitrary>], iteration_bounds = array<i64: 1, 1>, scalar_prefetch = 0 : i64, scratch_operands = 1 : i64, tpu.core_type = #tpu.core_type<tc>, window_params = [{transform_indices = @transform_0, window_bounds = array<i64: 1, 8, 8, 384>}, {transform_indices = @transform_1, window_bounds = array<i64: 1, 8, 128>}, {transform_indices = @transform_2, window_bounds = array<i64: 1, 8, 1>}, {transform_indices = @transform_3, window_bounds = array<i64: 1, 128, 384>}, {transform_indices = @transform_4, window_bounds = array<i64: 1, 1, 384>}, {transform_indices = @transform_5, window_bounds = array<i64: 1, 8, 8, 128>}]} {
    %c0_i32 = arith.constant 0 : i32
    %0 = arith.cmpi eq, %arg1, %c0_i32 : i32
    %1 = arith.extui %0 : i1 to i32
    %c0_i32_0 = arith.constant 0 : i32
    %2 = arith.cmpi ne, %1, %c0_i32_0 : i32
    scf.if %2 {
      %c0_96 = arith.constant 0 : index
      %c0_97 = arith.constant 0 : index
      %c0_98 = arith.constant 0 : index
      %391 = vector.load %arg3[%c0_96, %c0_97, %c0_98] : memref<1x8x128xf32, #tpu.memory_space<vmem>>, vector<1x8x128xf32>
      %c0_99 = arith.constant 0 : index
      %c0_100 = arith.constant 0 : index
      %c0_101 = arith.constant 0 : index
      %392 = vector.load %arg8[%c0_99, %c0_100, %c0_101] : memref<1x8x128xf32, #tpu.memory_space<vmem>>, vector<1x8x128xf32>
      tpu.vector_store %arg8[%c0_99, %c0_100, %c0_101], %391 {strides = array<i32>} : memref<1x8x128xf32, #tpu.memory_space<vmem>>, vector<1x8x128xf32>,
    } else {
    }
    %c0 = arith.constant 0 : index
    %c0_1 = arith.constant 0 : index
    %c0_2 = arith.constant 0 : index
    %3 = vector.load %arg5[%c0, %c0_1, %c0_2] : memref<1x128x384xbf16, #tpu.memory_space<vmem>>, vector<1x128x384xbf16>
    %4 = vector.shape_cast %3 : vector<1x128x384xbf16> to vector<128x384xbf16>
    %c0_3 = arith.constant 0 : index
    %c0_4 = arith.constant 0 : index
    %c0_5 = arith.constant 0 : index
    %5 = vector.load %arg6[%c0_3, %c0_4, %c0_5] : memref<1x1x384xf32, #tpu.memory_space<vmem>>, vector<1x1x384xf32>
    %6 = vector.shape_cast %5 : vector<1x1x384xf32> to vector<1x384xf32>
    %c0_6 = arith.constant 0 : index
    %c0_7 = arith.constant 0 : index
    %c0_8 = arith.constant 0 : index
    %7 = vector.load %arg4[%c0_6, %c0_7, %c0_8] : memref<1x8x1xi32, #tpu.memory_space<vmem>>, vector<1x8x1xi32>
    %8 = vector.shape_cast %7 : vector<1x8x1xi32> to vector<8x1xi32>
    %c8_i32 = arith.constant 8 : i32
    %9 = arith.muli %arg1, %c8_i32 : i32
    %c0_9 = arith.constant 0 : index
    %c0_10 = arith.constant 0 : index
    %c0_11 = arith.constant 0 : index
    %10 = vector.load %arg8[%c0_9, %c0_10, %c0_11] : memref<1x8x128xf32, #tpu.memory_space<vmem>>, vector<1x8x128xf32>
    %11 = vector.shape_cast %10 : vector<1x8x128xf32> to vector<8x128xf32>
    %c0_i32_12 = arith.constant 0 : i32
    %c0_13 = arith.constant 0 : index
    %12 = arith.index_cast %c0_i32_12 : i32 to index
    %c0_14 = arith.constant 0 : index
    %c0_15 = arith.constant 0 : index
    %13 = vector.load %arg2[%c0_13, %12, %c0_14, %c0_15] : memref<1x8x8x384xbf16, #tpu.memory_space<vmem>>, vector<1x1x8x384xbf16>
    %14 = vector.shape_cast %13 : vector<1x1x8x384xbf16> to vector<8x384xbf16>
    %15 = arith.truncf %11 : vector<8x128xf32> to vector<8x128xbf16>
    %cst = arith.constant dense<0.000000e+00> : vector<8x384xf32>
    %16 = tpu.matmul %15, %4, %cst {dimension_numbers = #tpu.dot_dimension_numbers<[1], [0], [0], [1], [0, 0, 1, 1], [], []>} : vector<8x128xbf16>, vector<128x384xbf16>, vector<8x384xf32> -> vector<8x384xf32>
    %17 = vector.broadcast %6 : vector<1x384xf32> to vector<8x384xf32>
    %18 = arith.addf %16, %17 : vector<8x384xf32>
    %19 = vector.extract_strided_slice %14 {offsets = [0, 0], sizes = [8, 128], strides = [1, 1]} : vector<8x384xbf16> to vector<8x128xbf16>
    %20 = vector.extract_strided_slice %18 {offsets = [0, 0], sizes = [8, 128], strides = [1, 1]} : vector<8x384xf32> to vector<8x128xf32>
    %21 = arith.extf %19 : vector<8x128xbf16> to vector<8x128xf32>
    %22 = arith.addf %21, %20 : vector<8x128xf32>
    %23 = arith.negf %22 : vector<8x128xf32>
    %24 = math.exp %23 : vector<8x128xf32>
    %cst_16 = arith.constant 1.000000e+00 : f32
    %25 = vector.broadcast %cst_16 : f32 to vector<8x128xf32>
    %26 = arith.addf %25, %24 : vector<8x128xf32>
    %27 = arith.divf %25, %26 : vector<8x128xf32>
    %28 = vector.extract_strided_slice %14 {offsets = [0, 128], sizes = [8, 128], strides = [1, 1]} : vector<8x384xbf16> to vector<8x128xbf16>
    %29 = vector.extract_strided_slice %18 {offsets = [0, 128], sizes = [8, 128], strides = [1, 1]} : vector<8x384xf32> to vector<8x128xf32>
    %30 = arith.extf %28 : vector<8x128xbf16> to vector<8x128xf32>
    %31 = arith.addf %30, %29 : vector<8x128xf32>
    %32 = arith.negf %31 : vector<8x128xf32>
    %33 = math.exp %32 : vector<8x128xf32>
    %cst_17 = arith.constant 1.000000e+00 : f32
    %34 = vector.broadcast %cst_17 : f32 to vector<8x128xf32>
    %35 = arith.addf %34, %33 : vector<8x128xf32>
    %36 = arith.divf %34, %35 : vector<8x128xf32>
    %37 = vector.extract_strided_slice %14 {offsets = [0, 256], sizes = [8, 128], strides = [1, 1]} : vector<8x384xbf16> to vector<8x128xbf16>
    %38 = vector.extract_strided_slice %18 {offsets = [0, 256], sizes = [8, 128], strides = [1, 1]} : vector<8x384xf32> to vector<8x128xf32>
    %39 = arith.mulf %27, %38 : vector<8x128xf32>
    %40 = arith.extf %37 : vector<8x128xbf16> to vector<8x128xf32>
    %41 = arith.addf %40, %39 : vector<8x128xf32>
    %42 = math.tanh %41 : vector<8x128xf32>
    %cst_18 = arith.constant 1.000000e+00 : f32
    %43 = vector.broadcast %cst_18 : f32 to vector<8x128xf32>
    %44 = arith.subf %43, %36 : vector<8x128xf32>
    %45 = arith.mulf %44, %42 : vector<8x128xf32>
    %46 = arith.mulf %36, %11 : vector<8x128xf32>
    %47 = arith.addf %45, %46 : vector<8x128xf32>
    %48 = arith.addi %9, %c0_i32_12 : i32
    %49 = vector.broadcast %48 : i32 to vector<8x1xi32>
    %50 = arith.cmpi sgt, %8, %49 : vector<8x1xi32>
    %51 = vector.shape_cast %50 : vector<8x1xi1> to vector<8x1xi1>
    %52 = vector.broadcast %51 : vector<8x1xi1> to vector<8x128xi1>
    %53 = arith.select %52, %47, %11 : vector<8x128xi1>, vector<8x128xf32>
    %54 = arith.truncf %53 : vector<8x128xf32> to vector<8x128xbf16>
    %c0_19 = arith.constant 0 : index
    %55 = arith.index_cast %c0_i32_12 : i32 to index
    %c0_20 = arith.constant 0 : index
    %c0_21 = arith.constant 0 : index
    %56 = vector.load %arg7[%c0_19, %55, %c0_20, %c0_21] : memref<1x8x8x128xbf16, #tpu.memory_space<vmem>>, vector<1x1x8x128xbf16>
    %57 = vector.shape_cast %56 : vector<1x1x8x128xbf16> to vector<8x128xbf16>
    %58 = vector.shape_cast %54 : vector<8x128xbf16> to vector<1x1x8x128xbf16>
    tpu.vector_store %arg7[%c0_19, %55, %c0_20, %c0_21], %58 {strides = array<i32>} : memref<1x8x8x128xbf16, #tpu.memory_space<vmem>>, vector<1x1x8x128xbf16>,
    %c1_i32 = arith.constant 1 : i32
    %c0_22 = arith.constant 0 : index
    %59 = arith.index_cast %c1_i32 : i32 to index
    %c0_23 = arith.constant 0 : index
    %c0_24 = arith.constant 0 : index
    %60 = vector.load %arg2[%c0_22, %59, %c0_23, %c0_24] : memref<1x8x8x384xbf16, #tpu.memory_space<vmem>>, vector<1x1x8x384xbf16>
    %61 = vector.shape_cast %60 : vector<1x1x8x384xbf16> to vector<8x384xbf16>
    %62 = arith.truncf %53 : vector<8x128xf32> to vector<8x128xbf16>
    %cst_25 = arith.constant dense<0.000000e+00> : vector<8x384xf32>
    %63 = tpu.matmul %62, %4, %cst_25 {dimension_numbers = #tpu.dot_dimension_numbers<[1], [0], [0], [1], [0, 0, 1, 1], [], []>} : vector<8x128xbf16>, vector<128x384xbf16>, vector<8x384xf32> -> vector<8x384xf32>
    %64 = vector.broadcast %6 : vector<1x384xf32> to vector<8x384xf32>
    %65 = arith.addf %63, %64 : vector<8x384xf32>
    %66 = vector.extract_strided_slice %61 {offsets = [0, 0], sizes = [8, 128], strides = [1, 1]} : vector<8x384xbf16> to vector<8x128xbf16>
    %67 = vector.extract_strided_slice %65 {offsets = [0, 0], sizes = [8, 128], strides = [1, 1]} : vector<8x384xf32> to vector<8x128xf32>
    %68 = arith.extf %66 : vector<8x128xbf16> to vector<8x128xf32>
    %69 = arith.addf %68, %67 : vector<8x128xf32>
    %70 = arith.negf %69 : vector<8x128xf32>
    %71 = math.exp %70 : vector<8x128xf32>
    %cst_26 = arith.constant 1.000000e+00 : f32
    %72 = vector.broadcast %cst_26 : f32 to vector<8x128xf32>
    %73 = arith.addf %72, %71 : vector<8x128xf32>
    %74 = arith.divf %72, %73 : vector<8x128xf32>
    %75 = vector.extract_strided_slice %61 {offsets = [0, 128], sizes = [8, 128], strides = [1, 1]} : vector<8x384xbf16> to vector<8x128xbf16>
    %76 = vector.extract_strided_slice %65 {offsets = [0, 128], sizes = [8, 128], strides = [1, 1]} : vector<8x384xf32> to vector<8x128xf32>
    %77 = arith.extf %75 : vector<8x128xbf16> to vector<8x128xf32>
    %78 = arith.addf %77, %76 : vector<8x128xf32>
    %79 = arith.negf %78 : vector<8x128xf32>
    %80 = math.exp %79 : vector<8x128xf32>
    %cst_27 = arith.constant 1.000000e+00 : f32
    %81 = vector.broadcast %cst_27 : f32 to vector<8x128xf32>
    %82 = arith.addf %81, %80 : vector<8x128xf32>
    %83 = arith.divf %81, %82 : vector<8x128xf32>
    %84 = vector.extract_strided_slice %61 {offsets = [0, 256], sizes = [8, 128], strides = [1, 1]} : vector<8x384xbf16> to vector<8x128xbf16>
    %85 = vector.extract_strided_slice %65 {offsets = [0, 256], sizes = [8, 128], strides = [1, 1]} : vector<8x384xf32> to vector<8x128xf32>
    %86 = arith.mulf %74, %85 : vector<8x128xf32>
    %87 = arith.extf %84 : vector<8x128xbf16> to vector<8x128xf32>
    %88 = arith.addf %87, %86 : vector<8x128xf32>
    %89 = math.tanh %88 : vector<8x128xf32>
    %cst_28 = arith.constant 1.000000e+00 : f32
    %90 = vector.broadcast %cst_28 : f32 to vector<8x128xf32>
    %91 = arith.subf %90, %83 : vector<8x128xf32>
    %92 = arith.mulf %91, %89 : vector<8x128xf32>
    %93 = arith.mulf %83, %53 : vector<8x128xf32>
    %94 = arith.addf %92, %93 : vector<8x128xf32>
    %95 = arith.addi %9, %c1_i32 : i32
    %96 = vector.broadcast %95 : i32 to vector<8x1xi32>
    %97 = arith.cmpi sgt, %8, %96 : vector<8x1xi32>
    %98 = vector.shape_cast %97 : vector<8x1xi1> to vector<8x1xi1>
    %99 = vector.broadcast %98 : vector<8x1xi1> to vector<8x128xi1>
    %100 = arith.select %99, %94, %53 : vector<8x128xi1>, vector<8x128xf32>
    %101 = arith.truncf %100 : vector<8x128xf32> to vector<8x128xbf16>
    %c0_29 = arith.constant 0 : index
    %102 = arith.index_cast %c1_i32 : i32 to index
    %c0_30 = arith.constant 0 : index
    %c0_31 = arith.constant 0 : index
    %103 = vector.load %arg7[%c0_29, %102, %c0_30, %c0_31] : memref<1x8x8x128xbf16, #tpu.memory_space<vmem>>, vector<1x1x8x128xbf16>
    %104 = vector.shape_cast %103 : vector<1x1x8x128xbf16> to vector<8x128xbf16>
    %105 = vector.shape_cast %101 : vector<8x128xbf16> to vector<1x1x8x128xbf16>
    tpu.vector_store %arg7[%c0_29, %102, %c0_30, %c0_31], %105 {strides = array<i32>} : memref<1x8x8x128xbf16, #tpu.memory_space<vmem>>, vector<1x1x8x128xbf16>,
    %c2_i32 = arith.constant 2 : i32
    %c0_32 = arith.constant 0 : index
    %106 = arith.index_cast %c2_i32 : i32 to index
    %c0_33 = arith.constant 0 : index
    %c0_34 = arith.constant 0 : index
    %107 = vector.load %arg2[%c0_32, %106, %c0_33, %c0_34] : memref<1x8x8x384xbf16, #tpu.memory_space<vmem>>, vector<1x1x8x384xbf16>
    %108 = vector.shape_cast %107 : vector<1x1x8x384xbf16> to vector<8x384xbf16>
    %109 = arith.truncf %100 : vector<8x128xf32> to vector<8x128xbf16>
    %cst_35 = arith.constant dense<0.000000e+00> : vector<8x384xf32>
    %110 = tpu.matmul %109, %4, %cst_35 {dimension_numbers = #tpu.dot_dimension_numbers<[1], [0], [0], [1], [0, 0, 1, 1], [], []>} : vector<8x128xbf16>, vector<128x384xbf16>, vector<8x384xf32> -> vector<8x384xf32>
    %111 = vector.broadcast %6 : vector<1x384xf32> to vector<8x384xf32>
    %112 = arith.addf %110, %111 : vector<8x384xf32>
    %113 = vector.extract_strided_slice %108 {offsets = [0, 0], sizes = [8, 128], strides = [1, 1]} : vector<8x384xbf16> to vector<8x128xbf16>
    %114 = vector.extract_strided_slice %112 {offsets = [0, 0], sizes = [8, 128], strides = [1, 1]} : vector<8x384xf32> to vector<8x128xf32>
    %115 = arith.extf %113 : vector<8x128xbf16> to vector<8x128xf32>
    %116 = arith.addf %115, %114 : vector<8x128xf32>
    %117 = arith.negf %116 : vector<8x128xf32>
    %118 = math.exp %117 : vector<8x128xf32>
    %cst_36 = arith.constant 1.000000e+00 : f32
    %119 = vector.broadcast %cst_36 : f32 to vector<8x128xf32>
    %120 = arith.addf %119, %118 : vector<8x128xf32>
    %121 = arith.divf %119, %120 : vector<8x128xf32>
    %122 = vector.extract_strided_slice %108 {offsets = [0, 128], sizes = [8, 128], strides = [1, 1]} : vector<8x384xbf16> to vector<8x128xbf16>
    %123 = vector.extract_strided_slice %112 {offsets = [0, 128], sizes = [8, 128], strides = [1, 1]} : vector<8x384xf32> to vector<8x128xf32>
    %124 = arith.extf %122 : vector<8x128xbf16> to vector<8x128xf32>
    %125 = arith.addf %124, %123 : vector<8x128xf32>
    %126 = arith.negf %125 : vector<8x128xf32>
    %127 = math.exp %126 : vector<8x128xf32>
    %cst_37 = arith.constant 1.000000e+00 : f32
    %128 = vector.broadcast %cst_37 : f32 to vector<8x128xf32>
    %129 = arith.addf %128, %127 : vector<8x128xf32>
    %130 = arith.divf %128, %129 : vector<8x128xf32>
    %131 = vector.extract_strided_slice %108 {offsets = [0, 256], sizes = [8, 128], strides = [1, 1]} : vector<8x384xbf16> to vector<8x128xbf16>
    %132 = vector.extract_strided_slice %112 {offsets = [0, 256], sizes = [8, 128], strides = [1, 1]} : vector<8x384xf32> to vector<8x128xf32>
    %133 = arith.mulf %121, %132 : vector<8x128xf32>
    %134 = arith.extf %131 : vector<8x128xbf16> to vector<8x128xf32>
    %135 = arith.addf %134, %133 : vector<8x128xf32>
    %136 = math.tanh %135 : vector<8x128xf32>
    %cst_38 = arith.constant 1.000000e+00 : f32
    %137 = vector.broadcast %cst_38 : f32 to vector<8x128xf32>
    %138 = arith.subf %137, %130 : vector<8x128xf32>
    %139 = arith.mulf %138, %136 : vector<8x128xf32>
    %140 = arith.mulf %130, %100 : vector<8x128xf32>
    %141 = arith.addf %139, %140 : vector<8x128xf32>
    %142 = arith.addi %9, %c2_i32 : i32
    %143 = vector.broadcast %142 : i32 to vector<8x1xi32>
    %144 = arith.cmpi sgt, %8, %143 : vector<8x1xi32>
    %145 = vector.shape_cast %144 : vector<8x1xi1> to vector<8x1xi1>
    %146 = vector.broadcast %145 : vector<8x1xi1> to vector<8x128xi1>
    %147 = arith.select %146, %141, %100 : vector<8x128xi1>, vector<8x128xf32>
    %148 = arith.truncf %147 : vector<8x128xf32> to vector<8x128xbf16>
    %c0_39 = arith.constant 0 : index
    %149 = arith.index_cast %c2_i32 : i32 to index
    %c0_40 = arith.constant 0 : index
    %c0_41 = arith.constant 0 : index
    %150 = vector.load %arg7[%c0_39, %149, %c0_40, %c0_41] : memref<1x8x8x128xbf16, #tpu.memory_space<vmem>>, vector<1x1x8x128xbf16>
    %151 = vector.shape_cast %150 : vector<1x1x8x128xbf16> to vector<8x128xbf16>
    %152 = vector.shape_cast %148 : vector<8x128xbf16> to vector<1x1x8x128xbf16>
    tpu.vector_store %arg7[%c0_39, %149, %c0_40, %c0_41], %152 {strides = array<i32>} : memref<1x8x8x128xbf16, #tpu.memory_space<vmem>>, vector<1x1x8x128xbf16>,
    %c3_i32 = arith.constant 3 : i32
    %c0_42 = arith.constant 0 : index
    %153 = arith.index_cast %c3_i32 : i32 to index
    %c0_43 = arith.constant 0 : index
    %c0_44 = arith.constant 0 : index
    %154 = vector.load %arg2[%c0_42, %153, %c0_43, %c0_44] : memref<1x8x8x384xbf16, #tpu.memory_space<vmem>>, vector<1x1x8x384xbf16>
    %155 = vector.shape_cast %154 : vector<1x1x8x384xbf16> to vector<8x384xbf16>
    %156 = arith.truncf %147 : vector<8x128xf32> to vector<8x128xbf16>
    %cst_45 = arith.constant dense<0.000000e+00> : vector<8x384xf32>
    %157 = tpu.matmul %156, %4, %cst_45 {dimension_numbers = #tpu.dot_dimension_numbers<[1], [0], [0], [1], [0, 0, 1, 1], [], []>} : vector<8x128xbf16>, vector<128x384xbf16>, vector<8x384xf32> -> vector<8x384xf32>
    %158 = vector.broadcast %6 : vector<1x384xf32> to vector<8x384xf32>
    %159 = arith.addf %157, %158 : vector<8x384xf32>
    %160 = vector.extract_strided_slice %155 {offsets = [0, 0], sizes = [8, 128], strides = [1, 1]} : vector<8x384xbf16> to vector<8x128xbf16>
    %161 = vector.extract_strided_slice %159 {offsets = [0, 0], sizes = [8, 128], strides = [1, 1]} : vector<8x384xf32> to vector<8x128xf32>
    %162 = arith.extf %160 : vector<8x128xbf16> to vector<8x128xf32>
    %163 = arith.addf %162, %161 : vector<8x128xf32>
    %164 = arith.negf %163 : vector<8x128xf32>
    %165 = math.exp %164 : vector<8x128xf32>
    %cst_46 = arith.constant 1.000000e+00 : f32
    %166 = vector.broadcast %cst_46 : f32 to vector<8x128xf32>
    %167 = arith.addf %166, %165 : vector<8x128xf32>
    %168 = arith.divf %166, %167 : vector<8x128xf32>
    %169 = vector.extract_strided_slice %155 {offsets = [0, 128], sizes = [8, 128], strides = [1, 1]} : vector<8x384xbf16> to vector<8x128xbf16>
    %170 = vector.extract_strided_slice %159 {offsets = [0, 128], sizes = [8, 128], strides = [1, 1]} : vector<8x384xf32> to vector<8x128xf32>
    %171 = arith.extf %169 : vector<8x128xbf16> to vector<8x128xf32>
    %172 = arith.addf %171, %170 : vector<8x128xf32>
    %173 = arith.negf %172 : vector<8x128xf32>
    %174 = math.exp %173 : vector<8x128xf32>
    %cst_47 = arith.constant 1.000000e+00 : f32
    %175 = vector.broadcast %cst_47 : f32 to vector<8x128xf32>
    %176 = arith.addf %175, %174 : vector<8x128xf32>
    %177 = arith.divf %175, %176 : vector<8x128xf32>
    %178 = vector.extract_strided_slice %155 {offsets = [0, 256], sizes = [8, 128], strides = [1, 1]} : vector<8x384xbf16> to vector<8x128xbf16>
    %179 = vector.extract_strided_slice %159 {offsets = [0, 256], sizes = [8, 128], strides = [1, 1]} : vector<8x384xf32> to vector<8x128xf32>
    %180 = arith.mulf %168, %179 : vector<8x128xf32>
    %181 = arith.extf %178 : vector<8x128xbf16> to vector<8x128xf32>
    %182 = arith.addf %181, %180 : vector<8x128xf32>
    %183 = math.tanh %182 : vector<8x128xf32>
    %cst_48 = arith.constant 1.000000e+00 : f32
    %184 = vector.broadcast %cst_48 : f32 to vector<8x128xf32>
    %185 = arith.subf %184, %177 : vector<8x128xf32>
    %186 = arith.mulf %185, %183 : vector<8x128xf32>
    %187 = arith.mulf %177, %147 : vector<8x128xf32>
    %188 = arith.addf %186, %187 : vector<8x128xf32>
    %189 = arith.addi %9, %c3_i32 : i32
    %190 = vector.broadcast %189 : i32 to vector<8x1xi32>
    %191 = arith.cmpi sgt, %8, %190 : vector<8x1xi32>
    %192 = vector.shape_cast %191 : vector<8x1xi1> to vector<8x1xi1>
    %193 = vector.broadcast %192 : vector<8x1xi1> to vector<8x128xi1>
    %194 = arith.select %193, %188, %147 : vector<8x128xi1>, vector<8x128xf32>
    %195 = arith.truncf %194 : vector<8x128xf32> to vector<8x128xbf16>
    %c0_49 = arith.constant 0 : index
    %196 = arith.index_cast %c3_i32 : i32 to index
    %c0_50 = arith.constant 0 : index
    %c0_51 = arith.constant 0 : index
    %197 = vector.load %arg7[%c0_49, %196, %c0_50, %c0_51] : memref<1x8x8x128xbf16, #tpu.memory_space<vmem>>, vector<1x1x8x128xbf16>
    %198 = vector.shape_cast %197 : vector<1x1x8x128xbf16> to vector<8x128xbf16>
    %199 = vector.shape_cast %195 : vector<8x128xbf16> to vector<1x1x8x128xbf16>
    tpu.vector_store %arg7[%c0_49, %196, %c0_50, %c0_51], %199 {strides = array<i32>} : memref<1x8x8x128xbf16, #tpu.memory_space<vmem>>, vector<1x1x8x128xbf16>,
    %c4_i32 = arith.constant 4 : i32
    %c0_52 = arith.constant 0 : index
    %200 = arith.index_cast %c4_i32 : i32 to index
    %c0_53 = arith.constant 0 : index
    %c0_54 = arith.constant 0 : index
    %201 = vector.load %arg2[%c0_52, %200, %c0_53, %c0_54] : memref<1x8x8x384xbf16, #tpu.memory_space<vmem>>, vector<1x1x8x384xbf16>
    %202 = vector.shape_cast %201 : vector<1x1x8x384xbf16> to vector<8x384xbf16>
    %203 = arith.truncf %194 : vector<8x128xf32> to vector<8x128xbf16>
    %cst_55 = arith.constant dense<0.000000e+00> : vector<8x384xf32>
    %204 = tpu.matmul %203, %4, %cst_55 {dimension_numbers = #tpu.dot_dimension_numbers<[1], [0], [0], [1], [0, 0, 1, 1], [], []>} : vector<8x128xbf16>, vector<128x384xbf16>, vector<8x384xf32> -> vector<8x384xf32>
    %205 = vector.broadcast %6 : vector<1x384xf32> to vector<8x384xf32>
    %206 = arith.addf %204, %205 : vector<8x384xf32>
    %207 = vector.extract_strided_slice %202 {offsets = [0, 0], sizes = [8, 128], strides = [1, 1]} : vector<8x384xbf16> to vector<8x128xbf16>
    %208 = vector.extract_strided_slice %206 {offsets = [0, 0], sizes = [8, 128], strides = [1, 1]} : vector<8x384xf32> to vector<8x128xf32>
    %209 = arith.extf %207 : vector<8x128xbf16> to vector<8x128xf32>
    %210 = arith.addf %209, %208 : vector<8x128xf32>
    %211 = arith.negf %210 : vector<8x128xf32>
    %212 = math.exp %211 : vector<8x128xf32>
    %cst_56 = arith.constant 1.000000e+00 : f32
    %213 = vector.broadcast %cst_56 : f32 to vector<8x128xf32>
    %214 = arith.addf %213, %212 : vector<8x128xf32>
    %215 = arith.divf %213, %214 : vector<8x128xf32>
    %216 = vector.extract_strided_slice %202 {offsets = [0, 128], sizes = [8, 128], strides = [1, 1]} : vector<8x384xbf16> to vector<8x128xbf16>
    %217 = vector.extract_strided_slice %206 {offsets = [0, 128], sizes = [8, 128], strides = [1, 1]} : vector<8x384xf32> to vector<8x128xf32>
    %218 = arith.extf %216 : vector<8x128xbf16> to vector<8x128xf32>
    %219 = arith.addf %218, %217 : vector<8x128xf32>
    %220 = arith.negf %219 : vector<8x128xf32>
    %221 = math.exp %220 : vector<8x128xf32>
    %cst_57 = arith.constant 1.000000e+00 : f32
    %222 = vector.broadcast %cst_57 : f32 to vector<8x128xf32>
    %223 = arith.addf %222, %221 : vector<8x128xf32>
    %224 = arith.divf %222, %223 : vector<8x128xf32>
    %225 = vector.extract_strided_slice %202 {offsets = [0, 256], sizes = [8, 128], strides = [1, 1]} : vector<8x384xbf16> to vector<8x128xbf16>
    %226 = vector.extract_strided_slice %206 {offsets = [0, 256], sizes = [8, 128], strides = [1, 1]} : vector<8x384xf32> to vector<8x128xf32>
    %227 = arith.mulf %215, %226 : vector<8x128xf32>
    %228 = arith.extf %225 : vector<8x128xbf16> to vector<8x128xf32>
    %229 = arith.addf %228, %227 : vector<8x128xf32>
    %230 = math.tanh %229 : vector<8x128xf32>
    %cst_58 = arith.constant 1.000000e+00 : f32
    %231 = vector.broadcast %cst_58 : f32 to vector<8x128xf32>
    %232 = arith.subf %231, %224 : vector<8x128xf32>
    %233 = arith.mulf %232, %230 : vector<8x128xf32>
    %234 = arith.mulf %224, %194 : vector<8x128xf32>
    %235 = arith.addf %233, %234 : vector<8x128xf32>
    %236 = arith.addi %9, %c4_i32 : i32
    %237 = vector.broadcast %236 : i32 to vector<8x1xi32>
    %238 = arith.cmpi sgt, %8, %237 : vector<8x1xi32>
    %239 = vector.shape_cast %238 : vector<8x1xi1> to vector<8x1xi1>
    %240 = vector.broadcast %239 : vector<8x1xi1> to vector<8x128xi1>
    %241 = arith.select %240, %235, %194 : vector<8x128xi1>, vector<8x128xf32>
    %242 = arith.truncf %241 : vector<8x128xf32> to vector<8x128xbf16>
    %c0_59 = arith.constant 0 : index
    %243 = arith.index_cast %c4_i32 : i32 to index
    %c0_60 = arith.constant 0 : index
    %c0_61 = arith.constant 0 : index
    %244 = vector.load %arg7[%c0_59, %243, %c0_60, %c0_61] : memref<1x8x8x128xbf16, #tpu.memory_space<vmem>>, vector<1x1x8x128xbf16>
    %245 = vector.shape_cast %244 : vector<1x1x8x128xbf16> to vector<8x128xbf16>
    %246 = vector.shape_cast %242 : vector<8x128xbf16> to vector<1x1x8x128xbf16>
    tpu.vector_store %arg7[%c0_59, %243, %c0_60, %c0_61], %246 {strides = array<i32>} : memref<1x8x8x128xbf16, #tpu.memory_space<vmem>>, vector<1x1x8x128xbf16>,
    %c5_i32 = arith.constant 5 : i32
    %c0_62 = arith.constant 0 : index
    %247 = arith.index_cast %c5_i32 : i32 to index
    %c0_63 = arith.constant 0 : index
    %c0_64 = arith.constant 0 : index
    %248 = vector.load %arg2[%c0_62, %247, %c0_63, %c0_64] : memref<1x8x8x384xbf16, #tpu.memory_space<vmem>>, vector<1x1x8x384xbf16>
    %249 = vector.shape_cast %248 : vector<1x1x8x384xbf16> to vector<8x384xbf16>
    %250 = arith.truncf %241 : vector<8x128xf32> to vector<8x128xbf16>
    %cst_65 = arith.constant dense<0.000000e+00> : vector<8x384xf32>
    %251 = tpu.matmul %250, %4, %cst_65 {dimension_numbers = #tpu.dot_dimension_numbers<[1], [0], [0], [1], [0, 0, 1, 1], [], []>} : vector<8x128xbf16>, vector<128x384xbf16>, vector<8x384xf32> -> vector<8x384xf32>
    %252 = vector.broadcast %6 : vector<1x384xf32> to vector<8x384xf32>
    %253 = arith.addf %251, %252 : vector<8x384xf32>
    %254 = vector.extract_strided_slice %249 {offsets = [0, 0], sizes = [8, 128], strides = [1, 1]} : vector<8x384xbf16> to vector<8x128xbf16>
    %255 = vector.extract_strided_slice %253 {offsets = [0, 0], sizes = [8, 128], strides = [1, 1]} : vector<8x384xf32> to vector<8x128xf32>
    %256 = arith.extf %254 : vector<8x128xbf16> to vector<8x128xf32>
    %257 = arith.addf %256, %255 : vector<8x128xf32>
    %258 = arith.negf %257 : vector<8x128xf32>
    %259 = math.exp %258 : vector<8x128xf32>
    %cst_66 = arith.constant 1.000000e+00 : f32
    %260 = vector.broadcast %cst_66 : f32 to vector<8x128xf32>
    %261 = arith.addf %260, %259 : vector<8x128xf32>
    %262 = arith.divf %260, %261 : vector<8x128xf32>
    %263 = vector.extract_strided_slice %249 {offsets = [0, 128], sizes = [8, 128], strides = [1, 1]} : vector<8x384xbf16> to vector<8x128xbf16>
    %264 = vector.extract_strided_slice %253 {offsets = [0, 128], sizes = [8, 128], strides = [1, 1]} : vector<8x384xf32> to vector<8x128xf32>
    %265 = arith.extf %263 : vector<8x128xbf16> to vector<8x128xf32>
    %266 = arith.addf %265, %264 : vector<8x128xf32>
    %267 = arith.negf %266 : vector<8x128xf32>
    %268 = math.exp %267 : vector<8x128xf32>
    %cst_67 = arith.constant 1.000000e+00 : f32
    %269 = vector.broadcast %cst_67 : f32 to vector<8x128xf32>
    %270 = arith.addf %269, %268 : vector<8x128xf32>
    %271 = arith.divf %269, %270 : vector<8x128xf32>
    %272 = vector.extract_strided_slice %249 {offsets = [0, 256], sizes = [8, 128], strides = [1, 1]} : vector<8x384xbf16> to vector<8x128xbf16>
    %273 = vector.extract_strided_slice %253 {offsets = [0, 256], sizes = [8, 128], strides = [1, 1]} : vector<8x384xf32> to vector<8x128xf32>
    %274 = arith.mulf %262, %273 : vector<8x128xf32>
    %275 = arith.extf %272 : vector<8x128xbf16> to vector<8x128xf32>
    %276 = arith.addf %275, %274 : vector<8x128xf32>
    %277 = math.tanh %276 : vector<8x128xf32>
    %cst_68 = arith.constant 1.000000e+00 : f32
    %278 = vector.broadcast %cst_68 : f32 to vector<8x128xf32>
    %279 = arith.subf %278, %271 : vector<8x128xf32>
    %280 = arith.mulf %279, %277 : vector<8x128xf32>
    %281 = arith.mulf %271, %241 : vector<8x128xf32>
    %282 = arith.addf %280, %281 : vector<8x128xf32>
    %283 = arith.addi %9, %c5_i32 : i32
    %284 = vector.broadcast %283 : i32 to vector<8x1xi32>
    %285 = arith.cmpi sgt, %8, %284 : vector<8x1xi32>
    %286 = vector.shape_cast %285 : vector<8x1xi1> to vector<8x1xi1>
    %287 = vector.broadcast %286 : vector<8x1xi1> to vector<8x128xi1>
    %288 = arith.select %287, %282, %241 : vector<8x128xi1>, vector<8x128xf32>
    %289 = arith.truncf %288 : vector<8x128xf32> to vector<8x128xbf16>
    %c0_69 = arith.constant 0 : index
    %290 = arith.index_cast %c5_i32 : i32 to index
    %c0_70 = arith.constant 0 : index
    %c0_71 = arith.constant 0 : index
    %291 = vector.load %arg7[%c0_69, %290, %c0_70, %c0_71] : memref<1x8x8x128xbf16, #tpu.memory_space<vmem>>, vector<1x1x8x128xbf16>
    %292 = vector.shape_cast %291 : vector<1x1x8x128xbf16> to vector<8x128xbf16>
    %293 = vector.shape_cast %289 : vector<8x128xbf16> to vector<1x1x8x128xbf16>
    tpu.vector_store %arg7[%c0_69, %290, %c0_70, %c0_71], %293 {strides = array<i32>} : memref<1x8x8x128xbf16, #tpu.memory_space<vmem>>, vector<1x1x8x128xbf16>,
    %c6_i32 = arith.constant 6 : i32
    %c0_72 = arith.constant 0 : index
    %294 = arith.index_cast %c6_i32 : i32 to index
    %c0_73 = arith.constant 0 : index
    %c0_74 = arith.constant 0 : index
    %295 = vector.load %arg2[%c0_72, %294, %c0_73, %c0_74] : memref<1x8x8x384xbf16, #tpu.memory_space<vmem>>, vector<1x1x8x384xbf16>
    %296 = vector.shape_cast %295 : vector<1x1x8x384xbf16> to vector<8x384xbf16>
    %297 = arith.truncf %288 : vector<8x128xf32> to vector<8x128xbf16>
    %cst_75 = arith.constant dense<0.000000e+00> : vector<8x384xf32>
    %298 = tpu.matmul %297, %4, %cst_75 {dimension_numbers = #tpu.dot_dimension_numbers<[1], [0], [0], [1], [0, 0, 1, 1], [], []>} : vector<8x128xbf16>, vector<128x384xbf16>, vector<8x384xf32> -> vector<8x384xf32>
    %299 = vector.broadcast %6 : vector<1x384xf32> to vector<8x384xf32>
    %300 = arith.addf %298, %299 : vector<8x384xf32>
    %301 = vector.extract_strided_slice %296 {offsets = [0, 0], sizes = [8, 128], strides = [1, 1]} : vector<8x384xbf16> to vector<8x128xbf16>
    %302 = vector.extract_strided_slice %300 {offsets = [0, 0], sizes = [8, 128], strides = [1, 1]} : vector<8x384xf32> to vector<8x128xf32>
    %303 = arith.extf %301 : vector<8x128xbf16> to vector<8x128xf32>
    %304 = arith.addf %303, %302 : vector<8x128xf32>
    %305 = arith.negf %304 : vector<8x128xf32>
    %306 = math.exp %305 : vector<8x128xf32>
    %cst_76 = arith.constant 1.000000e+00 : f32
    %307 = vector.broadcast %cst_76 : f32 to vector<8x128xf32>
    %308 = arith.addf %307, %306 : vector<8x128xf32>
    %309 = arith.divf %307, %308 : vector<8x128xf32>
    %310 = vector.extract_strided_slice %296 {offsets = [0, 128], sizes = [8, 128], strides = [1, 1]} : vector<8x384xbf16> to vector<8x128xbf16>
    %311 = vector.extract_strided_slice %300 {offsets = [0, 128], sizes = [8, 128], strides = [1, 1]} : vector<8x384xf32> to vector<8x128xf32>
    %312 = arith.extf %310 : vector<8x128xbf16> to vector<8x128xf32>
    %313 = arith.addf %312, %311 : vector<8x128xf32>
    %314 = arith.negf %313 : vector<8x128xf32>
    %315 = math.exp %314 : vector<8x128xf32>
    %cst_77 = arith.constant 1.000000e+00 : f32
    %316 = vector.broadcast %cst_77 : f32 to vector<8x128xf32>
    %317 = arith.addf %316, %315 : vector<8x128xf32>
    %318 = arith.divf %316, %317 : vector<8x128xf32>
    %319 = vector.extract_strided_slice %296 {offsets = [0, 256], sizes = [8, 128], strides = [1, 1]} : vector<8x384xbf16> to vector<8x128xbf16>
    %320 = vector.extract_strided_slice %300 {offsets = [0, 256], sizes = [8, 128], strides = [1, 1]} : vector<8x384xf32> to vector<8x128xf32>
    %321 = arith.mulf %309, %320 : vector<8x128xf32>
    %322 = arith.extf %319 : vector<8x128xbf16> to vector<8x128xf32>
    %323 = arith.addf %322, %321 : vector<8x128xf32>
    %324 = math.tanh %323 : vector<8x128xf32>
    %cst_78 = arith.constant 1.000000e+00 : f32
    %325 = vector.broadcast %cst_78 : f32 to vector<8x128xf32>
    %326 = arith.subf %325, %318 : vector<8x128xf32>
    %327 = arith.mulf %326, %324 : vector<8x128xf32>
    %328 = arith.mulf %318, %288 : vector<8x128xf32>
    %329 = arith.addf %327, %328 : vector<8x128xf32>
    %330 = arith.addi %9, %c6_i32 : i32
    %331 = vector.broadcast %330 : i32 to vector<8x1xi32>
    %332 = arith.cmpi sgt, %8, %331 : vector<8x1xi32>
    %333 = vector.shape_cast %332 : vector<8x1xi1> to vector<8x1xi1>
    %334 = vector.broadcast %333 : vector<8x1xi1> to vector<8x128xi1>
    %335 = arith.select %334, %329, %288 : vector<8x128xi1>, vector<8x128xf32>
    %336 = arith.truncf %335 : vector<8x128xf32> to vector<8x128xbf16>
    %c0_79 = arith.constant 0 : index
    %337 = arith.index_cast %c6_i32 : i32 to index
    %c0_80 = arith.constant 0 : index
    %c0_81 = arith.constant 0 : index
    %338 = vector.load %arg7[%c0_79, %337, %c0_80, %c0_81] : memref<1x8x8x128xbf16, #tpu.memory_space<vmem>>, vector<1x1x8x128xbf16>
    %339 = vector.shape_cast %338 : vector<1x1x8x128xbf16> to vector<8x128xbf16>
    %340 = vector.shape_cast %336 : vector<8x128xbf16> to vector<1x1x8x128xbf16>
    tpu.vector_store %arg7[%c0_79, %337, %c0_80, %c0_81], %340 {strides = array<i32>} : memref<1x8x8x128xbf16, #tpu.memory_space<vmem>>, vector<1x1x8x128xbf16>,
    %c7_i32 = arith.constant 7 : i32
    %c0_82 = arith.constant 0 : index
    %341 = arith.index_cast %c7_i32 : i32 to index
    %c0_83 = arith.constant 0 : index
    %c0_84 = arith.constant 0 : index
    %342 = vector.load %arg2[%c0_82, %341, %c0_83, %c0_84] : memref<1x8x8x384xbf16, #tpu.memory_space<vmem>>, vector<1x1x8x384xbf16>
    %343 = vector.shape_cast %342 : vector<1x1x8x384xbf16> to vector<8x384xbf16>
    %344 = arith.truncf %335 : vector<8x128xf32> to vector<8x128xbf16>
    %cst_85 = arith.constant dense<0.000000e+00> : vector<8x384xf32>
    %345 = tpu.matmul %344, %4, %cst_85 {dimension_numbers = #tpu.dot_dimension_numbers<[1], [0], [0], [1], [0, 0, 1, 1], [], []>} : vector<8x128xbf16>, vector<128x384xbf16>, vector<8x384xf32> -> vector<8x384xf32>
    %346 = vector.broadcast %6 : vector<1x384xf32> to vector<8x384xf32>
    %347 = arith.addf %345, %346 : vector<8x384xf32>
    %348 = vector.extract_strided_slice %343 {offsets = [0, 0], sizes = [8, 128], strides = [1, 1]} : vector<8x384xbf16> to vector<8x128xbf16>
    %349 = vector.extract_strided_slice %347 {offsets = [0, 0], sizes = [8, 128], strides = [1, 1]} : vector<8x384xf32> to vector<8x128xf32>
    %350 = arith.extf %348 : vector<8x128xbf16> to vector<8x128xf32>
    %351 = arith.addf %350, %349 : vector<8x128xf32>
    %352 = arith.negf %351 : vector<8x128xf32>
    %353 = math.exp %352 : vector<8x128xf32>
    %cst_86 = arith.constant 1.000000e+00 : f32
    %354 = vector.broadcast %cst_86 : f32 to vector<8x128xf32>
    %355 = arith.addf %354, %353 : vector<8x128xf32>
    %356 = arith.divf %354, %355 : vector<8x128xf32>
    %357 = vector.extract_strided_slice %343 {offsets = [0, 128], sizes = [8, 128], strides = [1, 1]} : vector<8x384xbf16> to vector<8x128xbf16>
    %358 = vector.extract_strided_slice %347 {offsets = [0, 128], sizes = [8, 128], strides = [1, 1]} : vector<8x384xf32> to vector<8x128xf32>
    %359 = arith.extf %357 : vector<8x128xbf16> to vector<8x128xf32>
    %360 = arith.addf %359, %358 : vector<8x128xf32>
    %361 = arith.negf %360 : vector<8x128xf32>
    %362 = math.exp %361 : vector<8x128xf32>
    %cst_87 = arith.constant 1.000000e+00 : f32
    %363 = vector.broadcast %cst_87 : f32 to vector<8x128xf32>
    %364 = arith.addf %363, %362 : vector<8x128xf32>
    %365 = arith.divf %363, %364 : vector<8x128xf32>
    %366 = vector.extract_strided_slice %343 {offsets = [0, 256], sizes = [8, 128], strides = [1, 1]} : vector<8x384xbf16> to vector<8x128xbf16>
    %367 = vector.extract_strided_slice %347 {offsets = [0, 256], sizes = [8, 128], strides = [1, 1]} : vector<8x384xf32> to vector<8x128xf32>
    %368 = arith.mulf %356, %367 : vector<8x128xf32>
    %369 = arith.extf %366 : vector<8x128xbf16> to vector<8x128xf32>
    %370 = arith.addf %369, %368 : vector<8x128xf32>
    %371 = math.tanh %370 : vector<8x128xf32>
    %cst_88 = arith.constant 1.000000e+00 : f32
    %372 = vector.broadcast %cst_88 : f32 to vector<8x128xf32>
    %373 = arith.subf %372, %365 : vector<8x128xf32>
    %374 = arith.mulf %373, %371 : vector<8x128xf32>
    %375 = arith.mulf %365, %335 : vector<8x128xf32>
    %376 = arith.addf %374, %375 : vector<8x128xf32>
    %377 = arith.addi %9, %c7_i32 : i32
    %378 = vector.broadcast %377 : i32 to vector<8x1xi32>
    %379 = arith.cmpi sgt, %8, %378 : vector<8x1xi32>
    %380 = vector.shape_cast %379 : vector<8x1xi1> to vector<8x1xi1>
    %381 = vector.broadcast %380 : vector<8x1xi1> to vector<8x128xi1>
    %382 = arith.select %381, %376, %335 : vector<8x128xi1>, vector<8x128xf32>
    %383 = arith.truncf %382 : vector<8x128xf32> to vector<8x128xbf16>
    %c0_89 = arith.constant 0 : index
    %384 = arith.index_cast %c7_i32 : i32 to index
    %c0_90 = arith.constant 0 : index
    %c0_91 = arith.constant 0 : index
    %385 = vector.load %arg7[%c0_89, %384, %c0_90, %c0_91] : memref<1x8x8x128xbf16, #tpu.memory_space<vmem>>, vector<1x1x8x128xbf16>
    %386 = vector.shape_cast %385 : vector<1x1x8x128xbf16> to vector<8x128xbf16>
    %387 = vector.shape_cast %383 : vector<8x128xbf16> to vector<1x1x8x128xbf16>
    tpu.vector_store %arg7[%c0_89, %384, %c0_90, %c0_91], %387 {strides = array<i32>} : memref<1x8x8x128xbf16, #tpu.memory_space<vmem>>, vector<1x1x8x128xbf16>,
    %c8_i32_92 = arith.constant 8 : i32
    %c0_93 = arith.constant 0 : index
    %c0_94 = arith.constant 0 : index
    %c0_95 = arith.constant 0 : index
    %388 = vector.load %arg8[%c0_93, %c0_94, %c0_95] : memref<1x8x128xf32, #tpu.memory_space<vmem>>, vector<1x8x128xf32>
    %389 = vector.shape_cast %388 : vector<1x8x128xf32> to vector<8x128xf32>
    %390 = vector.shape_cast %382 : vector<8x128xf32> to vector<1x8x128xf32>
    tpu.vector_store %arg8[%c0_93, %c0_94, %c0_95], %390 {strides = array<i32>} : memref<1x8x128xf32, #tpu.memory_space<vmem>>, vector<1x8x128xf32>,
    return
  }
  func.func @transform_0(%arg0: i32, %arg1: i32) -> (i32, i32, i32, i32) {
    %c0_i32 = arith.constant 0 : i32
    %c0_i32_0 = arith.constant 0 : i32
    %c0_i32_1 = arith.constant 0 : i32
    return %arg0, %arg1, %c0_i32, %c0_i32_0 : i32, i32, i32, i32
  }
  func.func @transform_1(%arg0: i32, %arg1: i32) -> (i32, i32, i32) {
    %c0_i32 = arith.constant 0 : i32
    %c0_i32_0 = arith.constant 0 : i32
    %c0_i32_1 = arith.constant 0 : i32
    return %arg0, %c0_i32, %c0_i32_0 : i32, i32, i32
  }
  func.func @transform_2(%arg0: i32, %arg1: i32) -> (i32, i32, i32) {
    %c0_i32 = arith.constant 0 : i32
    %c0_i32_0 = arith.constant 0 : i32
    %c0_i32_1 = arith.constant 0 : i32
    return %arg0, %c0_i32, %c0_i32_0 : i32, i32, i32
  }
  func.func @transform_3(%arg0: i32, %arg1: i32) -> (i32, i32, i32) {
    %c0_i32 = arith.constant 0 : i32
    %c0_i32_0 = arith.constant 0 : i32
    %c0_i32_1 = arith.constant 0 : i32
    return %arg0, %c0_i32, %c0_i32_0 : i32, i32, i32
  }
  func.func @transform_4(%arg0: i32, %arg1: i32) -> (i32, i32, i32) {
    %c0_i32 = arith.constant 0 : i32
    %c0_i32_0 = arith.constant 0 : i32
    %c0_i32_1 = arith.constant 0 : i32
    return %arg0, %c0_i32, %c0_i32_0 : i32, i32, i32
  }
  func.func @transform_5(%arg0: i32, %arg1: i32) -> (i32, i32, i32, i32) {
    %c0_i32 = arith.constant 0 : i32
    %c0_i32_0 = arith.constant 0 : i32
    %c0_i32_1 = arith.constant 0 : i32
    return %arg0, %arg1, %c0_i32, %c0_i32_0 : i32, i32, i32, i32
  }
}

module attributes {stable_mosaic.version = 11 : i64} {
  func.func @_linear_lse_kernel(%arg0: i32, %arg1: i32, %arg2: i32, %arg3: memref<16x128xbf16, #tpu.memory_space<vmem>>, %arg4: memref<128x128xbf16, #tpu.memory_space<vmem>>, %arg5: memref<1x128xf32, #tpu.memory_space<vmem>>, %arg6: memref<16x128xf32, #tpu.memory_space<vmem>>, %arg7: memref<16x1xf32, #tpu.memory_space<vmem>>, %arg8: memref<16x128xf32, #tpu.memory_space<vmem>>, %arg9: memref<16x1xf32, #tpu.memory_space<vmem>>, %arg10: memref<16x1xf32, #tpu.memory_space<vmem>>) attributes {dimension_semantics = [#tpu.dimension_semantics<parallel>, #tpu.dimension_semantics<arbitrary>, #tpu.dimension_semantics<arbitrary>], iteration_bounds = array<i64: 1, 1, 1>, scalar_prefetch = 0 : i64, scratch_operands = 3 : i64, tpu.core_type = #tpu.core_type<tc>, window_params = [{transform_indices = @transform_0, window_bounds = array<i64: 16, 128>}, {transform_indices = @transform_1, window_bounds = array<i64: 128, 128>}, {transform_indices = @transform_2, window_bounds = array<i64: 1, 128>}, {transform_indices = @transform_3, window_bounds = array<i64: 16, 128>}, {transform_indices = @transform_4, window_bounds = array<i64: 16, 1>}]} {
    %c0_i32 = arith.constant 0 : i32
    %0 = arith.cmpi eq, %arg2, %c0_i32 : i32
    %1 = arith.extui %0 : i1 to i32
    %c0_i32_0 = arith.constant 0 : i32
    %2 = arith.cmpi ne, %1, %c0_i32_0 : i32
    scf.if %2 {
      %cst_13 = arith.constant 0.000000e+00 : f32
      %17 = vector.broadcast %cst_13 : f32 to vector<16x128xf32>
      %c0_14 = arith.constant 0 : index
      %c0_15 = arith.constant 0 : index
      %18 = vector.load %arg8[%c0_14, %c0_15] : memref<16x128xf32, #tpu.memory_space<vmem>>, vector<16x128xf32>
      tpu.vector_store %arg8[%c0_14, %c0_15], %17 {strides = array<i32>} : memref<16x128xf32, #tpu.memory_space<vmem>>, vector<16x128xf32>,
    } else {
    }
    %c0 = arith.constant 0 : index
    %c0_1 = arith.constant 0 : index
    %3 = vector.load %arg8[%c0, %c0_1] : memref<16x128xf32, #tpu.memory_space<vmem>>, vector<16x128xf32>
    %c0_2 = arith.constant 0 : index
    %c0_3 = arith.constant 0 : index
    %4 = vector.load %arg3[%c0_2, %c0_3] : memref<16x128xbf16, #tpu.memory_space<vmem>>, vector<16x128xbf16>
    %c0_4 = arith.constant 0 : index
    %c0_5 = arith.constant 0 : index
    %5 = vector.load %arg4[%c0_4, %c0_5] : memref<128x128xbf16, #tpu.memory_space<vmem>>, vector<128x128xbf16>
    %cst = arith.constant dense<0.000000e+00> : vector<16x128xf32>
    %6 = tpu.matmul %4, %5, %cst {dimension_numbers = #tpu.dot_dimension_numbers<[1], [0], [0], [1], [0, 0, 1, 1], [], []>} : vector<16x128xbf16>, vector<128x128xbf16>, vector<16x128xf32> -> vector<16x128xf32>
    %7 = arith.addf %3, %6 : vector<16x128xf32>
    %c0_6 = arith.constant 0 : index
    %c0_7 = arith.constant 0 : index
    %8 = vector.load %arg8[%c0_6, %c0_7] : memref<16x128xf32, #tpu.memory_space<vmem>>, vector<16x128xf32>
    tpu.vector_store %arg8[%c0_6, %c0_7], %7 {strides = array<i32>} : memref<16x128xf32, #tpu.memory_space<vmem>>, vector<16x128xf32>,
    %c0_i32_8 = arith.constant 0 : i32
    %9 = arith.cmpi eq, %arg2, %c0_i32_8 : i32
    %10 = arith.extui %9 : i1 to i32
    %c0_i32_9 = arith.constant 0 : i32
    %11 = arith.cmpi ne, %10, %c0_i32_9 : i32
    scf.if %11 {
      %c0_13 = arith.constant 0 : index
      %c0_14 = arith.constant 0 : index
      %17 = vector.load %arg8[%c0_13, %c0_14] : memref<16x128xf32, #tpu.memory_space<vmem>>, vector<16x128xf32>
      %c0_15 = arith.constant 0 : index
      %c0_16 = arith.constant 0 : index
      %18 = vector.load %arg5[%c0_15, %c0_16] : memref<1x128xf32, #tpu.memory_space<vmem>>, vector<1x128xf32>
      %19 = vector.broadcast %18 : vector<1x128xf32> to vector<16x128xf32>
      %20 = arith.addf %17, %19 : vector<16x128xf32>
      %c0_17 = arith.constant 0 : index
      %c0_18 = arith.constant 0 : index
      %21 = vector.load %arg6[%c0_17, %c0_18] : memref<16x128xf32, #tpu.memory_space<vmem>>, vector<16x128xf32>
      tpu.vector_store %arg6[%c0_17, %c0_18], %20 {strides = array<i32>} : memref<16x128xf32, #tpu.memory_space<vmem>>, vector<16x128xf32>,
      %c128_i32 = arith.constant 128 : i32
      %22 = arith.muli %arg1, %c128_i32 : i32
      %23 = tpu.iota {dimensions = array<i32: 1>} : vector<16x128xi32>
      %24 = vector.broadcast %22 : i32 to vector<16x128xi32>
      %25 = arith.addi %24, %23 : vector<16x128xi32>
      %c32_i32 = arith.constant 32 : i32
      %26 = vector.broadcast %c32_i32 : i32 to vector<16x128xi32>
      %27 = arith.cmpi slt, %25, %26 : vector<16x128xi32>
      %cst_19 = arith.constant 0xFF800000 : f32
      %28 = vector.broadcast %cst_19 : f32 to vector<16x128xf32>
      %29 = arith.select %27, %20, %28 : vector<16x128xi1>, vector<16x128xf32>
      %cst_20 = arith.constant dense<0xFF800000> : vector<16xf32>
      %30 = vector.multi_reduction <maximumf>, %29, %cst_20 [1] : vector<16x128xf32> to vector<16xf32>
      %31 = vector.shape_cast %30 : vector<16xf32> to vector<16x1xf32>
      %cst_21 = arith.constant -1.000000e+30 : f32
      %32 = vector.broadcast %cst_21 : f32 to vector<16x1xf32>
      %33 = arith.maximumf %31, %32 : vector<16x1xf32>
      %34 = vector.broadcast %33 : vector<16x1xf32> to vector<16x128xf32>
      %35 = arith.subf %20, %34 : vector<16x128xf32>
      %36 = math.exp %35 : vector<16x128xf32>
      %cst_22 = arith.constant 0.000000e+00 : f32
      %37 = vector.broadcast %cst_22 : f32 to vector<16x128xf32>
      %38 = arith.select %27, %36, %37 : vector<16x128xi1>, vector<16x128xf32>
      %cst_23 = arith.constant dense<0.000000e+00> : vector<16xf32>
      %39 = vector.multi_reduction <add>, %38, %cst_23 [1] : vector<16x128xf32> to vector<16xf32>
      %40 = vector.shape_cast %39 : vector<16xf32> to vector<16x1xf32>
      %c0_i32_24 = arith.constant 0 : i32
      %41 = arith.cmpi eq, %arg1, %c0_i32_24 : i32
      %cst_25 = arith.constant -1.000000e+30 : f32
      %42 = vector.broadcast %cst_25 : f32 to vector<16x1xf32>
      %c0_26 = arith.constant 0 : index
      %c0_27 = arith.constant 0 : index
      %43 = vector.load %arg9[%c0_26, %c0_27] : memref<16x1xf32, #tpu.memory_space<vmem>>, vector<16x1xf32>
      %44 = arith.select %41, %42, %43 : vector<16x1xf32>
      %cst_28 = arith.constant 0.000000e+00 : f32
      %45 = vector.broadcast %cst_28 : f32 to vector<16x1xf32>
      %c0_29 = arith.constant 0 : index
      %c0_30 = arith.constant 0 : index
      %46 = vector.load %arg10[%c0_29, %c0_30] : memref<16x1xf32, #tpu.memory_space<vmem>>, vector<16x1xf32>
      %47 = arith.select %41, %45, %46 : vector<16x1xf32>
      %48 = arith.maximumf %44, %33 : vector<16x1xf32>
      %49 = arith.subf %44, %48 : vector<16x1xf32>
      %50 = math.exp %49 : vector<16x1xf32>
      %51 = arith.mulf %47, %50 : vector<16x1xf32>
      %52 = arith.subf %33, %48 : vector<16x1xf32>
      %53 = math.exp %52 : vector<16x1xf32>
      %54 = arith.mulf %40, %53 : vector<16x1xf32>
      %55 = arith.addf %51, %54 : vector<16x1xf32>
      %c0_31 = arith.constant 0 : index
      %c0_32 = arith.constant 0 : index
      %56 = vector.load %arg10[%c0_31, %c0_32] : memref<16x1xf32, #tpu.memory_space<vmem>>, vector<16x1xf32>
      tpu.vector_store %arg10[%c0_31, %c0_32], %55 {strides = array<i32>} : memref<16x1xf32, #tpu.memory_space<vmem>>, vector<16x1xf32>,
      %c0_33 = arith.constant 0 : index
      %c0_34 = arith.constant 0 : index
      %57 = vector.load %arg9[%c0_33, %c0_34] : memref<16x1xf32, #tpu.memory_space<vmem>>, vector<16x1xf32>
      tpu.vector_store %arg9[%c0_33, %c0_34], %48 {strides = array<i32>} : memref<16x1xf32, #tpu.memory_space<vmem>>, vector<16x1xf32>,
    } else {
    }
    %c0_i32_10 = arith.constant 0 : i32
    %12 = arith.cmpi eq, %arg2, %c0_i32_10 : i32
    %c0_i32_11 = arith.constant 0 : i32
    %13 = arith.cmpi eq, %arg1, %c0_i32_11 : i32
    %14 = arith.andi %12, %13 : i1
    %15 = arith.extui %14 : i1 to i32
    %c0_i32_12 = arith.constant 0 : i32
    %16 = arith.cmpi ne, %15, %c0_i32_12 : i32
    scf.if %16 {
      %c0_13 = arith.constant 0 : index
      %c0_14 = arith.constant 0 : index
      %17 = vector.load %arg9[%c0_13, %c0_14] : memref<16x1xf32, #tpu.memory_space<vmem>>, vector<16x1xf32>
      %c0_15 = arith.constant 0 : index
      %c0_16 = arith.constant 0 : index
      %18 = vector.load %arg10[%c0_15, %c0_16] : memref<16x1xf32, #tpu.memory_space<vmem>>, vector<16x1xf32>
      %19 = math.log %18 : vector<16x1xf32>
      %20 = arith.addf %17, %19 : vector<16x1xf32>
      %c0_17 = arith.constant 0 : index
      %c0_18 = arith.constant 0 : index
      %21 = vector.load %arg7[%c0_17, %c0_18] : memref<16x1xf32, #tpu.memory_space<vmem>>, vector<16x1xf32>
      tpu.vector_store %arg7[%c0_17, %c0_18], %20 {strides = array<i32>} : memref<16x1xf32, #tpu.memory_space<vmem>>, vector<16x1xf32>,
    } else {
    }
    return
  }
  func.func @transform_0(%arg0: i32, %arg1: i32, %arg2: i32) -> (i32, i32) {
    %c0_i32 = arith.constant 0 : i32
    return %arg0, %arg2 : i32, i32
  }
  func.func @transform_1(%arg0: i32, %arg1: i32, %arg2: i32) -> (i32, i32) {
    %c0_i32 = arith.constant 0 : i32
    return %arg2, %arg1 : i32, i32
  }
  func.func @transform_2(%arg0: i32, %arg1: i32, %arg2: i32) -> (i32, i32) {
    %c0_i32 = arith.constant 0 : i32
    %c0_i32_0 = arith.constant 0 : i32
    return %c0_i32, %arg1 : i32, i32
  }
  func.func @transform_3(%arg0: i32, %arg1: i32, %arg2: i32) -> (i32, i32) {
    %c0_i32 = arith.constant 0 : i32
    return %arg0, %arg1 : i32, i32
  }
  func.func @transform_4(%arg0: i32, %arg1: i32, %arg2: i32) -> (i32, i32) {
    %c0_i32 = arith.constant 0 : i32
    %c0_i32_0 = arith.constant 0 : i32
    return %arg0, %c0_i32 : i32, i32
  }
}

module attributes {stable_mosaic.version = 11 : i64} {
  func.func @_sub_lse_kernel(%arg0: i32, %arg1: i32, %arg2: memref<16x128xf32, #tpu.memory_space<vmem>>, %arg3: memref<16x1xf32, #tpu.memory_space<vmem>>, %arg4: memref<16x128xf32, #tpu.memory_space<vmem>>) attributes {dimension_semantics = [#tpu.dimension_semantics<parallel>, #tpu.dimension_semantics<parallel>], iteration_bounds = array<i64: 1, 1>, scalar_prefetch = 0 : i64, scratch_operands = 0 : i64, tpu.core_type = #tpu.core_type<tc>, window_params = [{transform_indices = @transform_0, window_bounds = array<i64: 16, 128>}, {transform_indices = @transform_1, window_bounds = array<i64: 16, 1>}, {transform_indices = @transform_2, window_bounds = array<i64: 16, 128>}]} {
    %c0 = arith.constant 0 : index
    %c0_0 = arith.constant 0 : index
    %0 = vector.load %arg2[%c0, %c0_0] : memref<16x128xf32, #tpu.memory_space<vmem>>, vector<16x128xf32>
    %c0_1 = arith.constant 0 : index
    %c0_2 = arith.constant 0 : index
    %1 = vector.load %arg3[%c0_1, %c0_2] : memref<16x1xf32, #tpu.memory_space<vmem>>, vector<16x1xf32>
    %2 = vector.broadcast %1 : vector<16x1xf32> to vector<16x128xf32>
    %3 = arith.subf %0, %2 : vector<16x128xf32>
    %c0_3 = arith.constant 0 : index
    %c0_4 = arith.constant 0 : index
    %4 = vector.load %arg4[%c0_3, %c0_4] : memref<16x128xf32, #tpu.memory_space<vmem>>, vector<16x128xf32>
    tpu.vector_store %arg4[%c0_3, %c0_4], %3 {strides = array<i32>} : memref<16x128xf32, #tpu.memory_space<vmem>>, vector<16x128xf32>,
    return
  }
  func.func @transform_0(%arg0: i32, %arg1: i32) -> (i32, i32) {
    %c0_i32 = arith.constant 0 : i32
    return %arg0, %arg1 : i32, i32
  }
  func.func @transform_1(%arg0: i32, %arg1: i32) -> (i32, i32) {
    %c0_i32 = arith.constant 0 : i32
    %c0_i32_0 = arith.constant 0 : i32
    return %arg0, %c0_i32 : i32, i32
  }
  func.func @transform_2(%arg0: i32, %arg1: i32) -> (i32, i32) {
    %c0_i32 = arith.constant 0 : i32
    return %arg0, %arg1 : i32, i32
  }
}

</mosaic_0001>

<llo_original>
// kernel: diallv_forward.11
$region0: #{diallv_forward.11}
  #allocation0 [shape = 'u32[]', space=smem, size = 0x4, offset = 0x4, fixed_abs, tag = 'smem constant byte address 0x4 - core index']
  #allocation1 [shape = 'u32[144,128]{1,0:T(1,128)}', space=vmem, size = 0x12000, scoped, tag = 'internal scratch']
  #allocation2 [shape = 'f32[16,256]{1,0:T(8,128)}', space=vmem, size = 0x4000, scoped, tag = 'scratch operand']
  %s0 = inlined_call_operand.vmem [shape: bf16[16,128], index: 0, kind: input, shape index: {}]
  %s1 = inlined_call_operand.hbm [shape: bf16[128,768], index: 1, kind: input, shape index: {}]
  %s2 = inlined_call_operand.vmem [shape: f32[1,768], index: 2, kind: input, shape index: {}]
  %s3 = inlined_call_operand.vmem [shape: bf16[16,768], index: 3, kind: output, shape index: {}]
  %s4 = sld [smem:[#allocation0]]
  $region91: #{diallv_forward.11} parent=0
    _
  %s6 = ssub.s32 1, %s4
  %s7 = scalar_select 0, %s6, %s4
  $region1: #{diallv_forward.11} parent=0
    #allocation3 [shape = 'u8[131072]{0}', space=vmem, size = 0x20000, scoped, tag = 'input window, operand 1']
    #allocation4 [shape = 's32[2]{0}', space=sflag, size = 0x8, scoped, tag = 'scoped memory for diallv_forward.11']
    #allocation5 [shape = 'u8[16384]{0}', space=vmem, size = 0x4000, scoped, tag = 'output window, operand 0']
    %8 = vsyncpa [#allocation4], 0
    %s9 = scalar_lea.sflag [#allocation4], 1
    %10 = vsyncpa %s9, 0
    loop: start=0, step=1, limit=5
    $region2: #{diallv_forward.11} parent=1 // loop_pre_header
      _
    $region3: #{diallv_forward.11} parent=1 // loop_header
      %s12 = sphi 0, %s16
      %p13 = scmp.ge.s32.totalorder %s12, 5
      %s19 = sphi 0, %s38
      %s20 = sphi 0, %s34
      %s21 = sphi 0, %s30
      %s22 = sphi 0, %s19
      %s23 = sphi 0, %s20
      %s24 = sphi 0, %s21
      %s25 = sphi 0, %s22
      %s26 = sphi 0, %s23
      %s27 = sphi 0, %s24
      %s43 = sphi 0, %s45
      %s46 = sphi 0, %s43
      %s47 = sphi 0, %s46
      %s63 = sphi 0, %s47
      %s71 = sphi 0, %s73
      %s74 = sphi 0, %s71
      %s75 = sphi 0, %s74
      %s91 = sphi 0, %s75
      %s97 = sphi 0, %s99
      %s100 = sphi 0, %s97
      %s101 = sphi 0, %s100
      %s117 = sphi 0, %s101
      %s125 = sphi 0, %s127
      %s128 = sphi 0, %s125
      %s129 = sphi 0, %s128
      %s145 = sphi 0, %s129
    $region4: #{diallv_forward.11} parent=1 // loop_header_branch
      %15 = sbr.rel (%p13) target = $region8
    $region5: #{diallv_forward.11} parent=1 // loop_body
      %s17 = ssub.s32 %s12, 1
      %s18 = ssub.s32 %s12, 2
      %s28 = sadd.s32 1, %s21
      %p29 = scmp.ge.s32.totalorder %s28, 1
      %s30 = scalar_select %p29, 0, %s28
      %s31 = sadd.s32 1, %s20
      %s32 = scalar_select %p29, %s31, %s20
      %p33 = scmp.ge.s32.totalorder %s32, 3
      %s34 = scalar_select %p33, 0, %s32
      %s35 = sadd.s32 1, %s19
      %s36 = scalar_select %p33, %s35, %s19
      %p37 = scmp.ge.s32.totalorder %s36, 1
      %s38 = scalar_select %p37, 0, %s36
      %s39 = ssub.s32 %s19, %s38
      %s40 = ssub.s32 %s21, %s30
      %s41 = sor.u32 %s39, %s40
      %p42 = scmp.eq.s32.totalorder %s41, 0
      %s44 = sadd.s32 %s43, 1
      %s45 = scalar_select %p42, %s43, %s44
      %p48 = pneg %p42
      %p49 = scmp.eq.s32.totalorder %s12, 2
      %p50 = por %p48, %p49
      %p51 = scmp.ne.s32.totalorder %s43, %s46
      %p52 = scmp.eq.s32.totalorder %s12, 0
      %p53 = por %p51, %p52
      %p54 = scmp.ne.s32.totalorder %s43, %s46
      %p55 = scmp.eq.s32.totalorder %s17, 2
      %p56 = por %p54, %p55
      %p57 = scmp.ne.s32.totalorder %s46, %s47
      %p58 = scmp.eq.s32.totalorder %s17, 0
      %p59 = por %p57, %p58
      %p60 = scmp.ne.s32.totalorder %s46, %s47
      %p61 = scmp.eq.s32.totalorder %s18, 2
      %p62 = por %p60, %p61
      %p64 = scmp.ne.s32.totalorder %s47, %s63
      %p65 = scmp.eq.s32.totalorder %s18, 0
      %p66 = por %p64, %p65
      %s67 = ssub.s32 %s21, %s30
      %s68 = ssub.s32 %s20, %s34
      %s69 = sor.u32 %s67, %s68
      %p70 = scmp.eq.s32.totalorder %s69, 0
      %s72 = sadd.s32 %s71, 1
      %s73 = scalar_select %p70, %s71, %s72
      %p76 = pneg %p70
      %p77 = scmp.eq.s32.totalorder %s12, 2
      %p78 = por %p76, %p77
      %p79 = scmp.ne.s32.totalorder %s71, %s74
      %p80 = scmp.eq.s32.totalorder %s12, 0
      %p81 = por %p79, %p80
      %p82 = scmp.ne.s32.totalorder %s71, %s74
      %p83 = scmp.eq.s32.totalorder %s17, 2
      %p84 = por %p82, %p83
      %p85 = scmp.ne.s32.totalorder %s74, %s75
      %p86 = scmp.eq.s32.totalorder %s17, 0
      %p87 = por %p85, %p86
      %p88 = scmp.ne.s32.totalorder %s74, %s75
      %p89 = scmp.eq.s32.totalorder %s18, 2
      %p90 = por %p88, %p89
      %p92 = scmp.ne.s32.totalorder %s75, %s91
      %p93 = scmp.eq.s32.totalorder %s18, 0
      %p94 = por %p92, %p93
      %s95 = ssub.s32 %s20, %s34
      %p96 = scmp.eq.s32.totalorder %s95, 0
      %s98 = sadd.s32 %s97, 1
      %s99 = scalar_select %p96, %s97, %s98
      %p102 = pneg %p96
      %p103 = scmp.eq.s32.totalorder %s12, 2
      %p104 = por %p102, %p103
      %p105 = scmp.ne.s32.totalorder %s97, %s100
      %p106 = scmp.eq.s32.totalorder %s12, 0
      %p107 = por %p105, %p106
      %p108 = scmp.ne.s32.totalorder %s97, %s100
      %p109 = scmp.eq.s32.totalorder %s17, 2
      %p110 = por %p108, %p109
      %p111 = scmp.ne.s32.totalorder %s100, %s101
      %p112 = scmp.eq.s32.totalorder %s17, 0
      %p113 = por %p111, %p112
      %p114 = scmp.ne.s32.totalorder %s100, %s101
      %p115 = scmp.eq.s32.totalorder %s18, 2
      %p116 = por %p114, %p115
      %p118 = scmp.ne.s32.totalorder %s101, %s117
      %p119 = scmp.eq.s32.totalorder %s18, 0
      %p120 = por %p118, %p119
      %s121 = ssub.s32 %s19, %s38
      %s122 = ssub.s32 %s20, %s34
      %s123 = sor.u32 %s121, %s122
      %p124 = scmp.eq.s32.totalorder %s123, 0
      %s126 = sadd.s32 %s125, 1
      %s127 = scalar_select %p124, %s125, %s126
      %p130 = pneg %p124
      %p131 = scmp.eq.s32.totalorder %s12, 2
      %p132 = por %p130, %p131
      %p133 = scmp.ne.s32.totalorder %s125, %s128
      %p134 = scmp.eq.s32.totalorder %s12, 0
      %p135 = por %p133, %p134
      %p136 = scmp.ne.s32.totalorder %s125, %s128
      %p137 = scmp.eq.s32.totalorder %s17, 2
      %p138 = por %p136, %p137
      %p139 = scmp.ne.s32.totalorder %s128, %s129
      %p140 = scmp.eq.s32.totalorder %s17, 0
      %p141 = por %p139, %p140
      %p142 = scmp.ne.s32.totalorder %s128, %s129
      %p143 = scmp.eq.s32.totalorder %s18, 2
      %p144 = por %p142, %p143
      %p146 = scmp.ne.s32.totalorder %s129, %s145
      %p147 = scmp.eq.s32.totalorder %s18, 0
      %p148 = por %p146, %p147
      %p149 = scmp.le.s32.totalorder 1, %s12
      %p150 = scmp.lt.s32.totalorder %s12, 4
      %p151 = pnand %p149, %p150
      %p152 = pneg %p151
      // Predicated region
      $region9: #{diallv_forward.11} parent=5 // pred_check
        _
      $region10: #{diallv_forward.11} parent=5 // pred_check_branch
        %154 = sbr.rel (%p151) target = $region12
      $region11: #{diallv_forward.11} parent=5 // pred_region
        %s155 = ssub.s32 %s12, 1
        // Predicated region
        $region13: #{diallv_forward.11} parent=11 // pred_check
          %p156 = pneg %p59
        $region14: #{diallv_forward.11} parent=11 // pred_check_branch
          %158 = sbr.rel (%p156) target = $region16
        $region15: #{diallv_forward.11} parent=11 // pred_region
          %s159 = smul.u32 2, %s22
          %p160 = scmp.lt.s32.totalorder %s159, 1
          %s161 = scalar_select %p160, %s159, 1
          %p162 = scmp.lt.s32.totalorder %s24, 0
          %s163 = scalar_select %p162, %s24, 0
          %s164 = sadd.s32 %s163, %s161
          %s165 = smul.addr %s164, 4
          %s166 = scalar_lea.vmem %s0, %s165
          %s167 = smul.u32 2, %s22
        $region16: #{diallv_forward.11} parent=11 // pred_fallthru
          _
      $region12: #{diallv_forward.11} parent=5 // pred_fallthru
        _
      %p168 = scmp.lt.s32.totalorder %s12, 3
      // Predicated region
      $region17: #{diallv_forward.11} parent=5 // pred_check
        %p169 = pneg %p168
      $region18: #{diallv_forward.11} parent=5 // pred_check_branch
        %171 = sbr.rel (%p169) target = $region20
      $region19: #{diallv_forward.11} parent=5 // pred_region
        // Predicated region
        $region21: #{diallv_forward.11} parent=19 // pred_check
          %p172 = pneg %p81
        $region22: #{diallv_forward.11} parent=19 // pred_check_branch
          %174 = sbr.rel (%p172) target = $region24
        $region23: #{diallv_forward.11} parent=19 // pred_region
          %s175 = sand.u32 %s71, 1
          %s176 = scalar_lea.sflag [#allocation4], %s175
          %s177 = sand.u32 %s71, 1
          %s178 = smul.addr %s177, 128
          %s179 = scalar_lea.vmem [#allocation3], %s178
          %s180 = smul.u32 16, %s21
          %s181 = smul.u32 2, %s20
          %s183 = ssub.s32 2048, 2048
          %184 = vsyncadd %s176, %s183
          %s185 = smul.addr %s180, 6
          %s186 = sadd.s32 %s181, %s185
          %s187 = smul.addr %s186, 64
          %s188 = scalar_lea.hbm %s1, %s187
          %s189 = sshll.u32 %s179, 4
          %s190 = int_to_ptr.vmem [resolvable:$true] %s189
          %195 = dma.hbm_to_vmem [thread:$0]  %s188, 2048, %s190, %s176, 384, 128, 8
        $region24: #{diallv_forward.11} parent=19 // pred_fallthru
          _
        // Predicated region
        $region25: #{diallv_forward.11} parent=19 // pred_check
          %p196 = pneg %p107
        $region26: #{diallv_forward.11} parent=19 // pred_check_branch
          %198 = sbr.rel (%p196) target = $region28
        $region27: #{diallv_forward.11} parent=19 // pred_region
          %s199 = smul.u32 2, %s20
          %p200 = scmp.lt.s32.totalorder %s199, 5
          %s201 = scalar_select %p200, %s199, 5
          %s202 = scalar_lea.vmem %s2, %s201
          %s203 = smul.u32 2, %s20
        $region28: #{diallv_forward.11} parent=19 // pred_fallthru
          _
      $region20: #{diallv_forward.11} parent=5 // pred_fallthru
        _
      %p204 = scmp.le.s32.totalorder 1, %s12
      %p205 = scmp.lt.s32.totalorder %s12, 4
      %p206 = pnand %p204, %p205
      %p207 = pneg %p206
      // Predicated region
      $region29: #{diallv_forward.11} parent=5 // pred_check
        _
      $region30: #{diallv_forward.11} parent=5 // pred_check_branch
        %209 = sbr.rel (%p206) target = $region32
      $region31: #{diallv_forward.11} parent=5 // pred_region
        %s210 = ssub.s32 %s12, 1
        %s211 = sand.u32 %s74, 1
        %s212 = scalar_lea.sflag [#allocation4], %s211
        %s213 = sand.u32 %s74, 1
        %s214 = smul.addr %s213, 128
        %s215 = scalar_lea.vmem [#allocation3], %s214
        // Predicated region
        $region33: #{diallv_forward.11} parent=31 // pred_check
          %p216 = pneg %p87
        $region34: #{diallv_forward.11} parent=31 // pred_check_branch
          %218 = sbr.rel (%p216) target = $region36
        $region35: #{diallv_forward.11} parent=31 // pred_region
          %219 = dma.done %s212, 2048
        $region36: #{diallv_forward.11} parent=31 // pred_fallthru
          _
        %s220 = smul.u32 2, %s22
        %p221 = scmp.lt.s32.totalorder %s220, 1
        %s222 = scalar_select %p221, %s220, 1
        %p223 = scmp.lt.s32.totalorder %s24, 0
        %s224 = scalar_select %p223, %s24, 0
        %s225 = sadd.s32 %s224, %s222
        %s226 = smul.addr %s225, 4
        %s227 = scalar_lea.vmem %s0, %s226
        %p228 = pneg %p59
        %p229 = pneg %p56
        %s230 = sand.u32 %s74, 1
        %s231 = scalar_lea.sflag [#allocation4], %s230
        %s232 = sand.u32 %s74, 1
        %s233 = smul.addr %s232, 128
        %s234 = scalar_lea.vmem [#allocation3], %s233
        %p235 = pneg %p87
        %p236 = pneg %p84
        %s237 = smul.u32 2, %s23
        %p238 = scmp.lt.s32.totalorder %s237, 5
        %s239 = scalar_select %p238, %s237, 5
        %s240 = scalar_lea.vmem %s2, %s239
        %p241 = pneg %p113
        %p242 = pneg %p110
        %p243 = pneg %p141
        %p244 = pneg %p138
        %s245 = sand.u32 %s128, 1
        %s246 = sand.u32 %s128, 1
        %s247 = smul.addr %s246, 16
        %s248 = scalar_lea.vmem [#allocation5], %s247
        %s249 = smul.u32 2, %s22
        %p250 = scmp.lt.s32.totalorder %s249, 1
        %s251 = scalar_select %p250, %s249, 1
        %p252 = scmp.lt.s32.totalorder %s24, 0
        %s253 = scalar_select %p252, %s24, 0
        %s254 = sadd.s32 %s253, %s251
        %s255 = smul.addr %s254, 4
        %s256 = scalar_lea.vmem %s0, %s255
        %s257 = smul.u32 2, %s22
        %s258 = smul.u32 16, %s24
        %s259 = smul.u32 2, %s23
        %s260 = smul.u32 2, %s23
        %p261 = scmp.lt.s32.totalorder %s260, 5
        %s262 = scalar_select %p261, %s260, 5
        %s263 = scalar_lea.vmem %s2, %s262
        %s264 = smul.u32 2, %s23
        %s265 = smul.u32 2, %s22
        %s266 = smul.u32 2, %s23
        %p268 = scmp.eq.s32.totalorder %s24, 0
        // Predicated region
        $region37: #{diallv_forward.11} parent=31 // pred_check
          %p269 = pneg %p268
        $region38: #{diallv_forward.11} parent=31 // pred_check_branch
          %271 = sbr.rel (%p269) target = $region40
        $region39: #{diallv_forward.11} parent=31 // pred_region
          %272 = vst [vmem:[#allocation2] sm:$0xff] 0.0
          %273 = vst [vmem:[#allocation2 + $0x8] sm:$0xff] 0.0
          %274 = vst [vmem:[#allocation2 + $0x10] sm:$0xff] 0.0
          %275 = vst [vmem:[#allocation2 + $0x18] sm:$0xff] 0.0
        $region40: #{diallv_forward.11} parent=31 // pred_fallthru
          _
        %v276 = vld [vmem:[#allocation2] sm:$0xff]
        %v277 = vld [vmem:[#allocation2 + $0x8] sm:$0xff]
        %v278 = vld [vmem:[#allocation2 + $0x10] sm:$0xff]
        %v279 = vld [vmem:[#allocation2 + $0x18] sm:$0xff]
        %v280 = vld [vmem:[%s256] sm:$0xf]
        %v281 = vld [vmem:[%s256 + $0x4] sm:$0xf]
        %v282 = vld [vmem:[%s215] sm:$0xff]
        %v283 = vld [vmem:[%s215 + $0x8] sm:$0xff]
        %v284 = vld [vmem:[%s215 + $0x10] sm:$0xff]
        %v285 = vld [vmem:[%s215 + $0x18] sm:$0xff]
        %v286 = vld [vmem:[%s215 + $0x20] sm:$0xff]
        %v287 = vld [vmem:[%s215 + $0x28] sm:$0xff]
        %v288 = vld [vmem:[%s215 + $0x30] sm:$0xff]
        %v289 = vld [vmem:[%s215 + $0x38] sm:$0xff]
        %v290 = vld [vmem:[%s215 + $0x40] sm:$0xff]
        %v291 = vld [vmem:[%s215 + $0x48] sm:$0xff]
        %v292 = vld [vmem:[%s215 + $0x50] sm:$0xff]
        %v293 = vld [vmem:[%s215 + $0x58] sm:$0xff]
        %v294 = vld [vmem:[%s215 + $0x60] sm:$0xff]
        %v295 = vld [vmem:[%s215 + $0x68] sm:$0xff]
        %v296 = vld [vmem:[%s215 + $0x70] sm:$0xff]
        %v297 = vld [vmem:[%s215 + $0x78] sm:$0xff]
        %v300 = vunpack.c.l.b16 %v280
        %v301 = vunpack.c.l.b16 %v281
        %v302 = vpack.c.b16 %v301, %v300
        %v320 = vunpack.c.l.b16 %v282
        %v321 = vunpack.c.h.b16 %v282
        %v322 = vunpack.c.l.b16 %v283
        %v323 = vunpack.c.h.b16 %v283
        %v324 = vunpack.c.l.b16 %v284
        %v325 = vunpack.c.h.b16 %v284
        %v326 = vunpack.c.l.b16 %v285
        %v327 = vunpack.c.h.b16 %v285
        %v328 = vunpack.c.l.b16 %v286
        %v329 = vunpack.c.h.b16 %v286
        %v330 = vunpack.c.l.b16 %v287
        %v331 = vunpack.c.h.b16 %v287
        %v332 = vunpack.c.l.b16 %v288
        %v333 = vunpack.c.h.b16 %v288
        %v334 = vunpack.c.l.b16 %v289
        %v335 = vunpack.c.h.b16 %v289
        %v336 = vunpack.c.l.b16 %v290
        %v337 = vunpack.c.h.b16 %v290
        %v338 = vunpack.c.l.b16 %v291
        %v339 = vunpack.c.h.b16 %v291
        %v340 = vunpack.c.l.b16 %v292
        %v341 = vunpack.c.h.b16 %v292
        %v342 = vunpack.c.l.b16 %v293
        %v343 = vunpack.c.h.b16 %v293
        %v344 = vunpack.c.l.b16 %v294
        %v345 = vunpack.c.h.b16 %v294
        %v346 = vunpack.c.l.b16 %v295
        %v347 = vunpack.c.h.b16 %v295
        %v348 = vunpack.c.l.b16 %v296
        %v349 = vunpack.c.h.b16 %v296
        %v350 = vunpack.c.l.b16 %v297
        %v351 = vunpack.c.h.b16 %v297
        %v352 = vpack.c.b16 %v322, %v320
        %v353 = vpack.c.b16 %v323, %v321
        %v354 = vpack.c.b16 %v326, %v324
        %v355 = vpack.c.b16 %v327, %v325
        %v356 = vpack.c.b16 %v330, %v328
        %v357 = vpack.c.b16 %v331, %v329
        %v358 = vpack.c.b16 %v334, %v332
        %v359 = vpack.c.b16 %v335, %v333
        %v360 = vpack.c.b16 %v338, %v336
        %v361 = vpack.c.b16 %v339, %v337
        %v362 = vpack.c.b16 %v342, %v340
        %v363 = vpack.c.b16 %v343, %v341
        %v364 = vpack.c.b16 %v346, %v344
        %v365 = vpack.c.b16 %v347, %v345
        %v366 = vpack.c.b16 %v350, %v348
        %v367 = vpack.c.b16 %v351, %v349
        %384 = vmatprep.subr.bf16.mxu0 %v367
        %385 = vmatpush1.bf16.msra.mxu0 %v366
        %386 = vmatprep.subr.bf16.mxu0 %v365
        %387 = vmatpush1.bf16.msra.mxu0 %v364
        %388 = vmatprep.subr.bf16.mxu0 %v363
        %389 = vmatpush1.bf16.msra.mxu0 %v362
        %390 = vmatprep.subr.bf16.mxu0 %v361
        %391 = vmatpush1.bf16.msra.mxu0 %v360
        %392 = vmatprep.subr.bf16.mxu0 %v359
        %393 = vmatpush1.bf16.msra.mxu0 %v358
        %394 = vmatprep.subr.bf16.mxu0 %v357
        %395 = vmatpush1.bf16.msra.mxu0 %v356
        %396 = vmatprep.subr.bf16.mxu0 %v355
        %397 = vmatpush1.bf16.msra.mxu0 %v354
        %398 = vmatprep.subr.bf16.mxu0 %v353
        %399 = vmatpush1.bf16.msra.mxu0 %v352
        %400 = vmatprep.subr.bf16.mxu0 0
        %401 = vmatpush2.bf16.msra.mxu0 0
        %402 = vmatprep.subr.bf16.mxu0 0
        %403 = vmatpush2.bf16.msra.mxu0 0
        %404 = vmatprep.subr.bf16.mxu0 0
        %405 = vmatpush2.bf16.msra.mxu0 0
        %406 = vmatprep.subr.bf16.mxu0 0
        %407 = vmatpush2.bf16.msra.mxu0 0
        %408 = vmatprep.subr.bf16.mxu0 0
        %409 = vmatpush2.bf16.msra.mxu0 0
        %410 = vmatprep.subr.bf16.mxu0 0
        %411 = vmatpush2.bf16.msra.mxu0 0
        %412 = vmatprep.subr.bf16.mxu0 0
        %413 = vmatpush2.bf16.msra.mxu0 0
        %414 = vmatprep.subr.bf16.mxu0 0
        %415 = vmatpush2.bf16.msra.mxu0 0
        %416 = vmatprep.mubr.bf16.mxu0 0
        %417 = vmatmul.mubr.bf16.gmra.mxu0 %v302
        %v418 = vpop.f32.mrf.mxu0
        %v419 = vadd.f32 0.0, %v418
        %v420 = vpop.f32.mrf.mxu0
        %v421 = vadd.f32 0.0, %v420
        %v422 = vpop.f32.mrf.mxu0
        %v423 = vadd.f32 0.0, %v422
        %v424 = vpop.f32.mrf.mxu0
        %v425 = vadd.f32 0.0, %v424
        %426 = vdwg.mxu0
        %v427 = vadd.f32 %v276, %v419
        %v428 = vadd.f32 %v277, %v421
        %v429 = vadd.f32 %v278, %v423
        %v430 = vadd.f32 %v279, %v425
        %431 = vst [vmem:[#allocation2] sm:$0xff] %v427
        %432 = vst [vmem:[#allocation2 + $0x8] sm:$0xff] %v428
        %433 = vst [vmem:[#allocation2 + $0x10] sm:$0xff] %v429
        %434 = vst [vmem:[#allocation2 + $0x18] sm:$0xff] %v430
        // Predicated region
        $region41: #{diallv_forward.11} parent=31 // pred_check
          %p435 = pneg %p268
        $region42: #{diallv_forward.11} parent=31 // pred_check_branch
          %437 = sbr.rel (%p435) target = $region44
        $region43: #{diallv_forward.11} parent=31 // pred_region
          %v438 = vld [vmem:[#allocation2] sm:$0xff]
          %v439 = vld [vmem:[#allocation2 + $0x8] sm:$0xff]
          %v440 = vld [vmem:[#allocation2 + $0x10] sm:$0xff]
          %v441 = vld [vmem:[#allocation2 + $0x18] sm:$0xff]
          %v442 = vld [vmem:[%s263] sm:$0x3]
          %v444 = vlaneseq
          %v445 = vshrl.u32 %v444, 7
          %v446 = vsub.s32 0, %v445
          %v447 = vrot.slane %v442, %v446
          %v448 = vlaneseq
          %v449 = vshrl.u32 %v448, 7
          %v450 = vsub.s32 1, %v449
          %v451 = vrot.slane %v442, %v450
          %v454 = vadd.f32 %v438, %v447
          %v455 = vadd.f32 %v439, %v451
          %v456 = vadd.f32 %v440, %v447
          %v457 = vadd.f32 %v441, %v451
          %v458 = vpack.c.bf16 %v456, %v454
          %v459 = vpack.c.bf16 %v457, %v455
          %v462 = vunpack.c.l.b16 %v458
          %v463 = vunpack.c.l.b16 %v459
          %v464 = vunpack.c.h.b16 %v458
          %v465 = vunpack.c.h.b16 %v459
          %v466 = vpack.c.b16 %v463, %v462
          %v467 = vpack.c.b16 %v465, %v464
          %470 = vst [vmem:[%s248] sm:$0xff] %v466
          %471 = vst [vmem:[%s248 + $0x8] sm:$0xff] %v467
        $region44: #{diallv_forward.11} parent=31 // pred_fallthru
          _
        %s472 = sand.u32 %s128, 1
        %s473 = sand.u32 %s128, 1
        %s474 = smul.addr %s473, 16
        %s475 = scalar_lea.vmem [#allocation5], %s474
        // Predicated region
        $region45: #{diallv_forward.11} parent=31 // pred_check
          %p476 = pneg %p138
        $region46: #{diallv_forward.11} parent=31 // pred_check_branch
          %478 = sbr.rel (%p476) target = $region48
        $region47: #{diallv_forward.11} parent=31 // pred_region
          %s479 = smul.u32 2, %s22
          %s480 = smul.u32 2, %s23
          %s481 = smul.addr %s479, 6
          %s482 = sadd.s32 %s480, %s481
          %s483 = smul.addr %s482, 4
          %s484 = scalar_lea.vmem %s3, %s483
          // Predicated region
          $region49: #{diallv_forward.11} parent=47 // pred_check
            _
          $region50: #{diallv_forward.11} parent=47 // pred_check_branch
            %486 = sbr.rel (0) target = $region52
          $region51: #{diallv_forward.11} parent=47 // pred_region
            // Predicated region
            $region53: #{diallv_forward.11} parent=51 // pred_check
              _
            $region54: #{diallv_forward.11} parent=51 // pred_check_branch
              %488 = sbr.rel (0) target = $region56
            $region55: #{diallv_forward.11} parent=51 // pred_region
              // Predicated region
              $region68: #{diallv_forward.11} parent=55 // pred_check
                _
              $region69: #{diallv_forward.11} parent=55 // pred_check_branch
                %506 = sbr.rel (0) target = $region71
              $region70: #{diallv_forward.11} parent=55 // pred_region
                loop: start=0, step=1, limit=1
                $region72: #{diallv_forward.11} parent=70 // loop_pre_header
                  _
                $region73: #{diallv_forward.11} parent=70 // loop_header
                  %s508 = sphi 0, %s512
                  %p509 = scmp.ge.s32.totalorder %s508, 1
                  %s513 = sphi %s475, %s475
                  %s514 = sphi %s484, %s484
                $region74: #{diallv_forward.11} parent=70 // loop_header_branch
                  %511 = sbr.rel (%p509) target = $region78
                $region75: #{diallv_forward.11} parent=70 // loop_body
                  %v515 = vld [vmem:[%s513] sm:$0xff]
                  %516 = vst [vmem:[%s514] sm:$0xff] %v515
                  %v517 = vld [vmem:[%s513 + $0x8] sm:$0xff]
                  %518 = vst [vmem:[%s514 + $0x18] sm:$0xff] %v517
                $region76: #{diallv_forward.11} parent=70 // loop_footer
                  %s512 = sadd.s32 1, %s508
                $region77: #{diallv_forward.11} parent=70 // loop_footer_branch
                  %507 = sbr.rel target = $region73
                $region78: #{diallv_forward.11} parent=70 // loop_exit
                  _
              $region71: #{diallv_forward.11} parent=55 // pred_fallthru
                _
              // Predicated region
              $region79: #{diallv_forward.11} parent=55 // pred_check
                _
              $region80: #{diallv_forward.11} parent=55 // pred_check_branch
                %520 = sbr.rel target = $region82
              $region81: #{diallv_forward.11} parent=55 // pred_region
                _
              $region82: #{diallv_forward.11} parent=55 // pred_fallthru
                _
            $region56: #{diallv_forward.11} parent=51 // pred_fallthru
              _
            // Predicated region
            $region57: #{diallv_forward.11} parent=51 // pred_check
              _
            $region58: #{diallv_forward.11} parent=51 // pred_check_branch
              %490 = sbr.rel target = $region60
            $region59: #{diallv_forward.11} parent=51 // pred_region
              %s492 = ssub.s32 256, 1
              loop: start=0, step=1, limit=1
              $region61: #{diallv_forward.11} parent=59 // loop_pre_header
                _
              $region62: #{diallv_forward.11} parent=59 // loop_header
                %s494 = sphi 0, %s498
                %p495 = scmp.ge.s32.totalorder %s494, 1
                %s499 = sphi %s475, %s475
                %s500 = sphi %s484, %s484
              $region63: #{diallv_forward.11} parent=59 // loop_header_branch
                %497 = sbr.rel (%p495) target = $region67
              $region64: #{diallv_forward.11} parent=59 // loop_body
                %v501 = vld [vmem:[%s499] sm:%s492]
                %502 = vst [vmem:[%s500] sm:%s492] %v501
                %v503 = vld [vmem:[%s499 + $0x8] sm:%s492]
                %504 = vst [vmem:[%s500 + $0x18] sm:%s492] %v503
              $region65: #{diallv_forward.11} parent=59 // loop_footer
                %s498 = sadd.s32 1, %s494
              $region66: #{diallv_forward.11} parent=59 // loop_footer_branch
                %493 = sbr.rel target = $region62
              $region67: #{diallv_forward.11} parent=59 // loop_exit
                _
            $region60: #{diallv_forward.11} parent=51 // pred_fallthru
              _
          $region52: #{diallv_forward.11} parent=47 // pred_fallthru
            _
          %521 = vnop
        $region48: #{diallv_forward.11} parent=31 // pred_fallthru
          _
      $region32: #{diallv_forward.11} parent=5 // pred_fallthru
        _
      %p522 = scmp.le.s32.totalorder 2, %s12
      // Predicated region
      $region83: #{diallv_forward.11} parent=5 // pred_check
        %p523 = pneg %p522
      $region84: #{diallv_forward.11} parent=5 // pred_check_branch
        %525 = sbr.rel (%p523) target = $region86
      $region85: #{diallv_forward.11} parent=5 // pred_region
        %s526 = ssub.s32 %s12, 2
        // Predicated region
        $region87: #{diallv_forward.11} parent=85 // pred_check
          %p527 = pneg %p144
        $region88: #{diallv_forward.11} parent=85 // pred_check_branch
          %529 = sbr.rel (%p527) target = $region90
        $region89: #{diallv_forward.11} parent=85 // pred_region
          %s530 = sand.u32 %s129, 1
          %s531 = sand.u32 %s129, 1
          %s532 = smul.addr %s531, 16
          %s533 = scalar_lea.vmem [#allocation5], %s532
        $region90: #{diallv_forward.11} parent=85 // pred_fallthru
          _
      $region86: #{diallv_forward.11} parent=5 // pred_fallthru
        _
    $region6: #{diallv_forward.11} parent=1 // loop_footer
      %s16 = sadd.s32 1, %s12
    $region7: #{diallv_forward.11} parent=1 // loop_footer_branch
      %11 = sbr.rel target = $region3
    $region8: #{diallv_forward.11} parent=1 // loop_exit
      _
    %534 = vsyncpa [#allocation4], 1
    %s535 = scalar_lea.sflag [#allocation4], 1
    %536 = vsyncpa %s535, 1

// kernel: diallv_forward.10
$region0: #{diallv_forward.10}
  #allocation0 [shape = 'u32[]', space=smem, size = 0x4, offset = 0x4, fixed_abs, tag = 'smem constant byte address 0x4 - core index']
  #allocation1 [shape = 'u32[144,128]{1,0:T(1,128)}', space=vmem, size = 0x12000, scoped, tag = 'internal scratch']
  #allocation2 [shape = 'f32[16,256]{1,0:T(8,128)}', space=vmem, size = 0x4000, scoped, tag = 'scratch operand']
  %s0 = inlined_call_operand.vmem [shape: bf16[16,128], index: 0, kind: input, shape index: {}]
  %s1 = inlined_call_operand.vmem [shape: bf16[128,768], index: 1, kind: input, shape index: {}]
  %s2 = inlined_call_operand.vmem [shape: f32[1,768], index: 2, kind: input, shape index: {}]
  %s3 = inlined_call_operand.vmem [shape: bf16[16,768], index: 3, kind: output, shape index: {}]
  %s4 = sld [smem:[#allocation0]]
  $region125: #{diallv_forward.10} parent=0
    _
  %s6 = ssub.s32 1, %s4
  %s7 = scalar_select 0, %s6, %s4
  $region1: #{diallv_forward.10} parent=0
    #allocation3 [shape = 'u8[131072]{0}', space=vmem, size = 0x20000, scoped, tag = 'input window, operand 1']
    #allocation4 [shape = 'u8[16384]{0}', space=vmem, size = 0x4000, scoped, tag = 'output window, operand 0']
    loop: start=0, step=1, limit=5
    $region2: #{diallv_forward.10} parent=1 // loop_pre_header
      _
    $region3: #{diallv_forward.10} parent=1 // loop_header
      %s9 = sphi 0, %s13
      %p10 = scmp.ge.s32.totalorder %s9, 5
      %s16 = sphi 0, %s35
      %s17 = sphi 0, %s31
      %s18 = sphi 0, %s27
      %s19 = sphi 0, %s16
      %s20 = sphi 0, %s17
      %s21 = sphi 0, %s18
      %s22 = sphi 0, %s19
      %s23 = sphi 0, %s20
      %s24 = sphi 0, %s21
      %s40 = sphi 0, %s42
      %s43 = sphi 0, %s40
      %s44 = sphi 0, %s43
      %s60 = sphi 0, %s44
      %s68 = sphi 0, %s70
      %s71 = sphi 0, %s68
      %s72 = sphi 0, %s71
      %s88 = sphi 0, %s72
      %s94 = sphi 0, %s96
      %s97 = sphi 0, %s94
      %s98 = sphi 0, %s97
      %s114 = sphi 0, %s98
      %s122 = sphi 0, %s124
      %s125 = sphi 0, %s122
      %s126 = sphi 0, %s125
      %s142 = sphi 0, %s126
    $region4: #{diallv_forward.10} parent=1 // loop_header_branch
      %12 = sbr.rel (%p10) target = $region8
    $region5: #{diallv_forward.10} parent=1 // loop_body
      %s14 = ssub.s32 %s9, 1
      %s15 = ssub.s32 %s9, 2
      %s25 = sadd.s32 1, %s18
      %p26 = scmp.ge.s32.totalorder %s25, 1
      %s27 = scalar_select %p26, 0, %s25
      %s28 = sadd.s32 1, %s17
      %s29 = scalar_select %p26, %s28, %s17
      %p30 = scmp.ge.s32.totalorder %s29, 3
      %s31 = scalar_select %p30, 0, %s29
      %s32 = sadd.s32 1, %s16
      %s33 = scalar_select %p30, %s32, %s16
      %p34 = scmp.ge.s32.totalorder %s33, 1
      %s35 = scalar_select %p34, 0, %s33
      %s36 = ssub.s32 %s16, %s35
      %s37 = ssub.s32 %s18, %s27
      %s38 = sor.u32 %s36, %s37
      %p39 = scmp.eq.s32.totalorder %s38, 0
      %s41 = sadd.s32 %s40, 1
      %s42 = scalar_select %p39, %s40, %s41
      %p45 = pneg %p39
      %p46 = scmp.eq.s32.totalorder %s9, 2
      %p47 = por %p45, %p46
      %p48 = scmp.ne.s32.totalorder %s40, %s43
      %p49 = scmp.eq.s32.totalorder %s9, 0
      %p50 = por %p48, %p49
      %p51 = scmp.ne.s32.totalorder %s40, %s43
      %p52 = scmp.eq.s32.totalorder %s14, 2
      %p53 = por %p51, %p52
      %p54 = scmp.ne.s32.totalorder %s43, %s44
      %p55 = scmp.eq.s32.totalorder %s14, 0
      %p56 = por %p54, %p55
      %p57 = scmp.ne.s32.totalorder %s43, %s44
      %p58 = scmp.eq.s32.totalorder %s15, 2
      %p59 = por %p57, %p58
      %p61 = scmp.ne.s32.totalorder %s44, %s60
      %p62 = scmp.eq.s32.totalorder %s15, 0
      %p63 = por %p61, %p62
      %s64 = ssub.s32 %s18, %s27
      %s65 = ssub.s32 %s17, %s31
      %s66 = sor.u32 %s64, %s65
      %p67 = scmp.eq.s32.totalorder %s66, 0
      %s69 = sadd.s32 %s68, 1
      %s70 = scalar_select %p67, %s68, %s69
      %p73 = pneg %p67
      %p74 = scmp.eq.s32.totalorder %s9, 2
      %p75 = por %p73, %p74
      %p76 = scmp.ne.s32.totalorder %s68, %s71
      %p77 = scmp.eq.s32.totalorder %s9, 0
      %p78 = por %p76, %p77
      %p79 = scmp.ne.s32.totalorder %s68, %s71
      %p80 = scmp.eq.s32.totalorder %s14, 2
      %p81 = por %p79, %p80
      %p82 = scmp.ne.s32.totalorder %s71, %s72
      %p83 = scmp.eq.s32.totalorder %s14, 0
      %p84 = por %p82, %p83
      %p85 = scmp.ne.s32.totalorder %s71, %s72
      %p86 = scmp.eq.s32.totalorder %s15, 2
      %p87 = por %p85, %p86
      %p89 = scmp.ne.s32.totalorder %s72, %s88
      %p90 = scmp.eq.s32.totalorder %s15, 0
      %p91 = por %p89, %p90
      %s92 = ssub.s32 %s17, %s31
      %p93 = scmp.eq.s32.totalorder %s92, 0
      %s95 = sadd.s32 %s94, 1
      %s96 = scalar_select %p93, %s94, %s95
      %p99 = pneg %p93
      %p100 = scmp.eq.s32.totalorder %s9, 2
      %p101 = por %p99, %p100
      %p102 = scmp.ne.s32.totalorder %s94, %s97
      %p103 = scmp.eq.s32.totalorder %s9, 0
      %p104 = por %p102, %p103
      %p105 = scmp.ne.s32.totalorder %s94, %s97
      %p106 = scmp.eq.s32.totalorder %s14, 2
      %p107 = por %p105, %p106
      %p108 = scmp.ne.s32.totalorder %s97, %s98
      %p109 = scmp.eq.s32.totalorder %s14, 0
      %p110 = por %p108, %p109
      %p111 = scmp.ne.s32.totalorder %s97, %s98
      %p112 = scmp.eq.s32.totalorder %s15, 2
      %p113 = por %p111, %p112
      %p115 = scmp.ne.s32.totalorder %s98, %s114
      %p116 = scmp.eq.s32.totalorder %s15, 0
      %p117 = por %p115, %p116
      %s118 = ssub.s32 %s16, %s35
      %s119 = ssub.s32 %s17, %s31
      %s120 = sor.u32 %s118, %s119
      %p121 = scmp.eq.s32.totalorder %s120, 0
      %s123 = sadd.s32 %s122, 1
      %s124 = scalar_select %p121, %s122, %s123
      %p127 = pneg %p121
      %p128 = scmp.eq.s32.totalorder %s9, 2
      %p129 = por %p127, %p128
      %p130 = scmp.ne.s32.totalorder %s122, %s125
      %p131 = scmp.eq.s32.totalorder %s9, 0
      %p132 = por %p130, %p131
      %p133 = scmp.ne.s32.totalorder %s122, %s125
      %p134 = scmp.eq.s32.totalorder %s14, 2
      %p135 = por %p133, %p134
      %p136 = scmp.ne.s32.totalorder %s125, %s126
      %p137 = scmp.eq.s32.totalorder %s14, 0
      %p138 = por %p136, %p137
      %p139 = scmp.ne.s32.totalorder %s125, %s126
      %p140 = scmp.eq.s32.totalorder %s15, 2
      %p141 = por %p139, %p140
      %p143 = scmp.ne.s32.totalorder %s126, %s142
      %p144 = scmp.eq.s32.totalorder %s15, 0
      %p145 = por %p143, %p144
      %p146 = scmp.le.s32.totalorder 1, %s9
      %p147 = scmp.lt.s32.totalorder %s9, 4
      %p148 = pnand %p146, %p147
      %p149 = pneg %p148
      // Predicated region
      $region9: #{diallv_forward.10} parent=5 // pred_check
        _
      $region10: #{diallv_forward.10} parent=5 // pred_check_branch
        %151 = sbr.rel (%p148) target = $region12
      $region11: #{diallv_forward.10} parent=5 // pred_region
        %s152 = ssub.s32 %s9, 1
        // Predicated region
        $region13: #{diallv_forward.10} parent=11 // pred_check
          %p153 = pneg %p56
        $region14: #{diallv_forward.10} parent=11 // pred_check_branch
          %155 = sbr.rel (%p153) target = $region16
        $region15: #{diallv_forward.10} parent=11 // pred_region
          %s156 = smul.u32 2, %s19
          %p157 = scmp.lt.s32.totalorder %s156, 1
          %s158 = scalar_select %p157, %s156, 1
          %p159 = scmp.lt.s32.totalorder %s21, 0
          %s160 = scalar_select %p159, %s21, 0
          %s161 = sadd.s32 %s160, %s158
          %s162 = smul.addr %s161, 4
          %s163 = scalar_lea.vmem %s0, %s162
          %s164 = smul.u32 2, %s19
        $region16: #{diallv_forward.10} parent=11 // pred_fallthru
          _
      $region12: #{diallv_forward.10} parent=5 // pred_fallthru
        _
      %p165 = scmp.lt.s32.totalorder %s9, 3
      // Predicated region
      $region17: #{diallv_forward.10} parent=5 // pred_check
        %p166 = pneg %p165
      $region18: #{diallv_forward.10} parent=5 // pred_check_branch
        %168 = sbr.rel (%p166) target = $region20
      $region19: #{diallv_forward.10} parent=5 // pred_region
        // Predicated region
        $region21: #{diallv_forward.10} parent=19 // pred_check
          %p169 = pneg %p78
        $region22: #{diallv_forward.10} parent=19 // pred_check_branch
          %171 = sbr.rel (%p169) target = $region24
        $region23: #{diallv_forward.10} parent=19 // pred_region
          %s172 = sand.u32 %s68, 1
          %s173 = sand.u32 %s68, 1
          %s174 = smul.addr %s173, 128
          %s175 = scalar_lea.vmem [#allocation3], %s174
          %s176 = smul.u32 16, %s18
          %s177 = smul.u32 2, %s17
          %s178 = smul.addr %s176, 6
          %s179 = sadd.s32 %s177, %s178
          %s180 = smul.addr %s179, 4
          %s181 = scalar_lea.vmem %s1, %s180
          // Predicated region
          $region25: #{diallv_forward.10} parent=23 // pred_check
            _
          $region26: #{diallv_forward.10} parent=23 // pred_check_branch
            %183 = sbr.rel (0) target = $region28
          $region27: #{diallv_forward.10} parent=23 // pred_region
            // Predicated region
            $region29: #{diallv_forward.10} parent=27 // pred_check
              _
            $region30: #{diallv_forward.10} parent=27 // pred_check_branch
              %185 = sbr.rel (0) target = $region32
            $region31: #{diallv_forward.10} parent=27 // pred_region
              // Predicated region
              $region44: #{diallv_forward.10} parent=31 // pred_check
                _
              $region45: #{diallv_forward.10} parent=31 // pred_check_branch
                %231 = sbr.rel (0) target = $region47
              $region46: #{diallv_forward.10} parent=31 // pred_region
                loop: start=0, step=1, limit=1
                $region48: #{diallv_forward.10} parent=46 // loop_pre_header
                  _
                $region49: #{diallv_forward.10} parent=46 // loop_header
                  %s233 = sphi 0, %s237
                  %p234 = scmp.ge.s32.totalorder %s233, 1
                  %s238 = sphi %s181, %s181
                  %s239 = sphi %s175, %s175
                $region50: #{diallv_forward.10} parent=46 // loop_header_branch
                  %236 = sbr.rel (%p234) target = $region54
                $region51: #{diallv_forward.10} parent=46 // loop_body
                  %v240 = vld [vmem:[%s238] sm:$0xff]
                  %241 = vst [vmem:[%s239] sm:$0xff] %v240
                  %v242 = vld [vmem:[%s238 + $0x18] sm:$0xff]
                  %243 = vst [vmem:[%s239 + $0x8] sm:$0xff] %v242
                  %v244 = vld [vmem:[%s238 + $0x30] sm:$0xff]
                  %245 = vst [vmem:[%s239 + $0x10] sm:$0xff] %v244
                  %v246 = vld [vmem:[%s238 + $0x48] sm:$0xff]
                  %247 = vst [vmem:[%s239 + $0x18] sm:$0xff] %v246
                  %v248 = vld [vmem:[%s238 + $0x60] sm:$0xff]
                  %249 = vst [vmem:[%s239 + $0x20] sm:$0xff] %v248
                  %v250 = vld [vmem:[%s238 + $0x78] sm:$0xff]
                  %251 = vst [vmem:[%s239 + $0x28] sm:$0xff] %v250
                  %v252 = vld [vmem:[%s238 + $0x90] sm:$0xff]
                  %253 = vst [vmem:[%s239 + $0x30] sm:$0xff] %v252
                  %v254 = vld [vmem:[%s238 + $0xa8] sm:$0xff]
                  %255 = vst [vmem:[%s239 + $0x38] sm:$0xff] %v254
                  %v256 = vld [vmem:[%s238 + $0xc0] sm:$0xff]
                  %257 = vst [vmem:[%s239 + $0x40] sm:$0xff] %v256
                  %v258 = vld [vmem:[%s238 + $0xd8] sm:$0xff]
                  %259 = vst [vmem:[%s239 + $0x48] sm:$0xff] %v258
                  %v260 = vld [vmem:[%s238 + $0xf0] sm:$0xff]
                  %261 = vst [vmem:[%s239 + $0x50] sm:$0xff] %v260
                  %v262 = vld [vmem:[%s238 + $0x108] sm:$0xff]
                  %263 = vst [vmem:[%s239 + $0x58] sm:$0xff] %v262
                  %v264 = vld [vmem:[%s238 + $0x120] sm:$0xff]
                  %265 = vst [vmem:[%s239 + $0x60] sm:$0xff] %v264
                  %v266 = vld [vmem:[%s238 + $0x138] sm:$0xff]
                  %267 = vst [vmem:[%s239 + $0x68] sm:$0xff] %v266
                  %v268 = vld [vmem:[%s238 + $0x150] sm:$0xff]
                  %269 = vst [vmem:[%s239 + $0x70] sm:$0xff] %v268
                  %v270 = vld [vmem:[%s238 + $0x168] sm:$0xff]
                  %271 = vst [vmem:[%s239 + $0x78] sm:$0xff] %v270
                $region52: #{diallv_forward.10} parent=46 // loop_footer
                  %s237 = sadd.s32 1, %s233
                $region53: #{diallv_forward.10} parent=46 // loop_footer_branch
                  %232 = sbr.rel target = $region49
                $region54: #{diallv_forward.10} parent=46 // loop_exit
                  _
              $region47: #{diallv_forward.10} parent=31 // pred_fallthru
                _
              // Predicated region
              $region55: #{diallv_forward.10} parent=31 // pred_check
                _
              $region56: #{diallv_forward.10} parent=31 // pred_check_branch
                %273 = sbr.rel target = $region58
              $region57: #{diallv_forward.10} parent=31 // pred_region
                _
              $region58: #{diallv_forward.10} parent=31 // pred_fallthru
                _
            $region32: #{diallv_forward.10} parent=27 // pred_fallthru
              _
            // Predicated region
            $region33: #{diallv_forward.10} parent=27 // pred_check
              _
            $region34: #{diallv_forward.10} parent=27 // pred_check_branch
              %187 = sbr.rel target = $region36
            $region35: #{diallv_forward.10} parent=27 // pred_region
              %s189 = ssub.s32 256, 1
              loop: start=0, step=1, limit=1
              $region37: #{diallv_forward.10} parent=35 // loop_pre_header
                _
              $region38: #{diallv_forward.10} parent=35 // loop_header
                %s191 = sphi 0, %s195
                %p192 = scmp.ge.s32.totalorder %s191, 1
                %s196 = sphi %s181, %s181
                %s197 = sphi %s175, %s175
              $region39: #{diallv_forward.10} parent=35 // loop_header_branch
                %194 = sbr.rel (%p192) target = $region43
              $region40: #{diallv_forward.10} parent=35 // loop_body
                %v198 = vld [vmem:[%s196] sm:%s189]
                %199 = vst [vmem:[%s197] sm:%s189] %v198
                %v200 = vld [vmem:[%s196 + $0x18] sm:%s189]
                %201 = vst [vmem:[%s197 + $0x8] sm:%s189] %v200
                %v202 = vld [vmem:[%s196 + $0x30] sm:%s189]
                %203 = vst [vmem:[%s197 + $0x10] sm:%s189] %v202
                %v204 = vld [vmem:[%s196 + $0x48] sm:%s189]
                %205 = vst [vmem:[%s197 + $0x18] sm:%s189] %v204
                %v206 = vld [vmem:[%s196 + $0x60] sm:%s189]
                %207 = vst [vmem:[%s197 + $0x20] sm:%s189] %v206
                %v208 = vld [vmem:[%s196 + $0x78] sm:%s189]
                %209 = vst [vmem:[%s197 + $0x28] sm:%s189] %v208
                %v210 = vld [vmem:[%s196 + $0x90] sm:%s189]
                %211 = vst [vmem:[%s197 + $0x30] sm:%s189] %v210
                %v212 = vld [vmem:[%s196 + $0xa8] sm:%s189]
                %213 = vst [vmem:[%s197 + $0x38] sm:%s189] %v212
                %v214 = vld [vmem:[%s196 + $0xc0] sm:%s189]
                %215 = vst [vmem:[%s197 + $0x40] sm:%s189] %v214
                %v216 = vld [vmem:[%s196 + $0xd8] sm:%s189]
                %217 = vst [vmem:[%s197 + $0x48] sm:%s189] %v216
                %v218 = vld [vmem:[%s196 + $0xf0] sm:%s189]
                %219 = vst [vmem:[%s197 + $0x50] sm:%s189] %v218
                %v220 = vld [vmem:[%s196 + $0x108] sm:%s189]
                %221 = vst [vmem:[%s197 + $0x58] sm:%s189] %v220
                %v222 = vld [vmem:[%s196 + $0x120] sm:%s189]
                %223 = vst [vmem:[%s197 + $0x60] sm:%s189] %v222
                %v224 = vld [vmem:[%s196 + $0x138] sm:%s189]
                %225 = vst [vmem:[%s197 + $0x68] sm:%s189] %v224
                %v226 = vld [vmem:[%s196 + $0x150] sm:%s189]
                %227 = vst [vmem:[%s197 + $0x70] sm:%s189] %v226
                %v228 = vld [vmem:[%s196 + $0x168] sm:%s189]
                %229 = vst [vmem:[%s197 + $0x78] sm:%s189] %v228
              $region41: #{diallv_forward.10} parent=35 // loop_footer
                %s195 = sadd.s32 1, %s191
              $region42: #{diallv_forward.10} parent=35 // loop_footer_branch
                %190 = sbr.rel target = $region38
              $region43: #{diallv_forward.10} parent=35 // loop_exit
                _
            $region36: #{diallv_forward.10} parent=27 // pred_fallthru
              _
          $region28: #{diallv_forward.10} parent=23 // pred_fallthru
            _
          %274 = vnop
        $region24: #{diallv_forward.10} parent=19 // pred_fallthru
          _
        // Predicated region
        $region59: #{diallv_forward.10} parent=19 // pred_check
          %p275 = pneg %p104
        $region60: #{diallv_forward.10} parent=19 // pred_check_branch
          %277 = sbr.rel (%p275) target = $region62
        $region61: #{diallv_forward.10} parent=19 // pred_region
          %s278 = smul.u32 2, %s17
          %p279 = scmp.lt.s32.totalorder %s278, 5
          %s280 = scalar_select %p279, %s278, 5
          %s281 = scalar_lea.vmem %s2, %s280
          %s282 = smul.u32 2, %s17
        $region62: #{diallv_forward.10} parent=19 // pred_fallthru
          _
      $region20: #{diallv_forward.10} parent=5 // pred_fallthru
        _
      %p283 = scmp.le.s32.totalorder 1, %s9
      %p284 = scmp.lt.s32.totalorder %s9, 4
      %p285 = pnand %p283, %p284
      %p286 = pneg %p285
      // Predicated region
      $region63: #{diallv_forward.10} parent=5 // pred_check
        _
      $region64: #{diallv_forward.10} parent=5 // pred_check_branch
        %288 = sbr.rel (%p285) target = $region66
      $region65: #{diallv_forward.10} parent=5 // pred_region
        %s289 = ssub.s32 %s9, 1
        %s290 = sand.u32 %s71, 1
        %s291 = sand.u32 %s71, 1
        %s292 = smul.addr %s291, 128
        %s293 = scalar_lea.vmem [#allocation3], %s292
        // Predicated region
        $region67: #{diallv_forward.10} parent=65 // pred_check
          %p294 = pneg %p84
        $region68: #{diallv_forward.10} parent=65 // pred_check_branch
          %296 = sbr.rel (%p294) target = $region70
        $region69: #{diallv_forward.10} parent=65 // pred_region
          _
        $region70: #{diallv_forward.10} parent=65 // pred_fallthru
          _
        %s297 = smul.u32 2, %s19
        %p298 = scmp.lt.s32.totalorder %s297, 1
        %s299 = scalar_select %p298, %s297, 1
        %p300 = scmp.lt.s32.totalorder %s21, 0
        %s301 = scalar_select %p300, %s21, 0
        %s302 = sadd.s32 %s301, %s299
        %s303 = smul.addr %s302, 4
        %s304 = scalar_lea.vmem %s0, %s303
        %p305 = pneg %p56
        %p306 = pneg %p53
        %s307 = sand.u32 %s71, 1
        %s308 = sand.u32 %s71, 1
        %s309 = smul.addr %s308, 128
        %s310 = scalar_lea.vmem [#allocation3], %s309
        %p311 = pneg %p84
        %p312 = pneg %p81
        %s313 = smul.u32 2, %s20
        %p314 = scmp.lt.s32.totalorder %s313, 5
        %s315 = scalar_select %p314, %s313, 5
        %s316 = scalar_lea.vmem %s2, %s315
        %p317 = pneg %p110
        %p318 = pneg %p107
        %p319 = pneg %p138
        %p320 = pneg %p135
        %s321 = sand.u32 %s125, 1
        %s322 = sand.u32 %s125, 1
        %s323 = smul.addr %s322, 16
        %s324 = scalar_lea.vmem [#allocation4], %s323
        %s325 = smul.u32 2, %s19
        %p326 = scmp.lt.s32.totalorder %s325, 1
        %s327 = scalar_select %p326, %s325, 1
        %p328 = scmp.lt.s32.totalorder %s21, 0
        %s329 = scalar_select %p328, %s21, 0
        %s330 = sadd.s32 %s329, %s327
        %s331 = smul.addr %s330, 4
        %s332 = scalar_lea.vmem %s0, %s331
        %s333 = smul.u32 2, %s19
        %s334 = smul.u32 16, %s21
        %s335 = smul.u32 2, %s20
        %s336 = smul.u32 2, %s20
        %p337 = scmp.lt.s32.totalorder %s336, 5
        %s338 = scalar_select %p337, %s336, 5
        %s339 = scalar_lea.vmem %s2, %s338
        %s340 = smul.u32 2, %s20
        %s341 = smul.u32 2, %s19
        %s342 = smul.u32 2, %s20
        %p344 = scmp.eq.s32.totalorder %s21, 0
        // Predicated region
        $region71: #{diallv_forward.10} parent=65 // pred_check
          %p345 = pneg %p344
        $region72: #{diallv_forward.10} parent=65 // pred_check_branch
          %347 = sbr.rel (%p345) target = $region74
        $region73: #{diallv_forward.10} parent=65 // pred_region
          %348 = vst [vmem:[#allocation2] sm:$0xff] 0.0
          %349 = vst [vmem:[#allocation2 + $0x8] sm:$0xff] 0.0
          %350 = vst [vmem:[#allocation2 + $0x10] sm:$0xff] 0.0
          %351 = vst [vmem:[#allocation2 + $0x18] sm:$0xff] 0.0
        $region74: #{diallv_forward.10} parent=65 // pred_fallthru
          _
        %v352 = vld [vmem:[#allocation2] sm:$0xff]
        %v353 = vld [vmem:[#allocation2 + $0x8] sm:$0xff]
        %v354 = vld [vmem:[#allocation2 + $0x10] sm:$0xff]
        %v355 = vld [vmem:[#allocation2 + $0x18] sm:$0xff]
        %v356 = vld [vmem:[%s332] sm:$0xf]
        %v357 = vld [vmem:[%s332 + $0x4] sm:$0xf]
        %v358 = vld [vmem:[%s293] sm:$0xff]
        %v359 = vld [vmem:[%s293 + $0x8] sm:$0xff]
        %v360 = vld [vmem:[%s293 + $0x10] sm:$0xff]
        %v361 = vld [vmem:[%s293 + $0x18] sm:$0xff]
        %v362 = vld [vmem:[%s293 + $0x20] sm:$0xff]
        %v363 = vld [vmem:[%s293 + $0x28] sm:$0xff]
        %v364 = vld [vmem:[%s293 + $0x30] sm:$0xff]
        %v365 = vld [vmem:[%s293 + $0x38] sm:$0xff]
        %v366 = vld [vmem:[%s293 + $0x40] sm:$0xff]
        %v367 = vld [vmem:[%s293 + $0x48] sm:$0xff]
        %v368 = vld [vmem:[%s293 + $0x50] sm:$0xff]
        %v369 = vld [vmem:[%s293 + $0x58] sm:$0xff]
        %v370 = vld [vmem:[%s293 + $0x60] sm:$0xff]
        %v371 = vld [vmem:[%s293 + $0x68] sm:$0xff]
        %v372 = vld [vmem:[%s293 + $0x70] sm:$0xff]
        %v373 = vld [vmem:[%s293 + $0x78] sm:$0xff]
        %v376 = vunpack.c.l.b16 %v356
        %v377 = vunpack.c.l.b16 %v357
        %v378 = vpack.c.b16 %v377, %v376
        %v396 = vunpack.c.l.b16 %v358
        %v397 = vunpack.c.h.b16 %v358
        %v398 = vunpack.c.l.b16 %v359
        %v399 = vunpack.c.h.b16 %v359
        %v400 = vunpack.c.l.b16 %v360
        %v401 = vunpack.c.h.b16 %v360
        %v402 = vunpack.c.l.b16 %v361
        %v403 = vunpack.c.h.b16 %v361
        %v404 = vunpack.c.l.b16 %v362
        %v405 = vunpack.c.h.b16 %v362
        %v406 = vunpack.c.l.b16 %v363
        %v407 = vunpack.c.h.b16 %v363
        %v408 = vunpack.c.l.b16 %v364
        %v409 = vunpack.c.h.b16 %v364
        %v410 = vunpack.c.l.b16 %v365
        %v411 = vunpack.c.h.b16 %v365
        %v412 = vunpack.c.l.b16 %v366
        %v413 = vunpack.c.h.b16 %v366
        %v414 = vunpack.c.l.b16 %v367
        %v415 = vunpack.c.h.b16 %v367
        %v416 = vunpack.c.l.b16 %v368
        %v417 = vunpack.c.h.b16 %v368
        %v418 = vunpack.c.l.b16 %v369
        %v419 = vunpack.c.h.b16 %v369
        %v420 = vunpack.c.l.b16 %v370
        %v421 = vunpack.c.h.b16 %v370
        %v422 = vunpack.c.l.b16 %v371
        %v423 = vunpack.c.h.b16 %v371
        %v424 = vunpack.c.l.b16 %v372
        %v425 = vunpack.c.h.b16 %v372
        %v426 = vunpack.c.l.b16 %v373
        %v427 = vunpack.c.h.b16 %v373
        %v428 = vpack.c.b16 %v398, %v396
        %v429 = vpack.c.b16 %v399, %v397
        %v430 = vpack.c.b16 %v402, %v400
        %v431 = vpack.c.b16 %v403, %v401
        %v432 = vpack.c.b16 %v406, %v404
        %v433 = vpack.c.b16 %v407, %v405
        %v434 = vpack.c.b16 %v410, %v408
        %v435 = vpack.c.b16 %v411, %v409
        %v436 = vpack.c.b16 %v414, %v412
        %v437 = vpack.c.b16 %v415, %v413
        %v438 = vpack.c.b16 %v418, %v416
        %v439 = vpack.c.b16 %v419, %v417
        %v440 = vpack.c.b16 %v422, %v420
        %v441 = vpack.c.b16 %v423, %v421
        %v442 = vpack.c.b16 %v426, %v424
        %v443 = vpack.c.b16 %v427, %v425
        %460 = vmatprep.subr.bf16.mxu0 %v443
        %461 = vmatpush1.bf16.msra.mxu0 %v442
        %462 = vmatprep.subr.bf16.mxu0 %v441
        %463 = vmatpush1.bf16.msra.mxu0 %v440
        %464 = vmatprep.subr.bf16.mxu0 %v439
        %465 = vmatpush1.bf16.msra.mxu0 %v438
        %466 = vmatprep.subr.bf16.mxu0 %v437
        %467 = vmatpush1.bf16.msra.mxu0 %v436
        %468 = vmatprep.subr.bf16.mxu0 %v435
        %469 = vmatpush1.bf16.msra.mxu0 %v434
        %470 = vmatprep.subr.bf16.mxu0 %v433
        %471 = vmatpush1.bf16.msra.mxu0 %v432
        %472 = vmatprep.subr.bf16.mxu0 %v431
        %473 = vmatpush1.bf16.msra.mxu0 %v430
        %474 = vmatprep.subr.bf16.mxu0 %v429
        %475 = vmatpush1.bf16.msra.mxu0 %v428
        %476 = vmatprep.subr.bf16.mxu0 0
        %477 = vmatpush2.bf16.msra.mxu0 0
        %478 = vmatprep.subr.bf16.mxu0 0
        %479 = vmatpush2.bf16.msra.mxu0 0
        %480 = vmatprep.subr.bf16.mxu0 0
        %481 = vmatpush2.bf16.msra.mxu0 0
        %482 = vmatprep.subr.bf16.mxu0 0
        %483 = vmatpush2.bf16.msra.mxu0 0
        %484 = vmatprep.subr.bf16.mxu0 0
        %485 = vmatpush2.bf16.msra.mxu0 0
        %486 = vmatprep.subr.bf16.mxu0 0
        %487 = vmatpush2.bf16.msra.mxu0 0
        %488 = vmatprep.subr.bf16.mxu0 0
        %489 = vmatpush2.bf16.msra.mxu0 0
        %490 = vmatprep.subr.bf16.mxu0 0
        %491 = vmatpush2.bf16.msra.mxu0 0
        %492 = vmatprep.mubr.bf16.mxu0 0
        %493 = vmatmul.mubr.bf16.gmra.mxu0 %v378
        %v494 = vpop.f32.mrf.mxu0
        %v495 = vadd.f32 0.0, %v494
        %v496 = vpop.f32.mrf.mxu0
        %v497 = vadd.f32 0.0, %v496
        %v498 = vpop.f32.mrf.mxu0
        %v499 = vadd.f32 0.0, %v498
        %v500 = vpop.f32.mrf.mxu0
        %v501 = vadd.f32 0.0, %v500
        %502 = vdwg.mxu0
        %v503 = vadd.f32 %v352, %v495
        %v504 = vadd.f32 %v353, %v497
        %v505 = vadd.f32 %v354, %v499
        %v506 = vadd.f32 %v355, %v501
        %507 = vst [vmem:[#allocation2] sm:$0xff] %v503
        %508 = vst [vmem:[#allocation2 + $0x8] sm:$0xff] %v504
        %509 = vst [vmem:[#allocation2 + $0x10] sm:$0xff] %v505
        %510 = vst [vmem:[#allocation2 + $0x18] sm:$0xff] %v506
        // Predicated region
        $region75: #{diallv_forward.10} parent=65 // pred_check
          %p511 = pneg %p344
        $region76: #{diallv_forward.10} parent=65 // pred_check_branch
          %513 = sbr.rel (%p511) target = $region78
        $region77: #{diallv_forward.10} parent=65 // pred_region
          %v514 = vld [vmem:[#allocation2] sm:$0xff]
          %v515 = vld [vmem:[#allocation2 + $0x8] sm:$0xff]
          %v516 = vld [vmem:[#allocation2 + $0x10] sm:$0xff]
          %v517 = vld [vmem:[#allocation2 + $0x18] sm:$0xff]
          %v518 = vld [vmem:[%s339] sm:$0x3]
          %v520 = vlaneseq
          %v521 = vshrl.u32 %v520, 7
          %v522 = vsub.s32 0, %v521
          %v523 = vrot.slane %v518, %v522
          %v524 = vlaneseq
          %v525 = vshrl.u32 %v524, 7
          %v526 = vsub.s32 1, %v525
          %v527 = vrot.slane %v518, %v526
          %v530 = vadd.f32 %v514, %v523
          %v531 = vadd.f32 %v515, %v527
          %v532 = vadd.f32 %v516, %v523
          %v533 = vadd.f32 %v517, %v527
          %v534 = vpack.c.bf16 %v532, %v530
          %v535 = vpack.c.bf16 %v533, %v531
          %v538 = vunpack.c.l.b16 %v534
          %v539 = vunpack.c.l.b16 %v535
          %v540 = vunpack.c.h.b16 %v534
          %v541 = vunpack.c.h.b16 %v535
          %v542 = vpack.c.b16 %v539, %v538
          %v543 = vpack.c.b16 %v541, %v540
          %546 = vst [vmem:[%s324] sm:$0xff] %v542
          %547 = vst [vmem:[%s324 + $0x8] sm:$0xff] %v543
        $region78: #{diallv_forward.10} parent=65 // pred_fallthru
          _
        %s548 = sand.u32 %s125, 1
        %s549 = sand.u32 %s125, 1
        %s550 = smul.addr %s549, 16
        %s551 = scalar_lea.vmem [#allocation4], %s550
        // Predicated region
        $region79: #{diallv_forward.10} parent=65 // pred_check
          %p552 = pneg %p135
        $region80: #{diallv_forward.10} parent=65 // pred_check_branch
          %554 = sbr.rel (%p552) target = $region82
        $region81: #{diallv_forward.10} parent=65 // pred_region
          %s555 = smul.u32 2, %s19
          %s556 = smul.u32 2, %s20
          %s557 = smul.addr %s555, 6
          %s558 = sadd.s32 %s556, %s557
          %s559 = smul.addr %s558, 4
          %s560 = scalar_lea.vmem %s3, %s559
          // Predicated region
          $region83: #{diallv_forward.10} parent=81 // pred_check
            _
          $region84: #{diallv_forward.10} parent=81 // pred_check_branch
            %562 = sbr.rel (0) target = $region86
          $region85: #{diallv_forward.10} parent=81 // pred_region
            // Predicated region
            $region87: #{diallv_forward.10} parent=85 // pred_check
              _
            $region88: #{diallv_forward.10} parent=85 // pred_check_branch
              %564 = sbr.rel (0) target = $region90
            $region89: #{diallv_forward.10} parent=85 // pred_region
              // Predicated region
              $region102: #{diallv_forward.10} parent=89 // pred_check
                _
              $region103: #{diallv_forward.10} parent=89 // pred_check_branch
                %582 = sbr.rel (0) target = $region105
              $region104: #{diallv_forward.10} parent=89 // pred_region
                loop: start=0, step=1, limit=1
                $region106: #{diallv_forward.10} parent=104 // loop_pre_header
                  _
                $region107: #{diallv_forward.10} parent=104 // loop_header
                  %s584 = sphi 0, %s588
                  %p585 = scmp.ge.s32.totalorder %s584, 1
                  %s589 = sphi %s551, %s551
                  %s590 = sphi %s560, %s560
                $region108: #{diallv_forward.10} parent=104 // loop_header_branch
                  %587 = sbr.rel (%p585) target = $region112
                $region109: #{diallv_forward.10} parent=104 // loop_body
                  %v591 = vld [vmem:[%s589] sm:$0xff]
                  %592 = vst [vmem:[%s590] sm:$0xff] %v591
                  %v593 = vld [vmem:[%s589 + $0x8] sm:$0xff]
                  %594 = vst [vmem:[%s590 + $0x18] sm:$0xff] %v593
                $region110: #{diallv_forward.10} parent=104 // loop_footer
                  %s588 = sadd.s32 1, %s584
                $region111: #{diallv_forward.10} parent=104 // loop_footer_branch
                  %583 = sbr.rel target = $region107
                $region112: #{diallv_forward.10} parent=104 // loop_exit
                  _
              $region105: #{diallv_forward.10} parent=89 // pred_fallthru
                _
              // Predicated region
              $region113: #{diallv_forward.10} parent=89 // pred_check
                _
              $region114: #{diallv_forward.10} parent=89 // pred_check_branch
                %596 = sbr.rel target = $region116
              $region115: #{diallv_forward.10} parent=89 // pred_region
                _
              $region116: #{diallv_forward.10} parent=89 // pred_fallthru
                _
            $region90: #{diallv_forward.10} parent=85 // pred_fallthru
              _
            // Predicated region
            $region91: #{diallv_forward.10} parent=85 // pred_check
              _
            $region92: #{diallv_forward.10} parent=85 // pred_check_branch
              %566 = sbr.rel target = $region94
            $region93: #{diallv_forward.10} parent=85 // pred_region
              %s568 = ssub.s32 256, 1
              loop: start=0, step=1, limit=1
              $region95: #{diallv_forward.10} parent=93 // loop_pre_header
                _
              $region96: #{diallv_forward.10} parent=93 // loop_header
                %s570 = sphi 0, %s574
                %p571 = scmp.ge.s32.totalorder %s570, 1
                %s575 = sphi %s551, %s551
                %s576 = sphi %s560, %s560
              $region97: #{diallv_forward.10} parent=93 // loop_header_branch
                %573 = sbr.rel (%p571) target = $region101
              $region98: #{diallv_forward.10} parent=93 // loop_body
                %v577 = vld [vmem:[%s575] sm:%s568]
                %578 = vst [vmem:[%s576] sm:%s568] %v577
                %v579 = vld [vmem:[%s575 + $0x8] sm:%s568]
                %580 = vst [vmem:[%s576 + $0x18] sm:%s568] %v579
              $region99: #{diallv_forward.10} parent=93 // loop_footer
                %s574 = sadd.s32 1, %s570
              $region100: #{diallv_forward.10} parent=93 // loop_footer_branch
                %569 = sbr.rel target = $region96
              $region101: #{diallv_forward.10} parent=93 // loop_exit
                _
            $region94: #{diallv_forward.10} parent=85 // pred_fallthru
              _
          $region86: #{diallv_forward.10} parent=81 // pred_fallthru
            _
          %597 = vnop
        $region82: #{diallv_forward.10} parent=65 // pred_fallthru
          _
      $region66: #{diallv_forward.10} parent=5 // pred_fallthru
        _
      %p598 = scmp.le.s32.totalorder 2, %s9
      // Predicated region
      $region117: #{diallv_forward.10} parent=5 // pred_check
        %p599 = pneg %p598
      $region118: #{diallv_forward.10} parent=5 // pred_check_branch
        %601 = sbr.rel (%p599) target = $region120
      $region119: #{diallv_forward.10} parent=5 // pred_region
        %s602 = ssub.s32 %s9, 2
        // Predicated region
        $region121: #{diallv_forward.10} parent=119 // pred_check
          %p603 = pneg %p141
        $region122: #{diallv_forward.10} parent=119 // pred_check_branch
          %605 = sbr.rel (%p603) target = $region124
        $region123: #{diallv_forward.10} parent=119 // pred_region
          %s606 = sand.u32 %s126, 1
          %s607 = sand.u32 %s126, 1
          %s608 = smul.addr %s607, 16
          %s609 = scalar_lea.vmem [#allocation4], %s608
        $region124: #{diallv_forward.10} parent=119 // pred_fallthru
          _
      $region120: #{diallv_forward.10} parent=5 // pred_fallthru
        _
    $region6: #{diallv_forward.10} parent=1 // loop_footer
      %s13 = sadd.s32 1, %s9
    $region7: #{diallv_forward.10} parent=1 // loop_footer_branch
      %8 = sbr.rel target = $region3
    $region8: #{diallv_forward.10} parent=1 // loop_exit
      _

// kernel: diallv_forward.13
$region0: #{diallv_forward.13}
  #allocation0 [shape = 'u32[]', space=smem, size = 0x4, offset = 0x4, fixed_abs, tag = 'smem constant byte address 0x4 - core index']
  #allocation1 [shape = 'u32[144,128]{1,0:T(1,128)}', space=vmem, size = 0x12000, scoped, tag = 'internal scratch']
  #allocation2 [shape = 'f32[8,128]{1,0:T(8,128)}', space=vmem, size = 0x1000, scoped, tag = 'scratch operand']
  %s0 = inlined_call_operand.vmem [shape: bf16[8,128], index: 0, kind: input, shape index: {}]
  %s1 = inlined_call_operand.vmem [shape: bf16[128,128], index: 1, kind: input, shape index: {}]
  %s2 = inlined_call_operand.vmem [shape: f32[1,128], index: 2, kind: input, shape index: {}]
  %s3 = inlined_call_operand.vmem [shape: f32[8,128], index: 3, kind: output, shape index: {}]
  %s4 = sld [smem:[#allocation0]]
  $region30: #{diallv_forward.13} parent=0
    _
  %s6 = ssub.s32 1, %s4
  %s7 = scalar_select 0, %s6, %s4
  // Predicated region
  $region2: #{diallv_forward.13} parent=0 // pred_check
    _
  $region3: #{diallv_forward.13} parent=0 // pred_check_branch
    %9 = sbr.rel (0) target = $region5
  $region4: #{diallv_forward.13} parent=0 // pred_region
    _
  $region5: #{diallv_forward.13} parent=0 // pred_fallthru
    _
  // Predicated region
  $region6: #{diallv_forward.13} parent=0 // pred_check
    _
  $region7: #{diallv_forward.13} parent=0 // pred_check_branch
    %11 = sbr.rel (0) target = $region9
  $region8: #{diallv_forward.13} parent=0 // pred_region
    _
  $region9: #{diallv_forward.13} parent=0 // pred_fallthru
    _
  // Predicated region
  $region10: #{diallv_forward.13} parent=0 // pred_check
    _
  $region11: #{diallv_forward.13} parent=0 // pred_check_branch
    %13 = sbr.rel (0) target = $region13
  $region12: #{diallv_forward.13} parent=0 // pred_region
    _
  $region13: #{diallv_forward.13} parent=0 // pred_fallthru
    _
  %p15 = scmp.eq.s32.totalorder 0, 0
  // Predicated region
  $region14: #{diallv_forward.13} parent=0 // pred_check
    %p16 = pneg %p15
  $region15: #{diallv_forward.13} parent=0 // pred_check_branch
    %18 = sbr.rel (%p16) target = $region17
  $region16: #{diallv_forward.13} parent=0 // pred_region
    %19 = vst [vmem:[#allocation2] sm:$0xff] 0.0
  $region17: #{diallv_forward.13} parent=0 // pred_fallthru
    _
  %v20 = vld [vmem:[#allocation2] sm:$0xff]
  %v21 = vld [vmem:[%s0] sm:$0xf]
  %v22 = vld [vmem:[%s1] sm:$0xf]
  %v23 = vld [vmem:[%s1 + $0x4] sm:$0xf]
  %v24 = vld [vmem:[%s1 + $0x8] sm:$0xf]
  %v25 = vld [vmem:[%s1 + $0xc] sm:$0xf]
  %v26 = vld [vmem:[%s1 + $0x10] sm:$0xf]
  %v27 = vld [vmem:[%s1 + $0x14] sm:$0xf]
  %v28 = vld [vmem:[%s1 + $0x18] sm:$0xf]
  %v29 = vld [vmem:[%s1 + $0x1c] sm:$0xf]
  %v30 = vld [vmem:[%s1 + $0x20] sm:$0xf]
  %v31 = vld [vmem:[%s1 + $0x24] sm:$0xf]
  %v32 = vld [vmem:[%s1 + $0x28] sm:$0xf]
  %v33 = vld [vmem:[%s1 + $0x2c] sm:$0xf]
  %v34 = vld [vmem:[%s1 + $0x30] sm:$0xf]
  %v35 = vld [vmem:[%s1 + $0x34] sm:$0xf]
  %v36 = vld [vmem:[%s1 + $0x38] sm:$0xf]
  %v37 = vld [vmem:[%s1 + $0x3c] sm:$0xf]
  %v54 = vunpack.c.l.b16 %v22
  %v55 = vunpack.c.l.b16 %v23
  %v56 = vunpack.c.l.b16 %v24
  %v57 = vunpack.c.l.b16 %v25
  %v58 = vunpack.c.l.b16 %v26
  %v59 = vunpack.c.l.b16 %v27
  %v60 = vunpack.c.l.b16 %v28
  %v61 = vunpack.c.l.b16 %v29
  %v62 = vunpack.c.l.b16 %v30
  %v63 = vunpack.c.l.b16 %v31
  %v64 = vunpack.c.l.b16 %v32
  %v65 = vunpack.c.l.b16 %v33
  %v66 = vunpack.c.l.b16 %v34
  %v67 = vunpack.c.l.b16 %v35
  %v68 = vunpack.c.l.b16 %v36
  %v69 = vunpack.c.l.b16 %v37
  %v70 = vpack.c.b16 %v55, %v54
  %v71 = vpack.c.b16 %v57, %v56
  %v72 = vpack.c.b16 %v59, %v58
  %v73 = vpack.c.b16 %v61, %v60
  %v74 = vpack.c.b16 %v63, %v62
  %v75 = vpack.c.b16 %v65, %v64
  %v76 = vpack.c.b16 %v67, %v66
  %v77 = vpack.c.b16 %v69, %v68
  %86 = vmatprep.subr.bf16.mxu0 0
  %87 = vmatpush1.bf16.msra.mxu0 %v77
  %88 = vmatprep.subr.bf16.mxu0 0
  %89 = vmatpush1.bf16.msra.mxu0 %v76
  %90 = vmatprep.subr.bf16.mxu0 0
  %91 = vmatpush1.bf16.msra.mxu0 %v75
  %92 = vmatprep.subr.bf16.mxu0 0
  %93 = vmatpush1.bf16.msra.mxu0 %v74
  %94 = vmatprep.subr.bf16.mxu0 0
  %95 = vmatpush1.bf16.msra.mxu0 %v73
  %96 = vmatprep.subr.bf16.mxu0 0
  %97 = vmatpush1.bf16.msra.mxu0 %v72
  %98 = vmatprep.subr.bf16.mxu0 0
  %99 = vmatpush1.bf16.msra.mxu0 %v71
  %100 = vmatprep.subr.bf16.mxu0 0
  %101 = vmatpush1.bf16.msra.mxu0 %v70
  %102 = vmatprep.subr.bf16.mxu0 0
  %103 = vmatpush2.bf16.msra.mxu0 0
  %104 = vmatprep.subr.bf16.mxu0 0
  %105 = vmatpush2.bf16.msra.mxu0 0
  %106 = vmatprep.subr.bf16.mxu0 0
  %107 = vmatpush2.bf16.msra.mxu0 0
  %108 = vmatprep.subr.bf16.mxu0 0
  %109 = vmatpush2.bf16.msra.mxu0 0
  %110 = vmatprep.subr.bf16.mxu0 0
  %111 = vmatpush2.bf16.msra.mxu0 0
  %112 = vmatprep.subr.bf16.mxu0 0
  %113 = vmatpush2.bf16.msra.mxu0 0
  %114 = vmatprep.subr.bf16.mxu0 0
  %115 = vmatpush2.bf16.msra.mxu0 0
  %116 = vmatprep.subr.bf16.mxu0 0
  %117 = vmatpush2.bf16.msra.mxu0 0
  %118 = vmatprep.mubr.bf16.mxu0 0
  %119 = vmatmul.mubr.bf16.gmra.mxu0 %v21
  %v120 = vpop.f32.mrf.mxu0
  %v121 = vadd.f32 0.0, %v120
  %v122 = vpop.f32.mrf.mxu0
  %v123 = vpop.f32.mrf.mxu0
  %v124 = vpop.f32.mrf.mxu0
  %125 = vdwg.mxu0
  %v126 = vadd.f32 %v20, %v121
  %127 = vst [vmem:[#allocation2] sm:$0xff] %v126
  // Predicated region
  $region18: #{diallv_forward.13} parent=0 // pred_check
    %p128 = pneg %p15
  $region19: #{diallv_forward.13} parent=0 // pred_check_branch
    %130 = sbr.rel (%p128) target = $region21
  $region20: #{diallv_forward.13} parent=0 // pred_region
    %v131 = vld [vmem:[#allocation2] sm:$0xff]
    %v132 = vld [vmem:[%s2] sm:$0x1]
    %v134 = vlaneseq
    %v135 = vshrl.u32 %v134, 7
    %v136 = vsub.s32 0, %v135
    %v137 = vrot.slane %v132, %v136
    %v139 = vadd.f32 %v131, %v137
    %v140 = vtanh.pop %v139
    %141 = vst [vmem:[%s3] sm:$0xff] %v140
  $region21: #{diallv_forward.13} parent=0 // pred_fallthru
    _
  // Predicated region
  $region22: #{diallv_forward.13} parent=0 // pred_check
    _
  $region23: #{diallv_forward.13} parent=0 // pred_check_branch
    %143 = sbr.rel (0) target = $region25
  $region24: #{diallv_forward.13} parent=0 // pred_region
    _
  $region25: #{diallv_forward.13} parent=0 // pred_fallthru
    _
  // Predicated region
  $region26: #{diallv_forward.13} parent=0 // pred_check
    _
  $region27: #{diallv_forward.13} parent=0 // pred_check_branch
    %145 = sbr.rel (0) target = $region29
  $region28: #{diallv_forward.13} parent=0 // pred_region
    _
  $region29: #{diallv_forward.13} parent=0 // pred_fallthru
    _

// kernel: diallv_forward.15
$region0: #{diallv_forward.15}
  #allocation0 [shape = 'u32[]', space=smem, size = 0x4, offset = 0x4, fixed_abs, tag = 'smem constant byte address 0x4 - core index']
  #allocation1 [shape = 'u32[144,128]{1,0:T(1,128)}', space=vmem, size = 0x12000, scoped, tag = 'internal scratch']
  #allocation2 [shape = 'f32[8,128]{1,0:T(8,128)}', space=vmem, size = 0x1000, scoped, tag = 'scratch operand']
  %s0 = inlined_call_operand.vmem [shape: bf16[8,128], index: 0, kind: input, shape index: {}]
  %s1 = inlined_call_operand.vmem [shape: bf16[128,128], index: 1, kind: input, shape index: {}]
  %s2 = inlined_call_operand.vmem [shape: f32[1,128], index: 2, kind: input, shape index: {}]
  %s3 = inlined_call_operand.vmem [shape: f32[8,128], index: 3, kind: output, shape index: {}]
  %s4 = sld [smem:[#allocation0]]
  $region30: #{diallv_forward.15} parent=0
    _
  %s6 = ssub.s32 1, %s4
  %s7 = scalar_select 0, %s6, %s4
  // Predicated region
  $region2: #{diallv_forward.15} parent=0 // pred_check
    _
  $region3: #{diallv_forward.15} parent=0 // pred_check_branch
    %9 = sbr.rel (0) target = $region5
  $region4: #{diallv_forward.15} parent=0 // pred_region
    _
  $region5: #{diallv_forward.15} parent=0 // pred_fallthru
    _
  // Predicated region
  $region6: #{diallv_forward.15} parent=0 // pred_check
    _
  $region7: #{diallv_forward.15} parent=0 // pred_check_branch
    %11 = sbr.rel (0) target = $region9
  $region8: #{diallv_forward.15} parent=0 // pred_region
    _
  $region9: #{diallv_forward.15} parent=0 // pred_fallthru
    _
  // Predicated region
  $region10: #{diallv_forward.15} parent=0 // pred_check
    _
  $region11: #{diallv_forward.15} parent=0 // pred_check_branch
    %13 = sbr.rel (0) target = $region13
  $region12: #{diallv_forward.15} parent=0 // pred_region
    _
  $region13: #{diallv_forward.15} parent=0 // pred_fallthru
    _
  %p15 = scmp.eq.s32.totalorder 0, 0
  // Predicated region
  $region14: #{diallv_forward.15} parent=0 // pred_check
    %p16 = pneg %p15
  $region15: #{diallv_forward.15} parent=0 // pred_check_branch
    %18 = sbr.rel (%p16) target = $region17
  $region16: #{diallv_forward.15} parent=0 // pred_region
    %19 = vst [vmem:[#allocation2] sm:$0xff] 0.0
  $region17: #{diallv_forward.15} parent=0 // pred_fallthru
    _
  %v20 = vld [vmem:[#allocation2] sm:$0xff]
  %v21 = vld [vmem:[%s0] sm:$0xf]
  %v22 = vld [vmem:[%s1] sm:$0xf]
  %v23 = vld [vmem:[%s1 + $0x4] sm:$0xf]
  %v24 = vld [vmem:[%s1 + $0x8] sm:$0xf]
  %v25 = vld [vmem:[%s1 + $0xc] sm:$0xf]
  %v26 = vld [vmem:[%s1 + $0x10] sm:$0xf]
  %v27 = vld [vmem:[%s1 + $0x14] sm:$0xf]
  %v28 = vld [vmem:[%s1 + $0x18] sm:$0xf]
  %v29 = vld [vmem:[%s1 + $0x1c] sm:$0xf]
  %v30 = vld [vmem:[%s1 + $0x20] sm:$0xf]
  %v31 = vld [vmem:[%s1 + $0x24] sm:$0xf]
  %v32 = vld [vmem:[%s1 + $0x28] sm:$0xf]
  %v33 = vld [vmem:[%s1 + $0x2c] sm:$0xf]
  %v34 = vld [vmem:[%s1 + $0x30] sm:$0xf]
  %v35 = vld [vmem:[%s1 + $0x34] sm:$0xf]
  %v36 = vld [vmem:[%s1 + $0x38] sm:$0xf]
  %v37 = vld [vmem:[%s1 + $0x3c] sm:$0xf]
  %v54 = vunpack.c.l.b16 %v22
  %v55 = vunpack.c.l.b16 %v23
  %v56 = vunpack.c.l.b16 %v24
  %v57 = vunpack.c.l.b16 %v25
  %v58 = vunpack.c.l.b16 %v26
  %v59 = vunpack.c.l.b16 %v27
  %v60 = vunpack.c.l.b16 %v28
  %v61 = vunpack.c.l.b16 %v29
  %v62 = vunpack.c.l.b16 %v30
  %v63 = vunpack.c.l.b16 %v31
  %v64 = vunpack.c.l.b16 %v32
  %v65 = vunpack.c.l.b16 %v33
  %v66 = vunpack.c.l.b16 %v34
  %v67 = vunpack.c.l.b16 %v35
  %v68 = vunpack.c.l.b16 %v36
  %v69 = vunpack.c.l.b16 %v37
  %v70 = vpack.c.b16 %v55, %v54
  %v71 = vpack.c.b16 %v57, %v56
  %v72 = vpack.c.b16 %v59, %v58
  %v73 = vpack.c.b16 %v61, %v60
  %v74 = vpack.c.b16 %v63, %v62
  %v75 = vpack.c.b16 %v65, %v64
  %v76 = vpack.c.b16 %v67, %v66
  %v77 = vpack.c.b16 %v69, %v68
  %86 = vmatprep.subr.bf16.mxu0 0
  %87 = vmatpush1.bf16.msra.mxu0 %v77
  %88 = vmatprep.subr.bf16.mxu0 0
  %89 = vmatpush1.bf16.msra.mxu0 %v76
  %90 = vmatprep.subr.bf16.mxu0 0
  %91 = vmatpush1.bf16.msra.mxu0 %v75
  %92 = vmatprep.subr.bf16.mxu0 0
  %93 = vmatpush1.bf16.msra.mxu0 %v74
  %94 = vmatprep.subr.bf16.mxu0 0
  %95 = vmatpush1.bf16.msra.mxu0 %v73
  %96 = vmatprep.subr.bf16.mxu0 0
  %97 = vmatpush1.bf16.msra.mxu0 %v72
  %98 = vmatprep.subr.bf16.mxu0 0
  %99 = vmatpush1.bf16.msra.mxu0 %v71
  %100 = vmatprep.subr.bf16.mxu0 0
  %101 = vmatpush1.bf16.msra.mxu0 %v70
  %102 = vmatprep.subr.bf16.mxu0 0
  %103 = vmatpush2.bf16.msra.mxu0 0
  %104 = vmatprep.subr.bf16.mxu0 0
  %105 = vmatpush2.bf16.msra.mxu0 0
  %106 = vmatprep.subr.bf16.mxu0 0
  %107 = vmatpush2.bf16.msra.mxu0 0
  %108 = vmatprep.subr.bf16.mxu0 0
  %109 = vmatpush2.bf16.msra.mxu0 0
  %110 = vmatprep.subr.bf16.mxu0 0
  %111 = vmatpush2.bf16.msra.mxu0 0
  %112 = vmatprep.subr.bf16.mxu0 0
  %113 = vmatpush2.bf16.msra.mxu0 0
  %114 = vmatprep.subr.bf16.mxu0 0
  %115 = vmatpush2.bf16.msra.mxu0 0
  %116 = vmatprep.subr.bf16.mxu0 0
  %117 = vmatpush2.bf16.msra.mxu0 0
  %118 = vmatprep.mubr.bf16.mxu0 0
  %119 = vmatmul.mubr.bf16.gmra.mxu0 %v21
  %v120 = vpop.f32.mrf.mxu0
  %v121 = vadd.f32 0.0, %v120
  %v122 = vpop.f32.mrf.mxu0
  %v123 = vpop.f32.mrf.mxu0
  %v124 = vpop.f32.mrf.mxu0
  %125 = vdwg.mxu0
  %v126 = vadd.f32 %v20, %v121
  %127 = vst [vmem:[#allocation2] sm:$0xff] %v126
  // Predicated region
  $region18: #{diallv_forward.15} parent=0 // pred_check
    %p128 = pneg %p15
  $region19: #{diallv_forward.15} parent=0 // pred_check_branch
    %130 = sbr.rel (%p128) target = $region21
  $region20: #{diallv_forward.15} parent=0 // pred_region
    %v131 = vld [vmem:[#allocation2] sm:$0xff]
    %v132 = vld [vmem:[%s2] sm:$0x1]
    %v134 = vlaneseq
    %v135 = vshrl.u32 %v134, 7
    %v136 = vsub.s32 0, %v135
    %v137 = vrot.slane %v132, %v136
    %v139 = vadd.f32 %v131, %v137
    %140 = vst [vmem:[%s3] sm:$0xff] %v139
  $region21: #{diallv_forward.15} parent=0 // pred_fallthru
    _
  // Predicated region
  $region22: #{diallv_forward.15} parent=0 // pred_check
    _
  $region23: #{diallv_forward.15} parent=0 // pred_check_branch
    %142 = sbr.rel (0) target = $region25
  $region24: #{diallv_forward.15} parent=0 // pred_region
    _
  $region25: #{diallv_forward.15} parent=0 // pred_fallthru
    _
  // Predicated region
  $region26: #{diallv_forward.15} parent=0 // pred_check
    _
  $region27: #{diallv_forward.15} parent=0 // pred_check_branch
    %144 = sbr.rel (0) target = $region29
  $region28: #{diallv_forward.15} parent=0 // pred_region
    _
  $region29: #{diallv_forward.15} parent=0 // pred_fallthru
    _

// kernel: diallv_forward.16
$region0: #{diallv_forward.16}
  #allocation0 [shape = 'u32[]', space=smem, size = 0x4, offset = 0x4, fixed_abs, tag = 'smem constant byte address 0x4 - core index']
  #allocation1 [shape = 'u32[144,128]{1,0:T(1,128)}', space=vmem, size = 0x12000, scoped, tag = 'internal scratch']
  #allocation2 [shape = 'f32[16,128]{1,0:T(8,128)}', space=vmem, size = 0x2000, scoped, tag = 'scratch operand']
  %s0 = inlined_call_operand.vmem [shape: bf16[16,128], index: 0, kind: input, shape index: {}]
  %s1 = inlined_call_operand.vmem [shape: bf16[128,384], index: 1, kind: input, shape index: {}]
  %s2 = inlined_call_operand.vmem [shape: f32[1,384], index: 2, kind: input, shape index: {}]
  %s3 = inlined_call_operand.vmem [shape: bf16[16,384], index: 3, kind: output, shape index: {}]
  %s4 = sld [smem:[#allocation0]]
  $region131: #{diallv_forward.16} parent=0
    _
  %s6 = ssub.s32 1, %s4
  %s7 = scalar_select 0, %s6, %s4
  $region1: #{diallv_forward.16} parent=0
    #allocation3 [shape = 'u8[65536]{0}', space=vmem, size = 0x10000, scoped, tag = 'input window, operand 1']
    #allocation4 [shape = 'u8[8192]{0}', space=vmem, size = 0x2000, scoped, tag = 'output window, operand 0']
    loop: start=0, step=1, limit=5
    $region2: #{diallv_forward.16} parent=1 // loop_pre_header
      _
    $region3: #{diallv_forward.16} parent=1 // loop_header
      %s9 = sphi 0, %s13
      %p10 = scmp.ge.s32.totalorder %s9, 5
      %s16 = sphi 0, %s35
      %s17 = sphi 0, %s31
      %s18 = sphi 0, %s27
      %s19 = sphi 0, %s16
      %s20 = sphi 0, %s17
      %s21 = sphi 0, %s18
      %s22 = sphi 0, %s19
      %s23 = sphi 0, %s20
      %s24 = sphi 0, %s21
      %s40 = sphi 0, %s42
      %s43 = sphi 0, %s40
      %s44 = sphi 0, %s43
      %s60 = sphi 0, %s44
      %s68 = sphi 0, %s70
      %s71 = sphi 0, %s68
      %s72 = sphi 0, %s71
      %s88 = sphi 0, %s72
      %s94 = sphi 0, %s96
      %s97 = sphi 0, %s94
      %s98 = sphi 0, %s97
      %s114 = sphi 0, %s98
      %s122 = sphi 0, %s124
      %s125 = sphi 0, %s122
      %s126 = sphi 0, %s125
      %s142 = sphi 0, %s126
    $region4: #{diallv_forward.16} parent=1 // loop_header_branch
      %12 = sbr.rel (%p10) target = $region8
    $region5: #{diallv_forward.16} parent=1 // loop_body
      %s14 = ssub.s32 %s9, 1
      %s15 = ssub.s32 %s9, 2
      %s25 = sadd.s32 1, %s18
      %p26 = scmp.ge.s32.totalorder %s25, 1
      %s27 = scalar_select %p26, 0, %s25
      %s28 = sadd.s32 1, %s17
      %s29 = scalar_select %p26, %s28, %s17
      %p30 = scmp.ge.s32.totalorder %s29, 3
      %s31 = scalar_select %p30, 0, %s29
      %s32 = sadd.s32 1, %s16
      %s33 = scalar_select %p30, %s32, %s16
      %p34 = scmp.ge.s32.totalorder %s33, 1
      %s35 = scalar_select %p34, 0, %s33
      %s36 = ssub.s32 %s16, %s35
      %s37 = ssub.s32 %s18, %s27
      %s38 = sor.u32 %s36, %s37
      %p39 = scmp.eq.s32.totalorder %s38, 0
      %s41 = sadd.s32 %s40, 1
      %s42 = scalar_select %p39, %s40, %s41
      %p45 = pneg %p39
      %p46 = scmp.eq.s32.totalorder %s9, 2
      %p47 = por %p45, %p46
      %p48 = scmp.ne.s32.totalorder %s40, %s43
      %p49 = scmp.eq.s32.totalorder %s9, 0
      %p50 = por %p48, %p49
      %p51 = scmp.ne.s32.totalorder %s40, %s43
      %p52 = scmp.eq.s32.totalorder %s14, 2
      %p53 = por %p51, %p52
      %p54 = scmp.ne.s32.totalorder %s43, %s44
      %p55 = scmp.eq.s32.totalorder %s14, 0
      %p56 = por %p54, %p55
      %p57 = scmp.ne.s32.totalorder %s43, %s44
      %p58 = scmp.eq.s32.totalorder %s15, 2
      %p59 = por %p57, %p58
      %p61 = scmp.ne.s32.totalorder %s44, %s60
      %p62 = scmp.eq.s32.totalorder %s15, 0
      %p63 = por %p61, %p62
      %s64 = ssub.s32 %s18, %s27
      %s65 = ssub.s32 %s17, %s31
      %s66 = sor.u32 %s64, %s65
      %p67 = scmp.eq.s32.totalorder %s66, 0
      %s69 = sadd.s32 %s68, 1
      %s70 = scalar_select %p67, %s68, %s69
      %p73 = pneg %p67
      %p74 = scmp.eq.s32.totalorder %s9, 2
      %p75 = por %p73, %p74
      %p76 = scmp.ne.s32.totalorder %s68, %s71
      %p77 = scmp.eq.s32.totalorder %s9, 0
      %p78 = por %p76, %p77
      %p79 = scmp.ne.s32.totalorder %s68, %s71
      %p80 = scmp.eq.s32.totalorder %s14, 2
      %p81 = por %p79, %p80
      %p82 = scmp.ne.s32.totalorder %s71, %s72
      %p83 = scmp.eq.s32.totalorder %s14, 0
      %p84 = por %p82, %p83
      %p85 = scmp.ne.s32.totalorder %s71, %s72
      %p86 = scmp.eq.s32.totalorder %s15, 2
      %p87 = por %p85, %p86
      %p89 = scmp.ne.s32.totalorder %s72, %s88
      %p90 = scmp.eq.s32.totalorder %s15, 0
      %p91 = por %p89, %p90
      %s92 = ssub.s32 %s17, %s31
      %p93 = scmp.eq.s32.totalorder %s92, 0
      %s95 = sadd.s32 %s94, 1
      %s96 = scalar_select %p93, %s94, %s95
      %p99 = pneg %p93
      %p100 = scmp.eq.s32.totalorder %s9, 2
      %p101 = por %p99, %p100
      %p102 = scmp.ne.s32.totalorder %s94, %s97
      %p103 = scmp.eq.s32.totalorder %s9, 0
      %p104 = por %p102, %p103
      %p105 = scmp.ne.s32.totalorder %s94, %s97
      %p106 = scmp.eq.s32.totalorder %s14, 2
      %p107 = por %p105, %p106
      %p108 = scmp.ne.s32.totalorder %s97, %s98
      %p109 = scmp.eq.s32.totalorder %s14, 0
      %p110 = por %p108, %p109
      %p111 = scmp.ne.s32.totalorder %s97, %s98
      %p112 = scmp.eq.s32.totalorder %s15, 2
      %p113 = por %p111, %p112
      %p115 = scmp.ne.s32.totalorder %s98, %s114
      %p116 = scmp.eq.s32.totalorder %s15, 0
      %p117 = por %p115, %p116
      %s118 = ssub.s32 %s16, %s35
      %s119 = ssub.s32 %s17, %s31
      %s120 = sor.u32 %s118, %s119
      %p121 = scmp.eq.s32.totalorder %s120, 0
      %s123 = sadd.s32 %s122, 1
      %s124 = scalar_select %p121, %s122, %s123
      %p127 = pneg %p121
      %p128 = scmp.eq.s32.totalorder %s9, 2
      %p129 = por %p127, %p128
      %p130 = scmp.ne.s32.totalorder %s122, %s125
      %p131 = scmp.eq.s32.totalorder %s9, 0
      %p132 = por %p130, %p131
      %p133 = scmp.ne.s32.totalorder %s122, %s125
      %p134 = scmp.eq.s32.totalorder %s14, 2
      %p135 = por %p133, %p134
      %p136 = scmp.ne.s32.totalorder %s125, %s126
      %p137 = scmp.eq.s32.totalorder %s14, 0
      %p138 = por %p136, %p137
      %p139 = scmp.ne.s32.totalorder %s125, %s126
      %p140 = scmp.eq.s32.totalorder %s15, 2
      %p141 = por %p139, %p140
      %p143 = scmp.ne.s32.totalorder %s126, %s142
      %p144 = scmp.eq.s32.totalorder %s15, 0
      %p145 = por %p143, %p144
      %p146 = scmp.le.s32.totalorder 1, %s9
      %p147 = scmp.lt.s32.totalorder %s9, 4
      %p148 = pnand %p146, %p147
      %p149 = pneg %p148
      // Predicated region
      $region9: #{diallv_forward.16} parent=5 // pred_check
        _
      $region10: #{diallv_forward.16} parent=5 // pred_check_branch
        %151 = sbr.rel (%p148) target = $region12
      $region11: #{diallv_forward.16} parent=5 // pred_region
        %s152 = ssub.s32 %s9, 1
        // Predicated region
        $region13: #{diallv_forward.16} parent=11 // pred_check
          %p153 = pneg %p56
        $region14: #{diallv_forward.16} parent=11 // pred_check_branch
          %155 = sbr.rel (%p153) target = $region16
        $region15: #{diallv_forward.16} parent=11 // pred_region
          %s156 = smul.u32 2, %s19
          %p157 = scmp.lt.s32.totalorder %s156, 1
          %s158 = scalar_select %p157, %s156, 1
          %p159 = scmp.lt.s32.totalorder %s21, 0
          %s160 = scalar_select %p159, %s21, 0
          %s161 = sadd.s32 %s160, %s158
          %s162 = smul.addr %s161, 4
          %s163 = scalar_lea.vmem %s0, %s162
          %s164 = smul.u32 2, %s19
        $region16: #{diallv_forward.16} parent=11 // pred_fallthru
          _
      $region12: #{diallv_forward.16} parent=5 // pred_fallthru
        _
      %p165 = scmp.lt.s32.totalorder %s9, 3
      // Predicated region
      $region17: #{diallv_forward.16} parent=5 // pred_check
        %p166 = pneg %p165
      $region18: #{diallv_forward.16} parent=5 // pred_check_branch
        %168 = sbr.rel (%p166) target = $region20
      $region19: #{diallv_forward.16} parent=5 // pred_region
        // Predicated region
        $region21: #{diallv_forward.16} parent=19 // pred_check
          %p169 = pneg %p78
        $region22: #{diallv_forward.16} parent=19 // pred_check_branch
          %171 = sbr.rel (%p169) target = $region24
        $region23: #{diallv_forward.16} parent=19 // pred_region
          %s172 = sand.u32 %s68, 1
          %s173 = sand.u32 %s68, 1
          %s174 = smul.addr %s173, 64
          %s175 = scalar_lea.vmem [#allocation3], %s174
          %s176 = smul.u32 16, %s18
          %s177 = smul.addr %s176, 3
          %s178 = sadd.s32 %s17, %s177
          %s179 = smul.addr %s178, 4
          %s180 = scalar_lea.vmem %s1, %s179
          // Predicated region
          $region25: #{diallv_forward.16} parent=23 // pred_check
            _
          $region26: #{diallv_forward.16} parent=23 // pred_check_branch
            %182 = sbr.rel (0) target = $region28
          $region27: #{diallv_forward.16} parent=23 // pred_region
            // Predicated region
            $region29: #{diallv_forward.16} parent=27 // pred_check
              _
            $region30: #{diallv_forward.16} parent=27 // pred_check_branch
              %184 = sbr.rel target = $region32
            $region31: #{diallv_forward.16} parent=27 // pred_region
              // Predicated region
              $region44: #{diallv_forward.16} parent=31 // pred_check
                _
              $region45: #{diallv_forward.16} parent=31 // pred_check_branch
                %230 = sbr.rel (0) target = $region47
              $region46: #{diallv_forward.16} parent=31 // pred_region
                loop: start=0, step=1, limit=1
                $region48: #{diallv_forward.16} parent=46 // loop_pre_header
                  _
                $region49: #{diallv_forward.16} parent=46 // loop_header
                  %s232 = sphi 0, %s236
                  %p233 = scmp.ge.s32.totalorder %s232, 1
                  %s237 = sphi %s180, %s180
                  %s238 = sphi %s175, %s175
                $region50: #{diallv_forward.16} parent=46 // loop_header_branch
                  %235 = sbr.rel (%p233) target = $region54
                $region51: #{diallv_forward.16} parent=46 // loop_body
                  _
                $region52: #{diallv_forward.16} parent=46 // loop_footer
                  %s236 = sadd.s32 1, %s232
                $region53: #{diallv_forward.16} parent=46 // loop_footer_branch
                  %231 = sbr.rel target = $region49
                $region54: #{diallv_forward.16} parent=46 // loop_exit
                  _
                %s240 = ssub.s32 16, 1
                loop: start=0, step=1, limit=1
                $region55: #{diallv_forward.16} parent=46 // loop_pre_header
                  _
                $region56: #{diallv_forward.16} parent=46 // loop_header
                  %s242 = sphi 0, %s246
                  %p243 = scmp.ge.s32.totalorder %s242, 1
                  %s247 = sphi %s180, %s180
                  %s248 = sphi %s175, %s175
                $region57: #{diallv_forward.16} parent=46 // loop_header_branch
                  %245 = sbr.rel (%p243) target = $region61
                $region58: #{diallv_forward.16} parent=46 // loop_body
                  %v249 = vld [vmem:[%s247] sm:%s240]
                  %250 = vst [vmem:[%s248] sm:%s240] %v249
                  %v251 = vld [vmem:[%s247 + $0xc] sm:%s240]
                  %252 = vst [vmem:[%s248 + $0x4] sm:%s240] %v251
                  %v253 = vld [vmem:[%s247 + $0x18] sm:%s240]
                  %254 = vst [vmem:[%s248 + $0x8] sm:%s240] %v253
                  %v255 = vld [vmem:[%s247 + $0x24] sm:%s240]
                  %256 = vst [vmem:[%s248 + $0xc] sm:%s240] %v255
                  %v257 = vld [vmem:[%s247 + $0x30] sm:%s240]
                  %258 = vst [vmem:[%s248 + $0x10] sm:%s240] %v257
                  %v259 = vld [vmem:[%s247 + $0x3c] sm:%s240]
                  %260 = vst [vmem:[%s248 + $0x14] sm:%s240] %v259
                  %v261 = vld [vmem:[%s247 + $0x48] sm:%s240]
                  %262 = vst [vmem:[%s248 + $0x18] sm:%s240] %v261
                  %v263 = vld [vmem:[%s247 + $0x54] sm:%s240]
                  %264 = vst [vmem:[%s248 + $0x1c] sm:%s240] %v263
                  %v265 = vld [vmem:[%s247 + $0x60] sm:%s240]
                  %266 = vst [vmem:[%s248 + $0x20] sm:%s240] %v265
                  %v267 = vld [vmem:[%s247 + $0x6c] sm:%s240]
                  %268 = vst [vmem:[%s248 + $0x24] sm:%s240] %v267
                  %v269 = vld [vmem:[%s247 + $0x78] sm:%s240]
                  %270 = vst [vmem:[%s248 + $0x28] sm:%s240] %v269
                  %v271 = vld [vmem:[%s247 + $0x84] sm:%s240]
                  %272 = vst [vmem:[%s248 + $0x2c] sm:%s240] %v271
                  %v273 = vld [vmem:[%s247 + $0x90] sm:%s240]
                  %274 = vst [vmem:[%s248 + $0x30] sm:%s240] %v273
                  %v275 = vld [vmem:[%s247 + $0x9c] sm:%s240]
                  %276 = vst [vmem:[%s248 + $0x34] sm:%s240] %v275
                  %v277 = vld [vmem:[%s247 + $0xa8] sm:%s240]
                  %278 = vst [vmem:[%s248 + $0x38] sm:%s240] %v277
                  %v279 = vld [vmem:[%s247 + $0xb4] sm:%s240]
                  %280 = vst [vmem:[%s248 + $0x3c] sm:%s240] %v279
                $region59: #{diallv_forward.16} parent=46 // loop_footer
                  %s246 = sadd.s32 1, %s242
                $region60: #{diallv_forward.16} parent=46 // loop_footer_branch
                  %241 = sbr.rel target = $region56
                $region61: #{diallv_forward.16} parent=46 // loop_exit
                  _
              $region47: #{diallv_forward.16} parent=31 // pred_fallthru
                _
            $region32: #{diallv_forward.16} parent=27 // pred_fallthru
              _
            // Predicated region
            $region33: #{diallv_forward.16} parent=27 // pred_check
              _
            $region34: #{diallv_forward.16} parent=27 // pred_check_branch
              %186 = sbr.rel (0) target = $region36
            $region35: #{diallv_forward.16} parent=27 // pred_region
              %s188 = ssub.s32 16, 1
              loop: start=0, step=1, limit=1
              $region37: #{diallv_forward.16} parent=35 // loop_pre_header
                _
              $region38: #{diallv_forward.16} parent=35 // loop_header
                %s190 = sphi 0, %s194
                %p191 = scmp.ge.s32.totalorder %s190, 1
                %s195 = sphi %s180, %s180
                %s196 = sphi %s175, %s175
              $region39: #{diallv_forward.16} parent=35 // loop_header_branch
                %193 = sbr.rel (%p191) target = $region43
              $region40: #{diallv_forward.16} parent=35 // loop_body
                %v197 = vld [vmem:[%s195] sm:%s188]
                %198 = vst [vmem:[%s196] sm:%s188] %v197
                %v199 = vld [vmem:[%s195 + $0xc] sm:%s188]
                %200 = vst [vmem:[%s196 + $0x4] sm:%s188] %v199
                %v201 = vld [vmem:[%s195 + $0x18] sm:%s188]
                %202 = vst [vmem:[%s196 + $0x8] sm:%s188] %v201
                %v203 = vld [vmem:[%s195 + $0x24] sm:%s188]
                %204 = vst [vmem:[%s196 + $0xc] sm:%s188] %v203
                %v205 = vld [vmem:[%s195 + $0x30] sm:%s188]
                %206 = vst [vmem:[%s196 + $0x10] sm:%s188] %v205
                %v207 = vld [vmem:[%s195 + $0x3c] sm:%s188]
                %208 = vst [vmem:[%s196 + $0x14] sm:%s188] %v207
                %v209 = vld [vmem:[%s195 + $0x48] sm:%s188]
                %210 = vst [vmem:[%s196 + $0x18] sm:%s188] %v209
                %v211 = vld [vmem:[%s195 + $0x54] sm:%s188]
                %212 = vst [vmem:[%s196 + $0x1c] sm:%s188] %v211
                %v213 = vld [vmem:[%s195 + $0x60] sm:%s188]
                %214 = vst [vmem:[%s196 + $0x20] sm:%s188] %v213
                %v215 = vld [vmem:[%s195 + $0x6c] sm:%s188]
                %216 = vst [vmem:[%s196 + $0x24] sm:%s188] %v215
                %v217 = vld [vmem:[%s195 + $0x78] sm:%s188]
                %218 = vst [vmem:[%s196 + $0x28] sm:%s188] %v217
                %v219 = vld [vmem:[%s195 + $0x84] sm:%s188]
                %220 = vst [vmem:[%s196 + $0x2c] sm:%s188] %v219
                %v221 = vld [vmem:[%s195 + $0x90] sm:%s188]
                %222 = vst [vmem:[%s196 + $0x30] sm:%s188] %v221
                %v223 = vld [vmem:[%s195 + $0x9c] sm:%s188]
                %224 = vst [vmem:[%s196 + $0x34] sm:%s188] %v223
                %v225 = vld [vmem:[%s195 + $0xa8] sm:%s188]
                %226 = vst [vmem:[%s196 + $0x38] sm:%s188] %v225
                %v227 = vld [vmem:[%s195 + $0xb4] sm:%s188]
                %228 = vst [vmem:[%s196 + $0x3c] sm:%s188] %v227
              $region41: #{diallv_forward.16} parent=35 // loop_footer
                %s194 = sadd.s32 1, %s190
              $region42: #{diallv_forward.16} parent=35 // loop_footer_branch
                %189 = sbr.rel target = $region38
              $region43: #{diallv_forward.16} parent=35 // loop_exit
                _
            $region36: #{diallv_forward.16} parent=27 // pred_fallthru
              _
          $region28: #{diallv_forward.16} parent=23 // pred_fallthru
            _
          %281 = vnop
        $region24: #{diallv_forward.16} parent=19 // pred_fallthru
          _
        // Predicated region
        $region62: #{diallv_forward.16} parent=19 // pred_check
          %p282 = pneg %p104
        $region63: #{diallv_forward.16} parent=19 // pred_check_branch
          %284 = sbr.rel (%p282) target = $region65
        $region64: #{diallv_forward.16} parent=19 // pred_region
          %p285 = scmp.lt.s32.totalorder %s17, 2
          %s286 = scalar_select %p285, %s17, 2
          %s287 = scalar_lea.vmem %s2, %s286
        $region65: #{diallv_forward.16} parent=19 // pred_fallthru
          _
      $region20: #{diallv_forward.16} parent=5 // pred_fallthru
        _
      %p288 = scmp.le.s32.totalorder 1, %s9
      %p289 = scmp.lt.s32.totalorder %s9, 4
      %p290 = pnand %p288, %p289
      %p291 = pneg %p290
      // Predicated region
      $region66: #{diallv_forward.16} parent=5 // pred_check
        _
      $region67: #{diallv_forward.16} parent=5 // pred_check_branch
        %293 = sbr.rel (%p290) target = $region69
      $region68: #{diallv_forward.16} parent=5 // pred_region
        %s294 = ssub.s32 %s9, 1
        %s295 = sand.u32 %s71, 1
        %s296 = sand.u32 %s71, 1
        %s297 = smul.addr %s296, 64
        %s298 = scalar_lea.vmem [#allocation3], %s297
        // Predicated region
        $region70: #{diallv_forward.16} parent=68 // pred_check
          %p299 = pneg %p84
        $region71: #{diallv_forward.16} parent=68 // pred_check_branch
          %301 = sbr.rel (%p299) target = $region73
        $region72: #{diallv_forward.16} parent=68 // pred_region
          _
        $region73: #{diallv_forward.16} parent=68 // pred_fallthru
          _
        %s302 = smul.u32 2, %s19
        %p303 = scmp.lt.s32.totalorder %s302, 1
        %s304 = scalar_select %p303, %s302, 1
        %p305 = scmp.lt.s32.totalorder %s21, 0
        %s306 = scalar_select %p305, %s21, 0
        %s307 = sadd.s32 %s306, %s304
        %s308 = smul.addr %s307, 4
        %s309 = scalar_lea.vmem %s0, %s308
        %p310 = pneg %p56
        %p311 = pneg %p53
        %s312 = sand.u32 %s71, 1
        %s313 = sand.u32 %s71, 1
        %s314 = smul.addr %s313, 64
        %s315 = scalar_lea.vmem [#allocation3], %s314
        %p316 = pneg %p84
        %p317 = pneg %p81
        %p318 = scmp.lt.s32.totalorder %s20, 2
        %s319 = scalar_select %p318, %s20, 2
        %s320 = scalar_lea.vmem %s2, %s319
        %p321 = pneg %p110
        %p322 = pneg %p107
        %p323 = pneg %p138
        %p324 = pneg %p135
        %s325 = sand.u32 %s125, 1
        %s326 = sand.u32 %s125, 1
        %s327 = smul.addr %s326, 8
        %s328 = scalar_lea.vmem [#allocation4], %s327
        %s329 = smul.u32 2, %s19
        %p330 = scmp.lt.s32.totalorder %s329, 1
        %s331 = scalar_select %p330, %s329, 1
        %p332 = scmp.lt.s32.totalorder %s21, 0
        %s333 = scalar_select %p332, %s21, 0
        %s334 = sadd.s32 %s333, %s331
        %s335 = smul.addr %s334, 4
        %s336 = scalar_lea.vmem %s0, %s335
        %s337 = smul.u32 2, %s19
        %s338 = smul.u32 16, %s21
        %p339 = scmp.lt.s32.totalorder %s20, 2
        %s340 = scalar_select %p339, %s20, 2
        %s341 = scalar_lea.vmem %s2, %s340
        %s342 = smul.u32 2, %s19
        %p344 = scmp.eq.s32.totalorder %s21, 0
        // Predicated region
        $region74: #{diallv_forward.16} parent=68 // pred_check
          %p345 = pneg %p344
        $region75: #{diallv_forward.16} parent=68 // pred_check_branch
          %347 = sbr.rel (%p345) target = $region77
        $region76: #{diallv_forward.16} parent=68 // pred_region
          %348 = vst [vmem:[#allocation2] sm:$0xff] 0.0
          %349 = vst [vmem:[#allocation2 + $0x8] sm:$0xff] 0.0
        $region77: #{diallv_forward.16} parent=68 // pred_fallthru
          _
        %v350 = vld [vmem:[#allocation2] sm:$0xff]
        %v351 = vld [vmem:[#allocation2 + $0x8] sm:$0xff]
        %v352 = vld [vmem:[%s336] sm:$0xf]
        %v353 = vld [vmem:[%s336 + $0x4] sm:$0xf]
        %v354 = vld [vmem:[%s298] sm:$0xf]
        %v355 = vld [vmem:[%s298 + $0x4] sm:$0xf]
        %v356 = vld [vmem:[%s298 + $0x8] sm:$0xf]
        %v357 = vld [vmem:[%s298 + $0xc] sm:$0xf]
        %v358 = vld [vmem:[%s298 + $0x10] sm:$0xf]
        %v359 = vld [vmem:[%s298 + $0x14] sm:$0xf]
        %v360 = vld [vmem:[%s298 + $0x18] sm:$0xf]
        %v361 = vld [vmem:[%s298 + $0x1c] sm:$0xf]
        %v362 = vld [vmem:[%s298 + $0x20] sm:$0xf]
        %v363 = vld [vmem:[%s298 + $0x24] sm:$0xf]
        %v364 = vld [vmem:[%s298 + $0x28] sm:$0xf]
        %v365 = vld [vmem:[%s298 + $0x2c] sm:$0xf]
        %v366 = vld [vmem:[%s298 + $0x30] sm:$0xf]
        %v367 = vld [vmem:[%s298 + $0x34] sm:$0xf]
        %v368 = vld [vmem:[%s298 + $0x38] sm:$0xf]
        %v369 = vld [vmem:[%s298 + $0x3c] sm:$0xf]
        %v372 = vunpack.c.l.b16 %v352
        %v373 = vunpack.c.l.b16 %v353
        %v374 = vpack.c.b16 %v373, %v372
        %v392 = vunpack.c.l.b16 %v354
        %v393 = vunpack.c.l.b16 %v355
        %v394 = vunpack.c.l.b16 %v356
        %v395 = vunpack.c.l.b16 %v357
        %v396 = vunpack.c.l.b16 %v358
        %v397 = vunpack.c.l.b16 %v359
        %v398 = vunpack.c.l.b16 %v360
        %v399 = vunpack.c.l.b16 %v361
        %v400 = vunpack.c.l.b16 %v362
        %v401 = vunpack.c.l.b16 %v363
        %v402 = vunpack.c.l.b16 %v364
        %v403 = vunpack.c.l.b16 %v365
        %v404 = vunpack.c.l.b16 %v366
        %v405 = vunpack.c.l.b16 %v367
        %v406 = vunpack.c.l.b16 %v368
        %v407 = vunpack.c.l.b16 %v369
        %v408 = vpack.c.b16 %v393, %v392
        %v409 = vpack.c.b16 %v395, %v394
        %v410 = vpack.c.b16 %v397, %v396
        %v411 = vpack.c.b16 %v399, %v398
        %v412 = vpack.c.b16 %v401, %v400
        %v413 = vpack.c.b16 %v403, %v402
        %v414 = vpack.c.b16 %v405, %v404
        %v415 = vpack.c.b16 %v407, %v406
        %424 = vmatprep.subr.bf16.mxu0 0
        %425 = vmatpush1.bf16.msra.mxu0 %v415
        %426 = vmatprep.subr.bf16.mxu0 0
        %427 = vmatpush1.bf16.msra.mxu0 %v414
        %428 = vmatprep.subr.bf16.mxu0 0
        %429 = vmatpush1.bf16.msra.mxu0 %v413
        %430 = vmatprep.subr.bf16.mxu0 0
        %431 = vmatpush1.bf16.msra.mxu0 %v412
        %432 = vmatprep.subr.bf16.mxu0 0
        %433 = vmatpush1.bf16.msra.mxu0 %v411
        %434 = vmatprep.subr.bf16.mxu0 0
        %435 = vmatpush1.bf16.msra.mxu0 %v410
        %436 = vmatprep.subr.bf16.mxu0 0
        %437 = vmatpush1.bf16.msra.mxu0 %v409
        %438 = vmatprep.subr.bf16.mxu0 0
        %439 = vmatpush1.bf16.msra.mxu0 %v408
        %440 = vmatprep.subr.bf16.mxu0 0
        %441 = vmatpush2.bf16.msra.mxu0 0
        %442 = vmatprep.subr.bf16.mxu0 0
        %443 = vmatpush2.bf16.msra.mxu0 0
        %444 = vmatprep.subr.bf16.mxu0 0
        %445 = vmatpush2.bf16.msra.mxu0 0
        %446 = vmatprep.subr.bf16.mxu0 0
        %447 = vmatpush2.bf16.msra.mxu0 0
        %448 = vmatprep.subr.bf16.mxu0 0
        %449 = vmatpush2.bf16.msra.mxu0 0
        %450 = vmatprep.subr.bf16.mxu0 0
        %451 = vmatpush2.bf16.msra.mxu0 0
        %452 = vmatprep.subr.bf16.mxu0 0
        %453 = vmatpush2.bf16.msra.mxu0 0
        %454 = vmatprep.subr.bf16.mxu0 0
        %455 = vmatpush2.bf16.msra.mxu0 0
        %456 = vmatprep.mubr.bf16.mxu0 0
        %457 = vmatmul.mubr.bf16.gmra.mxu0 %v374
        %v458 = vpop.f32.mrf.mxu0
        %v459 = vadd.f32 0.0, %v458
        %v460 = vpop.f32.mrf.mxu0
        %v461 = vpop.f32.mrf.mxu0
        %v462 = vadd.f32 0.0, %v461
        %v463 = vpop.f32.mrf.mxu0
        %464 = vdwg.mxu0
        %v465 = vadd.f32 %v350, %v459
        %v466 = vadd.f32 %v351, %v462
        %467 = vst [vmem:[#allocation2] sm:$0xff] %v465
        %468 = vst [vmem:[#allocation2 + $0x8] sm:$0xff] %v466
        // Predicated region
        $region78: #{diallv_forward.16} parent=68 // pred_check
          %p469 = pneg %p344
        $region79: #{diallv_forward.16} parent=68 // pred_check_branch
          %471 = sbr.rel (%p469) target = $region81
        $region80: #{diallv_forward.16} parent=68 // pred_region
          %v472 = vld [vmem:[#allocation2] sm:$0xff]
          %v473 = vld [vmem:[#allocation2 + $0x8] sm:$0xff]
          %v474 = vld [vmem:[%s341] sm:$0x1]
          %v476 = vlaneseq
          %v477 = vshrl.u32 %v476, 7
          %v478 = vsub.s32 0, %v477
          %v479 = vrot.slane %v474, %v478
          %v481 = vadd.f32 %v472, %v479
          %v482 = vadd.f32 %v473, %v479
          %v483 = vpack.c.bf16 %v482, %v481
          %v485 = vunpack.c.l.b16 %v483
          %v486 = vunpack.c.h.b16 %v483
          %v487 = vpack.c.b16 %v485, %v485
          %v488 = vpack.c.b16 %v486, %v486
          %491 = vst [vmem:[%s328] sm:$0xf] %v487
          %492 = vst [vmem:[%s328 + $0x4] sm:$0xf] %v488
        $region81: #{diallv_forward.16} parent=68 // pred_fallthru
          _
        %s493 = sand.u32 %s125, 1
        %s494 = sand.u32 %s125, 1
        %s495 = smul.addr %s494, 8
        %s496 = scalar_lea.vmem [#allocation4], %s495
        // Predicated region
        $region82: #{diallv_forward.16} parent=68 // pred_check
          %p497 = pneg %p135
        $region83: #{diallv_forward.16} parent=68 // pred_check_branch
          %499 = sbr.rel (%p497) target = $region85
        $region84: #{diallv_forward.16} parent=68 // pred_region
          %s500 = smul.u32 2, %s19
          %s501 = smul.addr %s500, 3
          %s502 = sadd.s32 %s20, %s501
          %s503 = smul.addr %s502, 4
          %s504 = scalar_lea.vmem %s3, %s503
          // Predicated region
          $region86: #{diallv_forward.16} parent=84 // pred_check
            _
          $region87: #{diallv_forward.16} parent=84 // pred_check_branch
            %506 = sbr.rel (0) target = $region89
          $region88: #{diallv_forward.16} parent=84 // pred_region
            // Predicated region
            $region90: #{diallv_forward.16} parent=88 // pred_check
              _
            $region91: #{diallv_forward.16} parent=88 // pred_check_branch
              %508 = sbr.rel target = $region93
            $region92: #{diallv_forward.16} parent=88 // pred_region
              // Predicated region
              $region105: #{diallv_forward.16} parent=92 // pred_check
                _
              $region106: #{diallv_forward.16} parent=92 // pred_check_branch
                %526 = sbr.rel (0) target = $region108
              $region107: #{diallv_forward.16} parent=92 // pred_region
                loop: start=0, step=1, limit=1
                $region109: #{diallv_forward.16} parent=107 // loop_pre_header
                  _
                $region110: #{diallv_forward.16} parent=107 // loop_header
                  %s528 = sphi 0, %s532
                  %p529 = scmp.ge.s32.totalorder %s528, 1
                  %s533 = sphi %s496, %s496
                  %s534 = sphi %s504, %s504
                $region111: #{diallv_forward.16} parent=107 // loop_header_branch
                  %531 = sbr.rel (%p529) target = $region115
                $region112: #{diallv_forward.16} parent=107 // loop_body
                  _
                $region113: #{diallv_forward.16} parent=107 // loop_footer
                  %s532 = sadd.s32 1, %s528
                $region114: #{diallv_forward.16} parent=107 // loop_footer_branch
                  %527 = sbr.rel target = $region110
                $region115: #{diallv_forward.16} parent=107 // loop_exit
                  _
                %s536 = ssub.s32 16, 1
                loop: start=0, step=1, limit=1
                $region116: #{diallv_forward.16} parent=107 // loop_pre_header
                  _
                $region117: #{diallv_forward.16} parent=107 // loop_header
                  %s538 = sphi 0, %s542
                  %p539 = scmp.ge.s32.totalorder %s538, 1
                  %s543 = sphi %s496, %s496
                  %s544 = sphi %s504, %s504
                $region118: #{diallv_forward.16} parent=107 // loop_header_branch
                  %541 = sbr.rel (%p539) target = $region122
                $region119: #{diallv_forward.16} parent=107 // loop_body
                  %v545 = vld [vmem:[%s543] sm:%s536]
                  %546 = vst [vmem:[%s544] sm:%s536] %v545
                  %v547 = vld [vmem:[%s543 + $0x4] sm:%s536]
                  %548 = vst [vmem:[%s544 + $0xc] sm:%s536] %v547
                $region120: #{diallv_forward.16} parent=107 // loop_footer
                  %s542 = sadd.s32 1, %s538
                $region121: #{diallv_forward.16} parent=107 // loop_footer_branch
                  %537 = sbr.rel target = $region117
                $region122: #{diallv_forward.16} parent=107 // loop_exit
                  _
              $region108: #{diallv_forward.16} parent=92 // pred_fallthru
                _
            $region93: #{diallv_forward.16} parent=88 // pred_fallthru
              _
            // Predicated region
            $region94: #{diallv_forward.16} parent=88 // pred_check
              _
            $region95: #{diallv_forward.16} parent=88 // pred_check_branch
              %510 = sbr.rel (0) target = $region97
            $region96: #{diallv_forward.16} parent=88 // pred_region
              %s512 = ssub.s32 16, 1
              loop: start=0, step=1, limit=1
              $region98: #{diallv_forward.16} parent=96 // loop_pre_header
                _
              $region99: #{diallv_forward.16} parent=96 // loop_header
                %s514 = sphi 0, %s518
                %p515 = scmp.ge.s32.totalorder %s514, 1
                %s519 = sphi %s496, %s496
                %s520 = sphi %s504, %s504
              $region100: #{diallv_forward.16} parent=96 // loop_header_branch
                %517 = sbr.rel (%p515) target = $region104
              $region101: #{diallv_forward.16} parent=96 // loop_body
                %v521 = vld [vmem:[%s519] sm:%s512]
                %522 = vst [vmem:[%s520] sm:%s512] %v521
                %v523 = vld [vmem:[%s519 + $0x4] sm:%s512]
                %524 = vst [vmem:[%s520 + $0xc] sm:%s512] %v523
              $region102: #{diallv_forward.16} parent=96 // loop_footer
                %s518 = sadd.s32 1, %s514
              $region103: #{diallv_forward.16} parent=96 // loop_footer_branch
                %513 = sbr.rel target = $region99
              $region104: #{diallv_forward.16} parent=96 // loop_exit
                _
            $region97: #{diallv_forward.16} parent=88 // pred_fallthru
              _
          $region89: #{diallv_forward.16} parent=84 // pred_fallthru
            _
          %549 = vnop
        $region85: #{diallv_forward.16} parent=68 // pred_fallthru
          _
      $region69: #{diallv_forward.16} parent=5 // pred_fallthru
        _
      %p550 = scmp.le.s32.totalorder 2, %s9
      // Predicated region
      $region123: #{diallv_forward.16} parent=5 // pred_check
        %p551 = pneg %p550
      $region124: #{diallv_forward.16} parent=5 // pred_check_branch
        %553 = sbr.rel (%p551) target = $region126
      $region125: #{diallv_forward.16} parent=5 // pred_region
        %s554 = ssub.s32 %s9, 2
        // Predicated region
        $region127: #{diallv_forward.16} parent=125 // pred_check
          %p555 = pneg %p141
        $region128: #{diallv_forward.16} parent=125 // pred_check_branch
          %557 = sbr.rel (%p555) target = $region130
        $region129: #{diallv_forward.16} parent=125 // pred_region
          %s558 = sand.u32 %s126, 1
          %s559 = sand.u32 %s126, 1
          %s560 = smul.addr %s559, 8
          %s561 = scalar_lea.vmem [#allocation4], %s560
        $region130: #{diallv_forward.16} parent=125 // pred_fallthru
          _
      $region126: #{diallv_forward.16} parent=5 // pred_fallthru
        _
    $region6: #{diallv_forward.16} parent=1 // loop_footer
      %s13 = sadd.s32 1, %s9
    $region7: #{diallv_forward.16} parent=1 // loop_footer_branch
      %8 = sbr.rel target = $region3
    $region8: #{diallv_forward.16} parent=1 // loop_exit
      _

// kernel: diallv_forward.18
$region0: #{diallv_forward.18}
  #allocation0 [shape = 'u32[]', space=smem, size = 0x4, offset = 0x4, fixed_abs, tag = 'smem constant byte address 0x4 - core index']
  #allocation1 [shape = 'u32[144,128]{1,0:T(1,128)}', space=vmem, size = 0x12000, scoped, tag = 'internal scratch']
  #allocation2 [shape = 'f32[16,128]{1,0:T(8,128)}', space=vmem, size = 0x2000, scoped, tag = 'scratch operand']
  #allocation3 [shape = 'f32[16,1]{1,0:T(8,128)}', space=vmem, size = 0x2000, scoped, tag = 'scratch operand']
  #allocation4 [shape = 'f32[16,1]{1,0:T(8,128)}', space=vmem, size = 0x2000, scoped, tag = 'scratch operand']
  %s0 = inlined_call_operand.vmem [shape: bf16[16,128], index: 0, kind: input, shape index: {}]
  %s1 = inlined_call_operand.vmem [shape: bf16[128,128], index: 1, kind: input, shape index: {}]
  %s2 = inlined_call_operand.vmem [shape: f32[1,128], index: 2, kind: input, shape index: {}]
  %s3 = inlined_call_operand.vmem [shape: f32[16,128], index: 3, kind: output, shape index: {0}]
  %s4 = inlined_call_operand.vmem [shape: f32[16,1], index: 4, kind: output, shape index: {1}]
  %5 = xla_tuple %s3, %s4
  %s6 = sld [smem:[#allocation0]]
  $region42: #{diallv_forward.18} parent=0
    _
  %s8 = ssub.s32 1, %s6
  %s9 = scalar_select 0, %s8, %s6
  // Predicated region
  $region2: #{diallv_forward.18} parent=0 // pred_check
    _
  $region3: #{diallv_forward.18} parent=0 // pred_check_branch
    %11 = sbr.rel (0) target = $region5
  $region4: #{diallv_forward.18} parent=0 // pred_region
    _
  $region5: #{diallv_forward.18} parent=0 // pred_fallthru
    _
  // Predicated region
  $region6: #{diallv_forward.18} parent=0 // pred_check
    _
  $region7: #{diallv_forward.18} parent=0 // pred_check_branch
    %13 = sbr.rel (0) target = $region9
  $region8: #{diallv_forward.18} parent=0 // pred_region
    _
  $region9: #{diallv_forward.18} parent=0 // pred_fallthru
    _
  // Predicated region
  $region10: #{diallv_forward.18} parent=0 // pred_check
    _
  $region11: #{diallv_forward.18} parent=0 // pred_check_branch
    %15 = sbr.rel (0) target = $region13
  $region12: #{diallv_forward.18} parent=0 // pred_region
    _
  $region13: #{diallv_forward.18} parent=0 // pred_fallthru
    _
  %p17 = scmp.eq.s32.totalorder 0, 0
  // Predicated region
  $region14: #{diallv_forward.18} parent=0 // pred_check
    %p18 = pneg %p17
  $region15: #{diallv_forward.18} parent=0 // pred_check_branch
    %20 = sbr.rel (%p18) target = $region17
  $region16: #{diallv_forward.18} parent=0 // pred_region
    %21 = vst [vmem:[#allocation2] sm:$0xff] 0.0
    %22 = vst [vmem:[#allocation2 + $0x8] sm:$0xff] 0.0
  $region17: #{diallv_forward.18} parent=0 // pred_fallthru
    _
  %v23 = vld [vmem:[#allocation2] sm:$0xff]
  %v24 = vld [vmem:[#allocation2 + $0x8] sm:$0xff]
  %v25 = vld [vmem:[%s0] sm:$0xf]
  %v26 = vld [vmem:[%s0 + $0x4] sm:$0xf]
  %v27 = vld [vmem:[%s1] sm:$0xf]
  %v28 = vld [vmem:[%s1 + $0x4] sm:$0xf]
  %v29 = vld [vmem:[%s1 + $0x8] sm:$0xf]
  %v30 = vld [vmem:[%s1 + $0xc] sm:$0xf]
  %v31 = vld [vmem:[%s1 + $0x10] sm:$0xf]
  %v32 = vld [vmem:[%s1 + $0x14] sm:$0xf]
  %v33 = vld [vmem:[%s1 + $0x18] sm:$0xf]
  %v34 = vld [vmem:[%s1 + $0x1c] sm:$0xf]
  %v35 = vld [vmem:[%s1 + $0x20] sm:$0xf]
  %v36 = vld [vmem:[%s1 + $0x24] sm:$0xf]
  %v37 = vld [vmem:[%s1 + $0x28] sm:$0xf]
  %v38 = vld [vmem:[%s1 + $0x2c] sm:$0xf]
  %v39 = vld [vmem:[%s1 + $0x30] sm:$0xf]
  %v40 = vld [vmem:[%s1 + $0x34] sm:$0xf]
  %v41 = vld [vmem:[%s1 + $0x38] sm:$0xf]
  %v42 = vld [vmem:[%s1 + $0x3c] sm:$0xf]
  %v45 = vunpack.c.l.b16 %v25
  %v46 = vunpack.c.l.b16 %v26
  %v47 = vpack.c.b16 %v46, %v45
  %v65 = vunpack.c.l.b16 %v27
  %v66 = vunpack.c.l.b16 %v28
  %v67 = vunpack.c.l.b16 %v29
  %v68 = vunpack.c.l.b16 %v30
  %v69 = vunpack.c.l.b16 %v31
  %v70 = vunpack.c.l.b16 %v32
  %v71 = vunpack.c.l.b16 %v33
  %v72 = vunpack.c.l.b16 %v34
  %v73 = vunpack.c.l.b16 %v35
  %v74 = vunpack.c.l.b16 %v36
  %v75 = vunpack.c.l.b16 %v37
  %v76 = vunpack.c.l.b16 %v38
  %v77 = vunpack.c.l.b16 %v39
  %v78 = vunpack.c.l.b16 %v40
  %v79 = vunpack.c.l.b16 %v41
  %v80 = vunpack.c.l.b16 %v42
  %v81 = vpack.c.b16 %v66, %v65
  %v82 = vpack.c.b16 %v68, %v67
  %v83 = vpack.c.b16 %v70, %v69
  %v84 = vpack.c.b16 %v72, %v71
  %v85 = vpack.c.b16 %v74, %v73
  %v86 = vpack.c.b16 %v76, %v75
  %v87 = vpack.c.b16 %v78, %v77
  %v88 = vpack.c.b16 %v80, %v79
  %97 = vmatprep.subr.bf16.mxu0 0
  %98 = vmatpush1.bf16.msra.mxu0 %v88
  %99 = vmatprep.subr.bf16.mxu0 0
  %100 = vmatpush1.bf16.msra.mxu0 %v87
  %101 = vmatprep.subr.bf16.mxu0 0
  %102 = vmatpush1.bf16.msra.mxu0 %v86
  %103 = vmatprep.subr.bf16.mxu0 0
  %104 = vmatpush1.bf16.msra.mxu0 %v85
  %105 = vmatprep.subr.bf16.mxu0 0
  %106 = vmatpush1.bf16.msra.mxu0 %v84
  %107 = vmatprep.subr.bf16.mxu0 0
  %108 = vmatpush1.bf16.msra.mxu0 %v83
  %109 = vmatprep.subr.bf16.mxu0 0
  %110 = vmatpush1.bf16.msra.mxu0 %v82
  %111 = vmatprep.subr.bf16.mxu0 0
  %112 = vmatpush1.bf16.msra.mxu0 %v81
  %113 = vmatprep.subr.bf16.mxu0 0
  %114 = vmatpush2.bf16.msra.mxu0 0
  %115 = vmatprep.subr.bf16.mxu0 0
  %116 = vmatpush2.bf16.msra.mxu0 0
  %117 = vmatprep.subr.bf16.mxu0 0
  %118 = vmatpush2.bf16.msra.mxu0 0
  %119 = vmatprep.subr.bf16.mxu0 0
  %120 = vmatpush2.bf16.msra.mxu0 0
  %121 = vmatprep.subr.bf16.mxu0 0
  %122 = vmatpush2.bf16.msra.mxu0 0
  %123 = vmatprep.subr.bf16.mxu0 0
  %124 = vmatpush2.bf16.msra.mxu0 0
  %125 = vmatprep.subr.bf16.mxu0 0
  %126 = vmatpush2.bf16.msra.mxu0 0
  %127 = vmatprep.subr.bf16.mxu0 0
  %128 = vmatpush2.bf16.msra.mxu0 0
  %129 = vmatprep.mubr.bf16.mxu0 0
  %130 = vmatmul.mubr.bf16.gmra.mxu0 %v47
  %v131 = vpop.f32.mrf.mxu0
  %v132 = vadd.f32 0.0, %v131
  %v133 = vpop.f32.mrf.mxu0
  %v134 = vpop.f32.mrf.mxu0
  %v135 = vadd.f32 0.0, %v134
  %v136 = vpop.f32.mrf.mxu0
  %137 = vdwg.mxu0
  %v138 = vadd.f32 %v23, %v132
  %v139 = vadd.f32 %v24, %v135
  %140 = vst [vmem:[#allocation2] sm:$0xff] %v138
  %141 = vst [vmem:[#allocation2 + $0x8] sm:$0xff] %v139
  // Predicated region
  $region18: #{diallv_forward.18} parent=0 // pred_check
    %p142 = pneg %p17
  $region19: #{diallv_forward.18} parent=0 // pred_check_branch
    %144 = sbr.rel (%p142) target = $region21
  $region20: #{diallv_forward.18} parent=0 // pred_region
    %v145 = vld [vmem:[#allocation2] sm:$0xff]
    %v146 = vld [vmem:[#allocation2 + $0x8] sm:$0xff]
    %v147 = vld [vmem:[%s2] sm:$0x1]
    %v149 = vlaneseq
    %v150 = vshrl.u32 %v149, 7
    %v151 = vsub.s32 0, %v150
    %v152 = vrot.slane %v147, %v151
    %v154 = vadd.f32 %v145, %v152
    %v155 = vadd.f32 %v146, %v152
    %156 = vst [vmem:[%s3] sm:$0xff] %v154
    %157 = vst [vmem:[%s3 + $0x8] sm:$0xff] %v155
    %s158 = smul.u32 0, 128
    %v159 = vlaneseq
    %v160 = vand.u32 %v159, 127
    %v161 = vstv %s158
    %v162 = vadd.s32 %v161, %v160
    %vm163 = vcmp.lt.s32.totalorder %v162, 32
    %v164 = vsel %vm163, %v154, -inf
    %v165 = vsel %vm163, %v155, -inf
    %166 = vmax.xlane.f32.xlu0 %v164
    %v167 = vpop.xlane.xlu0 %166
    %168 = vmax.xlane.f32.xlu0 %v165
    %v169 = vpop.xlane.xlu0 %168
    %v170 = vmax.f32 %v167, -1e+30
    %v171 = vmax.f32 %v169, -1e+30
    %v172 = vsub.f32 %v154, %v170
    %v173 = vsub.f32 %v155, %v171
    %v174 = vmul.f32 %v172, 1.442695
    %v175 = vpow.pop %v174
    %v176 = vmul.f32 %v173, 1.442695
    %v177 = vpow.pop %v176
    %v178 = vsel %vm163, %v175, 0.0
    %v179 = vsel %vm163, %v177, 0.0
    %180 = vadd.xlane.f32.xlu0 %v178
    %v181 = vpop.xlane.xlu0 %180
    %182 = vadd.xlane.f32.xlu0 %v179
    %v183 = vpop.xlane.xlu0 %182
    %p184 = scmp.eq.s32.totalorder 0, 0
    %v185 = vld [vmem:[#allocation3] sm:$0xff]
    %v186 = vld [vmem:[#allocation3 + $0x8] sm:$0xff]
    %s187 = scalar_select %p184, 1, 0
    %v188 = vstv %s187
    %vm189 = vcmp.eq.s32.totalorder %v188, 1
    %v190 = vsel %vm189, -1e+30, %v185
    %v191 = vsel %vm189, -1e+30, %v186
    %v192 = vld [vmem:[#allocation4] sm:$0xff]
    %v193 = vld [vmem:[#allocation4 + $0x8] sm:$0xff]
    %v194 = vsel %vm189, 0.0, %v192
    %v195 = vsel %vm189, 0.0, %v193
    %v196 = vmax.f32 %v190, %v170
    %v197 = vmax.f32 %v191, %v171
    %v198 = vsub.f32 %v190, %v196
    %v199 = vsub.f32 %v191, %v197
    %v200 = vmul.f32 %v198, 1.442695
    %v201 = vpow.pop %v200
    %v202 = vmul.f32 %v199, 1.442695
    %v203 = vpow.pop %v202
    %v204 = vmul.f32 %v194, %v201
    %v205 = vmul.f32 %v195, %v203
    %v206 = vsub.f32 %v170, %v196
    %v207 = vsub.f32 %v171, %v197
    %v208 = vmul.f32 %v206, 1.442695
    %v209 = vpow.pop %v208
    %v210 = vmul.f32 %v207, 1.442695
    %v211 = vpow.pop %v210
    %v212 = vmul.f32 %v181, %v209
    %v213 = vmul.f32 %v183, %v211
    %v214 = vadd.f32 %v204, %v212
    %v215 = vadd.f32 %v205, %v213
    %vm216 = vcmask 7168
    %217 = vst.msk [vmem:[#allocation4] sm:$0xff] %vm216, %v214
    %218 = vst.msk [vmem:[#allocation4 + $0x8] sm:$0xff] %vm216, %v215
    %219 = vst.msk [vmem:[#allocation3] sm:$0xff] %vm216, %v196
    %220 = vst.msk [vmem:[#allocation3 + $0x8] sm:$0xff] %vm216, %v197
  $region21: #{diallv_forward.18} parent=0 // pred_fallthru
    _
  %p221 = scmp.eq.s32.totalorder 0, 0
  %p222 = pnand %p17, %p221
  %p223 = pneg %p222
  // Predicated region
  $region22: #{diallv_forward.18} parent=0 // pred_check
    _
  $region23: #{diallv_forward.18} parent=0 // pred_check_branch
    %225 = sbr.rel (%p222) target = $region25
  $region24: #{diallv_forward.18} parent=0 // pred_region
    %v226 = vld [vmem:[#allocation3] sm:$0xff]
    %v227 = vld [vmem:[#allocation3 + $0x8] sm:$0xff]
    %v228 = vld [vmem:[#allocation4] sm:$0xff]
    %v229 = vld [vmem:[#allocation4 + $0x8] sm:$0xff]
    %v230 = vlog2.pop %v228
    %v231 = vmul.f32 %v230, 0.6931472
    %v232 = vlog2.pop %v229
    %v233 = vmul.f32 %v232, 0.6931472
    %v234 = vadd.f32 %v226, %v231
    %v235 = vadd.f32 %v227, %v233
    %vm236 = vcmask 7168
    %237 = vst.msk [vmem:[%s4] sm:$0xff] %vm236, %v234
    %238 = vst.msk [vmem:[%s4 + $0x8] sm:$0xff] %vm236, %v235
  $region25: #{diallv_forward.18} parent=0 // pred_fallthru
    _
  // Predicated region
  $region26: #{diallv_forward.18} parent=0 // pred_check
    _
  $region27: #{diallv_forward.18} parent=0 // pred_check_branch
    %240 = sbr.rel (0) target = $region29
  $region28: #{diallv_forward.18} parent=0 // pred_region
    _
  $region29: #{diallv_forward.18} parent=0 // pred_fallthru
    _
  // Predicated region
  $region30: #{diallv_forward.18} parent=0 // pred_check
    _
  $region31: #{diallv_forward.18} parent=0 // pred_check_branch
    %242 = sbr.rel (0) target = $region33
  $region32: #{diallv_forward.18} parent=0 // pred_region
    _
  $region33: #{diallv_forward.18} parent=0 // pred_fallthru
    _
  // Predicated region
  $region34: #{diallv_forward.18} parent=0 // pred_check
    _
  $region35: #{diallv_forward.18} parent=0 // pred_check_branch
    %244 = sbr.rel (0) target = $region37
  $region36: #{diallv_forward.18} parent=0 // pred_region
    _
  $region37: #{diallv_forward.18} parent=0 // pred_fallthru
    _
  // Predicated region
  $region38: #{diallv_forward.18} parent=0 // pred_check
    _
  $region39: #{diallv_forward.18} parent=0 // pred_check_branch
    %246 = sbr.rel (0) target = $region41
  $region40: #{diallv_forward.18} parent=0 // pred_region
    _
  $region41: #{diallv_forward.18} parent=0 // pred_fallthru
    _

// kernel: diallv_forward.19
$region0: #{diallv_forward.19}
  #allocation0 [shape = 'u32[]', space=smem, size = 0x4, offset = 0x4, fixed_abs, tag = 'smem constant byte address 0x4 - core index']
  #allocation1 [shape = 'u32[144,128]{1,0:T(1,128)}', space=vmem, size = 0x12000, scoped, tag = 'internal scratch']
  %s0 = inlined_call_operand.vmem [shape: f32[16,128], index: 0, kind: input, shape index: {}]
  %s1 = inlined_call_operand.vmem [shape: f32[16,1], index: 1, kind: input, shape index: {}]
  %s2 = inlined_call_operand.hbm [shape: f32[16,128], index: 2, kind: output, shape index: {}]
  %s3 = sld [smem:[#allocation0]]
  $region18: #{diallv_forward.19} parent=0
    _
  %s5 = ssub.s32 1, %s3
  %s6 = scalar_select 0, %s5, %s3
  $region1: #{diallv_forward.19} parent=0
    #allocation2 [shape = 'u8[8192]{0}', space=vmem, size = 0x2000, scoped, tag = 'output window, operand 0, single buffered']
    #allocation3 [shape = 's32[1]{0}', space=sflag, size = 0x4, scoped, tag = 'scoped memory for diallv_forward.19']
    %7 = vsyncpa [#allocation3], 0
    // Predicated region
    $region2: #{diallv_forward.19} parent=1 // pred_check
      _
    $region3: #{diallv_forward.19} parent=1 // pred_check_branch
      %9 = sbr.rel (0) target = $region5
    $region4: #{diallv_forward.19} parent=1 // pred_region
      _
    $region5: #{diallv_forward.19} parent=1 // pred_fallthru
      _
    // Predicated region
    $region6: #{diallv_forward.19} parent=1 // pred_check
      _
    $region7: #{diallv_forward.19} parent=1 // pred_check_branch
      %11 = sbr.rel (0) target = $region9
    $region8: #{diallv_forward.19} parent=1 // pred_region
      _
    $region9: #{diallv_forward.19} parent=1 // pred_fallthru
      _
    %v12 = vld [vmem:[%s0] sm:$0xff]
    %v13 = vld [vmem:[%s0 + $0x8] sm:$0xff]
    %v14 = vld [vmem:[%s1] sm:$0xff]
    %v15 = vld [vmem:[%s1 + $0x8] sm:$0xff]
    %17 = vset.pattern.permute.xlu0 0
    %18 = vperm.xlu0 %17, %v14
    %v19 = vpop.permute.xlu0 %18
    %22 = vset.pattern.permute.xlu0 0
    %23 = vperm.xlu0 %22, %v15
    %v24 = vpop.permute.xlu0 %23
    %v26 = vsub.f32 %v12, %v19
    %v27 = vsub.f32 %v13, %v24
    %28 = vst [vmem:[#allocation2] sm:$0xff] %v26
    %29 = vst [vmem:[#allocation2 + $0x8] sm:$0xff] %v27
    // Predicated region
    $region10: #{diallv_forward.19} parent=1 // pred_check
      _
    $region11: #{diallv_forward.19} parent=1 // pred_check_branch
      %31 = sbr.rel (0) target = $region13
    $region12: #{diallv_forward.19} parent=1 // pred_region
      %s33 = ssub.s32 256, 256
      %34 = vsyncadd [#allocation3], %s33
      %s35 = sshll.u32 [#allocation2], 4
      %s36 = int_to_ptr.vmem [resolvable:$true] %s35
      %41 = dma.vmem_to_hbm [thread:$0]  %s36, 256, %s2, [#allocation3], 128, 128, 8
    $region13: #{diallv_forward.19} parent=1 // pred_fallthru
      _
    // Predicated region
    $region14: #{diallv_forward.19} parent=1 // pred_check
      _
    $region15: #{diallv_forward.19} parent=1 // pred_check_branch
      %43 = sbr.rel (0) target = $region17
    $region16: #{diallv_forward.19} parent=1 // pred_region
      %44 = dma.done [#allocation3], 256
    $region17: #{diallv_forward.19} parent=1 // pred_fallthru
      _
    %45 = vsyncpa [#allocation3], 1

// kernel: diallv_forward.12
$region0: #{diallv_forward.12}
  #allocation0 [shape = 'u32[]', space=smem, size = 0x4, offset = 0x4, fixed_abs, tag = 'smem constant byte address 0x4 - core index']
  #allocation1 [shape = 'u32[144,128]{1,0:T(1,128)}', space=vmem, size = 0x12000, scoped, tag = 'internal scratch']
  #allocation2 [shape = 'f32[2,8,128]{2,1,0:T(8,128)}', space=vmem, size = 0x2000, scoped, tag = 'scratch operand']
  %s0 = inlined_call_operand.vmem [shape: bf16[4,8,8,384], index: 0, kind: input, shape index: {}]
  %s1 = inlined_call_operand.vmem [shape: f32[4,8,128], index: 1, kind: input, shape index: {}]
  %s2 = inlined_call_operand.vmem [shape: s32[4,8,1], index: 2, kind: input, shape index: {}]
  %s3 = inlined_call_operand.vmem [shape: bf16[4,128,384], index: 3, kind: input, shape index: {}]
  %s4 = inlined_call_operand.vmem [shape: f32[4,1,384], index: 4, kind: input, shape index: {}]
  %s5 = inlined_call_operand.vmem [shape: f32[4,8,128], index: 5, kind: output, shape index: {}]
  %s6 = sld [smem:[#allocation0]]
  $region57: #{diallv_forward.12} parent=0
    _
  %s8 = ssub.s32 1, %s6
  %s9 = scalar_select 0, %s8, %s6
  loop: start=0, step=1, limit=4
  $region2: #{diallv_forward.12} parent=0 // loop_pre_header
    _
  $region3: #{diallv_forward.12} parent=0 // loop_header
    %s11 = sphi 0, %s15
    %p12 = scmp.ge.s32.totalorder %s11, 4
    %s18 = sphi 0, %s30
    %s19 = sphi 0, %s26
    %s20 = sphi 0, %s18
    %s21 = sphi 0, %s19
    %s22 = sphi 0, %s20
    %s23 = sphi 0, %s21
    %s35 = sphi 0, %s37
    %s38 = sphi 0, %s35
    %s39 = sphi 0, %s38
    %s55 = sphi 0, %s39
    %s61 = sphi 0, %s63
    %s64 = sphi 0, %s61
    %s65 = sphi 0, %s64
    %s81 = sphi 0, %s65
    %s87 = sphi 0, %s89
    %s90 = sphi 0, %s87
    %s91 = sphi 0, %s90
    %s107 = sphi 0, %s91
    %s113 = sphi 0, %s115
    %s116 = sphi 0, %s113
    %s117 = sphi 0, %s116
    %s133 = sphi 0, %s117
    %s139 = sphi 0, %s141
    %s142 = sphi 0, %s139
    %s143 = sphi 0, %s142
    %s159 = sphi 0, %s143
    %s165 = sphi 0, %s167
    %s168 = sphi 0, %s165
    %s169 = sphi 0, %s168
    %s185 = sphi 0, %s169
  $region4: #{diallv_forward.12} parent=0 // loop_header_branch
    %14 = sbr.rel (%p12) target = $region8
  $region5: #{diallv_forward.12} parent=0 // loop_body
    %s16 = ssub.s32 %s11, 1
    %s17 = ssub.s32 %s11, 2
    %s24 = sadd.s32 1, %s19
    %p25 = scmp.ge.s32.totalorder %s24, 1
    %s26 = scalar_select %p25, 0, %s24
    %s27 = sadd.s32 1, %s18
    %s28 = scalar_select %p25, %s27, %s18
    %p29 = scmp.ge.s32.totalorder %s28, 2
    %s30 = scalar_select %p29, 0, %s28
    %s31 = ssub.s32 %s18, %s30
    %s32 = ssub.s32 %s19, %s26
    %s33 = sor.u32 %s31, %s32
    %p34 = scmp.eq.s32.totalorder %s33, 0
    %s36 = sadd.s32 %s35, 1
    %s37 = scalar_select %p34, %s35, %s36
    %p40 = pneg %p34
    %p41 = scmp.eq.s32.totalorder %s11, 1
    %p42 = por %p40, %p41
    %p43 = scmp.ne.s32.totalorder %s35, %s38
    %p44 = scmp.eq.s32.totalorder %s11, 0
    %p45 = por %p43, %p44
    %p46 = scmp.ne.s32.totalorder %s35, %s38
    %p47 = scmp.eq.s32.totalorder %s16, 1
    %p48 = por %p46, %p47
    %p49 = scmp.ne.s32.totalorder %s38, %s39
    %p50 = scmp.eq.s32.totalorder %s16, 0
    %p51 = por %p49, %p50
    %p52 = scmp.ne.s32.totalorder %s38, %s39
    %p53 = scmp.eq.s32.totalorder %s17, 1
    %p54 = por %p52, %p53
    %p56 = scmp.ne.s32.totalorder %s39, %s55
    %p57 = scmp.eq.s32.totalorder %s17, 0
    %p58 = por %p56, %p57
    %s59 = ssub.s32 %s18, %s30
    %p60 = scmp.eq.s32.totalorder %s59, 0
    %s62 = sadd.s32 %s61, 1
    %s63 = scalar_select %p60, %s61, %s62
    %p66 = pneg %p60
    %p67 = scmp.eq.s32.totalorder %s11, 1
    %p68 = por %p66, %p67
    %p69 = scmp.ne.s32.totalorder %s61, %s64
    %p70 = scmp.eq.s32.totalorder %s11, 0
    %p71 = por %p69, %p70
    %p72 = scmp.ne.s32.totalorder %s61, %s64
    %p73 = scmp.eq.s32.totalorder %s16, 1
    %p74 = por %p72, %p73
    %p75 = scmp.ne.s32.totalorder %s64, %s65
    %p76 = scmp.eq.s32.totalorder %s16, 0
    %p77 = por %p75, %p76
    %p78 = scmp.ne.s32.totalorder %s64, %s65
    %p79 = scmp.eq.s32.totalorder %s17, 1
    %p80 = por %p78, %p79
    %p82 = scmp.ne.s32.totalorder %s65, %s81
    %p83 = scmp.eq.s32.totalorder %s17, 0
    %p84 = por %p82, %p83
    %s85 = ssub.s32 %s18, %s30
    %p86 = scmp.eq.s32.totalorder %s85, 0
    %s88 = sadd.s32 %s87, 1
    %s89 = scalar_select %p86, %s87, %s88
    %p92 = pneg %p86
    %p93 = scmp.eq.s32.totalorder %s11, 1
    %p94 = por %p92, %p93
    %p95 = scmp.ne.s32.totalorder %s87, %s90
    %p96 = scmp.eq.s32.totalorder %s11, 0
    %p97 = por %p95, %p96
    %p98 = scmp.ne.s32.totalorder %s87, %s90
    %p99 = scmp.eq.s32.totalorder %s16, 1
    %p100 = por %p98, %p99
    %p101 = scmp.ne.s32.totalorder %s90, %s91
    %p102 = scmp.eq.s32.totalorder %s16, 0
    %p103 = por %p101, %p102
    %p104 = scmp.ne.s32.totalorder %s90, %s91
    %p105 = scmp.eq.s32.totalorder %s17, 1
    %p106 = por %p104, %p105
    %p108 = scmp.ne.s32.totalorder %s91, %s107
    %p109 = scmp.eq.s32.totalorder %s17, 0
    %p110 = por %p108, %p109
    %s111 = ssub.s32 %s18, %s30
    %p112 = scmp.eq.s32.totalorder %s111, 0
    %s114 = sadd.s32 %s113, 1
    %s115 = scalar_select %p112, %s113, %s114
    %p118 = pneg %p112
    %p119 = scmp.eq.s32.totalorder %s11, 1
    %p120 = por %p118, %p119
    %p121 = scmp.ne.s32.totalorder %s113, %s116
    %p122 = scmp.eq.s32.totalorder %s11, 0
    %p123 = por %p121, %p122
    %p124 = scmp.ne.s32.totalorder %s113, %s116
    %p125 = scmp.eq.s32.totalorder %s16, 1
    %p126 = por %p124, %p125
    %p127 = scmp.ne.s32.totalorder %s116, %s117
    %p128 = scmp.eq.s32.totalorder %s16, 0
    %p129 = por %p127, %p128
    %p130 = scmp.ne.s32.totalorder %s116, %s117
    %p131 = scmp.eq.s32.totalorder %s17, 1
    %p132 = por %p130, %p131
    %p134 = scmp.ne.s32.totalorder %s117, %s133
    %p135 = scmp.eq.s32.totalorder %s17, 0
    %p136 = por %p134, %p135
    %s137 = ssub.s32 %s18, %s30
    %p138 = scmp.eq.s32.totalorder %s137, 0
    %s140 = sadd.s32 %s139, 1
    %s141 = scalar_select %p138, %s139, %s140
    %p144 = pneg %p138
    %p145 = scmp.eq.s32.totalorder %s11, 1
    %p146 = por %p144, %p145
    %p147 = scmp.ne.s32.totalorder %s139, %s142
    %p148 = scmp.eq.s32.totalorder %s11, 0
    %p149 = por %p147, %p148
    %p150 = scmp.ne.s32.totalorder %s139, %s142
    %p151 = scmp.eq.s32.totalorder %s16, 1
    %p152 = por %p150, %p151
    %p153 = scmp.ne.s32.totalorder %s142, %s143
    %p154 = scmp.eq.s32.totalorder %s16, 0
    %p155 = por %p153, %p154
    %p156 = scmp.ne.s32.totalorder %s142, %s143
    %p157 = scmp.eq.s32.totalorder %s17, 1
    %p158 = por %p156, %p157
    %p160 = scmp.ne.s32.totalorder %s143, %s159
    %p161 = scmp.eq.s32.totalorder %s17, 0
    %p162 = por %p160, %p161
    %s163 = ssub.s32 %s18, %s30
    %p164 = scmp.eq.s32.totalorder %s163, 0
    %s166 = sadd.s32 %s165, 1
    %s167 = scalar_select %p164, %s165, %s166
    %p170 = pneg %p164
    %p171 = scmp.eq.s32.totalorder %s11, 1
    %p172 = por %p170, %p171
    %p173 = scmp.ne.s32.totalorder %s165, %s168
    %p174 = scmp.eq.s32.totalorder %s11, 0
    %p175 = por %p173, %p174
    %p176 = scmp.ne.s32.totalorder %s165, %s168
    %p177 = scmp.eq.s32.totalorder %s16, 1
    %p178 = por %p176, %p177
    %p179 = scmp.ne.s32.totalorder %s168, %s169
    %p180 = scmp.eq.s32.totalorder %s16, 0
    %p181 = por %p179, %p180
    %p182 = scmp.ne.s32.totalorder %s168, %s169
    %p183 = scmp.eq.s32.totalorder %s17, 1
    %p184 = por %p182, %p183
    %p186 = scmp.ne.s32.totalorder %s169, %s185
    %p187 = scmp.eq.s32.totalorder %s17, 0
    %p188 = por %p186, %p187
    %p189 = scmp.le.s32.totalorder 1, %s11
    %p190 = scmp.lt.s32.totalorder %s11, 3
    %p191 = pnand %p189, %p190
    %p192 = pneg %p191
    // Predicated region
    $region9: #{diallv_forward.12} parent=5 // pred_check
      _
    $region10: #{diallv_forward.12} parent=5 // pred_check_branch
      %194 = sbr.rel (%p191) target = $region12
    $region11: #{diallv_forward.12} parent=5 // pred_region
      %s195 = ssub.s32 %s11, 1
    $region12: #{diallv_forward.12} parent=5 // pred_fallthru
      _
    %p196 = scmp.lt.s32.totalorder %s11, 2
    // Predicated region
    $region13: #{diallv_forward.12} parent=5 // pred_check
      %p197 = pneg %p196
    $region14: #{diallv_forward.12} parent=5 // pred_check_branch
      %199 = sbr.rel (%p197) target = $region16
    $region15: #{diallv_forward.12} parent=5 // pred_region
      // Predicated region
      $region17: #{diallv_forward.12} parent=15 // pred_check
        %p200 = pneg %p45
      $region18: #{diallv_forward.12} parent=15 // pred_check_branch
        %202 = sbr.rel (%p200) target = $region20
      $region19: #{diallv_forward.12} parent=15 // pred_region
        %s203 = smul.u32 2, %s18
        %s204 = smul.u32 8, %s19
        %p205 = scmp.lt.s32.totalorder %s203, 3
        %s206 = scalar_select %p205, %s203, 3
        %p207 = scmp.lt.s32.totalorder %s204, 7
        %s208 = scalar_select %p207, %s204, 7
        %s209 = smul.addr %s208, 3
        %s210 = smul.addr %s206, 24
        %s211 = sadd.s32 %s209, %s210
        %s212 = smul.addr %s211, 4
        %s213 = scalar_lea.vmem %s0, %s212
        %s214 = smul.u32 2, %s18
        %s215 = smul.u32 8, %s19
      $region20: #{diallv_forward.12} parent=15 // pred_fallthru
        _
      // Predicated region
      $region21: #{diallv_forward.12} parent=15 // pred_check
        %p216 = pneg %p71
      $region22: #{diallv_forward.12} parent=15 // pred_check_branch
        %218 = sbr.rel (%p216) target = $region24
      $region23: #{diallv_forward.12} parent=15 // pred_region
        %s219 = smul.u32 2, %s18
        %p220 = scmp.lt.s32.totalorder %s219, 3
        %s221 = scalar_select %p220, %s219, 3
        %s222 = smul.addr %s221, 8
        %s223 = scalar_lea.vmem %s1, %s222
        %s224 = smul.u32 2, %s18
      $region24: #{diallv_forward.12} parent=15 // pred_fallthru
        _
      // Predicated region
      $region25: #{diallv_forward.12} parent=15 // pred_check
        %p225 = pneg %p97
      $region26: #{diallv_forward.12} parent=15 // pred_check_branch
        %227 = sbr.rel (%p225) target = $region28
      $region27: #{diallv_forward.12} parent=15 // pred_region
        %s228 = smul.u32 2, %s18
        %p229 = scmp.lt.s32.totalorder %s228, 3
        %s230 = scalar_select %p229, %s228, 3
        %s231 = smul.addr %s230, 8
        %s232 = scalar_lea.vmem %s2, %s231
        %s233 = smul.u32 2, %s18
      $region28: #{diallv_forward.12} parent=15 // pred_fallthru
        _
      // Predicated region
      $region29: #{diallv_forward.12} parent=15 // pred_check
        %p234 = pneg %p123
      $region30: #{diallv_forward.12} parent=15 // pred_check_branch
        %236 = sbr.rel (%p234) target = $region32
      $region31: #{diallv_forward.12} parent=15 // pred_region
        %s237 = smul.u32 2, %s18
        %p238 = scmp.lt.s32.totalorder %s237, 3
        %s239 = scalar_select %p238, %s237, 3
        %s240 = smul.addr %s239, 48
        %s241 = smul.addr %s240, 4
        %s242 = scalar_lea.vmem %s3, %s241
        %s243 = smul.u32 2, %s18
      $region32: #{diallv_forward.12} parent=15 // pred_fallthru
        _
      // Predicated region
      $region33: #{diallv_forward.12} parent=15 // pred_check
        %p244 = pneg %p149
      $region34: #{diallv_forward.12} parent=15 // pred_check_branch
        %246 = sbr.rel (%p244) target = $region36
      $region35: #{diallv_forward.12} parent=15 // pred_region
        %s247 = smul.u32 2, %s18
        %p248 = scmp.lt.s32.totalorder %s247, 3
        %s249 = scalar_select %p248, %s247, 3
        %s250 = smul.addr %s249, 3
        %s251 = scalar_lea.vmem %s4, %s250
        %s252 = smul.u32 2, %s18
      $region36: #{diallv_forward.12} parent=15 // pred_fallthru
        _
    $region16: #{diallv_forward.12} parent=5 // pred_fallthru
      _
    %p253 = scmp.le.s32.totalorder 1, %s11
    %p254 = scmp.lt.s32.totalorder %s11, 3
    %p255 = pnand %p253, %p254
    %p256 = pneg %p255
    // Predicated region
    $region37: #{diallv_forward.12} parent=5 // pred_check
      _
    $region38: #{diallv_forward.12} parent=5 // pred_check_branch
      %258 = sbr.rel (%p255) target = $region40
    $region39: #{diallv_forward.12} parent=5 // pred_region
      %s259 = ssub.s32 %s11, 1
      %s260 = smul.u32 2, %s20
      %s261 = smul.u32 8, %s21
      %p262 = scmp.lt.s32.totalorder %s260, 3
      %s263 = scalar_select %p262, %s260, 3
      %p264 = scmp.lt.s32.totalorder %s261, 7
      %s265 = scalar_select %p264, %s261, 7
      %s266 = smul.addr %s265, 3
      %s267 = smul.addr %s263, 24
      %s268 = sadd.s32 %s266, %s267
      %s269 = smul.addr %s268, 4
      %s270 = scalar_lea.vmem %s0, %s269
      %p271 = pneg %p51
      %p272 = pneg %p48
      %s273 = smul.u32 2, %s20
      %p274 = scmp.lt.s32.totalorder %s273, 3
      %s275 = scalar_select %p274, %s273, 3
      %s276 = smul.addr %s275, 8
      %s277 = scalar_lea.vmem %s1, %s276
      %p278 = pneg %p77
      %p279 = pneg %p74
      %s280 = smul.u32 2, %s20
      %p281 = scmp.lt.s32.totalorder %s280, 3
      %s282 = scalar_select %p281, %s280, 3
      %s283 = smul.addr %s282, 8
      %s284 = scalar_lea.vmem %s2, %s283
      %p285 = pneg %p103
      %p286 = pneg %p100
      %s287 = smul.u32 2, %s20
      %p288 = scmp.lt.s32.totalorder %s287, 3
      %s289 = scalar_select %p288, %s287, 3
      %s290 = smul.addr %s289, 48
      %s291 = smul.addr %s290, 4
      %s292 = scalar_lea.vmem %s3, %s291
      %p293 = pneg %p129
      %p294 = pneg %p126
      %s295 = smul.u32 2, %s20
      %p296 = scmp.lt.s32.totalorder %s295, 3
      %s297 = scalar_select %p296, %s295, 3
      %s298 = smul.addr %s297, 3
      %s299 = scalar_lea.vmem %s4, %s298
      %p300 = pneg %p155
      %p301 = pneg %p152
      %p302 = pneg %p181
      %p303 = pneg %p178
      %s304 = smul.u32 2, %s20
      %p305 = scmp.lt.s32.totalorder %s304, 3
      %s306 = scalar_select %p305, %s304, 3
      %s307 = smul.addr %s306, 8
      %s308 = scalar_lea.vmem %s5, %s307
      %s309 = smul.u32 2, %s20
      %s310 = smul.u32 8, %s21
      %p311 = scmp.lt.s32.totalorder %s309, 3
      %s312 = scalar_select %p311, %s309, 3
      %p313 = scmp.lt.s32.totalorder %s310, 7
      %s314 = scalar_select %p313, %s310, 7
      %s315 = smul.addr %s314, 3
      %s316 = smul.addr %s312, 24
      %s317 = sadd.s32 %s315, %s316
      %s318 = smul.addr %s317, 4
      %s319 = scalar_lea.vmem %s0, %s318
      %s320 = smul.u32 2, %s20
      %s321 = smul.u32 8, %s21
      %s322 = smul.u32 2, %s20
      %p323 = scmp.lt.s32.totalorder %s322, 3
      %s324 = scalar_select %p323, %s322, 3
      %s325 = smul.addr %s324, 8
      %s326 = scalar_lea.vmem %s1, %s325
      %s327 = smul.u32 2, %s20
      %s328 = smul.u32 2, %s20
      %p329 = scmp.lt.s32.totalorder %s328, 3
      %s330 = scalar_select %p329, %s328, 3
      %s331 = smul.addr %s330, 8
      %s332 = scalar_lea.vmem %s2, %s331
      %s333 = smul.u32 2, %s20
      %s334 = smul.u32 2, %s20
      %p335 = scmp.lt.s32.totalorder %s334, 3
      %s336 = scalar_select %p335, %s334, 3
      %s337 = smul.addr %s336, 48
      %s338 = smul.addr %s337, 4
      %s339 = scalar_lea.vmem %s3, %s338
      %s340 = smul.u32 2, %s20
      %s341 = smul.u32 2, %s20
      %p342 = scmp.lt.s32.totalorder %s341, 3
      %s343 = scalar_select %p342, %s341, 3
      %s344 = smul.addr %s343, 3
      %s345 = scalar_lea.vmem %s4, %s344
      %s346 = smul.u32 2, %s20
      %s347 = smul.u32 2, %s20
      %p348 = scmp.lt.s32.totalorder %s347, 3
      %s349 = scalar_select %p348, %s347, 3
      %s350 = smul.addr %s349, 8
      %s351 = scalar_lea.vmem %s5, %s350
      %s352 = smul.u32 2, %s20
      %p354 = scmp.eq.s32.totalorder %s21, 0
      // Predicated region
      $region41: #{diallv_forward.12} parent=39 // pred_check
        %p355 = pneg %p354
      $region42: #{diallv_forward.12} parent=39 // pred_check_branch
        %357 = sbr.rel (%p355) target = $region44
      $region43: #{diallv_forward.12} parent=39 // pred_region
        %v358 = vld [vmem:[%s326] sm:$0xff]
        %v359 = vld [vmem:[%s326 + $0x8] sm:$0xff]
        %360 = vst [vmem:[#allocation2] sm:$0xff] %v358
        %361 = vst [vmem:[#allocation2 + $0x8] sm:$0xff] %v359
      $region44: #{diallv_forward.12} parent=39 // pred_fallthru
        _
      %v362 = vld [vmem:[%s339] sm:$0xff]
      %v363 = vld [vmem:[%s339 + $0x8] sm:$0xf]
      %v364 = vld [vmem:[%s339 + $0xc] sm:$0xff]
      %v365 = vld [vmem:[%s339 + $0x14] sm:$0xf]
      %v366 = vld [vmem:[%s339 + $0x18] sm:$0xff]
      %v367 = vld [vmem:[%s339 + $0x20] sm:$0xf]
      %v368 = vld [vmem:[%s339 + $0x24] sm:$0xff]
      %v369 = vld [vmem:[%s339 + $0x2c] sm:$0xf]
      %v370 = vld [vmem:[%s339 + $0x30] sm:$0xff]
      %v371 = vld [vmem:[%s339 + $0x38] sm:$0xf]
      %v372 = vld [vmem:[%s339 + $0x3c] sm:$0xff]
      %v373 = vld [vmem:[%s339 + $0x44] sm:$0xf]
      %v374 = vld [vmem:[%s339 + $0x48] sm:$0xff]
      %v375 = vld [vmem:[%s339 + $0x50] sm:$0xf]
      %v376 = vld [vmem:[%s339 + $0x54] sm:$0xff]
      %v377 = vld [vmem:[%s339 + $0x5c] sm:$0xf]
      %v378 = vld [vmem:[%s339 + $0x60] sm:$0xff]
      %v379 = vld [vmem:[%s339 + $0x68] sm:$0xf]
      %v380 = vld [vmem:[%s339 + $0x6c] sm:$0xff]
      %v381 = vld [vmem:[%s339 + $0x74] sm:$0xf]
      %v382 = vld [vmem:[%s339 + $0x78] sm:$0xff]
      %v383 = vld [vmem:[%s339 + $0x80] sm:$0xf]
      %v384 = vld [vmem:[%s339 + $0x84] sm:$0xff]
      %v385 = vld [vmem:[%s339 + $0x8c] sm:$0xf]
      %v386 = vld [vmem:[%s339 + $0x90] sm:$0xff]
      %v387 = vld [vmem:[%s339 + $0x98] sm:$0xf]
      %v388 = vld [vmem:[%s339 + $0x9c] sm:$0xff]
      %v389 = vld [vmem:[%s339 + $0xa4] sm:$0xf]
      %v390 = vld [vmem:[%s339 + $0xa8] sm:$0xff]
      %v391 = vld [vmem:[%s339 + $0xb0] sm:$0xf]
      %v392 = vld [vmem:[%s339 + $0xb4] sm:$0xff]
      %v393 = vld [vmem:[%s339 + $0xbc] sm:$0xf]
      %s394 = scalar_lea.vmem %s339, 192
      %v395 = vld [vmem:[%s394] sm:$0xff]
      %v396 = vld [vmem:[%s394 + $0x8] sm:$0xf]
      %v397 = vld [vmem:[%s394 + $0xc] sm:$0xff]
      %v398 = vld [vmem:[%s394 + $0x14] sm:$0xf]
      %v399 = vld [vmem:[%s394 + $0x18] sm:$0xff]
      %v400 = vld [vmem:[%s394 + $0x20] sm:$0xf]
      %v401 = vld [vmem:[%s394 + $0x24] sm:$0xff]
      %v402 = vld [vmem:[%s394 + $0x2c] sm:$0xf]
      %v403 = vld [vmem:[%s394 + $0x30] sm:$0xff]
      %v404 = vld [vmem:[%s394 + $0x38] sm:$0xf]
      %v405 = vld [vmem:[%s394 + $0x3c] sm:$0xff]
      %v406 = vld [vmem:[%s394 + $0x44] sm:$0xf]
      %v407 = vld [vmem:[%s394 + $0x48] sm:$0xff]
      %v408 = vld [vmem:[%s394 + $0x50] sm:$0xf]
      %v409 = vld [vmem:[%s394 + $0x54] sm:$0xff]
      %v410 = vld [vmem:[%s394 + $0x5c] sm:$0xf]
      %v411 = vld [vmem:[%s394 + $0x60] sm:$0xff]
      %v412 = vld [vmem:[%s394 + $0x68] sm:$0xf]
      %v413 = vld [vmem:[%s394 + $0x6c] sm:$0xff]
      %v414 = vld [vmem:[%s394 + $0x74] sm:$0xf]
      %v415 = vld [vmem:[%s394 + $0x78] sm:$0xff]
      %v416 = vld [vmem:[%s394 + $0x80] sm:$0xf]
      %v417 = vld [vmem:[%s394 + $0x84] sm:$0xff]
      %v418 = vld [vmem:[%s394 + $0x8c] sm:$0xf]
      %v419 = vld [vmem:[%s394 + $0x90] sm:$0xff]
      %v420 = vld [vmem:[%s394 + $0x98] sm:$0xf]
      %v421 = vld [vmem:[%s394 + $0x9c] sm:$0xff]
      %v422 = vld [vmem:[%s394 + $0xa4] sm:$0xf]
      %v423 = vld [vmem:[%s394 + $0xa8] sm:$0xff]
      %v424 = vld [vmem:[%s394 + $0xb0] sm:$0xf]
      %v425 = vld [vmem:[%s394 + $0xb4] sm:$0xff]
      %v426 = vld [vmem:[%s394 + $0xbc] sm:$0xf]
      %v427 = vld [vmem:[%s345] sm:$0x7]
      %s428 = scalar_lea.vmem %s345, 3
      %v429 = vld [vmem:[%s428] sm:$0x7]
      %v430 = vld [vmem:[%s332] sm:$0xff]
      %s431 = scalar_lea.vmem %s332, 8
      %v432 = vld [vmem:[%s431] sm:$0xff]
      %s433 = smul.u32 %s21, 8
      %v434 = vld [vmem:[#allocation2] sm:$0xff]
      %s435 = scalar_lea.vmem [#allocation2], 8
      %v436 = vld [vmem:[%s435] sm:$0xff]
      %v437 = vld [vmem:[%s319] sm:$0xff]
      %v438 = vld [vmem:[%s319 + $0x8] sm:$0xf]
      %v439 = vpack.c.bf16 %v434, %v434
      %v441 = vlaneseq
      %v442 = vshrl.u32 %v441, 7
      %v443 = vsub.s32 0, %v442
      %v444 = vrot.slane %v427, %v443
      %v445 = vlaneseq
      %v446 = vshrl.u32 %v445, 7
      %v447 = vsub.s32 1, %v446
      %v448 = vrot.slane %v427, %v447
      %v449 = vlaneseq
      %v450 = vshrl.u32 %v449, 7
      %v451 = vsub.s32 2, %v450
      %v452 = vrot.slane %v427, %v451
      %v488 = vunpack.c.l.b16 %v362
      %v489 = vunpack.c.h.b16 %v362
      %v490 = vunpack.c.l.b16 %v363
      %v491 = vunpack.c.l.b16 %v364
      %v492 = vunpack.c.h.b16 %v364
      %v493 = vunpack.c.l.b16 %v365
      %v494 = vunpack.c.l.b16 %v366
      %v495 = vunpack.c.h.b16 %v366
      %v496 = vunpack.c.l.b16 %v367
      %v497 = vunpack.c.l.b16 %v368
      %v498 = vunpack.c.h.b16 %v368
      %v499 = vunpack.c.l.b16 %v369
      %v500 = vunpack.c.l.b16 %v370
      %v501 = vunpack.c.h.b16 %v370
      %v502 = vunpack.c.l.b16 %v371
      %v503 = vunpack.c.l.b16 %v372
      %v504 = vunpack.c.h.b16 %v372
      %v505 = vunpack.c.l.b16 %v373
      %v506 = vunpack.c.l.b16 %v374
      %v507 = vunpack.c.h.b16 %v374
      %v508 = vunpack.c.l.b16 %v375
      %v509 = vunpack.c.l.b16 %v376
      %v510 = vunpack.c.h.b16 %v376
      %v511 = vunpack.c.l.b16 %v377
      %v512 = vunpack.c.l.b16 %v378
      %v513 = vunpack.c.h.b16 %v378
      %v514 = vunpack.c.l.b16 %v379
      %v515 = vunpack.c.l.b16 %v380
      %v516 = vunpack.c.h.b16 %v380
      %v517 = vunpack.c.l.b16 %v381
      %v518 = vunpack.c.l.b16 %v382
      %v519 = vunpack.c.h.b16 %v382
      %v520 = vunpack.c.l.b16 %v383
      %v521 = vunpack.c.l.b16 %v384
      %v522 = vunpack.c.h.b16 %v384
      %v523 = vunpack.c.l.b16 %v385
      %v524 = vunpack.c.l.b16 %v386
      %v525 = vunpack.c.h.b16 %v386
      %v526 = vunpack.c.l.b16 %v387
      %v527 = vunpack.c.l.b16 %v388
      %v528 = vunpack.c.h.b16 %v388
      %v529 = vunpack.c.l.b16 %v389
      %v530 = vunpack.c.l.b16 %v390
      %v531 = vunpack.c.h.b16 %v390
      %v532 = vunpack.c.l.b16 %v391
      %v533 = vunpack.c.l.b16 %v392
      %v534 = vunpack.c.h.b16 %v392
      %v535 = vunpack.c.l.b16 %v393
      %v536 = vpack.c.b16 %v491, %v488
      %v537 = vpack.c.b16 %v492, %v489
      %v538 = vpack.c.b16 %v493, %v490
      %v539 = vpack.c.b16 %v497, %v494
      %v540 = vpack.c.b16 %v498, %v495
      %v541 = vpack.c.b16 %v499, %v496
      %v542 = vpack.c.b16 %v503, %v500
      %v543 = vpack.c.b16 %v504, %v501
      %v544 = vpack.c.b16 %v505, %v502
      %v545 = vpack.c.b16 %v509, %v506
      %v546 = vpack.c.b16 %v510, %v507
      %v547 = vpack.c.b16 %v511, %v508
      %v548 = vpack.c.b16 %v515, %v512
      %v549 = vpack.c.b16 %v516, %v513
      %v550 = vpack.c.b16 %v517, %v514
      %v551 = vpack.c.b16 %v521, %v518
      %v552 = vpack.c.b16 %v522, %v519
      %v553 = vpack.c.b16 %v523, %v520
      %v554 = vpack.c.b16 %v527, %v524
      %v555 = vpack.c.b16 %v528, %v525
      %v556 = vpack.c.b16 %v529, %v526
      %v557 = vpack.c.b16 %v533, %v530
      %v558 = vpack.c.b16 %v534, %v531
      %v559 = vpack.c.b16 %v535, %v532
      %584 = vmatprep.subr.bf16.mxu0 %v558
      %585 = vmatpush1.bf16.msra.mxu0 %v557
      %586 = vmatprep.subr.bf16.mxu0 %v555
      %587 = vmatpush1.bf16.msra.mxu0 %v554
      %588 = vmatprep.subr.bf16.mxu0 %v552
      %589 = vmatpush1.bf16.msra.mxu0 %v551
      %590 = vmatprep.subr.bf16.mxu0 %v549
      %591 = vmatpush1.bf16.msra.mxu0 %v548
      %592 = vmatprep.subr.bf16.mxu0 %v546
      %593 = vmatpush1.bf16.msra.mxu0 %v545
      %594 = vmatprep.subr.bf16.mxu0 %v543
      %595 = vmatpush1.bf16.msra.mxu0 %v542
      %596 = vmatprep.subr.bf16.mxu0 %v540
      %597 = vmatpush1.bf16.msra.mxu0 %v539
      %598 = vmatprep.subr.bf16.mxu0 %v537
      %599 = vmatpush1.bf16.msra.mxu0 %v536
      %600 = vmatprep.subr.bf16.mxu0 0
      %601 = vmatpush2.bf16.msra.mxu0 0
      %602 = vmatprep.subr.bf16.mxu0 0
      %603 = vmatpush2.bf16.msra.mxu0 0
      %604 = vmatprep.subr.bf16.mxu0 0
      %605 = vmatpush2.bf16.msra.mxu0 0
      %606 = vmatprep.subr.bf16.mxu0 0
      %607 = vmatpush2.bf16.msra.mxu0 0
      %608 = vmatprep.subr.bf16.mxu0 0
      %609 = vmatpush2.bf16.msra.mxu0 0
      %610 = vmatprep.subr.bf16.mxu0 0
      %611 = vmatpush2.bf16.msra.mxu0 0
      %612 = vmatprep.subr.bf16.mxu0 0
      %613 = vmatpush2.bf16.msra.mxu0 0
      %614 = vmatprep.subr.bf16.mxu0 0
      %615 = vmatpush2.bf16.msra.mxu0 0
      %616 = vmatprep.mubr.bf16.mxu0 0
      %617 = vmatmul.mubr.bf16.gmra.mxu0 %v439
      %v618 = vpop.f32.mrf.mxu0
      %v619 = vadd.f32 %v444, %v618
      %v620 = vpop.f32.mrf.mxu0
      %v621 = vadd.f32 %v448, %v620
      %v622 = vpop.f32.mrf.mxu0
      %v623 = vpop.f32.mrf.mxu0
      %624 = vdwg.mxu0
      %625 = vmatprep.subr.bf16.mxu0 0
      %626 = vmatpush1.bf16.msra.mxu0 %v559
      %627 = vmatprep.subr.bf16.mxu0 0
      %628 = vmatpush1.bf16.msra.mxu0 %v556
      %629 = vmatprep.subr.bf16.mxu0 0
      %630 = vmatpush1.bf16.msra.mxu0 %v553
      %631 = vmatprep.subr.bf16.mxu0 0
      %632 = vmatpush1.bf16.msra.mxu0 %v550
      %633 = vmatprep.subr.bf16.mxu0 0
      %634 = vmatpush1.bf16.msra.mxu0 %v547
      %635 = vmatprep.subr.bf16.mxu0 0
      %636 = vmatpush1.bf16.msra.mxu0 %v544
      %637 = vmatprep.subr.bf16.mxu0 0
      %638 = vmatpush1.bf16.msra.mxu0 %v541
      %639 = vmatprep.subr.bf16.mxu0 0
      %640 = vmatpush1.bf16.msra.mxu0 %v538
      %641 = vmatprep.subr.bf16.mxu0 0
      %642 = vmatpush2.bf16.msra.mxu0 0
      %643 = vmatprep.subr.bf16.mxu0 0
      %644 = vmatpush2.bf16.msra.mxu0 0
      %645 = vmatprep.subr.bf16.mxu0 0
      %646 = vmatpush2.bf16.msra.mxu0 0
      %647 = vmatprep.subr.bf16.mxu0 0
      %648 = vmatpush2.bf16.msra.mxu0 0
      %649 = vmatprep.subr.bf16.mxu0 0
      %650 = vmatpush2.bf16.msra.mxu0 0
      %651 = vmatprep.subr.bf16.mxu0 0
      %652 = vmatpush2.bf16.msra.mxu0 0
      %653 = vmatprep.subr.bf16.mxu0 0
      %654 = vmatpush2.bf16.msra.mxu0 0
      %655 = vmatprep.subr.bf16.mxu0 0
      %656 = vmatpush2.bf16.msra.mxu0 0
      %657 = vmatprep.mubr.bf16.mxu0 0
      %658 = vmatmul.mubr.bf16.gmra.mxu0 %v439
      %v659 = vpop.f32.mrf.mxu0
      %v660 = vadd.f32 %v452, %v659
      %v661 = vpop.f32.mrf.mxu0
      %v662 = vpop.f32.mrf.mxu0
      %v663 = vpop.f32.mrf.mxu0
      %664 = vdwg.mxu0
      %v665 = vunpack.c.l.bf16 %v437
      %v666 = vadd.f32 %v665, %v619
      %v667 = vxor.u32 %v666, 2147483648
      %v668 = vmul.f32 %v667, 1.442695
      %v669 = vpow.pop %v668
      %v670 = vadd.f32 %v669, 1.0
      %v671 = vrcp.pop %v670
      %v672 = vmul.f32 1.0, %v671
      %v674 = vrot.slane %v437, 4
      %v676 = vunpack.c.l.bf16 %v674
      %v677 = vadd.f32 %v676, %v621
      %v678 = vxor.u32 %v677, 2147483648
      %v679 = vmul.f32 %v678, 1.442695
      %v680 = vpow.pop %v679
      %v681 = vadd.f32 %v680, 1.0
      %v682 = vrcp.pop %v681
      %v683 = vmul.f32 1.0, %v682
      %v684 = vmul.f32 %v672, %v660
      %v685 = vunpack.c.l.bf16 %v438
      %v686 = vadd.f32 %v685, %v684
      %v687 = vtanh.pop %v686
      %v688 = vsub.f32 1.0, %v683
      %v689 = vmul.f32 %v688, %v687
      %v690 = vmul.f32 %v683, %v434
      %v691 = vadd.f32 %v689, %v690
      %v692 = vstv %s433
      %vm693 = vcmp.gt.s32.totalorder %v430, %v692
      %v694 = vsel %vm693, 1, 0
      %695 = vset.pattern.permute.xlu0 0
      %696 = vperm.xlu0 %695, %v694
      %v697 = vpop.permute.xlu0 %696
      %vm698 = vcmp.eq.s32.totalorder %v697, 1
      %v699 = vsel %vm698, %v691, %v434
      %s700 = scalar_lea.vmem %s319, 96
      %v701 = vld [vmem:[%s700] sm:$0xff]
      %v702 = vld [vmem:[%s700 + $0x8] sm:$0xf]
      %v703 = vpack.c.bf16 %v436, %v436
      %v705 = vlaneseq
      %v706 = vshrl.u32 %v705, 7
      %v707 = vsub.s32 0, %v706
      %v708 = vrot.slane %v429, %v707
      %v709 = vlaneseq
      %v710 = vshrl.u32 %v709, 7
      %v711 = vsub.s32 1, %v710
      %v712 = vrot.slane %v429, %v711
      %v713 = vlaneseq
      %v714 = vshrl.u32 %v713, 7
      %v715 = vsub.s32 2, %v714
      %v716 = vrot.slane %v429, %v715
      %v752 = vunpack.c.l.b16 %v395
      %v753 = vunpack.c.h.b16 %v395
      %v754 = vunpack.c.l.b16 %v396
      %v755 = vunpack.c.l.b16 %v397
      %v756 = vunpack.c.h.b16 %v397
      %v757 = vunpack.c.l.b16 %v398
      %v758 = vunpack.c.l.b16 %v399
      %v759 = vunpack.c.h.b16 %v399
      %v760 = vunpack.c.l.b16 %v400
      %v761 = vunpack.c.l.b16 %v401
      %v762 = vunpack.c.h.b16 %v401
      %v763 = vunpack.c.l.b16 %v402
      %v764 = vunpack.c.l.b16 %v403
      %v765 = vunpack.c.h.b16 %v403
      %v766 = vunpack.c.l.b16 %v404
      %v767 = vunpack.c.l.b16 %v405
      %v768 = vunpack.c.h.b16 %v405
      %v769 = vunpack.c.l.b16 %v406
      %v770 = vunpack.c.l.b16 %v407
      %v771 = vunpack.c.h.b16 %v407
      %v772 = vunpack.c.l.b16 %v408
      %v773 = vunpack.c.l.b16 %v409
      %v774 = vunpack.c.h.b16 %v409
      %v775 = vunpack.c.l.b16 %v410
      %v776 = vunpack.c.l.b16 %v411
      %v777 = vunpack.c.h.b16 %v411
      %v778 = vunpack.c.l.b16 %v412
      %v779 = vunpack.c.l.b16 %v413
      %v780 = vunpack.c.h.b16 %v413
      %v781 = vunpack.c.l.b16 %v414
      %v782 = vunpack.c.l.b16 %v415
      %v783 = vunpack.c.h.b16 %v415
      %v784 = vunpack.c.l.b16 %v416
      %v785 = vunpack.c.l.b16 %v417
      %v786 = vunpack.c.h.b16 %v417
      %v787 = vunpack.c.l.b16 %v418
      %v788 = vunpack.c.l.b16 %v419
      %v789 = vunpack.c.h.b16 %v419
      %v790 = vunpack.c.l.b16 %v420
      %v791 = vunpack.c.l.b16 %v421
      %v792 = vunpack.c.h.b16 %v421
      %v793 = vunpack.c.l.b16 %v422
      %v794 = vunpack.c.l.b16 %v423
      %v795 = vunpack.c.h.b16 %v423
      %v796 = vunpack.c.l.b16 %v424
      %v797 = vunpack.c.l.b16 %v425
      %v798 = vunpack.c.h.b16 %v425
      %v799 = vunpack.c.l.b16 %v426
      %v800 = vpack.c.b16 %v755, %v752
      %v801 = vpack.c.b16 %v756, %v753
      %v802 = vpack.c.b16 %v757, %v754
      %v803 = vpack.c.b16 %v761, %v758
      %v804 = vpack.c.b16 %v762, %v759
      %v805 = vpack.c.b16 %v763, %v760
      %v806 = vpack.c.b16 %v767, %v764
      %v807 = vpack.c.b16 %v768, %v765
      %v808 = vpack.c.b16 %v769, %v766
      %v809 = vpack.c.b16 %v773, %v770
      %v810 = vpack.c.b16 %v774, %v771
      %v811 = vpack.c.b16 %v775, %v772
      %v812 = vpack.c.b16 %v779, %v776
      %v813 = vpack.c.b16 %v780, %v777
      %v814 = vpack.c.b16 %v781, %v778
      %v815 = vpack.c.b16 %v785, %v782
      %v816 = vpack.c.b16 %v786, %v783
      %v817 = vpack.c.b16 %v787, %v784
      %v818 = vpack.c.b16 %v791, %v788
      %v819 = vpack.c.b16 %v792, %v789
      %v820 = vpack.c.b16 %v793, %v790
      %v821 = vpack.c.b16 %v797, %v794
      %v822 = vpack.c.b16 %v798, %v795
      %v823 = vpack.c.b16 %v799, %v796
      %848 = vmatprep.subr.bf16.mxu0 %v822
      %849 = vmatpush1.bf16.msra.mxu0 %v821
      %850 = vmatprep.subr.bf16.mxu0 %v819
      %851 = vmatpush1.bf16.msra.mxu0 %v818
      %852 = vmatprep.subr.bf16.mxu0 %v816
      %853 = vmatpush1.bf16.msra.mxu0 %v815
      %854 = vmatprep.subr.bf16.mxu0 %v813
      %855 = vmatpush1.bf16.msra.mxu0 %v812
      %856 = vmatprep.subr.bf16.mxu0 %v810
      %857 = vmatpush1.bf16.msra.mxu0 %v809
      %858 = vmatprep.subr.bf16.mxu0 %v807
      %859 = vmatpush1.bf16.msra.mxu0 %v806
      %860 = vmatprep.subr.bf16.mxu0 %v804
      %861 = vmatpush1.bf16.msra.mxu0 %v803
      %862 = vmatprep.subr.bf16.mxu0 %v801
      %863 = vmatpush1.bf16.msra.mxu0 %v800
      %864 = vmatprep.subr.bf16.mxu0 0
      %865 = vmatpush2.bf16.msra.mxu0 0
      %866 = vmatprep.subr.bf16.mxu0 0
      %867 = vmatpush2.bf16.msra.mxu0 0
      %868 = vmatprep.subr.bf16.mxu0 0
      %869 = vmatpush2.bf16.msra.mxu0 0
      %870 = vmatprep.subr.bf16.mxu0 0
      %871 = vmatpush2.bf16.msra.mxu0 0
      %872 = vmatprep.subr.bf16.mxu0 0
      %873 = vmatpush2.bf16.msra.mxu0 0
      %874 = vmatprep.subr.bf16.mxu0 0
      %875 = vmatpush2.bf16.msra.mxu0 0
      %876 = vmatprep.subr.bf16.mxu0 0
      %877 = vmatpush2.bf16.msra.mxu0 0
      %878 = vmatprep.subr.bf16.mxu0 0
      %879 = vmatpush2.bf16.msra.mxu0 0
      %880 = vmatprep.mubr.bf16.mxu0 0
      %881 = vmatmul.mubr.bf16.gmra.mxu0 %v703
      %v882 = vpop.f32.mrf.mxu0
      %v883 = vadd.f32 %v708, %v882
      %v884 = vpop.f32.mrf.mxu0
      %v885 = vadd.f32 %v712, %v884
      %v886 = vpop.f32.mrf.mxu0
      %v887 = vpop.f32.mrf.mxu0
      %888 = vdwg.mxu0
      %889 = vmatprep.subr.bf16.mxu0 0
      %890 = vmatpush1.bf16.msra.mxu0 %v823
      %891 = vmatprep.subr.bf16.mxu0 0
      %892 = vmatpush1.bf16.msra.mxu0 %v820
      %893 = vmatprep.subr.bf16.mxu0 0
      %894 = vmatpush1.bf16.msra.mxu0 %v817
      %895 = vmatprep.subr.bf16.mxu0 0
      %896 = vmatpush1.bf16.msra.mxu0 %v814
      %897 = vmatprep.subr.bf16.mxu0 0
      %898 = vmatpush1.bf16.msra.mxu0 %v811
      %899 = vmatprep.subr.bf16.mxu0 0
      %900 = vmatpush1.bf16.msra.mxu0 %v808
      %901 = vmatprep.subr.bf16.mxu0 0
      %902 = vmatpush1.bf16.msra.mxu0 %v805
      %903 = vmatprep.subr.bf16.mxu0 0
      %904 = vmatpush1.bf16.msra.mxu0 %v802
      %905 = vmatprep.subr.bf16.mxu0 0
      %906 = vmatpush2.bf16.msra.mxu0 0
      %907 = vmatprep.subr.bf16.mxu0 0
      %908 = vmatpush2.bf16.msra.mxu0 0
      %909 = vmatprep.subr.bf16.mxu0 0
      %910 = vmatpush2.bf16.msra.mxu0 0
      %911 = vmatprep.subr.bf16.mxu0 0
      %912 = vmatpush2.bf16.msra.mxu0 0
      %913 = vmatprep.subr.bf16.mxu0 0
      %914 = vmatpush2.bf16.msra.mxu0 0
      %915 = vmatprep.subr.bf16.mxu0 0
      %916 = vmatpush2.bf16.msra.mxu0 0
      %917 = vmatprep.subr.bf16.mxu0 0
      %918 = vmatpush2.bf16.msra.mxu0 0
      %919 = vmatprep.subr.bf16.mxu0 0
      %920 = vmatpush2.bf16.msra.mxu0 0
      %921 = vmatprep.mubr.bf16.mxu0 0
      %922 = vmatmul.mubr.bf16.gmra.mxu0 %v703
      %v923 = vpop.f32.mrf.mxu0
      %v924 = vadd.f32 %v716, %v923
      %v925 = vpop.f32.mrf.mxu0
      %v926 = vpop.f32.mrf.mxu0
      %v927 = vpop.f32.mrf.mxu0
      %928 = vdwg.mxu0
      %v929 = vunpack.c.l.bf16 %v701
      %v930 = vadd.f32 %v929, %v883
      %v931 = vxor.u32 %v930, 2147483648
      %v932 = vmul.f32 %v931, 1.442695
      %v933 = vpow.pop %v932
      %v934 = vadd.f32 %v933, 1.0
      %v935 = vrcp.pop %v934
      %v936 = vmul.f32 1.0, %v935
      %v938 = vrot.slane %v701, 4
      %v940 = vunpack.c.l.bf16 %v938
      %v941 = vadd.f32 %v940, %v885
      %v942 = vxor.u32 %v941, 2147483648
      %v943 = vmul.f32 %v942, 1.442695
      %v944 = vpow.pop %v943
      %v945 = vadd.f32 %v944, 1.0
      %v946 = vrcp.pop %v945
      %v947 = vmul.f32 1.0, %v946
      %v948 = vmul.f32 %v936, %v924
      %v949 = vunpack.c.l.bf16 %v702
      %v950 = vadd.f32 %v949, %v948
      %v951 = vtanh.pop %v950
      %v952 = vsub.f32 1.0, %v947
      %v953 = vmul.f32 %v952, %v951
      %v954 = vmul.f32 %v947, %v436
      %v955 = vadd.f32 %v953, %v954
      %vm956 = vcmp.gt.s32.totalorder %v432, %v692
      %v957 = vsel %vm956, 1, 0
      %958 = vset.pattern.permute.xlu0 0
      %959 = vperm.xlu0 %958, %v957
      %v960 = vpop.permute.xlu0 %959
      %vm961 = vcmp.eq.s32.totalorder %v960, 1
      %v962 = vsel %vm961, %v955, %v436
      %s963 = scalar_lea.vmem %s319, 12
      %v964 = vld [vmem:[%s963] sm:$0xff]
      %v965 = vld [vmem:[%s963 + $0x8] sm:$0xf]
      %v966 = vpack.c.bf16 %v699, %v699
      %967 = vmatprep.subr.bf16.mxu0 %v558
      %968 = vmatpush1.bf16.msra.mxu0 %v557
      %969 = vmatprep.subr.bf16.mxu0 %v555
      %970 = vmatpush1.bf16.msra.mxu0 %v554
      %971 = vmatprep.subr.bf16.mxu0 %v552
      %972 = vmatpush1.bf16.msra.mxu0 %v551
      %973 = vmatprep.subr.bf16.mxu0 %v549
      %974 = vmatpush1.bf16.msra.mxu0 %v548
      %975 = vmatprep.subr.bf16.mxu0 %v546
      %976 = vmatpush1.bf16.msra.mxu0 %v545
      %977 = vmatprep.subr.bf16.mxu0 %v543
      %978 = vmatpush1.bf16.msra.mxu0 %v542
      %979 = vmatprep.subr.bf16.mxu0 %v540
      %980 = vmatpush1.bf16.msra.mxu0 %v539
      %981 = vmatprep.subr.bf16.mxu0 %v537
      %982 = vmatpush1.bf16.msra.mxu0 %v536
      %983 = vmatprep.subr.bf16.mxu0 0
      %984 = vmatpush2.bf16.msra.mxu0 0
      %985 = vmatprep.subr.bf16.mxu0 0
      %986 = vmatpush2.bf16.msra.mxu0 0
      %987 = vmatprep.subr.bf16.mxu0 0
      %988 = vmatpush2.bf16.msra.mxu0 0
      %989 = vmatprep.subr.bf16.mxu0 0
      %990 = vmatpush2.bf16.msra.mxu0 0
      %991 = vmatprep.subr.bf16.mxu0 0
      %992 = vmatpush2.bf16.msra.mxu0 0
      %993 = vmatprep.subr.bf16.mxu0 0
      %994 = vmatpush2.bf16.msra.mxu0 0
      %995 = vmatprep.subr.bf16.mxu0 0
      %996 = vmatpush2.bf16.msra.mxu0 0
      %997 = vmatprep.subr.bf16.mxu0 0
      %998 = vmatpush2.bf16.msra.mxu0 0
      %999 = vmatprep.mubr.bf16.mxu0 0
      %1000 = vmatmul.mubr.bf16.gmra.mxu0 %v966
      %v1001 = vpop.f32.mrf.mxu0
      %v1002 = vadd.f32 %v444, %v1001
      %v1003 = vpop.f32.mrf.mxu0
      %v1004 = vadd.f32 %v448, %v1003
      %v1005 = vpop.f32.mrf.mxu0
      %v1006 = vpop.f32.mrf.mxu0
      %1007 = vdwg.mxu0
      %1008 = vmatprep.subr.bf16.mxu0 0
      %1009 = vmatpush1.bf16.msra.mxu0 %v559
      %1010 = vmatprep.subr.bf16.mxu0 0
      %1011 = vmatpush1.bf16.msra.mxu0 %v556
      %1012 = vmatprep.subr.bf16.mxu0 0
      %1013 = vmatpush1.bf16.msra.mxu0 %v553
      %1014 = vmatprep.subr.bf16.mxu0 0
      %1015 = vmatpush1.bf16.msra.mxu0 %v550
      %1016 = vmatprep.subr.bf16.mxu0 0
      %1017 = vmatpush1.bf16.msra.mxu0 %v547
      %1018 = vmatprep.subr.bf16.mxu0 0
      %1019 = vmatpush1.bf16.msra.mxu0 %v544
      %1020 = vmatprep.subr.bf16.mxu0 0
      %1021 = vmatpush1.bf16.msra.mxu0 %v541
      %1022 = vmatprep.subr.bf16.mxu0 0
      %1023 = vmatpush1.bf16.msra.mxu0 %v538
      %1024 = vmatprep.subr.bf16.mxu0 0
      %1025 = vmatpush2.bf16.msra.mxu0 0
      %1026 = vmatprep.subr.bf16.mxu0 0
      %1027 = vmatpush2.bf16.msra.mxu0 0
      %1028 = vmatprep.subr.bf16.mxu0 0
      %1029 = vmatpush2.bf16.msra.mxu0 0
      %1030 = vmatprep.subr.bf16.mxu0 0
      %1031 = vmatpush2.bf16.msra.mxu0 0
      %1032 = vmatprep.subr.bf16.mxu0 0
      %1033 = vmatpush2.bf16.msra.mxu0 0
      %1034 = vmatprep.subr.bf16.mxu0 0
      %1035 = vmatpush2.bf16.msra.mxu0 0
      %1036 = vmatprep.subr.bf16.mxu0 0
      %1037 = vmatpush2.bf16.msra.mxu0 0
      %1038 = vmatprep.subr.bf16.mxu0 0
      %1039 = vmatpush2.bf16.msra.mxu0 0
      %1040 = vmatprep.mubr.bf16.mxu0 0
      %1041 = vmatmul.mubr.bf16.gmra.mxu0 %v966
      %v1042 = vpop.f32.mrf.mxu0
      %v1043 = vadd.f32 %v452, %v1042
      %v1044 = vpop.f32.mrf.mxu0
      %v1045 = vpop.f32.mrf.mxu0
      %v1046 = vpop.f32.mrf.mxu0
      %1047 = vdwg.mxu0
      %v1048 = vunpack.c.l.bf16 %v964
      %v1049 = vadd.f32 %v1048, %v1002
      %v1050 = vxor.u32 %v1049, 2147483648
      %v1051 = vmul.f32 %v1050, 1.442695
      %v1052 = vpow.pop %v1051
      %v1053 = vadd.f32 %v1052, 1.0
      %v1054 = vrcp.pop %v1053
      %v1055 = vmul.f32 1.0, %v1054
      %v1057 = vrot.slane %v964, 4
      %v1059 = vunpack.c.l.bf16 %v1057
      %v1060 = vadd.f32 %v1059, %v1004
      %v1061 = vxor.u32 %v1060, 2147483648
      %v1062 = vmul.f32 %v1061, 1.442695
      %v1063 = vpow.pop %v1062
      %v1064 = vadd.f32 %v1063, 1.0
      %v1065 = vrcp.pop %v1064
      %v1066 = vmul.f32 1.0, %v1065
      %v1067 = vmul.f32 %v1055, %v1043
      %v1068 = vunpack.c.l.bf16 %v965
      %v1069 = vadd.f32 %v1068, %v1067
      %v1070 = vtanh.pop %v1069
      %v1071 = vsub.f32 1.0, %v1066
      %v1072 = vmul.f32 %v1071, %v1070
      %v1073 = vmul.f32 %v1066, %v699
      %v1074 = vadd.f32 %v1072, %v1073
      %s1075 = sadd.s32 %s433, 1
      %v1076 = vstv %s1075
      %vm1077 = vcmp.gt.s32.totalorder %v430, %v1076
      %v1078 = vsel %vm1077, 1, 0
      %1079 = vset.pattern.permute.xlu0 0
      %1080 = vperm.xlu0 %1079, %v1078
      %v1081 = vpop.permute.xlu0 %1080
      %vm1082 = vcmp.eq.s32.totalorder %v1081, 1
      %v1083 = vsel %vm1082, %v1074, %v699
      %s1084 = scalar_lea.vmem %s319, 108
      %v1085 = vld [vmem:[%s1084] sm:$0xff]
      %v1086 = vld [vmem:[%s1084 + $0x8] sm:$0xf]
      %v1087 = vpack.c.bf16 %v962, %v962
      %1088 = vmatprep.subr.bf16.mxu0 %v822
      %1089 = vmatpush1.bf16.msra.mxu0 %v821
      %1090 = vmatprep.subr.bf16.mxu0 %v819
      %1091 = vmatpush1.bf16.msra.mxu0 %v818
      %1092 = vmatprep.subr.bf16.mxu0 %v816
      %1093 = vmatpush1.bf16.msra.mxu0 %v815
      %1094 = vmatprep.subr.bf16.mxu0 %v813
      %1095 = vmatpush1.bf16.msra.mxu0 %v812
      %1096 = vmatprep.subr.bf16.mxu0 %v810
      %1097 = vmatpush1.bf16.msra.mxu0 %v809
      %1098 = vmatprep.subr.bf16.mxu0 %v807
      %1099 = vmatpush1.bf16.msra.mxu0 %v806
      %1100 = vmatprep.subr.bf16.mxu0 %v804
      %1101 = vmatpush1.bf16.msra.mxu0 %v803
      %1102 = vmatprep.subr.bf16.mxu0 %v801
      %1103 = vmatpush1.bf16.msra.mxu0 %v800
      %1104 = vmatprep.subr.bf16.mxu0 0
      %1105 = vmatpush2.bf16.msra.mxu0 0
      %1106 = vmatprep.subr.bf16.mxu0 0
      %1107 = vmatpush2.bf16.msra.mxu0 0
      %1108 = vmatprep.subr.bf16.mxu0 0
      %1109 = vmatpush2.bf16.msra.mxu0 0
      %1110 = vmatprep.subr.bf16.mxu0 0
      %1111 = vmatpush2.bf16.msra.mxu0 0
      %1112 = vmatprep.subr.bf16.mxu0 0
      %1113 = vmatpush2.bf16.msra.mxu0 0
      %1114 = vmatprep.subr.bf16.mxu0 0
      %1115 = vmatpush2.bf16.msra.mxu0 0
      %1116 = vmatprep.subr.bf16.mxu0 0
      %1117 = vmatpush2.bf16.msra.mxu0 0
      %1118 = vmatprep.subr.bf16.mxu0 0
      %1119 = vmatpush2.bf16.msra.mxu0 0
      %1120 = vmatprep.mubr.bf16.mxu0 0
      %1121 = vmatmul.mubr.bf16.gmra.mxu0 %v1087
      %v1122 = vpop.f32.mrf.mxu0
      %v1123 = vadd.f32 %v708, %v1122
      %v1124 = vpop.f32.mrf.mxu0
      %v1125 = vadd.f32 %v712, %v1124
      %v1126 = vpop.f32.mrf.mxu0
      %v1127 = vpop.f32.mrf.mxu0
      %1128 = vdwg.mxu0
      %1129 = vmatprep.subr.bf16.mxu0 0
      %1130 = vmatpush1.bf16.msra.mxu0 %v823
      %1131 = vmatprep.subr.bf16.mxu0 0
      %1132 = vmatpush1.bf16.msra.mxu0 %v820
      %1133 = vmatprep.subr.bf16.mxu0 0
      %1134 = vmatpush1.bf16.msra.mxu0 %v817
      %1135 = vmatprep.subr.bf16.mxu0 0
      %1136 = vmatpush1.bf16.msra.mxu0 %v814
      %1137 = vmatprep.subr.bf16.mxu0 0
      %1138 = vmatpush1.bf16.msra.mxu0 %v811
      %1139 = vmatprep.subr.bf16.mxu0 0
      %1140 = vmatpush1.bf16.msra.mxu0 %v808
      %1141 = vmatprep.subr.bf16.mxu0 0
      %1142 = vmatpush1.bf16.msra.mxu0 %v805
      %1143 = vmatprep.subr.bf16.mxu0 0
      %1144 = vmatpush1.bf16.msra.mxu0 %v802
      %1145 = vmatprep.subr.bf16.mxu0 0
      %1146 = vmatpush2.bf16.msra.mxu0 0
      %1147 = vmatprep.subr.bf16.mxu0 0
      %1148 = vmatpush2.bf16.msra.mxu0 0
      %1149 = vmatprep.subr.bf16.mxu0 0
      %1150 = vmatpush2.bf16.msra.mxu0 0
      %1151 = vmatprep.subr.bf16.mxu0 0
      %1152 = vmatpush2.bf16.msra.mxu0 0
      %1153 = vmatprep.subr.bf16.mxu0 0
      %1154 = vmatpush2.bf16.msra.mxu0 0
      %1155 = vmatprep.subr.bf16.mxu0 0
      %1156 = vmatpush2.bf16.msra.mxu0 0
      %1157 = vmatprep.subr.bf16.mxu0 0
      %1158 = vmatpush2.bf16.msra.mxu0 0
      %1159 = vmatprep.subr.bf16.mxu0 0
      %1160 = vmatpush2.bf16.msra.mxu0 0
      %1161 = vmatprep.mubr.bf16.mxu0 0
      %1162 = vmatmul.mubr.bf16.gmra.mxu0 %v1087
      %v1163 = vpop.f32.mrf.mxu0
      %v1164 = vadd.f32 %v716, %v1163
      %v1165 = vpop.f32.mrf.mxu0
      %v1166 = vpop.f32.mrf.mxu0
      %v1167 = vpop.f32.mrf.mxu0
      %1168 = vdwg.mxu0
      %v1169 = vunpack.c.l.bf16 %v1085
      %v1170 = vadd.f32 %v1169, %v1123
      %v1171 = vxor.u32 %v1170, 2147483648
      %v1172 = vmul.f32 %v1171, 1.442695
      %v1173 = vpow.pop %v1172
      %v1174 = vadd.f32 %v1173, 1.0
      %v1175 = vrcp.pop %v1174
      %v1176 = vmul.f32 1.0, %v1175
      %v1178 = vrot.slane %v1085, 4
      %v1180 = vunpack.c.l.bf16 %v1178
      %v1181 = vadd.f32 %v1180, %v1125
      %v1182 = vxor.u32 %v1181, 2147483648
      %v1183 = vmul.f32 %v1182, 1.442695
      %v1184 = vpow.pop %v1183
      %v1185 = vadd.f32 %v1184, 1.0
      %v1186 = vrcp.pop %v1185
      %v1187 = vmul.f32 1.0, %v1186
      %v1188 = vmul.f32 %v1176, %v1164
      %v1189 = vunpack.c.l.bf16 %v1086
      %v1190 = vadd.f32 %v1189, %v1188
      %v1191 = vtanh.pop %v1190
      %v1192 = vsub.f32 1.0, %v1187
      %v1193 = vmul.f32 %v1192, %v1191
      %v1194 = vmul.f32 %v1187, %v962
      %v1195 = vadd.f32 %v1193, %v1194
      %vm1196 = vcmp.gt.s32.totalorder %v432, %v1076
      %v1197 = vsel %vm1196, 1, 0
      %1198 = vset.pattern.permute.xlu0 0
      %1199 = vperm.xlu0 %1198, %v1197
      %v1200 = vpop.permute.xlu0 %1199
      %vm1201 = vcmp.eq.s32.totalorder %v1200, 1
      %v1202 = vsel %vm1201, %v1195, %v962
      %s1203 = scalar_lea.vmem %s319, 24
      %v1204 = vld [vmem:[%s1203] sm:$0xff]
      %v1205 = vld [vmem:[%s1203 + $0x8] sm:$0xf]
      %v1206 = vpack.c.bf16 %v1083, %v1083
      %1207 = vmatprep.subr.bf16.mxu0 %v558
      %1208 = vmatpush1.bf16.msra.mxu0 %v557
      %1209 = vmatprep.subr.bf16.mxu0 %v555
      %1210 = vmatpush1.bf16.msra.mxu0 %v554
      %1211 = vmatprep.subr.bf16.mxu0 %v552
      %1212 = vmatpush1.bf16.msra.mxu0 %v551
      %1213 = vmatprep.subr.bf16.mxu0 %v549
      %1214 = vmatpush1.bf16.msra.mxu0 %v548
      %1215 = vmatprep.subr.bf16.mxu0 %v546
      %1216 = vmatpush1.bf16.msra.mxu0 %v545
      %1217 = vmatprep.subr.bf16.mxu0 %v543
      %1218 = vmatpush1.bf16.msra.mxu0 %v542
      %1219 = vmatprep.subr.bf16.mxu0 %v540
      %1220 = vmatpush1.bf16.msra.mxu0 %v539
      %1221 = vmatprep.subr.bf16.mxu0 %v537
      %1222 = vmatpush1.bf16.msra.mxu0 %v536
      %1223 = vmatprep.subr.bf16.mxu0 0
      %1224 = vmatpush2.bf16.msra.mxu0 0
      %1225 = vmatprep.subr.bf16.mxu0 0
      %1226 = vmatpush2.bf16.msra.mxu0 0
      %1227 = vmatprep.subr.bf16.mxu0 0
      %1228 = vmatpush2.bf16.msra.mxu0 0
      %1229 = vmatprep.subr.bf16.mxu0 0
      %1230 = vmatpush2.bf16.msra.mxu0 0
      %1231 = vmatprep.subr.bf16.mxu0 0
      %1232 = vmatpush2.bf16.msra.mxu0 0
      %1233 = vmatprep.subr.bf16.mxu0 0
      %1234 = vmatpush2.bf16.msra.mxu0 0
      %1235 = vmatprep.subr.bf16.mxu0 0
      %1236 = vmatpush2.bf16.msra.mxu0 0
      %1237 = vmatprep.subr.bf16.mxu0 0
      %1238 = vmatpush2.bf16.msra.mxu0 0
      %1239 = vmatprep.mubr.bf16.mxu0 0
      %1240 = vmatmul.mubr.bf16.gmra.mxu0 %v1206
      %v1241 = vpop.f32.mrf.mxu0
      %v1242 = vadd.f32 %v444, %v1241
      %v1243 = vpop.f32.mrf.mxu0
      %v1244 = vadd.f32 %v448, %v1243
      %v1245 = vpop.f32.mrf.mxu0
      %v1246 = vpop.f32.mrf.mxu0
      %1247 = vdwg.mxu0
      %1248 = vmatprep.subr.bf16.mxu0 0
      %1249 = vmatpush1.bf16.msra.mxu0 %v559
      %1250 = vmatprep.subr.bf16.mxu0 0
      %1251 = vmatpush1.bf16.msra.mxu0 %v556
      %1252 = vmatprep.subr.bf16.mxu0 0
      %1253 = vmatpush1.bf16.msra.mxu0 %v553
      %1254 = vmatprep.subr.bf16.mxu0 0
      %1255 = vmatpush1.bf16.msra.mxu0 %v550
      %1256 = vmatprep.subr.bf16.mxu0 0
      %1257 = vmatpush1.bf16.msra.mxu0 %v547
      %1258 = vmatprep.subr.bf16.mxu0 0
      %1259 = vmatpush1.bf16.msra.mxu0 %v544
      %1260 = vmatprep.subr.bf16.mxu0 0
      %1261 = vmatpush1.bf16.msra.mxu0 %v541
      %1262 = vmatprep.subr.bf16.mxu0 0
      %1263 = vmatpush1.bf16.msra.mxu0 %v538
      %1264 = vmatprep.subr.bf16.mxu0 0
      %1265 = vmatpush2.bf16.msra.mxu0 0
      %1266 = vmatprep.subr.bf16.mxu0 0
      %1267 = vmatpush2.bf16.msra.mxu0 0
      %1268 = vmatprep.subr.bf16.mxu0 0
      %1269 = vmatpush2.bf16.msra.mxu0 0
      %1270 = vmatprep.subr.bf16.mxu0 0
      %1271 = vmatpush2.bf16.msra.mxu0 0
      %1272 = vmatprep.subr.bf16.mxu0 0
      %1273 = vmatpush2.bf16.msra.mxu0 0
      %1274 = vmatprep.subr.bf16.mxu0 0
      %1275 = vmatpush2.bf16.msra.mxu0 0
      %1276 = vmatprep.subr.bf16.mxu0 0
      %1277 = vmatpush2.bf16.msra.mxu0 0
      %1278 = vmatprep.subr.bf16.mxu0 0
      %1279 = vmatpush2.bf16.msra.mxu0 0
      %1280 = vmatprep.mubr.bf16.mxu0 0
      %1281 = vmatmul.mubr.bf16.gmra.mxu0 %v1206
      %v1282 = vpop.f32.mrf.mxu0
      %v1283 = vadd.f32 %v452, %v1282
      %v1284 = vpop.f32.mrf.mxu0
      %v1285 = vpop.f32.mrf.mxu0
      %v1286 = vpop.f32.mrf.mxu0
      %1287 = vdwg.mxu0
      %v1288 = vunpack.c.l.bf16 %v1204
      %v1289 = vadd.f32 %v1288, %v1242
      %v1290 = vxor.u32 %v1289, 2147483648
      %v1291 = vmul.f32 %v1290, 1.442695
      %v1292 = vpow.pop %v1291
      %v1293 = vadd.f32 %v1292, 1.0
      %v1294 = vrcp.pop %v1293
      %v1295 = vmul.f32 1.0, %v1294
      %v1297 = vrot.slane %v1204, 4
      %v1299 = vunpack.c.l.bf16 %v1297
      %v1300 = vadd.f32 %v1299, %v1244
      %v1301 = vxor.u32 %v1300, 2147483648
      %v1302 = vmul.f32 %v1301, 1.442695
      %v1303 = vpow.pop %v1302
      %v1304 = vadd.f32 %v1303, 1.0
      %v1305 = vrcp.pop %v1304
      %v1306 = vmul.f32 1.0, %v1305
      %v1307 = vmul.f32 %v1295, %v1283
      %v1308 = vunpack.c.l.bf16 %v1205
      %v1309 = vadd.f32 %v1308, %v1307
      %v1310 = vtanh.pop %v1309
      %v1311 = vsub.f32 1.0, %v1306
      %v1312 = vmul.f32 %v1311, %v1310
      %v1313 = vmul.f32 %v1306, %v1083
      %v1314 = vadd.f32 %v1312, %v1313
      %s1315 = sadd.s32 %s433, 2
      %v1316 = vstv %s1315
      %vm1317 = vcmp.gt.s32.totalorder %v430, %v1316
      %v1318 = vsel %vm1317, 1, 0
      %1319 = vset.pattern.permute.xlu0 0
      %1320 = vperm.xlu0 %1319, %v1318
      %v1321 = vpop.permute.xlu0 %1320
      %vm1322 = vcmp.eq.s32.totalorder %v1321, 1
      %v1323 = vsel %vm1322, %v1314, %v1083
      %s1324 = scalar_lea.vmem %s319, 120
      %v1325 = vld [vmem:[%s1324] sm:$0xff]
      %v1326 = vld [vmem:[%s1324 + $0x8] sm:$0xf]
      %v1327 = vpack.c.bf16 %v1202, %v1202
      %1328 = vmatprep.subr.bf16.mxu0 %v822
      %1329 = vmatpush1.bf16.msra.mxu0 %v821
      %1330 = vmatprep.subr.bf16.mxu0 %v819
      %1331 = vmatpush1.bf16.msra.mxu0 %v818
      %1332 = vmatprep.subr.bf16.mxu0 %v816
      %1333 = vmatpush1.bf16.msra.mxu0 %v815
      %1334 = vmatprep.subr.bf16.mxu0 %v813
      %1335 = vmatpush1.bf16.msra.mxu0 %v812
      %1336 = vmatprep.subr.bf16.mxu0 %v810
      %1337 = vmatpush1.bf16.msra.mxu0 %v809
      %1338 = vmatprep.subr.bf16.mxu0 %v807
      %1339 = vmatpush1.bf16.msra.mxu0 %v806
      %1340 = vmatprep.subr.bf16.mxu0 %v804
      %1341 = vmatpush1.bf16.msra.mxu0 %v803
      %1342 = vmatprep.subr.bf16.mxu0 %v801
      %1343 = vmatpush1.bf16.msra.mxu0 %v800
      %1344 = vmatprep.subr.bf16.mxu0 0
      %1345 = vmatpush2.bf16.msra.mxu0 0
      %1346 = vmatprep.subr.bf16.mxu0 0
      %1347 = vmatpush2.bf16.msra.mxu0 0
      %1348 = vmatprep.subr.bf16.mxu0 0
      %1349 = vmatpush2.bf16.msra.mxu0 0
      %1350 = vmatprep.subr.bf16.mxu0 0
      %1351 = vmatpush2.bf16.msra.mxu0 0
      %1352 = vmatprep.subr.bf16.mxu0 0
      %1353 = vmatpush2.bf16.msra.mxu0 0
      %1354 = vmatprep.subr.bf16.mxu0 0
      %1355 = vmatpush2.bf16.msra.mxu0 0
      %1356 = vmatprep.subr.bf16.mxu0 0
      %1357 = vmatpush2.bf16.msra.mxu0 0
      %1358 = vmatprep.subr.bf16.mxu0 0
      %1359 = vmatpush2.bf16.msra.mxu0 0
      %1360 = vmatprep.mubr.bf16.mxu0 0
      %1361 = vmatmul.mubr.bf16.gmra.mxu0 %v1327
      %v1362 = vpop.f32.mrf.mxu0
      %v1363 = vadd.f32 %v708, %v1362
      %v1364 = vpop.f32.mrf.mxu0
      %v1365 = vadd.f32 %v712, %v1364
      %v1366 = vpop.f32.mrf.mxu0
      %v1367 = vpop.f32.mrf.mxu0
      %1368 = vdwg.mxu0
      %1369 = vmatprep.subr.bf16.mxu0 0
      %1370 = vmatpush1.bf16.msra.mxu0 %v823
      %1371 = vmatprep.subr.bf16.mxu0 0
      %1372 = vmatpush1.bf16.msra.mxu0 %v820
      %1373 = vmatprep.subr.bf16.mxu0 0
      %1374 = vmatpush1.bf16.msra.mxu0 %v817
      %1375 = vmatprep.subr.bf16.mxu0 0
      %1376 = vmatpush1.bf16.msra.mxu0 %v814
      %1377 = vmatprep.subr.bf16.mxu0 0
      %1378 = vmatpush1.bf16.msra.mxu0 %v811
      %1379 = vmatprep.subr.bf16.mxu0 0
      %1380 = vmatpush1.bf16.msra.mxu0 %v808
      %1381 = vmatprep.subr.bf16.mxu0 0
      %1382 = vmatpush1.bf16.msra.mxu0 %v805
      %1383 = vmatprep.subr.bf16.mxu0 0
      %1384 = vmatpush1.bf16.msra.mxu0 %v802
      %1385 = vmatprep.subr.bf16.mxu0 0
      %1386 = vmatpush2.bf16.msra.mxu0 0
      %1387 = vmatprep.subr.bf16.mxu0 0
      %1388 = vmatpush2.bf16.msra.mxu0 0
      %1389 = vmatprep.subr.bf16.mxu0 0
      %1390 = vmatpush2.bf16.msra.mxu0 0
      %1391 = vmatprep.subr.bf16.mxu0 0
      %1392 = vmatpush2.bf16.msra.mxu0 0
      %1393 = vmatprep.subr.bf16.mxu0 0
      %1394 = vmatpush2.bf16.msra.mxu0 0
      %1395 = vmatprep.subr.bf16.mxu0 0
      %1396 = vmatpush2.bf16.msra.mxu0 0
      %1397 = vmatprep.subr.bf16.mxu0 0
      %1398 = vmatpush2.bf16.msra.mxu0 0
      %1399 = vmatprep.subr.bf16.mxu0 0
      %1400 = vmatpush2.bf16.msra.mxu0 0
      %1401 = vmatprep.mubr.bf16.mxu0 0
      %1402 = vmatmul.mubr.bf16.gmra.mxu0 %v1327
      %v1403 = vpop.f32.mrf.mxu0
      %v1404 = vadd.f32 %v716, %v1403
      %v1405 = vpop.f32.mrf.mxu0
      %v1406 = vpop.f32.mrf.mxu0
      %v1407 = vpop.f32.mrf.mxu0
      %1408 = vdwg.mxu0
      %v1409 = vunpack.c.l.bf16 %v1325
      %v1410 = vadd.f32 %v1409, %v1363
      %v1411 = vxor.u32 %v1410, 2147483648
      %v1412 = vmul.f32 %v1411, 1.442695
      %v1413 = vpow.pop %v1412
      %v1414 = vadd.f32 %v1413, 1.0
      %v1415 = vrcp.pop %v1414
      %v1416 = vmul.f32 1.0, %v1415
      %v1418 = vrot.slane %v1325, 4
      %v1420 = vunpack.c.l.bf16 %v1418
      %v1421 = vadd.f32 %v1420, %v1365
      %v1422 = vxor.u32 %v1421, 2147483648
      %v1423 = vmul.f32 %v1422, 1.442695
      %v1424 = vpow.pop %v1423
      %v1425 = vadd.f32 %v1424, 1.0
      %v1426 = vrcp.pop %v1425
      %v1427 = vmul.f32 1.0, %v1426
      %v1428 = vmul.f32 %v1416, %v1404
      %v1429 = vunpack.c.l.bf16 %v1326
      %v1430 = vadd.f32 %v1429, %v1428
      %v1431 = vtanh.pop %v1430
      %v1432 = vsub.f32 1.0, %v1427
      %v1433 = vmul.f32 %v1432, %v1431
      %v1434 = vmul.f32 %v1427, %v1202
      %v1435 = vadd.f32 %v1433, %v1434
      %vm1436 = vcmp.gt.s32.totalorder %v432, %v1316
      %v1437 = vsel %vm1436, 1, 0
      %1438 = vset.pattern.permute.xlu0 0
      %1439 = vperm.xlu0 %1438, %v1437
      %v1440 = vpop.permute.xlu0 %1439
      %vm1441 = vcmp.eq.s32.totalorder %v1440, 1
      %v1442 = vsel %vm1441, %v1435, %v1202
      %s1443 = scalar_lea.vmem %s319, 36
      %v1444 = vld [vmem:[%s1443] sm:$0xff]
      %v1445 = vld [vmem:[%s1443 + $0x8] sm:$0xf]
      %v1446 = vpack.c.bf16 %v1323, %v1323
      %1447 = vmatprep.subr.bf16.mxu0 %v558
      %1448 = vmatpush1.bf16.msra.mxu0 %v557
      %1449 = vmatprep.subr.bf16.mxu0 %v555
      %1450 = vmatpush1.bf16.msra.mxu0 %v554
      %1451 = vmatprep.subr.bf16.mxu0 %v552
      %1452 = vmatpush1.bf16.msra.mxu0 %v551
      %1453 = vmatprep.subr.bf16.mxu0 %v549
      %1454 = vmatpush1.bf16.msra.mxu0 %v548
      %1455 = vmatprep.subr.bf16.mxu0 %v546
      %1456 = vmatpush1.bf16.msra.mxu0 %v545
      %1457 = vmatprep.subr.bf16.mxu0 %v543
      %1458 = vmatpush1.bf16.msra.mxu0 %v542
      %1459 = vmatprep.subr.bf16.mxu0 %v540
      %1460 = vmatpush1.bf16.msra.mxu0 %v539
      %1461 = vmatprep.subr.bf16.mxu0 %v537
      %1462 = vmatpush1.bf16.msra.mxu0 %v536
      %1463 = vmatprep.subr.bf16.mxu0 0
      %1464 = vmatpush2.bf16.msra.mxu0 0
      %1465 = vmatprep.subr.bf16.mxu0 0
      %1466 = vmatpush2.bf16.msra.mxu0 0
      %1467 = vmatprep.subr.bf16.mxu0 0
      %1468 = vmatpush2.bf16.msra.mxu0 0
      %1469 = vmatprep.subr.bf16.mxu0 0
      %1470 = vmatpush2.bf16.msra.mxu0 0
      %1471 = vmatprep.subr.bf16.mxu0 0
      %1472 = vmatpush2.bf16.msra.mxu0 0
      %1473 = vmatprep.subr.bf16.mxu0 0
      %1474 = vmatpush2.bf16.msra.mxu0 0
      %1475 = vmatprep.subr.bf16.mxu0 0
      %1476 = vmatpush2.bf16.msra.mxu0 0
      %1477 = vmatprep.subr.bf16.mxu0 0
      %1478 = vmatpush2.bf16.msra.mxu0 0
      %1479 = vmatprep.mubr.bf16.mxu0 0
      %1480 = vmatmul.mubr.bf16.gmra.mxu0 %v1446
      %v1481 = vpop.f32.mrf.mxu0
      %v1482 = vadd.f32 %v444, %v1481
      %v1483 = vpop.f32.mrf.mxu0
      %v1484 = vadd.f32 %v448, %v1483
      %v1485 = vpop.f32.mrf.mxu0
      %v1486 = vpop.f32.mrf.mxu0
      %1487 = vdwg.mxu0
      %1488 = vmatprep.subr.bf16.mxu0 0
      %1489 = vmatpush1.bf16.msra.mxu0 %v559
      %1490 = vmatprep.subr.bf16.mxu0 0
      %1491 = vmatpush1.bf16.msra.mxu0 %v556
      %1492 = vmatprep.subr.bf16.mxu0 0
      %1493 = vmatpush1.bf16.msra.mxu0 %v553
      %1494 = vmatprep.subr.bf16.mxu0 0
      %1495 = vmatpush1.bf16.msra.mxu0 %v550
      %1496 = vmatprep.subr.bf16.mxu0 0
      %1497 = vmatpush1.bf16.msra.mxu0 %v547
      %1498 = vmatprep.subr.bf16.mxu0 0
      %1499 = vmatpush1.bf16.msra.mxu0 %v544
      %1500 = vmatprep.subr.bf16.mxu0 0
      %1501 = vmatpush1.bf16.msra.mxu0 %v541
      %1502 = vmatprep.subr.bf16.mxu0 0
      %1503 = vmatpush1.bf16.msra.mxu0 %v538
      %1504 = vmatprep.subr.bf16.mxu0 0
      %1505 = vmatpush2.bf16.msra.mxu0 0
      %1506 = vmatprep.subr.bf16.mxu0 0
      %1507 = vmatpush2.bf16.msra.mxu0 0
      %1508 = vmatprep.subr.bf16.mxu0 0
      %1509 = vmatpush2.bf16.msra.mxu0 0
      %1510 = vmatprep.subr.bf16.mxu0 0
      %1511 = vmatpush2.bf16.msra.mxu0 0
      %1512 = vmatprep.subr.bf16.mxu0 0
      %1513 = vmatpush2.bf16.msra.mxu0 0
      %1514 = vmatprep.subr.bf16.mxu0 0
      %1515 = vmatpush2.bf16.msra.mxu0 0
      %1516 = vmatprep.subr.bf16.mxu0 0
      %1517 = vmatpush2.bf16.msra.mxu0 0
      %1518 = vmatprep.subr.bf16.mxu0 0
      %1519 = vmatpush2.bf16.msra.mxu0 0
      %1520 = vmatprep.mubr.bf16.mxu0 0
      %1521 = vmatmul.mubr.bf16.gmra.mxu0 %v1446
      %v1522 = vpop.f32.mrf.mxu0
      %v1523 = vadd.f32 %v452, %v1522
      %v1524 = vpop.f32.mrf.mxu0
      %v1525 = vpop.f32.mrf.mxu0
      %v1526 = vpop.f32.mrf.mxu0
      %1527 = vdwg.mxu0
      %v1528 = vunpack.c.l.bf16 %v1444
      %v1529 = vadd.f32 %v1528, %v1482
      %v1530 = vxor.u32 %v1529, 2147483648
      %v1531 = vmul.f32 %v1530, 1.442695
      %v1532 = vpow.pop %v1531
      %v1533 = vadd.f32 %v1532, 1.0
      %v1534 = vrcp.pop %v1533
      %v1535 = vmul.f32 1.0, %v1534
      %v1537 = vrot.slane %v1444, 4
      %v1539 = vunpack.c.l.bf16 %v1537
      %v1540 = vadd.f32 %v1539, %v1484
      %v1541 = vxor.u32 %v1540, 2147483648
      %v1542 = vmul.f32 %v1541, 1.442695
      %v1543 = vpow.pop %v1542
      %v1544 = vadd.f32 %v1543, 1.0
      %v1545 = vrcp.pop %v1544
      %v1546 = vmul.f32 1.0, %v1545
      %v1547 = vmul.f32 %v1535, %v1523
      %v1548 = vunpack.c.l.bf16 %v1445
      %v1549 = vadd.f32 %v1548, %v1547
      %v1550 = vtanh.pop %v1549
      %v1551 = vsub.f32 1.0, %v1546
      %v1552 = vmul.f32 %v1551, %v1550
      %v1553 = vmul.f32 %v1546, %v1323
      %v1554 = vadd.f32 %v1552, %v1553
      %s1555 = sadd.s32 %s433, 3
      %v1556 = vstv %s1555
      %vm1557 = vcmp.gt.s32.totalorder %v430, %v1556
      %v1558 = vsel %vm1557, 1, 0
      %1559 = vset.pattern.permute.xlu0 0
      %1560 = vperm.xlu0 %1559, %v1558
      %v1561 = vpop.permute.xlu0 %1560
      %vm1562 = vcmp.eq.s32.totalorder %v1561, 1
      %v1563 = vsel %vm1562, %v1554, %v1323
      %s1564 = scalar_lea.vmem %s319, 132
      %v1565 = vld [vmem:[%s1564] sm:$0xff]
      %v1566 = vld [vmem:[%s1564 + $0x8] sm:$0xf]
      %v1567 = vpack.c.bf16 %v1442, %v1442
      %1568 = vmatprep.subr.bf16.mxu0 %v822
      %1569 = vmatpush1.bf16.msra.mxu0 %v821
      %1570 = vmatprep.subr.bf16.mxu0 %v819
      %1571 = vmatpush1.bf16.msra.mxu0 %v818
      %1572 = vmatprep.subr.bf16.mxu0 %v816
      %1573 = vmatpush1.bf16.msra.mxu0 %v815
      %1574 = vmatprep.subr.bf16.mxu0 %v813
      %1575 = vmatpush1.bf16.msra.mxu0 %v812
      %1576 = vmatprep.subr.bf16.mxu0 %v810
      %1577 = vmatpush1.bf16.msra.mxu0 %v809
      %1578 = vmatprep.subr.bf16.mxu0 %v807
      %1579 = vmatpush1.bf16.msra.mxu0 %v806
      %1580 = vmatprep.subr.bf16.mxu0 %v804
      %1581 = vmatpush1.bf16.msra.mxu0 %v803
      %1582 = vmatprep.subr.bf16.mxu0 %v801
      %1583 = vmatpush1.bf16.msra.mxu0 %v800
      %1584 = vmatprep.subr.bf16.mxu0 0
      %1585 = vmatpush2.bf16.msra.mxu0 0
      %1586 = vmatprep.subr.bf16.mxu0 0
      %1587 = vmatpush2.bf16.msra.mxu0 0
      %1588 = vmatprep.subr.bf16.mxu0 0
      %1589 = vmatpush2.bf16.msra.mxu0 0
      %1590 = vmatprep.subr.bf16.mxu0 0
      %1591 = vmatpush2.bf16.msra.mxu0 0
      %1592 = vmatprep.subr.bf16.mxu0 0
      %1593 = vmatpush2.bf16.msra.mxu0 0
      %1594 = vmatprep.subr.bf16.mxu0 0
      %1595 = vmatpush2.bf16.msra.mxu0 0
      %1596 = vmatprep.subr.bf16.mxu0 0
      %1597 = vmatpush2.bf16.msra.mxu0 0
      %1598 = vmatprep.subr.bf16.mxu0 0
      %1599 = vmatpush2.bf16.msra.mxu0 0
      %1600 = vmatprep.mubr.bf16.mxu0 0
      %1601 = vmatmul.mubr.bf16.gmra.mxu0 %v1567
      %v1602 = vpop.f32.mrf.mxu0
      %v1603 = vadd.f32 %v708, %v1602
      %v1604 = vpop.f32.mrf.mxu0
      %v1605 = vadd.f32 %v712, %v1604
      %v1606 = vpop.f32.mrf.mxu0
      %v1607 = vpop.f32.mrf.mxu0
      %1608 = vdwg.mxu0
      %1609 = vmatprep.subr.bf16.mxu0 0
      %1610 = vmatpush1.bf16.msra.mxu0 %v823
      %1611 = vmatprep.subr.bf16.mxu0 0
      %1612 = vmatpush1.bf16.msra.mxu0 %v820
      %1613 = vmatprep.subr.bf16.mxu0 0
      %1614 = vmatpush1.bf16.msra.mxu0 %v817
      %1615 = vmatprep.subr.bf16.mxu0 0
      %1616 = vmatpush1.bf16.msra.mxu0 %v814
      %1617 = vmatprep.subr.bf16.mxu0 0
      %1618 = vmatpush1.bf16.msra.mxu0 %v811
      %1619 = vmatprep.subr.bf16.mxu0 0
      %1620 = vmatpush1.bf16.msra.mxu0 %v808
      %1621 = vmatprep.subr.bf16.mxu0 0
      %1622 = vmatpush1.bf16.msra.mxu0 %v805
      %1623 = vmatprep.subr.bf16.mxu0 0
      %1624 = vmatpush1.bf16.msra.mxu0 %v802
      %1625 = vmatprep.subr.bf16.mxu0 0
      %1626 = vmatpush2.bf16.msra.mxu0 0
      %1627 = vmatprep.subr.bf16.mxu0 0
      %1628 = vmatpush2.bf16.msra.mxu0 0
      %1629 = vmatprep.subr.bf16.mxu0 0
      %1630 = vmatpush2.bf16.msra.mxu0 0
      %1631 = vmatprep.subr.bf16.mxu0 0
      %1632 = vmatpush2.bf16.msra.mxu0 0
      %1633 = vmatprep.subr.bf16.mxu0 0
      %1634 = vmatpush2.bf16.msra.mxu0 0
      %1635 = vmatprep.subr.bf16.mxu0 0
      %1636 = vmatpush2.bf16.msra.mxu0 0
      %1637 = vmatprep.subr.bf16.mxu0 0
      %1638 = vmatpush2.bf16.msra.mxu0 0
      %1639 = vmatprep.subr.bf16.mxu0 0
      %1640 = vmatpush2.bf16.msra.mxu0 0
      %1641 = vmatprep.mubr.bf16.mxu0 0
      %1642 = vmatmul.mubr.bf16.gmra.mxu0 %v1567
      %v1643 = vpop.f32.mrf.mxu0
      %v1644 = vadd.f32 %v716, %v1643
      %v1645 = vpop.f32.mrf.mxu0
      %v1646 = vpop.f32.mrf.mxu0
      %v1647 = vpop.f32.mrf.mxu0
      %1648 = vdwg.mxu0
      %v1649 = vunpack.c.l.bf16 %v1565
      %v1650 = vadd.f32 %v1649, %v1603
      %v1651 = vxor.u32 %v1650, 2147483648
      %v1652 = vmul.f32 %v1651, 1.442695
      %v1653 = vpow.pop %v1652
      %v1654 = vadd.f32 %v1653, 1.0
      %v1655 = vrcp.pop %v1654
      %v1656 = vmul.f32 1.0, %v1655
      %v1658 = vrot.slane %v1565, 4
      %v1660 = vunpack.c.l.bf16 %v1658
      %v1661 = vadd.f32 %v1660, %v1605
      %v1662 = vxor.u32 %v1661, 2147483648
      %v1663 = vmul.f32 %v1662, 1.442695
      %v1664 = vpow.pop %v1663
      %v1665 = vadd.f32 %v1664, 1.0
      %v1666 = vrcp.pop %v1665
      %v1667 = vmul.f32 1.0, %v1666
      %v1668 = vmul.f32 %v1656, %v1644
      %v1669 = vunpack.c.l.bf16 %v1566
      %v1670 = vadd.f32 %v1669, %v1668
      %v1671 = vtanh.pop %v1670
      %v1672 = vsub.f32 1.0, %v1667
      %v1673 = vmul.f32 %v1672, %v1671
      %v1674 = vmul.f32 %v1667, %v1442
      %v1675 = vadd.f32 %v1673, %v1674
      %vm1676 = vcmp.gt.s32.totalorder %v432, %v1556
      %v1677 = vsel %vm1676, 1, 0
      %1678 = vset.pattern.permute.xlu0 0
      %1679 = vperm.xlu0 %1678, %v1677
      %v1680 = vpop.permute.xlu0 %1679
      %vm1681 = vcmp.eq.s32.totalorder %v1680, 1
      %v1682 = vsel %vm1681, %v1675, %v1442
      %s1683 = scalar_lea.vmem %s319, 48
      %v1684 = vld [vmem:[%s1683] sm:$0xff]
      %v1685 = vld [vmem:[%s1683 + $0x8] sm:$0xf]
      %v1686 = vpack.c.bf16 %v1563, %v1563
      %1687 = vmatprep.subr.bf16.mxu0 %v558
      %1688 = vmatpush1.bf16.msra.mxu0 %v557
      %1689 = vmatprep.subr.bf16.mxu0 %v555
      %1690 = vmatpush1.bf16.msra.mxu0 %v554
      %1691 = vmatprep.subr.bf16.mxu0 %v552
      %1692 = vmatpush1.bf16.msra.mxu0 %v551
      %1693 = vmatprep.subr.bf16.mxu0 %v549
      %1694 = vmatpush1.bf16.msra.mxu0 %v548
      %1695 = vmatprep.subr.bf16.mxu0 %v546
      %1696 = vmatpush1.bf16.msra.mxu0 %v545
      %1697 = vmatprep.subr.bf16.mxu0 %v543
      %1698 = vmatpush1.bf16.msra.mxu0 %v542
      %1699 = vmatprep.subr.bf16.mxu0 %v540
      %1700 = vmatpush1.bf16.msra.mxu0 %v539
      %1701 = vmatprep.subr.bf16.mxu0 %v537
      %1702 = vmatpush1.bf16.msra.mxu0 %v536
      %1703 = vmatprep.subr.bf16.mxu0 0
      %1704 = vmatpush2.bf16.msra.mxu0 0
      %1705 = vmatprep.subr.bf16.mxu0 0
      %1706 = vmatpush2.bf16.msra.mxu0 0
      %1707 = vmatprep.subr.bf16.mxu0 0
      %1708 = vmatpush2.bf16.msra.mxu0 0
      %1709 = vmatprep.subr.bf16.mxu0 0
      %1710 = vmatpush2.bf16.msra.mxu0 0
      %1711 = vmatprep.subr.bf16.mxu0 0
      %1712 = vmatpush2.bf16.msra.mxu0 0
      %1713 = vmatprep.subr.bf16.mxu0 0
      %1714 = vmatpush2.bf16.msra.mxu0 0
      %1715 = vmatprep.subr.bf16.mxu0 0
      %1716 = vmatpush2.bf16.msra.mxu0 0
      %1717 = vmatprep.subr.bf16.mxu0 0
      %1718 = vmatpush2.bf16.msra.mxu0 0
      %1719 = vmatprep.mubr.bf16.mxu0 0
      %1720 = vmatmul.mubr.bf16.gmra.mxu0 %v1686
      %v1721 = vpop.f32.mrf.mxu0
      %v1722 = vadd.f32 %v444, %v1721
      %v1723 = vpop.f32.mrf.mxu0
      %v1724 = vadd.f32 %v448, %v1723
      %v1725 = vpop.f32.mrf.mxu0
      %v1726 = vpop.f32.mrf.mxu0
      %1727 = vdwg.mxu0
      %1728 = vmatprep.subr.bf16.mxu0 0
      %1729 = vmatpush1.bf16.msra.mxu0 %v559
      %1730 = vmatprep.subr.bf16.mxu0 0
      %1731 = vmatpush1.bf16.msra.mxu0 %v556
      %1732 = vmatprep.subr.bf16.mxu0 0
      %1733 = vmatpush1.bf16.msra.mxu0 %v553
      %1734 = vmatprep.subr.bf16.mxu0 0
      %1735 = vmatpush1.bf16.msra.mxu0 %v550
      %1736 = vmatprep.subr.bf16.mxu0 0
      %1737 = vmatpush1.bf16.msra.mxu0 %v547
      %1738 = vmatprep.subr.bf16.mxu0 0
      %1739 = vmatpush1.bf16.msra.mxu0 %v544
      %1740 = vmatprep.subr.bf16.mxu0 0
      %1741 = vmatpush1.bf16.msra.mxu0 %v541
      %1742 = vmatprep.subr.bf16.mxu0 0
      %1743 = vmatpush1.bf16.msra.mxu0 %v538
      %1744 = vmatprep.subr.bf16.mxu0 0
      %1745 = vmatpush2.bf16.msra.mxu0 0
      %1746 = vmatprep.subr.bf16.mxu0 0
      %1747 = vmatpush2.bf16.msra.mxu0 0
      %1748 = vmatprep.subr.bf16.mxu0 0
      %1749 = vmatpush2.bf16.msra.mxu0 0
      %1750 = vmatprep.subr.bf16.mxu0 0
      %1751 = vmatpush2.bf16.msra.mxu0 0
      %1752 = vmatprep.subr.bf16.mxu0 0
      %1753 = vmatpush2.bf16.msra.mxu0 0
      %1754 = vmatprep.subr.bf16.mxu0 0
      %1755 = vmatpush2.bf16.msra.mxu0 0
      %1756 = vmatprep.subr.bf16.mxu0 0
      %1757 = vmatpush2.bf16.msra.mxu0 0
      %1758 = vmatprep.subr.bf16.mxu0 0
      %1759 = vmatpush2.bf16.msra.mxu0 0
      %1760 = vmatprep.mubr.bf16.mxu0 0
      %1761 = vmatmul.mubr.bf16.gmra.mxu0 %v1686
      %v1762 = vpop.f32.mrf.mxu0
      %v1763 = vadd.f32 %v452, %v1762
      %v1764 = vpop.f32.mrf.mxu0
      %v1765 = vpop.f32.mrf.mxu0
      %v1766 = vpop.f32.mrf.mxu0
      %1767 = vdwg.mxu0
      %v1768 = vunpack.c.l.bf16 %v1684
      %v1769 = vadd.f32 %v1768, %v1722
      %v1770 = vxor.u32 %v1769, 2147483648
      %v1771 = vmul.f32 %v1770, 1.442695
      %v1772 = vpow.pop %v1771
      %v1773 = vadd.f32 %v1772, 1.0
      %v1774 = vrcp.pop %v1773
      %v1775 = vmul.f32 1.0, %v1774
      %v1777 = vrot.slane %v1684, 4
      %v1779 = vunpack.c.l.bf16 %v1777
      %v1780 = vadd.f32 %v1779, %v1724
      %v1781 = vxor.u32 %v1780, 2147483648
      %v1782 = vmul.f32 %v1781, 1.442695
      %v1783 = vpow.pop %v1782
      %v1784 = vadd.f32 %v1783, 1.0
      %v1785 = vrcp.pop %v1784
      %v1786 = vmul.f32 1.0, %v1785
      %v1787 = vmul.f32 %v1775, %v1763
      %v1788 = vunpack.c.l.bf16 %v1685
      %v1789 = vadd.f32 %v1788, %v1787
      %v1790 = vtanh.pop %v1789
      %v1791 = vsub.f32 1.0, %v1786
      %v1792 = vmul.f32 %v1791, %v1790
      %v1793 = vmul.f32 %v1786, %v1563
      %v1794 = vadd.f32 %v1792, %v1793
      %s1795 = sadd.s32 %s433, 4
      %v1796 = vstv %s1795
      %vm1797 = vcmp.gt.s32.totalorder %v430, %v1796
      %v1798 = vsel %vm1797, 1, 0
      %1799 = vset.pattern.permute.xlu0 0
      %1800 = vperm.xlu0 %1799, %v1798
      %v1801 = vpop.permute.xlu0 %1800
      %vm1802 = vcmp.eq.s32.totalorder %v1801, 1
      %v1803 = vsel %vm1802, %v1794, %v1563
      %s1804 = scalar_lea.vmem %s319, 144
      %v1805 = vld [vmem:[%s1804] sm:$0xff]
      %v1806 = vld [vmem:[%s1804 + $0x8] sm:$0xf]
      %v1807 = vpack.c.bf16 %v1682, %v1682
      %1808 = vmatprep.subr.bf16.mxu0 %v822
      %1809 = vmatpush1.bf16.msra.mxu0 %v821
      %1810 = vmatprep.subr.bf16.mxu0 %v819
      %1811 = vmatpush1.bf16.msra.mxu0 %v818
      %1812 = vmatprep.subr.bf16.mxu0 %v816
      %1813 = vmatpush1.bf16.msra.mxu0 %v815
      %1814 = vmatprep.subr.bf16.mxu0 %v813
      %1815 = vmatpush1.bf16.msra.mxu0 %v812
      %1816 = vmatprep.subr.bf16.mxu0 %v810
      %1817 = vmatpush1.bf16.msra.mxu0 %v809
      %1818 = vmatprep.subr.bf16.mxu0 %v807
      %1819 = vmatpush1.bf16.msra.mxu0 %v806
      %1820 = vmatprep.subr.bf16.mxu0 %v804
      %1821 = vmatpush1.bf16.msra.mxu0 %v803
      %1822 = vmatprep.subr.bf16.mxu0 %v801
      %1823 = vmatpush1.bf16.msra.mxu0 %v800
      %1824 = vmatprep.subr.bf16.mxu0 0
      %1825 = vmatpush2.bf16.msra.mxu0 0
      %1826 = vmatprep.subr.bf16.mxu0 0
      %1827 = vmatpush2.bf16.msra.mxu0 0
      %1828 = vmatprep.subr.bf16.mxu0 0
      %1829 = vmatpush2.bf16.msra.mxu0 0
      %1830 = vmatprep.subr.bf16.mxu0 0
      %1831 = vmatpush2.bf16.msra.mxu0 0
      %1832 = vmatprep.subr.bf16.mxu0 0
      %1833 = vmatpush2.bf16.msra.mxu0 0
      %1834 = vmatprep.subr.bf16.mxu0 0
      %1835 = vmatpush2.bf16.msra.mxu0 0
      %1836 = vmatprep.subr.bf16.mxu0 0
      %1837 = vmatpush2.bf16.msra.mxu0 0
      %1838 = vmatprep.subr.bf16.mxu0 0
      %1839 = vmatpush2.bf16.msra.mxu0 0
      %1840 = vmatprep.mubr.bf16.mxu0 0
      %1841 = vmatmul.mubr.bf16.gmra.mxu0 %v1807
      %v1842 = vpop.f32.mrf.mxu0
      %v1843 = vadd.f32 %v708, %v1842
      %v1844 = vpop.f32.mrf.mxu0
      %v1845 = vadd.f32 %v712, %v1844
      %v1846 = vpop.f32.mrf.mxu0
      %v1847 = vpop.f32.mrf.mxu0
      %1848 = vdwg.mxu0
      %1849 = vmatprep.subr.bf16.mxu0 0
      %1850 = vmatpush1.bf16.msra.mxu0 %v823
      %1851 = vmatprep.subr.bf16.mxu0 0
      %1852 = vmatpush1.bf16.msra.mxu0 %v820
      %1853 = vmatprep.subr.bf16.mxu0 0
      %1854 = vmatpush1.bf16.msra.mxu0 %v817
      %1855 = vmatprep.subr.bf16.mxu0 0
      %1856 = vmatpush1.bf16.msra.mxu0 %v814
      %1857 = vmatprep.subr.bf16.mxu0 0
      %1858 = vmatpush1.bf16.msra.mxu0 %v811
      %1859 = vmatprep.subr.bf16.mxu0 0
      %1860 = vmatpush1.bf16.msra.mxu0 %v808
      %1861 = vmatprep.subr.bf16.mxu0 0
      %1862 = vmatpush1.bf16.msra.mxu0 %v805
      %1863 = vmatprep.subr.bf16.mxu0 0
      %1864 = vmatpush1.bf16.msra.mxu0 %v802
      %1865 = vmatprep.subr.bf16.mxu0 0
      %1866 = vmatpush2.bf16.msra.mxu0 0
      %1867 = vmatprep.subr.bf16.mxu0 0
      %1868 = vmatpush2.bf16.msra.mxu0 0
      %1869 = vmatprep.subr.bf16.mxu0 0
      %1870 = vmatpush2.bf16.msra.mxu0 0
      %1871 = vmatprep.subr.bf16.mxu0 0
      %1872 = vmatpush2.bf16.msra.mxu0 0
      %1873 = vmatprep.subr.bf16.mxu0 0
      %1874 = vmatpush2.bf16.msra.mxu0 0
      %1875 = vmatprep.subr.bf16.mxu0 0
      %1876 = vmatpush2.bf16.msra.mxu0 0
      %1877 = vmatprep.subr.bf16.mxu0 0
      %1878 = vmatpush2.bf16.msra.mxu0 0
      %1879 = vmatprep.subr.bf16.mxu0 0
      %1880 = vmatpush2.bf16.msra.mxu0 0
      %1881 = vmatprep.mubr.bf16.mxu0 0
      %1882 = vmatmul.mubr.bf16.gmra.mxu0 %v1807
      %v1883 = vpop.f32.mrf.mxu0
      %v1884 = vadd.f32 %v716, %v1883
      %v1885 = vpop.f32.mrf.mxu0
      %v1886 = vpop.f32.mrf.mxu0
      %v1887 = vpop.f32.mrf.mxu0
      %1888 = vdwg.mxu0
      %v1889 = vunpack.c.l.bf16 %v1805
      %v1890 = vadd.f32 %v1889, %v1843
      %v1891 = vxor.u32 %v1890, 2147483648
      %v1892 = vmul.f32 %v1891, 1.442695
      %v1893 = vpow.pop %v1892
      %v1894 = vadd.f32 %v1893, 1.0
      %v1895 = vrcp.pop %v1894
      %v1896 = vmul.f32 1.0, %v1895
      %v1898 = vrot.slane %v1805, 4
      %v1900 = vunpack.c.l.bf16 %v1898
      %v1901 = vadd.f32 %v1900, %v1845
      %v1902 = vxor.u32 %v1901, 2147483648
      %v1903 = vmul.f32 %v1902, 1.442695
      %v1904 = vpow.pop %v1903
      %v1905 = vadd.f32 %v1904, 1.0
      %v1906 = vrcp.pop %v1905
      %v1907 = vmul.f32 1.0, %v1906
      %v1908 = vmul.f32 %v1896, %v1884
      %v1909 = vunpack.c.l.bf16 %v1806
      %v1910 = vadd.f32 %v1909, %v1908
      %v1911 = vtanh.pop %v1910
      %v1912 = vsub.f32 1.0, %v1907
      %v1913 = vmul.f32 %v1912, %v1911
      %v1914 = vmul.f32 %v1907, %v1682
      %v1915 = vadd.f32 %v1913, %v1914
      %vm1916 = vcmp.gt.s32.totalorder %v432, %v1796
      %v1917 = vsel %vm1916, 1, 0
      %1918 = vset.pattern.permute.xlu0 0
      %1919 = vperm.xlu0 %1918, %v1917
      %v1920 = vpop.permute.xlu0 %1919
      %vm1921 = vcmp.eq.s32.totalorder %v1920, 1
      %v1922 = vsel %vm1921, %v1915, %v1682
      %s1923 = scalar_lea.vmem %s319, 60
      %v1924 = vld [vmem:[%s1923] sm:$0xff]
      %v1925 = vld [vmem:[%s1923 + $0x8] sm:$0xf]
      %v1926 = vpack.c.bf16 %v1803, %v1803
      %1927 = vmatprep.subr.bf16.mxu0 %v558
      %1928 = vmatpush1.bf16.msra.mxu0 %v557
      %1929 = vmatprep.subr.bf16.mxu0 %v555
      %1930 = vmatpush1.bf16.msra.mxu0 %v554
      %1931 = vmatprep.subr.bf16.mxu0 %v552
      %1932 = vmatpush1.bf16.msra.mxu0 %v551
      %1933 = vmatprep.subr.bf16.mxu0 %v549
      %1934 = vmatpush1.bf16.msra.mxu0 %v548
      %1935 = vmatprep.subr.bf16.mxu0 %v546
      %1936 = vmatpush1.bf16.msra.mxu0 %v545
      %1937 = vmatprep.subr.bf16.mxu0 %v543
      %1938 = vmatpush1.bf16.msra.mxu0 %v542
      %1939 = vmatprep.subr.bf16.mxu0 %v540
      %1940 = vmatpush1.bf16.msra.mxu0 %v539
      %1941 = vmatprep.subr.bf16.mxu0 %v537
      %1942 = vmatpush1.bf16.msra.mxu0 %v536
      %1943 = vmatprep.subr.bf16.mxu0 0
      %1944 = vmatpush2.bf16.msra.mxu0 0
      %1945 = vmatprep.subr.bf16.mxu0 0
      %1946 = vmatpush2.bf16.msra.mxu0 0
      %1947 = vmatprep.subr.bf16.mxu0 0
      %1948 = vmatpush2.bf16.msra.mxu0 0
      %1949 = vmatprep.subr.bf16.mxu0 0
      %1950 = vmatpush2.bf16.msra.mxu0 0
      %1951 = vmatprep.subr.bf16.mxu0 0
      %1952 = vmatpush2.bf16.msra.mxu0 0
      %1953 = vmatprep.subr.bf16.mxu0 0
      %1954 = vmatpush2.bf16.msra.mxu0 0
      %1955 = vmatprep.subr.bf16.mxu0 0
      %1956 = vmatpush2.bf16.msra.mxu0 0
      %1957 = vmatprep.subr.bf16.mxu0 0
      %1958 = vmatpush2.bf16.msra.mxu0 0
      %1959 = vmatprep.mubr.bf16.mxu0 0
      %1960 = vmatmul.mubr.bf16.gmra.mxu0 %v1926
      %v1961 = vpop.f32.mrf.mxu0
      %v1962 = vadd.f32 %v444, %v1961
      %v1963 = vpop.f32.mrf.mxu0
      %v1964 = vadd.f32 %v448, %v1963
      %v1965 = vpop.f32.mrf.mxu0
      %v1966 = vpop.f32.mrf.mxu0
      %1967 = vdwg.mxu0
      %1968 = vmatprep.subr.bf16.mxu0 0
      %1969 = vmatpush1.bf16.msra.mxu0 %v559
      %1970 = vmatprep.subr.bf16.mxu0 0
      %1971 = vmatpush1.bf16.msra.mxu0 %v556
      %1972 = vmatprep.subr.bf16.mxu0 0
      %1973 = vmatpush1.bf16.msra.mxu0 %v553
      %1974 = vmatprep.subr.bf16.mxu0 0
      %1975 = vmatpush1.bf16.msra.mxu0 %v550
      %1976 = vmatprep.subr.bf16.mxu0 0
      %1977 = vmatpush1.bf16.msra.mxu0 %v547
      %1978 = vmatprep.subr.bf16.mxu0 0
      %1979 = vmatpush1.bf16.msra.mxu0 %v544
      %1980 = vmatprep.subr.bf16.mxu0 0
      %1981 = vmatpush1.bf16.msra.mxu0 %v541
      %1982 = vmatprep.subr.bf16.mxu0 0
      %1983 = vmatpush1.bf16.msra.mxu0 %v538
      %1984 = vmatprep.subr.bf16.mxu0 0
      %1985 = vmatpush2.bf16.msra.mxu0 0
      %1986 = vmatprep.subr.bf16.mxu0 0
      %1987 = vmatpush2.bf16.msra.mxu0 0
      %1988 = vmatprep.subr.bf16.mxu0 0
      %1989 = vmatpush2.bf16.msra.mxu0 0
      %1990 = vmatprep.subr.bf16.mxu0 0
      %1991 = vmatpush2.bf16.msra.mxu0 0
      %1992 = vmatprep.subr.bf16.mxu0 0
      %1993 = vmatpush2.bf16.msra.mxu0 0
      %1994 = vmatprep.subr.bf16.mxu0 0
      %1995 = vmatpush2.bf16.msra.mxu0 0
      %1996 = vmatprep.subr.bf16.mxu0 0
      %1997 = vmatpush2.bf16.msra.mxu0 0
      %1998 = vmatprep.subr.bf16.mxu0 0
      %1999 = vmatpush2.bf16.msra.mxu0 0
      %2000 = vmatprep.mubr.bf16.mxu0 0
      %2001 = vmatmul.mubr.bf16.gmra.mxu0 %v1926
      %v2002 = vpop.f32.mrf.mxu0
      %v2003 = vadd.f32 %v452, %v2002
      %v2004 = vpop.f32.mrf.mxu0
      %v2005 = vpop.f32.mrf.mxu0
      %v2006 = vpop.f32.mrf.mxu0
      %2007 = vdwg.mxu0
      %v2008 = vunpack.c.l.bf16 %v1924
      %v2009 = vadd.f32 %v2008, %v1962
      %v2010 = vxor.u32 %v2009, 2147483648
      %v2011 = vmul.f32 %v2010, 1.442695
      %v2012 = vpow.pop %v2011
      %v2013 = vadd.f32 %v2012, 1.0
      %v2014 = vrcp.pop %v2013
      %v2015 = vmul.f32 1.0, %v2014
      %v2017 = vrot.slane %v1924, 4
      %v2019 = vunpack.c.l.bf16 %v2017
      %v2020 = vadd.f32 %v2019, %v1964
      %v2021 = vxor.u32 %v2020, 2147483648
      %v2022 = vmul.f32 %v2021, 1.442695
      %v2023 = vpow.pop %v2022
      %v2024 = vadd.f32 %v2023, 1.0
      %v2025 = vrcp.pop %v2024
      %v2026 = vmul.f32 1.0, %v2025
      %v2027 = vmul.f32 %v2015, %v2003
      %v2028 = vunpack.c.l.bf16 %v1925
      %v2029 = vadd.f32 %v2028, %v2027
      %v2030 = vtanh.pop %v2029
      %v2031 = vsub.f32 1.0, %v2026
      %v2032 = vmul.f32 %v2031, %v2030
      %v2033 = vmul.f32 %v2026, %v1803
      %v2034 = vadd.f32 %v2032, %v2033
      %s2035 = sadd.s32 %s433, 5
      %v2036 = vstv %s2035
      %vm2037 = vcmp.gt.s32.totalorder %v430, %v2036
      %v2038 = vsel %vm2037, 1, 0
      %2039 = vset.pattern.permute.xlu0 0
      %2040 = vperm.xlu0 %2039, %v2038
      %v2041 = vpop.permute.xlu0 %2040
      %vm2042 = vcmp.eq.s32.totalorder %v2041, 1
      %v2043 = vsel %vm2042, %v2034, %v1803
      %s2044 = scalar_lea.vmem %s319, 156
      %v2045 = vld [vmem:[%s2044] sm:$0xff]
      %v2046 = vld [vmem:[%s2044 + $0x8] sm:$0xf]
      %v2047 = vpack.c.bf16 %v1922, %v1922
      %2048 = vmatprep.subr.bf16.mxu0 %v822
      %2049 = vmatpush1.bf16.msra.mxu0 %v821
      %2050 = vmatprep.subr.bf16.mxu0 %v819
      %2051 = vmatpush1.bf16.msra.mxu0 %v818
      %2052 = vmatprep.subr.bf16.mxu0 %v816
      %2053 = vmatpush1.bf16.msra.mxu0 %v815
      %2054 = vmatprep.subr.bf16.mxu0 %v813
      %2055 = vmatpush1.bf16.msra.mxu0 %v812
      %2056 = vmatprep.subr.bf16.mxu0 %v810
      %2057 = vmatpush1.bf16.msra.mxu0 %v809
      %2058 = vmatprep.subr.bf16.mxu0 %v807
      %2059 = vmatpush1.bf16.msra.mxu0 %v806
      %2060 = vmatprep.subr.bf16.mxu0 %v804
      %2061 = vmatpush1.bf16.msra.mxu0 %v803
      %2062 = vmatprep.subr.bf16.mxu0 %v801
      %2063 = vmatpush1.bf16.msra.mxu0 %v800
      %2064 = vmatprep.subr.bf16.mxu0 0
      %2065 = vmatpush2.bf16.msra.mxu0 0
      %2066 = vmatprep.subr.bf16.mxu0 0
      %2067 = vmatpush2.bf16.msra.mxu0 0
      %2068 = vmatprep.subr.bf16.mxu0 0
      %2069 = vmatpush2.bf16.msra.mxu0 0
      %2070 = vmatprep.subr.bf16.mxu0 0
      %2071 = vmatpush2.bf16.msra.mxu0 0
      %2072 = vmatprep.subr.bf16.mxu0 0
      %2073 = vmatpush2.bf16.msra.mxu0 0
      %2074 = vmatprep.subr.bf16.mxu0 0
      %2075 = vmatpush2.bf16.msra.mxu0 0
      %2076 = vmatprep.subr.bf16.mxu0 0
      %2077 = vmatpush2.bf16.msra.mxu0 0
      %2078 = vmatprep.subr.bf16.mxu0 0
      %2079 = vmatpush2.bf16.msra.mxu0 0
      %2080 = vmatprep.mubr.bf16.mxu0 0
      %2081 = vmatmul.mubr.bf16.gmra.mxu0 %v2047
      %v2082 = vpop.f32.mrf.mxu0
      %v2083 = vadd.f32 %v708, %v2082
      %v2084 = vpop.f32.mrf.mxu0
      %v2085 = vadd.f32 %v712, %v2084
      %v2086 = vpop.f32.mrf.mxu0
      %v2087 = vpop.f32.mrf.mxu0
      %2088 = vdwg.mxu0
      %2089 = vmatprep.subr.bf16.mxu0 0
      %2090 = vmatpush1.bf16.msra.mxu0 %v823
      %2091 = vmatprep.subr.bf16.mxu0 0
      %2092 = vmatpush1.bf16.msra.mxu0 %v820
      %2093 = vmatprep.subr.bf16.mxu0 0
      %2094 = vmatpush1.bf16.msra.mxu0 %v817
      %2095 = vmatprep.subr.bf16.mxu0 0
      %2096 = vmatpush1.bf16.msra.mxu0 %v814
      %2097 = vmatprep.subr.bf16.mxu0 0
      %2098 = vmatpush1.bf16.msra.mxu0 %v811
      %2099 = vmatprep.subr.bf16.mxu0 0
      %2100 = vmatpush1.bf16.msra.mxu0 %v808
      %2101 = vmatprep.subr.bf16.mxu0 0
      %2102 = vmatpush1.bf16.msra.mxu0 %v805
      %2103 = vmatprep.subr.bf16.mxu0 0
      %2104 = vmatpush1.bf16.msra.mxu0 %v802
      %2105 = vmatprep.subr.bf16.mxu0 0
      %2106 = vmatpush2.bf16.msra.mxu0 0
      %2107 = vmatprep.subr.bf16.mxu0 0
      %2108 = vmatpush2.bf16.msra.mxu0 0
      %2109 = vmatprep.subr.bf16.mxu0 0
      %2110 = vmatpush2.bf16.msra.mxu0 0
      %2111 = vmatprep.subr.bf16.mxu0 0
      %2112 = vmatpush2.bf16.msra.mxu0 0
      %2113 = vmatprep.subr.bf16.mxu0 0
      %2114 = vmatpush2.bf16.msra.mxu0 0
      %2115 = vmatprep.subr.bf16.mxu0 0
      %2116 = vmatpush2.bf16.msra.mxu0 0
      %2117 = vmatprep.subr.bf16.mxu0 0
      %2118 = vmatpush2.bf16.msra.mxu0 0
      %2119 = vmatprep.subr.bf16.mxu0 0
      %2120 = vmatpush2.bf16.msra.mxu0 0
      %2121 = vmatprep.mubr.bf16.mxu0 0
      %2122 = vmatmul.mubr.bf16.gmra.mxu0 %v2047
      %v2123 = vpop.f32.mrf.mxu0
      %v2124 = vadd.f32 %v716, %v2123
      %v2125 = vpop.f32.mrf.mxu0
      %v2126 = vpop.f32.mrf.mxu0
      %v2127 = vpop.f32.mrf.mxu0
      %2128 = vdwg.mxu0
      %v2129 = vunpack.c.l.bf16 %v2045
      %v2130 = vadd.f32 %v2129, %v2083
      %v2131 = vxor.u32 %v2130, 2147483648
      %v2132 = vmul.f32 %v2131, 1.442695
      %v2133 = vpow.pop %v2132
      %v2134 = vadd.f32 %v2133, 1.0
      %v2135 = vrcp.pop %v2134
      %v2136 = vmul.f32 1.0, %v2135
      %v2138 = vrot.slane %v2045, 4
      %v2140 = vunpack.c.l.bf16 %v2138
      %v2141 = vadd.f32 %v2140, %v2085
      %v2142 = vxor.u32 %v2141, 2147483648
      %v2143 = vmul.f32 %v2142, 1.442695
      %v2144 = vpow.pop %v2143
      %v2145 = vadd.f32 %v2144, 1.0
      %v2146 = vrcp.pop %v2145
      %v2147 = vmul.f32 1.0, %v2146
      %v2148 = vmul.f32 %v2136, %v2124
      %v2149 = vunpack.c.l.bf16 %v2046
      %v2150 = vadd.f32 %v2149, %v2148
      %v2151 = vtanh.pop %v2150
      %v2152 = vsub.f32 1.0, %v2147
      %v2153 = vmul.f32 %v2152, %v2151
      %v2154 = vmul.f32 %v2147, %v1922
      %v2155 = vadd.f32 %v2153, %v2154
      %vm2156 = vcmp.gt.s32.totalorder %v432, %v2036
      %v2157 = vsel %vm2156, 1, 0
      %2158 = vset.pattern.permute.xlu0 0
      %2159 = vperm.xlu0 %2158, %v2157
      %v2160 = vpop.permute.xlu0 %2159
      %vm2161 = vcmp.eq.s32.totalorder %v2160, 1
      %v2162 = vsel %vm2161, %v2155, %v1922
      %s2163 = scalar_lea.vmem %s319, 72
      %v2164 = vld [vmem:[%s2163] sm:$0xff]
      %v2165 = vld [vmem:[%s2163 + $0x8] sm:$0xf]
      %v2166 = vpack.c.bf16 %v2043, %v2043
      %2167 = vmatprep.subr.bf16.mxu0 %v558
      %2168 = vmatpush1.bf16.msra.mxu0 %v557
      %2169 = vmatprep.subr.bf16.mxu0 %v555
      %2170 = vmatpush1.bf16.msra.mxu0 %v554
      %2171 = vmatprep.subr.bf16.mxu0 %v552
      %2172 = vmatpush1.bf16.msra.mxu0 %v551
      %2173 = vmatprep.subr.bf16.mxu0 %v549
      %2174 = vmatpush1.bf16.msra.mxu0 %v548
      %2175 = vmatprep.subr.bf16.mxu0 %v546
      %2176 = vmatpush1.bf16.msra.mxu0 %v545
      %2177 = vmatprep.subr.bf16.mxu0 %v543
      %2178 = vmatpush1.bf16.msra.mxu0 %v542
      %2179 = vmatprep.subr.bf16.mxu0 %v540
      %2180 = vmatpush1.bf16.msra.mxu0 %v539
      %2181 = vmatprep.subr.bf16.mxu0 %v537
      %2182 = vmatpush1.bf16.msra.mxu0 %v536
      %2183 = vmatprep.subr.bf16.mxu0 0
      %2184 = vmatpush2.bf16.msra.mxu0 0
      %2185 = vmatprep.subr.bf16.mxu0 0
      %2186 = vmatpush2.bf16.msra.mxu0 0
      %2187 = vmatprep.subr.bf16.mxu0 0
      %2188 = vmatpush2.bf16.msra.mxu0 0
      %2189 = vmatprep.subr.bf16.mxu0 0
      %2190 = vmatpush2.bf16.msra.mxu0 0
      %2191 = vmatprep.subr.bf16.mxu0 0
      %2192 = vmatpush2.bf16.msra.mxu0 0
      %2193 = vmatprep.subr.bf16.mxu0 0
      %2194 = vmatpush2.bf16.msra.mxu0 0
      %2195 = vmatprep.subr.bf16.mxu0 0
      %2196 = vmatpush2.bf16.msra.mxu0 0
      %2197 = vmatprep.subr.bf16.mxu0 0
      %2198 = vmatpush2.bf16.msra.mxu0 0
      %2199 = vmatprep.mubr.bf16.mxu0 0
      %2200 = vmatmul.mubr.bf16.gmra.mxu0 %v2166
      %v2201 = vpop.f32.mrf.mxu0
      %v2202 = vadd.f32 %v444, %v2201
      %v2203 = vpop.f32.mrf.mxu0
      %v2204 = vadd.f32 %v448, %v2203
      %v2205 = vpop.f32.mrf.mxu0
      %v2206 = vpop.f32.mrf.mxu0
      %2207 = vdwg.mxu0
      %2208 = vmatprep.subr.bf16.mxu0 0
      %2209 = vmatpush1.bf16.msra.mxu0 %v559
      %2210 = vmatprep.subr.bf16.mxu0 0
      %2211 = vmatpush1.bf16.msra.mxu0 %v556
      %2212 = vmatprep.subr.bf16.mxu0 0
      %2213 = vmatpush1.bf16.msra.mxu0 %v553
      %2214 = vmatprep.subr.bf16.mxu0 0
      %2215 = vmatpush1.bf16.msra.mxu0 %v550
      %2216 = vmatprep.subr.bf16.mxu0 0
      %2217 = vmatpush1.bf16.msra.mxu0 %v547
      %2218 = vmatprep.subr.bf16.mxu0 0
      %2219 = vmatpush1.bf16.msra.mxu0 %v544
      %2220 = vmatprep.subr.bf16.mxu0 0
      %2221 = vmatpush1.bf16.msra.mxu0 %v541
      %2222 = vmatprep.subr.bf16.mxu0 0
      %2223 = vmatpush1.bf16.msra.mxu0 %v538
      %2224 = vmatprep.subr.bf16.mxu0 0
      %2225 = vmatpush2.bf16.msra.mxu0 0
      %2226 = vmatprep.subr.bf16.mxu0 0
      %2227 = vmatpush2.bf16.msra.mxu0 0
      %2228 = vmatprep.subr.bf16.mxu0 0
      %2229 = vmatpush2.bf16.msra.mxu0 0
      %2230 = vmatprep.subr.bf16.mxu0 0
      %2231 = vmatpush2.bf16.msra.mxu0 0
      %2232 = vmatprep.subr.bf16.mxu0 0
      %2233 = vmatpush2.bf16.msra.mxu0 0
      %2234 = vmatprep.subr.bf16.mxu0 0
      %2235 = vmatpush2.bf16.msra.mxu0 0
      %2236 = vmatprep.subr.bf16.mxu0 0
      %2237 = vmatpush2.bf16.msra.mxu0 0
      %2238 = vmatprep.subr.bf16.mxu0 0
      %2239 = vmatpush2.bf16.msra.mxu0 0
      %2240 = vmatprep.mubr.bf16.mxu0 0
      %2241 = vmatmul.mubr.bf16.gmra.mxu0 %v2166
      %v2242 = vpop.f32.mrf.mxu0
      %v2243 = vadd.f32 %v452, %v2242
      %v2244 = vpop.f32.mrf.mxu0
      %v2245 = vpop.f32.mrf.mxu0
      %v2246 = vpop.f32.mrf.mxu0
      %2247 = vdwg.mxu0
      %v2248 = vunpack.c.l.bf16 %v2164
      %v2249 = vadd.f32 %v2248, %v2202
      %v2250 = vxor.u32 %v2249, 2147483648
      %v2251 = vmul.f32 %v2250, 1.442695
      %v2252 = vpow.pop %v2251
      %v2253 = vadd.f32 %v2252, 1.0
      %v2254 = vrcp.pop %v2253
      %v2255 = vmul.f32 1.0, %v2254
      %v2257 = vrot.slane %v2164, 4
      %v2259 = vunpack.c.l.bf16 %v2257
      %v2260 = vadd.f32 %v2259, %v2204
      %v2261 = vxor.u32 %v2260, 2147483648
      %v2262 = vmul.f32 %v2261, 1.442695
      %v2263 = vpow.pop %v2262
      %v2264 = vadd.f32 %v2263, 1.0
      %v2265 = vrcp.pop %v2264
      %v2266 = vmul.f32 1.0, %v2265
      %v2267 = vmul.f32 %v2255, %v2243
      %v2268 = vunpack.c.l.bf16 %v2165
      %v2269 = vadd.f32 %v2268, %v2267
      %v2270 = vtanh.pop %v2269
      %v2271 = vsub.f32 1.0, %v2266
      %v2272 = vmul.f32 %v2271, %v2270
      %v2273 = vmul.f32 %v2266, %v2043
      %v2274 = vadd.f32 %v2272, %v2273
      %s2275 = sadd.s32 %s433, 6
      %v2276 = vstv %s2275
      %vm2277 = vcmp.gt.s32.totalorder %v430, %v2276
      %v2278 = vsel %vm2277, 1, 0
      %2279 = vset.pattern.permute.xlu0 0
      %2280 = vperm.xlu0 %2279, %v2278
      %v2281 = vpop.permute.xlu0 %2280
      %vm2282 = vcmp.eq.s32.totalorder %v2281, 1
      %v2283 = vsel %vm2282, %v2274, %v2043
      %s2284 = scalar_lea.vmem %s319, 168
      %v2285 = vld [vmem:[%s2284] sm:$0xff]
      %v2286 = vld [vmem:[%s2284 + $0x8] sm:$0xf]
      %v2287 = vpack.c.bf16 %v2162, %v2162
      %2288 = vmatprep.subr.bf16.mxu0 %v822
      %2289 = vmatpush1.bf16.msra.mxu0 %v821
      %2290 = vmatprep.subr.bf16.mxu0 %v819
      %2291 = vmatpush1.bf16.msra.mxu0 %v818
      %2292 = vmatprep.subr.bf16.mxu0 %v816
      %2293 = vmatpush1.bf16.msra.mxu0 %v815
      %2294 = vmatprep.subr.bf16.mxu0 %v813
      %2295 = vmatpush1.bf16.msra.mxu0 %v812
      %2296 = vmatprep.subr.bf16.mxu0 %v810
      %2297 = vmatpush1.bf16.msra.mxu0 %v809
      %2298 = vmatprep.subr.bf16.mxu0 %v807
      %2299 = vmatpush1.bf16.msra.mxu0 %v806
      %2300 = vmatprep.subr.bf16.mxu0 %v804
      %2301 = vmatpush1.bf16.msra.mxu0 %v803
      %2302 = vmatprep.subr.bf16.mxu0 %v801
      %2303 = vmatpush1.bf16.msra.mxu0 %v800
      %2304 = vmatprep.subr.bf16.mxu0 0
      %2305 = vmatpush2.bf16.msra.mxu0 0
      %2306 = vmatprep.subr.bf16.mxu0 0
      %2307 = vmatpush2.bf16.msra.mxu0 0
      %2308 = vmatprep.subr.bf16.mxu0 0
      %2309 = vmatpush2.bf16.msra.mxu0 0
      %2310 = vmatprep.subr.bf16.mxu0 0
      %2311 = vmatpush2.bf16.msra.mxu0 0
      %2312 = vmatprep.subr.bf16.mxu0 0
      %2313 = vmatpush2.bf16.msra.mxu0 0
      %2314 = vmatprep.subr.bf16.mxu0 0
      %2315 = vmatpush2.bf16.msra.mxu0 0
      %2316 = vmatprep.subr.bf16.mxu0 0
      %2317 = vmatpush2.bf16.msra.mxu0 0
      %2318 = vmatprep.subr.bf16.mxu0 0
      %2319 = vmatpush2.bf16.msra.mxu0 0
      %2320 = vmatprep.mubr.bf16.mxu0 0
      %2321 = vmatmul.mubr.bf16.gmra.mxu0 %v2287
      %v2322 = vpop.f32.mrf.mxu0
      %v2323 = vadd.f32 %v708, %v2322
      %v2324 = vpop.f32.mrf.mxu0
      %v2325 = vadd.f32 %v712, %v2324
      %v2326 = vpop.f32.mrf.mxu0
      %v2327 = vpop.f32.mrf.mxu0
      %2328 = vdwg.mxu0
      %2329 = vmatprep.subr.bf16.mxu0 0
      %2330 = vmatpush1.bf16.msra.mxu0 %v823
      %2331 = vmatprep.subr.bf16.mxu0 0
      %2332 = vmatpush1.bf16.msra.mxu0 %v820
      %2333 = vmatprep.subr.bf16.mxu0 0
      %2334 = vmatpush1.bf16.msra.mxu0 %v817
      %2335 = vmatprep.subr.bf16.mxu0 0
      %2336 = vmatpush1.bf16.msra.mxu0 %v814
      %2337 = vmatprep.subr.bf16.mxu0 0
      %2338 = vmatpush1.bf16.msra.mxu0 %v811
      %2339 = vmatprep.subr.bf16.mxu0 0
      %2340 = vmatpush1.bf16.msra.mxu0 %v808
      %2341 = vmatprep.subr.bf16.mxu0 0
      %2342 = vmatpush1.bf16.msra.mxu0 %v805
      %2343 = vmatprep.subr.bf16.mxu0 0
      %2344 = vmatpush1.bf16.msra.mxu0 %v802
      %2345 = vmatprep.subr.bf16.mxu0 0
      %2346 = vmatpush2.bf16.msra.mxu0 0
      %2347 = vmatprep.subr.bf16.mxu0 0
      %2348 = vmatpush2.bf16.msra.mxu0 0
      %2349 = vmatprep.subr.bf16.mxu0 0
      %2350 = vmatpush2.bf16.msra.mxu0 0
      %2351 = vmatprep.subr.bf16.mxu0 0
      %2352 = vmatpush2.bf16.msra.mxu0 0
      %2353 = vmatprep.subr.bf16.mxu0 0
      %2354 = vmatpush2.bf16.msra.mxu0 0
      %2355 = vmatprep.subr.bf16.mxu0 0
      %2356 = vmatpush2.bf16.msra.mxu0 0
      %2357 = vmatprep.subr.bf16.mxu0 0
      %2358 = vmatpush2.bf16.msra.mxu0 0
      %2359 = vmatprep.subr.bf16.mxu0 0
      %2360 = vmatpush2.bf16.msra.mxu0 0
      %2361 = vmatprep.mubr.bf16.mxu0 0
      %2362 = vmatmul.mubr.bf16.gmra.mxu0 %v2287
      %v2363 = vpop.f32.mrf.mxu0
      %v2364 = vadd.f32 %v716, %v2363
      %v2365 = vpop.f32.mrf.mxu0
      %v2366 = vpop.f32.mrf.mxu0
      %v2367 = vpop.f32.mrf.mxu0
      %2368 = vdwg.mxu0
      %v2369 = vunpack.c.l.bf16 %v2285
      %v2370 = vadd.f32 %v2369, %v2323
      %v2371 = vxor.u32 %v2370, 2147483648
      %v2372 = vmul.f32 %v2371, 1.442695
      %v2373 = vpow.pop %v2372
      %v2374 = vadd.f32 %v2373, 1.0
      %v2375 = vrcp.pop %v2374
      %v2376 = vmul.f32 1.0, %v2375
      %v2378 = vrot.slane %v2285, 4
      %v2380 = vunpack.c.l.bf16 %v2378
      %v2381 = vadd.f32 %v2380, %v2325
      %v2382 = vxor.u32 %v2381, 2147483648
      %v2383 = vmul.f32 %v2382, 1.442695
      %v2384 = vpow.pop %v2383
      %v2385 = vadd.f32 %v2384, 1.0
      %v2386 = vrcp.pop %v2385
      %v2387 = vmul.f32 1.0, %v2386
      %v2388 = vmul.f32 %v2376, %v2364
      %v2389 = vunpack.c.l.bf16 %v2286
      %v2390 = vadd.f32 %v2389, %v2388
      %v2391 = vtanh.pop %v2390
      %v2392 = vsub.f32 1.0, %v2387
      %v2393 = vmul.f32 %v2392, %v2391
      %v2394 = vmul.f32 %v2387, %v2162
      %v2395 = vadd.f32 %v2393, %v2394
      %vm2396 = vcmp.gt.s32.totalorder %v432, %v2276
      %v2397 = vsel %vm2396, 1, 0
      %2398 = vset.pattern.permute.xlu0 0
      %2399 = vperm.xlu0 %2398, %v2397
      %v2400 = vpop.permute.xlu0 %2399
      %vm2401 = vcmp.eq.s32.totalorder %v2400, 1
      %v2402 = vsel %vm2401, %v2395, %v2162
      %s2403 = scalar_lea.vmem %s319, 84
      %v2404 = vld [vmem:[%s2403] sm:$0xff]
      %v2405 = vld [vmem:[%s2403 + $0x8] sm:$0xf]
      %v2406 = vpack.c.bf16 %v2283, %v2283
      %2407 = vmatprep.subr.bf16.mxu0 %v558
      %2408 = vmatpush1.bf16.msra.mxu0 %v557
      %2409 = vmatprep.subr.bf16.mxu0 %v555
      %2410 = vmatpush1.bf16.msra.mxu0 %v554
      %2411 = vmatprep.subr.bf16.mxu0 %v552
      %2412 = vmatpush1.bf16.msra.mxu0 %v551
      %2413 = vmatprep.subr.bf16.mxu0 %v549
      %2414 = vmatpush1.bf16.msra.mxu0 %v548
      %2415 = vmatprep.subr.bf16.mxu0 %v546
      %2416 = vmatpush1.bf16.msra.mxu0 %v545
      %2417 = vmatprep.subr.bf16.mxu0 %v543
      %2418 = vmatpush1.bf16.msra.mxu0 %v542
      %2419 = vmatprep.subr.bf16.mxu0 %v540
      %2420 = vmatpush1.bf16.msra.mxu0 %v539
      %2421 = vmatprep.subr.bf16.mxu0 %v537
      %2422 = vmatpush1.bf16.msra.mxu0 %v536
      %2423 = vmatprep.subr.bf16.mxu0 0
      %2424 = vmatpush2.bf16.msra.mxu0 0
      %2425 = vmatprep.subr.bf16.mxu0 0
      %2426 = vmatpush2.bf16.msra.mxu0 0
      %2427 = vmatprep.subr.bf16.mxu0 0
      %2428 = vmatpush2.bf16.msra.mxu0 0
      %2429 = vmatprep.subr.bf16.mxu0 0
      %2430 = vmatpush2.bf16.msra.mxu0 0
      %2431 = vmatprep.subr.bf16.mxu0 0
      %2432 = vmatpush2.bf16.msra.mxu0 0
      %2433 = vmatprep.subr.bf16.mxu0 0
      %2434 = vmatpush2.bf16.msra.mxu0 0
      %2435 = vmatprep.subr.bf16.mxu0 0
      %2436 = vmatpush2.bf16.msra.mxu0 0
      %2437 = vmatprep.subr.bf16.mxu0 0
      %2438 = vmatpush2.bf16.msra.mxu0 0
      %2439 = vmatprep.mubr.bf16.mxu0 0
      %2440 = vmatmul.mubr.bf16.gmra.mxu0 %v2406
      %v2441 = vpop.f32.mrf.mxu0
      %v2442 = vadd.f32 %v444, %v2441
      %v2443 = vpop.f32.mrf.mxu0
      %v2444 = vadd.f32 %v448, %v2443
      %v2445 = vpop.f32.mrf.mxu0
      %v2446 = vpop.f32.mrf.mxu0
      %2447 = vdwg.mxu0
      %2448 = vmatprep.subr.bf16.mxu0 0
      %2449 = vmatpush1.bf16.msra.mxu0 %v559
      %2450 = vmatprep.subr.bf16.mxu0 0
      %2451 = vmatpush1.bf16.msra.mxu0 %v556
      %2452 = vmatprep.subr.bf16.mxu0 0
      %2453 = vmatpush1.bf16.msra.mxu0 %v553
      %2454 = vmatprep.subr.bf16.mxu0 0
      %2455 = vmatpush1.bf16.msra.mxu0 %v550
      %2456 = vmatprep.subr.bf16.mxu0 0
      %2457 = vmatpush1.bf16.msra.mxu0 %v547
      %2458 = vmatprep.subr.bf16.mxu0 0
      %2459 = vmatpush1.bf16.msra.mxu0 %v544
      %2460 = vmatprep.subr.bf16.mxu0 0
      %2461 = vmatpush1.bf16.msra.mxu0 %v541
      %2462 = vmatprep.subr.bf16.mxu0 0
      %2463 = vmatpush1.bf16.msra.mxu0 %v538
      %2464 = vmatprep.subr.bf16.mxu0 0
      %2465 = vmatpush2.bf16.msra.mxu0 0
      %2466 = vmatprep.subr.bf16.mxu0 0
      %2467 = vmatpush2.bf16.msra.mxu0 0
      %2468 = vmatprep.subr.bf16.mxu0 0
      %2469 = vmatpush2.bf16.msra.mxu0 0
      %2470 = vmatprep.subr.bf16.mxu0 0
      %2471 = vmatpush2.bf16.msra.mxu0 0
      %2472 = vmatprep.subr.bf16.mxu0 0
      %2473 = vmatpush2.bf16.msra.mxu0 0
      %2474 = vmatprep.subr.bf16.mxu0 0
      %2475 = vmatpush2.bf16.msra.mxu0 0
      %2476 = vmatprep.subr.bf16.mxu0 0
      %2477 = vmatpush2.bf16.msra.mxu0 0
      %2478 = vmatprep.subr.bf16.mxu0 0
      %2479 = vmatpush2.bf16.msra.mxu0 0
      %2480 = vmatprep.mubr.bf16.mxu0 0
      %2481 = vmatmul.mubr.bf16.gmra.mxu0 %v2406
      %v2482 = vpop.f32.mrf.mxu0
      %v2483 = vadd.f32 %v452, %v2482
      %v2484 = vpop.f32.mrf.mxu0
      %v2485 = vpop.f32.mrf.mxu0
      %v2486 = vpop.f32.mrf.mxu0
      %2487 = vdwg.mxu0
      %v2488 = vunpack.c.l.bf16 %v2404
      %v2489 = vadd.f32 %v2488, %v2442
      %v2490 = vxor.u32 %v2489, 2147483648
      %v2491 = vmul.f32 %v2490, 1.442695
      %v2492 = vpow.pop %v2491
      %v2493 = vadd.f32 %v2492, 1.0
      %v2494 = vrcp.pop %v2493
      %v2495 = vmul.f32 1.0, %v2494
      %v2497 = vrot.slane %v2404, 4
      %v2499 = vunpack.c.l.bf16 %v2497
      %v2500 = vadd.f32 %v2499, %v2444
      %v2501 = vxor.u32 %v2500, 2147483648
      %v2502 = vmul.f32 %v2501, 1.442695
      %v2503 = vpow.pop %v2502
      %v2504 = vadd.f32 %v2503, 1.0
      %v2505 = vrcp.pop %v2504
      %v2506 = vmul.f32 1.0, %v2505
      %v2507 = vmul.f32 %v2495, %v2483
      %v2508 = vunpack.c.l.bf16 %v2405
      %v2509 = vadd.f32 %v2508, %v2507
      %v2510 = vtanh.pop %v2509
      %v2511 = vsub.f32 1.0, %v2506
      %v2512 = vmul.f32 %v2511, %v2510
      %v2513 = vmul.f32 %v2506, %v2283
      %v2514 = vadd.f32 %v2512, %v2513
      %s2515 = sadd.s32 %s433, 7
      %v2516 = vstv %s2515
      %vm2517 = vcmp.gt.s32.totalorder %v430, %v2516
      %v2518 = vsel %vm2517, 1, 0
      %2519 = vset.pattern.permute.xlu0 0
      %2520 = vperm.xlu0 %2519, %v2518
      %v2521 = vpop.permute.xlu0 %2520
      %vm2522 = vcmp.eq.s32.totalorder %v2521, 1
      %v2523 = vsel %vm2522, %v2514, %v2283
      %s2524 = scalar_lea.vmem %s319, 180
      %v2525 = vld [vmem:[%s2524] sm:$0xff]
      %v2526 = vld [vmem:[%s2524 + $0x8] sm:$0xf]
      %v2527 = vpack.c.bf16 %v2402, %v2402
      %2528 = vmatprep.subr.bf16.mxu0 %v822
      %2529 = vmatpush1.bf16.msra.mxu0 %v821
      %2530 = vmatprep.subr.bf16.mxu0 %v819
      %2531 = vmatpush1.bf16.msra.mxu0 %v818
      %2532 = vmatprep.subr.bf16.mxu0 %v816
      %2533 = vmatpush1.bf16.msra.mxu0 %v815
      %2534 = vmatprep.subr.bf16.mxu0 %v813
      %2535 = vmatpush1.bf16.msra.mxu0 %v812
      %2536 = vmatprep.subr.bf16.mxu0 %v810
      %2537 = vmatpush1.bf16.msra.mxu0 %v809
      %2538 = vmatprep.subr.bf16.mxu0 %v807
      %2539 = vmatpush1.bf16.msra.mxu0 %v806
      %2540 = vmatprep.subr.bf16.mxu0 %v804
      %2541 = vmatpush1.bf16.msra.mxu0 %v803
      %2542 = vmatprep.subr.bf16.mxu0 %v801
      %2543 = vmatpush1.bf16.msra.mxu0 %v800
      %2544 = vmatprep.subr.bf16.mxu0 0
      %2545 = vmatpush2.bf16.msra.mxu0 0
      %2546 = vmatprep.subr.bf16.mxu0 0
      %2547 = vmatpush2.bf16.msra.mxu0 0
      %2548 = vmatprep.subr.bf16.mxu0 0
      %2549 = vmatpush2.bf16.msra.mxu0 0
      %2550 = vmatprep.subr.bf16.mxu0 0
      %2551 = vmatpush2.bf16.msra.mxu0 0
      %2552 = vmatprep.subr.bf16.mxu0 0
      %2553 = vmatpush2.bf16.msra.mxu0 0
      %2554 = vmatprep.subr.bf16.mxu0 0
      %2555 = vmatpush2.bf16.msra.mxu0 0
      %2556 = vmatprep.subr.bf16.mxu0 0
      %2557 = vmatpush2.bf16.msra.mxu0 0
      %2558 = vmatprep.subr.bf16.mxu0 0
      %2559 = vmatpush2.bf16.msra.mxu0 0
      %2560 = vmatprep.mubr.bf16.mxu0 0
      %2561 = vmatmul.mubr.bf16.gmra.mxu0 %v2527
      %v2562 = vpop.f32.mrf.mxu0
      %v2563 = vadd.f32 %v708, %v2562
      %v2564 = vpop.f32.mrf.mxu0
      %v2565 = vadd.f32 %v712, %v2564
      %v2566 = vpop.f32.mrf.mxu0
      %v2567 = vpop.f32.mrf.mxu0
      %2568 = vdwg.mxu0
      %2569 = vmatprep.subr.bf16.mxu0 0
      %2570 = vmatpush1.bf16.msra.mxu0 %v823
      %2571 = vmatprep.subr.bf16.mxu0 0
      %2572 = vmatpush1.bf16.msra.mxu0 %v820
      %2573 = vmatprep.subr.bf16.mxu0 0
      %2574 = vmatpush1.bf16.msra.mxu0 %v817
      %2575 = vmatprep.subr.bf16.mxu0 0
      %2576 = vmatpush1.bf16.msra.mxu0 %v814
      %2577 = vmatprep.subr.bf16.mxu0 0
      %2578 = vmatpush1.bf16.msra.mxu0 %v811
      %2579 = vmatprep.subr.bf16.mxu0 0
      %2580 = vmatpush1.bf16.msra.mxu0 %v808
      %2581 = vmatprep.subr.bf16.mxu0 0
      %2582 = vmatpush1.bf16.msra.mxu0 %v805
      %2583 = vmatprep.subr.bf16.mxu0 0
      %2584 = vmatpush1.bf16.msra.mxu0 %v802
      %2585 = vmatprep.subr.bf16.mxu0 0
      %2586 = vmatpush2.bf16.msra.mxu0 0
      %2587 = vmatprep.subr.bf16.mxu0 0
      %2588 = vmatpush2.bf16.msra.mxu0 0
      %2589 = vmatprep.subr.bf16.mxu0 0
      %2590 = vmatpush2.bf16.msra.mxu0 0
      %2591 = vmatprep.subr.bf16.mxu0 0
      %2592 = vmatpush2.bf16.msra.mxu0 0
      %2593 = vmatprep.subr.bf16.mxu0 0
      %2594 = vmatpush2.bf16.msra.mxu0 0
      %2595 = vmatprep.subr.bf16.mxu0 0
      %2596 = vmatpush2.bf16.msra.mxu0 0
      %2597 = vmatprep.subr.bf16.mxu0 0
      %2598 = vmatpush2.bf16.msra.mxu0 0
      %2599 = vmatprep.subr.bf16.mxu0 0
      %2600 = vmatpush2.bf16.msra.mxu0 0
      %2601 = vmatprep.mubr.bf16.mxu0 0
      %2602 = vmatmul.mubr.bf16.gmra.mxu0 %v2527
      %v2603 = vpop.f32.mrf.mxu0
      %v2604 = vadd.f32 %v716, %v2603
      %v2605 = vpop.f32.mrf.mxu0
      %v2606 = vpop.f32.mrf.mxu0
      %v2607 = vpop.f32.mrf.mxu0
      %2608 = vdwg.mxu0
      %v2609 = vunpack.c.l.bf16 %v2525
      %v2610 = vadd.f32 %v2609, %v2563
      %v2611 = vxor.u32 %v2610, 2147483648
      %v2612 = vmul.f32 %v2611, 1.442695
      %v2613 = vpow.pop %v2612
      %v2614 = vadd.f32 %v2613, 1.0
      %v2615 = vrcp.pop %v2614
      %v2616 = vmul.f32 1.0, %v2615
      %v2618 = vrot.slane %v2525, 4
      %v2620 = vunpack.c.l.bf16 %v2618
      %v2621 = vadd.f32 %v2620, %v2565
      %v2622 = vxor.u32 %v2621, 2147483648
      %v2623 = vmul.f32 %v2622, 1.442695
      %v2624 = vpow.pop %v2623
      %v2625 = vadd.f32 %v2624, 1.0
      %v2626 = vrcp.pop %v2625
      %v2627 = vmul.f32 1.0, %v2626
      %v2628 = vmul.f32 %v2616, %v2604
      %v2629 = vunpack.c.l.bf16 %v2526
      %v2630 = vadd.f32 %v2629, %v2628
      %v2631 = vtanh.pop %v2630
      %v2632 = vsub.f32 1.0, %v2627
      %v2633 = vmul.f32 %v2632, %v2631
      %v2634 = vmul.f32 %v2627, %v2402
      %v2635 = vadd.f32 %v2633, %v2634
      %vm2636 = vcmp.gt.s32.totalorder %v432, %v2516
      %v2637 = vsel %vm2636, 1, 0
      %2638 = vset.pattern.permute.xlu0 0
      %2639 = vperm.xlu0 %2638, %v2637
      %v2640 = vpop.permute.xlu0 %2639
      %vm2641 = vcmp.eq.s32.totalorder %v2640, 1
      %v2642 = vsel %vm2641, %v2635, %v2402
      %2643 = vst [vmem:[#allocation2] sm:$0xff] %v2523
      %2644 = vst [vmem:[%s435] sm:$0xff] %v2642
      %v2645 = vld [vmem:[#allocation2] sm:$0xff]
      %v2646 = vld [vmem:[#allocation2 + $0x8] sm:$0xff]
      %2647 = vst [vmem:[%s351] sm:$0xff] %v2645
      %2648 = vst [vmem:[%s351 + $0x8] sm:$0xff] %v2646
      %s2649 = smul.u32 2, %s20
      %p2650 = scmp.lt.s32.totalorder %s2649, 3
      %s2651 = scalar_select %p2650, %s2649, 3
      %s2652 = smul.addr %s2651, 8
      %s2653 = scalar_lea.vmem %s5, %s2652
      // Predicated region
      $region45: #{diallv_forward.12} parent=39 // pred_check
        %p2654 = pneg %p178
      $region46: #{diallv_forward.12} parent=39 // pred_check_branch
        %2656 = sbr.rel (%p2654) target = $region48
      $region47: #{diallv_forward.12} parent=39 // pred_region
        %s2657 = smul.u32 2, %s20
      $region48: #{diallv_forward.12} parent=39 // pred_fallthru
        _
    $region40: #{diallv_forward.12} parent=5 // pred_fallthru
      _
    %p2658 = scmp.le.s32.totalorder 2, %s11
    // Predicated region
    $region49: #{diallv_forward.12} parent=5 // pred_check
      %p2659 = pneg %p2658
    $region50: #{diallv_forward.12} parent=5 // pred_check_branch
      %2661 = sbr.rel (%p2659) target = $region52
    $region51: #{diallv_forward.12} parent=5 // pred_region
      %s2662 = ssub.s32 %s11, 2
      // Predicated region
      $region53: #{diallv_forward.12} parent=51 // pred_check
        %p2663 = pneg %p184
      $region54: #{diallv_forward.12} parent=51 // pred_check_branch
        %2665 = sbr.rel (%p2663) target = $region56
      $region55: #{diallv_forward.12} parent=51 // pred_region
        %s2666 = smul.u32 2, %s22
        %p2667 = scmp.lt.s32.totalorder %s2666, 3
        %s2668 = scalar_select %p2667, %s2666, 3
        %s2669 = smul.addr %s2668, 8
        %s2670 = scalar_lea.vmem %s5, %s2669
      $region56: #{diallv_forward.12} parent=51 // pred_fallthru
        _
    $region52: #{diallv_forward.12} parent=5 // pred_fallthru
      _
  $region6: #{diallv_forward.12} parent=0 // loop_footer
    %s15 = sadd.s32 1, %s11
  $region7: #{diallv_forward.12} parent=0 // loop_footer_branch
    %10 = sbr.rel target = $region3
  $region8: #{diallv_forward.12} parent=0 // loop_exit
    _

// kernel: diallv_forward.17
$region0: #{diallv_forward.17}
  #allocation0 [shape = 'u32[]', space=smem, size = 0x4, offset = 0x4, fixed_abs, tag = 'smem constant byte address 0x4 - core index']
  #allocation1 [shape = 'u32[144,128]{1,0:T(1,128)}', space=vmem, size = 0x12000, scoped, tag = 'internal scratch']
  #allocation2 [shape = 'f32[1,8,128]{2,1,0:T(8,128)}', space=vmem, size = 0x1000, scoped, tag = 'scratch operand']
  %s0 = inlined_call_operand.vmem [shape: bf16[1,8,8,384], index: 0, kind: input, shape index: {}]
  %s1 = inlined_call_operand.vmem [shape: f32[1,8,128], index: 1, kind: input, shape index: {}]
  %s2 = inlined_call_operand.vmem [shape: s32[1,8,1], index: 2, kind: input, shape index: {}]
  %s3 = inlined_call_operand.vmem [shape: bf16[1,128,384], index: 3, kind: input, shape index: {}]
  %s4 = inlined_call_operand.vmem [shape: f32[1,1,384], index: 4, kind: input, shape index: {}]
  %s5 = inlined_call_operand.vmem [shape: bf16[1,8,8,128], index: 5, kind: output, shape index: {}]
  %s6 = sld [smem:[#allocation0]]
  $region34: #{diallv_forward.17} parent=0
    _
  %s8 = ssub.s32 1, %s6
  %s9 = scalar_select 0, %s8, %s6
  // Predicated region
  $region2: #{diallv_forward.17} parent=0 // pred_check
    _
  $region3: #{diallv_forward.17} parent=0 // pred_check_branch
    %11 = sbr.rel (0) target = $region5
  $region4: #{diallv_forward.17} parent=0 // pred_region
    _
  $region5: #{diallv_forward.17} parent=0 // pred_fallthru
    _
  // Predicated region
  $region6: #{diallv_forward.17} parent=0 // pred_check
    _
  $region7: #{diallv_forward.17} parent=0 // pred_check_branch
    %13 = sbr.rel (0) target = $region9
  $region8: #{diallv_forward.17} parent=0 // pred_region
    _
  $region9: #{diallv_forward.17} parent=0 // pred_fallthru
    _
  // Predicated region
  $region10: #{diallv_forward.17} parent=0 // pred_check
    _
  $region11: #{diallv_forward.17} parent=0 // pred_check_branch
    %15 = sbr.rel (0) target = $region13
  $region12: #{diallv_forward.17} parent=0 // pred_region
    _
  $region13: #{diallv_forward.17} parent=0 // pred_fallthru
    _
  // Predicated region
  $region14: #{diallv_forward.17} parent=0 // pred_check
    _
  $region15: #{diallv_forward.17} parent=0 // pred_check_branch
    %17 = sbr.rel (0) target = $region17
  $region16: #{diallv_forward.17} parent=0 // pred_region
    _
  $region17: #{diallv_forward.17} parent=0 // pred_fallthru
    _
  // Predicated region
  $region18: #{diallv_forward.17} parent=0 // pred_check
    _
  $region19: #{diallv_forward.17} parent=0 // pred_check_branch
    %19 = sbr.rel (0) target = $region21
  $region20: #{diallv_forward.17} parent=0 // pred_region
    _
  $region21: #{diallv_forward.17} parent=0 // pred_fallthru
    _
  %p21 = scmp.eq.s32.totalorder 0, 0
  // Predicated region
  $region22: #{diallv_forward.17} parent=0 // pred_check
    %p22 = pneg %p21
  $region23: #{diallv_forward.17} parent=0 // pred_check_branch
    %24 = sbr.rel (%p22) target = $region25
  $region24: #{diallv_forward.17} parent=0 // pred_region
    %v25 = vld [vmem:[%s1] sm:$0xff]
    %26 = vst [vmem:[#allocation2] sm:$0xff] %v25
  $region25: #{diallv_forward.17} parent=0 // pred_fallthru
    _
  %v27 = vld [vmem:[%s3] sm:$0xff]
  %v28 = vld [vmem:[%s3 + $0x8] sm:$0xf]
  %v29 = vld [vmem:[%s3 + $0xc] sm:$0xff]
  %v30 = vld [vmem:[%s3 + $0x14] sm:$0xf]
  %v31 = vld [vmem:[%s3 + $0x18] sm:$0xff]
  %v32 = vld [vmem:[%s3 + $0x20] sm:$0xf]
  %v33 = vld [vmem:[%s3 + $0x24] sm:$0xff]
  %v34 = vld [vmem:[%s3 + $0x2c] sm:$0xf]
  %v35 = vld [vmem:[%s3 + $0x30] sm:$0xff]
  %v36 = vld [vmem:[%s3 + $0x38] sm:$0xf]
  %v37 = vld [vmem:[%s3 + $0x3c] sm:$0xff]
  %v38 = vld [vmem:[%s3 + $0x44] sm:$0xf]
  %v39 = vld [vmem:[%s3 + $0x48] sm:$0xff]
  %v40 = vld [vmem:[%s3 + $0x50] sm:$0xf]
  %v41 = vld [vmem:[%s3 + $0x54] sm:$0xff]
  %v42 = vld [vmem:[%s3 + $0x5c] sm:$0xf]
  %v43 = vld [vmem:[%s3 + $0x60] sm:$0xff]
  %v44 = vld [vmem:[%s3 + $0x68] sm:$0xf]
  %v45 = vld [vmem:[%s3 + $0x6c] sm:$0xff]
  %v46 = vld [vmem:[%s3 + $0x74] sm:$0xf]
  %v47 = vld [vmem:[%s3 + $0x78] sm:$0xff]
  %v48 = vld [vmem:[%s3 + $0x80] sm:$0xf]
  %v49 = vld [vmem:[%s3 + $0x84] sm:$0xff]
  %v50 = vld [vmem:[%s3 + $0x8c] sm:$0xf]
  %v51 = vld [vmem:[%s3 + $0x90] sm:$0xff]
  %v52 = vld [vmem:[%s3 + $0x98] sm:$0xf]
  %v53 = vld [vmem:[%s3 + $0x9c] sm:$0xff]
  %v54 = vld [vmem:[%s3 + $0xa4] sm:$0xf]
  %v55 = vld [vmem:[%s3 + $0xa8] sm:$0xff]
  %v56 = vld [vmem:[%s3 + $0xb0] sm:$0xf]
  %v57 = vld [vmem:[%s3 + $0xb4] sm:$0xff]
  %v58 = vld [vmem:[%s3 + $0xbc] sm:$0xf]
  %v59 = vld [vmem:[%s4] sm:$0x7]
  %v60 = vld [vmem:[%s2] sm:$0xff]
  %s61 = smul.u32 0, 8
  %v62 = vld [vmem:[#allocation2] sm:$0xff]
  %v63 = vld [vmem:[%s0] sm:$0xff]
  %v64 = vld [vmem:[%s0 + $0x8] sm:$0xf]
  %v65 = vpack.c.bf16 %v62, %v62
  %v67 = vlaneseq
  %v68 = vshrl.u32 %v67, 7
  %v69 = vsub.s32 0, %v68
  %v70 = vrot.slane %v59, %v69
  %v71 = vlaneseq
  %v72 = vshrl.u32 %v71, 7
  %v73 = vsub.s32 1, %v72
  %v74 = vrot.slane %v59, %v73
  %v75 = vlaneseq
  %v76 = vshrl.u32 %v75, 7
  %v77 = vsub.s32 2, %v76
  %v78 = vrot.slane %v59, %v77
  %v114 = vunpack.c.l.b16 %v27
  %v115 = vunpack.c.h.b16 %v27
  %v116 = vunpack.c.l.b16 %v28
  %v117 = vunpack.c.l.b16 %v29
  %v118 = vunpack.c.h.b16 %v29
  %v119 = vunpack.c.l.b16 %v30
  %v120 = vunpack.c.l.b16 %v31
  %v121 = vunpack.c.h.b16 %v31
  %v122 = vunpack.c.l.b16 %v32
  %v123 = vunpack.c.l.b16 %v33
  %v124 = vunpack.c.h.b16 %v33
  %v125 = vunpack.c.l.b16 %v34
  %v126 = vunpack.c.l.b16 %v35
  %v127 = vunpack.c.h.b16 %v35
  %v128 = vunpack.c.l.b16 %v36
  %v129 = vunpack.c.l.b16 %v37
  %v130 = vunpack.c.h.b16 %v37
  %v131 = vunpack.c.l.b16 %v38
  %v132 = vunpack.c.l.b16 %v39
  %v133 = vunpack.c.h.b16 %v39
  %v134 = vunpack.c.l.b16 %v40
  %v135 = vunpack.c.l.b16 %v41
  %v136 = vunpack.c.h.b16 %v41
  %v137 = vunpack.c.l.b16 %v42
  %v138 = vunpack.c.l.b16 %v43
  %v139 = vunpack.c.h.b16 %v43
  %v140 = vunpack.c.l.b16 %v44
  %v141 = vunpack.c.l.b16 %v45
  %v142 = vunpack.c.h.b16 %v45
  %v143 = vunpack.c.l.b16 %v46
  %v144 = vunpack.c.l.b16 %v47
  %v145 = vunpack.c.h.b16 %v47
  %v146 = vunpack.c.l.b16 %v48
  %v147 = vunpack.c.l.b16 %v49
  %v148 = vunpack.c.h.b16 %v49
  %v149 = vunpack.c.l.b16 %v50
  %v150 = vunpack.c.l.b16 %v51
  %v151 = vunpack.c.h.b16 %v51
  %v152 = vunpack.c.l.b16 %v52
  %v153 = vunpack.c.l.b16 %v53
  %v154 = vunpack.c.h.b16 %v53
  %v155 = vunpack.c.l.b16 %v54
  %v156 = vunpack.c.l.b16 %v55
  %v157 = vunpack.c.h.b16 %v55
  %v158 = vunpack.c.l.b16 %v56
  %v159 = vunpack.c.l.b16 %v57
  %v160 = vunpack.c.h.b16 %v57
  %v161 = vunpack.c.l.b16 %v58
  %v162 = vpack.c.b16 %v117, %v114
  %v163 = vpack.c.b16 %v118, %v115
  %v164 = vpack.c.b16 %v119, %v116
  %v165 = vpack.c.b16 %v123, %v120
  %v166 = vpack.c.b16 %v124, %v121
  %v167 = vpack.c.b16 %v125, %v122
  %v168 = vpack.c.b16 %v129, %v126
  %v169 = vpack.c.b16 %v130, %v127
  %v170 = vpack.c.b16 %v131, %v128
  %v171 = vpack.c.b16 %v135, %v132
  %v172 = vpack.c.b16 %v136, %v133
  %v173 = vpack.c.b16 %v137, %v134
  %v174 = vpack.c.b16 %v141, %v138
  %v175 = vpack.c.b16 %v142, %v139
  %v176 = vpack.c.b16 %v143, %v140
  %v177 = vpack.c.b16 %v147, %v144
  %v178 = vpack.c.b16 %v148, %v145
  %v179 = vpack.c.b16 %v149, %v146
  %v180 = vpack.c.b16 %v153, %v150
  %v181 = vpack.c.b16 %v154, %v151
  %v182 = vpack.c.b16 %v155, %v152
  %v183 = vpack.c.b16 %v159, %v156
  %v184 = vpack.c.b16 %v160, %v157
  %v185 = vpack.c.b16 %v161, %v158
  %210 = vmatprep.subr.bf16.mxu0 %v184
  %211 = vmatpush1.bf16.msra.mxu0 %v183
  %212 = vmatprep.subr.bf16.mxu0 %v181
  %213 = vmatpush1.bf16.msra.mxu0 %v180
  %214 = vmatprep.subr.bf16.mxu0 %v178
  %215 = vmatpush1.bf16.msra.mxu0 %v177
  %216 = vmatprep.subr.bf16.mxu0 %v175
  %217 = vmatpush1.bf16.msra.mxu0 %v174
  %218 = vmatprep.subr.bf16.mxu0 %v172
  %219 = vmatpush1.bf16.msra.mxu0 %v171
  %220 = vmatprep.subr.bf16.mxu0 %v169
  %221 = vmatpush1.bf16.msra.mxu0 %v168
  %222 = vmatprep.subr.bf16.mxu0 %v166
  %223 = vmatpush1.bf16.msra.mxu0 %v165
  %224 = vmatprep.subr.bf16.mxu0 %v163
  %225 = vmatpush1.bf16.msra.mxu0 %v162
  %226 = vmatprep.subr.bf16.mxu0 0
  %227 = vmatpush2.bf16.msra.mxu0 0
  %228 = vmatprep.subr.bf16.mxu0 0
  %229 = vmatpush2.bf16.msra.mxu0 0
  %230 = vmatprep.subr.bf16.mxu0 0
  %231 = vmatpush2.bf16.msra.mxu0 0
  %232 = vmatprep.subr.bf16.mxu0 0
  %233 = vmatpush2.bf16.msra.mxu0 0
  %234 = vmatprep.subr.bf16.mxu0 0
  %235 = vmatpush2.bf16.msra.mxu0 0
  %236 = vmatprep.subr.bf16.mxu0 0
  %237 = vmatpush2.bf16.msra.mxu0 0
  %238 = vmatprep.subr.bf16.mxu0 0
  %239 = vmatpush2.bf16.msra.mxu0 0
  %240 = vmatprep.subr.bf16.mxu0 0
  %241 = vmatpush2.bf16.msra.mxu0 0
  %242 = vmatprep.mubr.bf16.mxu0 0
  %243 = vmatmul.mubr.bf16.gmra.mxu0 %v65
  %v244 = vpop.f32.mrf.mxu0
  %v245 = vadd.f32 %v70, %v244
  %v246 = vpop.f32.mrf.mxu0
  %v247 = vadd.f32 %v74, %v246
  %v248 = vpop.f32.mrf.mxu0
  %v249 = vpop.f32.mrf.mxu0
  %250 = vdwg.mxu0
  %251 = vmatprep.subr.bf16.mxu0 0
  %252 = vmatpush1.bf16.msra.mxu0 %v185
  %253 = vmatprep.subr.bf16.mxu0 0
  %254 = vmatpush1.bf16.msra.mxu0 %v182
  %255 = vmatprep.subr.bf16.mxu0 0
  %256 = vmatpush1.bf16.msra.mxu0 %v179
  %257 = vmatprep.subr.bf16.mxu0 0
  %258 = vmatpush1.bf16.msra.mxu0 %v176
  %259 = vmatprep.subr.bf16.mxu0 0
  %260 = vmatpush1.bf16.msra.mxu0 %v173
  %261 = vmatprep.subr.bf16.mxu0 0
  %262 = vmatpush1.bf16.msra.mxu0 %v170
  %263 = vmatprep.subr.bf16.mxu0 0
  %264 = vmatpush1.bf16.msra.mxu0 %v167
  %265 = vmatprep.subr.bf16.mxu0 0
  %266 = vmatpush1.bf16.msra.mxu0 %v164
  %267 = vmatprep.subr.bf16.mxu0 0
  %268 = vmatpush2.bf16.msra.mxu0 0
  %269 = vmatprep.subr.bf16.mxu0 0
  %270 = vmatpush2.bf16.msra.mxu0 0
  %271 = vmatprep.subr.bf16.mxu0 0
  %272 = vmatpush2.bf16.msra.mxu0 0
  %273 = vmatprep.subr.bf16.mxu0 0
  %274 = vmatpush2.bf16.msra.mxu0 0
  %275 = vmatprep.subr.bf16.mxu0 0
  %276 = vmatpush2.bf16.msra.mxu0 0
  %277 = vmatprep.subr.bf16.mxu0 0
  %278 = vmatpush2.bf16.msra.mxu0 0
  %279 = vmatprep.subr.bf16.mxu0 0
  %280 = vmatpush2.bf16.msra.mxu0 0
  %281 = vmatprep.subr.bf16.mxu0 0
  %282 = vmatpush2.bf16.msra.mxu0 0
  %283 = vmatprep.mubr.bf16.mxu0 0
  %284 = vmatmul.mubr.bf16.gmra.mxu0 %v65
  %v285 = vpop.f32.mrf.mxu0
  %v286 = vadd.f32 %v78, %v285
  %v287 = vpop.f32.mrf.mxu0
  %v288 = vpop.f32.mrf.mxu0
  %v289 = vpop.f32.mrf.mxu0
  %290 = vdwg.mxu0
  %v291 = vunpack.c.l.bf16 %v63
  %v292 = vadd.f32 %v291, %v245
  %v293 = vxor.u32 %v292, 2147483648
  %v294 = vmul.f32 %v293, 1.442695
  %v295 = vpow.pop %v294
  %v296 = vadd.f32 %v295, 1.0
  %v297 = vrcp.pop %v296
  %v298 = vmul.f32 1.0, %v297
  %v300 = vrot.slane %v63, 4
  %v302 = vunpack.c.l.bf16 %v300
  %v303 = vadd.f32 %v302, %v247
  %v304 = vxor.u32 %v303, 2147483648
  %v305 = vmul.f32 %v304, 1.442695
  %v306 = vpow.pop %v305
  %v307 = vadd.f32 %v306, 1.0
  %v308 = vrcp.pop %v307
  %v309 = vmul.f32 1.0, %v308
  %v310 = vmul.f32 %v298, %v286
  %v311 = vunpack.c.l.bf16 %v64
  %v312 = vadd.f32 %v311, %v310
  %v313 = vtanh.pop %v312
  %v314 = vsub.f32 1.0, %v309
  %v315 = vmul.f32 %v314, %v313
  %v316 = vmul.f32 %v309, %v62
  %v317 = vadd.f32 %v315, %v316
  %v318 = vstv %s61
  %vm319 = vcmp.gt.s32.totalorder %v60, %v318
  %v320 = vsel %vm319, 1, 0
  %321 = vset.pattern.permute.xlu0 0
  %322 = vperm.xlu0 %321, %v320
  %v323 = vpop.permute.xlu0 %322
  %vm324 = vcmp.eq.s32.totalorder %v323, 1
  %v325 = vsel %vm324, %v317, %v62
  %v326 = vpack.c.bf16 %v325, %v325
  %327 = vst [vmem:[%s5] sm:$0xf] %v326
  %s328 = scalar_lea.vmem %s0, 12
  %v329 = vld [vmem:[%s328] sm:$0xff]
  %v330 = vld [vmem:[%s328 + $0x8] sm:$0xf]
  %331 = vmatprep.subr.bf16.mxu0 %v184
  %332 = vmatpush1.bf16.msra.mxu0 %v183
  %333 = vmatprep.subr.bf16.mxu0 %v181
  %334 = vmatpush1.bf16.msra.mxu0 %v180
  %335 = vmatprep.subr.bf16.mxu0 %v178
  %336 = vmatpush1.bf16.msra.mxu0 %v177
  %337 = vmatprep.subr.bf16.mxu0 %v175
  %338 = vmatpush1.bf16.msra.mxu0 %v174
  %339 = vmatprep.subr.bf16.mxu0 %v172
  %340 = vmatpush1.bf16.msra.mxu0 %v171
  %341 = vmatprep.subr.bf16.mxu0 %v169
  %342 = vmatpush1.bf16.msra.mxu0 %v168
  %343 = vmatprep.subr.bf16.mxu0 %v166
  %344 = vmatpush1.bf16.msra.mxu0 %v165
  %345 = vmatprep.subr.bf16.mxu0 %v163
  %346 = vmatpush1.bf16.msra.mxu0 %v162
  %347 = vmatprep.subr.bf16.mxu0 0
  %348 = vmatpush2.bf16.msra.mxu0 0
  %349 = vmatprep.subr.bf16.mxu0 0
  %350 = vmatpush2.bf16.msra.mxu0 0
  %351 = vmatprep.subr.bf16.mxu0 0
  %352 = vmatpush2.bf16.msra.mxu0 0
  %353 = vmatprep.subr.bf16.mxu0 0
  %354 = vmatpush2.bf16.msra.mxu0 0
  %355 = vmatprep.subr.bf16.mxu0 0
  %356 = vmatpush2.bf16.msra.mxu0 0
  %357 = vmatprep.subr.bf16.mxu0 0
  %358 = vmatpush2.bf16.msra.mxu0 0
  %359 = vmatprep.subr.bf16.mxu0 0
  %360 = vmatpush2.bf16.msra.mxu0 0
  %361 = vmatprep.subr.bf16.mxu0 0
  %362 = vmatpush2.bf16.msra.mxu0 0
  %363 = vmatprep.mubr.bf16.mxu0 0
  %364 = vmatmul.mubr.bf16.gmra.mxu0 %v326
  %v365 = vpop.f32.mrf.mxu0
  %v366 = vadd.f32 %v70, %v365
  %v367 = vpop.f32.mrf.mxu0
  %v368 = vadd.f32 %v74, %v367
  %v369 = vpop.f32.mrf.mxu0
  %v370 = vpop.f32.mrf.mxu0
  %371 = vdwg.mxu0
  %372 = vmatprep.subr.bf16.mxu0 0
  %373 = vmatpush1.bf16.msra.mxu0 %v185
  %374 = vmatprep.subr.bf16.mxu0 0
  %375 = vmatpush1.bf16.msra.mxu0 %v182
  %376 = vmatprep.subr.bf16.mxu0 0
  %377 = vmatpush1.bf16.msra.mxu0 %v179
  %378 = vmatprep.subr.bf16.mxu0 0
  %379 = vmatpush1.bf16.msra.mxu0 %v176
  %380 = vmatprep.subr.bf16.mxu0 0
  %381 = vmatpush1.bf16.msra.mxu0 %v173
  %382 = vmatprep.subr.bf16.mxu0 0
  %383 = vmatpush1.bf16.msra.mxu0 %v170
  %384 = vmatprep.subr.bf16.mxu0 0
  %385 = vmatpush1.bf16.msra.mxu0 %v167
  %386 = vmatprep.subr.bf16.mxu0 0
  %387 = vmatpush1.bf16.msra.mxu0 %v164
  %388 = vmatprep.subr.bf16.mxu0 0
  %389 = vmatpush2.bf16.msra.mxu0 0
  %390 = vmatprep.subr.bf16.mxu0 0
  %391 = vmatpush2.bf16.msra.mxu0 0
  %392 = vmatprep.subr.bf16.mxu0 0
  %393 = vmatpush2.bf16.msra.mxu0 0
  %394 = vmatprep.subr.bf16.mxu0 0
  %395 = vmatpush2.bf16.msra.mxu0 0
  %396 = vmatprep.subr.bf16.mxu0 0
  %397 = vmatpush2.bf16.msra.mxu0 0
  %398 = vmatprep.subr.bf16.mxu0 0
  %399 = vmatpush2.bf16.msra.mxu0 0
  %400 = vmatprep.subr.bf16.mxu0 0
  %401 = vmatpush2.bf16.msra.mxu0 0
  %402 = vmatprep.subr.bf16.mxu0 0
  %403 = vmatpush2.bf16.msra.mxu0 0
  %404 = vmatprep.mubr.bf16.mxu0 0
  %405 = vmatmul.mubr.bf16.gmra.mxu0 %v326
  %v406 = vpop.f32.mrf.mxu0
  %v407 = vadd.f32 %v78, %v406
  %v408 = vpop.f32.mrf.mxu0
  %v409 = vpop.f32.mrf.mxu0
  %v410 = vpop.f32.mrf.mxu0
  %411 = vdwg.mxu0
  %v412 = vunpack.c.l.bf16 %v329
  %v413 = vadd.f32 %v412, %v366
  %v414 = vxor.u32 %v413, 2147483648
  %v415 = vmul.f32 %v414, 1.442695
  %v416 = vpow.pop %v415
  %v417 = vadd.f32 %v416, 1.0
  %v418 = vrcp.pop %v417
  %v419 = vmul.f32 1.0, %v418
  %v421 = vrot.slane %v329, 4
  %v423 = vunpack.c.l.bf16 %v421
  %v424 = vadd.f32 %v423, %v368
  %v425 = vxor.u32 %v424, 2147483648
  %v426 = vmul.f32 %v425, 1.442695
  %v427 = vpow.pop %v426
  %v428 = vadd.f32 %v427, 1.0
  %v429 = vrcp.pop %v428
  %v430 = vmul.f32 1.0, %v429
  %v431 = vmul.f32 %v419, %v407
  %v432 = vunpack.c.l.bf16 %v330
  %v433 = vadd.f32 %v432, %v431
  %v434 = vtanh.pop %v433
  %v435 = vsub.f32 1.0, %v430
  %v436 = vmul.f32 %v435, %v434
  %v437 = vmul.f32 %v430, %v325
  %v438 = vadd.f32 %v436, %v437
  %s439 = sadd.s32 %s61, 1
  %v440 = vstv %s439
  %vm441 = vcmp.gt.s32.totalorder %v60, %v440
  %v442 = vsel %vm441, 1, 0
  %443 = vset.pattern.permute.xlu0 0
  %444 = vperm.xlu0 %443, %v442
  %v445 = vpop.permute.xlu0 %444
  %vm446 = vcmp.eq.s32.totalorder %v445, 1
  %v447 = vsel %vm446, %v438, %v325
  %v448 = vpack.c.bf16 %v447, %v447
  %s449 = scalar_lea.vmem %s5, 4
  %450 = vst [vmem:[%s449] sm:$0xf] %v448
  %s451 = scalar_lea.vmem %s0, 24
  %v452 = vld [vmem:[%s451] sm:$0xff]
  %v453 = vld [vmem:[%s451 + $0x8] sm:$0xf]
  %454 = vmatprep.subr.bf16.mxu0 %v184
  %455 = vmatpush1.bf16.msra.mxu0 %v183
  %456 = vmatprep.subr.bf16.mxu0 %v181
  %457 = vmatpush1.bf16.msra.mxu0 %v180
  %458 = vmatprep.subr.bf16.mxu0 %v178
  %459 = vmatpush1.bf16.msra.mxu0 %v177
  %460 = vmatprep.subr.bf16.mxu0 %v175
  %461 = vmatpush1.bf16.msra.mxu0 %v174
  %462 = vmatprep.subr.bf16.mxu0 %v172
  %463 = vmatpush1.bf16.msra.mxu0 %v171
  %464 = vmatprep.subr.bf16.mxu0 %v169
  %465 = vmatpush1.bf16.msra.mxu0 %v168
  %466 = vmatprep.subr.bf16.mxu0 %v166
  %467 = vmatpush1.bf16.msra.mxu0 %v165
  %468 = vmatprep.subr.bf16.mxu0 %v163
  %469 = vmatpush1.bf16.msra.mxu0 %v162
  %470 = vmatprep.subr.bf16.mxu0 0
  %471 = vmatpush2.bf16.msra.mxu0 0
  %472 = vmatprep.subr.bf16.mxu0 0
  %473 = vmatpush2.bf16.msra.mxu0 0
  %474 = vmatprep.subr.bf16.mxu0 0
  %475 = vmatpush2.bf16.msra.mxu0 0
  %476 = vmatprep.subr.bf16.mxu0 0
  %477 = vmatpush2.bf16.msra.mxu0 0
  %478 = vmatprep.subr.bf16.mxu0 0
  %479 = vmatpush2.bf16.msra.mxu0 0
  %480 = vmatprep.subr.bf16.mxu0 0
  %481 = vmatpush2.bf16.msra.mxu0 0
  %482 = vmatprep.subr.bf16.mxu0 0
  %483 = vmatpush2.bf16.msra.mxu0 0
  %484 = vmatprep.subr.bf16.mxu0 0
  %485 = vmatpush2.bf16.msra.mxu0 0
  %486 = vmatprep.mubr.bf16.mxu0 0
  %487 = vmatmul.mubr.bf16.gmra.mxu0 %v448
  %v488 = vpop.f32.mrf.mxu0
  %v489 = vadd.f32 %v70, %v488
  %v490 = vpop.f32.mrf.mxu0
  %v491 = vadd.f32 %v74, %v490
  %v492 = vpop.f32.mrf.mxu0
  %v493 = vpop.f32.mrf.mxu0
  %494 = vdwg.mxu0
  %495 = vmatprep.subr.bf16.mxu0 0
  %496 = vmatpush1.bf16.msra.mxu0 %v185
  %497 = vmatprep.subr.bf16.mxu0 0
  %498 = vmatpush1.bf16.msra.mxu0 %v182
  %499 = vmatprep.subr.bf16.mxu0 0
  %500 = vmatpush1.bf16.msra.mxu0 %v179
  %501 = vmatprep.subr.bf16.mxu0 0
  %502 = vmatpush1.bf16.msra.mxu0 %v176
  %503 = vmatprep.subr.bf16.mxu0 0
  %504 = vmatpush1.bf16.msra.mxu0 %v173
  %505 = vmatprep.subr.bf16.mxu0 0
  %506 = vmatpush1.bf16.msra.mxu0 %v170
  %507 = vmatprep.subr.bf16.mxu0 0
  %508 = vmatpush1.bf16.msra.mxu0 %v167
  %509 = vmatprep.subr.bf16.mxu0 0
  %510 = vmatpush1.bf16.msra.mxu0 %v164
  %511 = vmatprep.subr.bf16.mxu0 0
  %512 = vmatpush2.bf16.msra.mxu0 0
  %513 = vmatprep.subr.bf16.mxu0 0
  %514 = vmatpush2.bf16.msra.mxu0 0
  %515 = vmatprep.subr.bf16.mxu0 0
  %516 = vmatpush2.bf16.msra.mxu0 0
  %517 = vmatprep.subr.bf16.mxu0 0
  %518 = vmatpush2.bf16.msra.mxu0 0
  %519 = vmatprep.subr.bf16.mxu0 0
  %520 = vmatpush2.bf16.msra.mxu0 0
  %521 = vmatprep.subr.bf16.mxu0 0
  %522 = vmatpush2.bf16.msra.mxu0 0
  %523 = vmatprep.subr.bf16.mxu0 0
  %524 = vmatpush2.bf16.msra.mxu0 0
  %525 = vmatprep.subr.bf16.mxu0 0
  %526 = vmatpush2.bf16.msra.mxu0 0
  %527 = vmatprep.mubr.bf16.mxu0 0
  %528 = vmatmul.mubr.bf16.gmra.mxu0 %v448
  %v529 = vpop.f32.mrf.mxu0
  %v530 = vadd.f32 %v78, %v529
  %v531 = vpop.f32.mrf.mxu0
  %v532 = vpop.f32.mrf.mxu0
  %v533 = vpop.f32.mrf.mxu0
  %534 = vdwg.mxu0
  %v535 = vunpack.c.l.bf16 %v452
  %v536 = vadd.f32 %v535, %v489
  %v537 = vxor.u32 %v536, 2147483648
  %v538 = vmul.f32 %v537, 1.442695
  %v539 = vpow.pop %v538
  %v540 = vadd.f32 %v539, 1.0
  %v541 = vrcp.pop %v540
  %v542 = vmul.f32 1.0, %v541
  %v544 = vrot.slane %v452, 4
  %v546 = vunpack.c.l.bf16 %v544
  %v547 = vadd.f32 %v546, %v491
  %v548 = vxor.u32 %v547, 2147483648
  %v549 = vmul.f32 %v548, 1.442695
  %v550 = vpow.pop %v549
  %v551 = vadd.f32 %v550, 1.0
  %v552 = vrcp.pop %v551
  %v553 = vmul.f32 1.0, %v552
  %v554 = vmul.f32 %v542, %v530
  %v555 = vunpack.c.l.bf16 %v453
  %v556 = vadd.f32 %v555, %v554
  %v557 = vtanh.pop %v556
  %v558 = vsub.f32 1.0, %v553
  %v559 = vmul.f32 %v558, %v557
  %v560 = vmul.f32 %v553, %v447
  %v561 = vadd.f32 %v559, %v560
  %s562 = sadd.s32 %s61, 2
  %v563 = vstv %s562
  %vm564 = vcmp.gt.s32.totalorder %v60, %v563
  %v565 = vsel %vm564, 1, 0
  %566 = vset.pattern.permute.xlu0 0
  %567 = vperm.xlu0 %566, %v565
  %v568 = vpop.permute.xlu0 %567
  %vm569 = vcmp.eq.s32.totalorder %v568, 1
  %v570 = vsel %vm569, %v561, %v447
  %v571 = vpack.c.bf16 %v570, %v570
  %s572 = scalar_lea.vmem %s5, 8
  %573 = vst [vmem:[%s572] sm:$0xf] %v571
  %s574 = scalar_lea.vmem %s0, 36
  %v575 = vld [vmem:[%s574] sm:$0xff]
  %v576 = vld [vmem:[%s574 + $0x8] sm:$0xf]
  %577 = vmatprep.subr.bf16.mxu0 %v184
  %578 = vmatpush1.bf16.msra.mxu0 %v183
  %579 = vmatprep.subr.bf16.mxu0 %v181
  %580 = vmatpush1.bf16.msra.mxu0 %v180
  %581 = vmatprep.subr.bf16.mxu0 %v178
  %582 = vmatpush1.bf16.msra.mxu0 %v177
  %583 = vmatprep.subr.bf16.mxu0 %v175
  %584 = vmatpush1.bf16.msra.mxu0 %v174
  %585 = vmatprep.subr.bf16.mxu0 %v172
  %586 = vmatpush1.bf16.msra.mxu0 %v171
  %587 = vmatprep.subr.bf16.mxu0 %v169
  %588 = vmatpush1.bf16.msra.mxu0 %v168
  %589 = vmatprep.subr.bf16.mxu0 %v166
  %590 = vmatpush1.bf16.msra.mxu0 %v165
  %591 = vmatprep.subr.bf16.mxu0 %v163
  %592 = vmatpush1.bf16.msra.mxu0 %v162
  %593 = vmatprep.subr.bf16.mxu0 0
  %594 = vmatpush2.bf16.msra.mxu0 0
  %595 = vmatprep.subr.bf16.mxu0 0
  %596 = vmatpush2.bf16.msra.mxu0 0
  %597 = vmatprep.subr.bf16.mxu0 0
  %598 = vmatpush2.bf16.msra.mxu0 0
  %599 = vmatprep.subr.bf16.mxu0 0
  %600 = vmatpush2.bf16.msra.mxu0 0
  %601 = vmatprep.subr.bf16.mxu0 0
  %602 = vmatpush2.bf16.msra.mxu0 0
  %603 = vmatprep.subr.bf16.mxu0 0
  %604 = vmatpush2.bf16.msra.mxu0 0
  %605 = vmatprep.subr.bf16.mxu0 0
  %606 = vmatpush2.bf16.msra.mxu0 0
  %607 = vmatprep.subr.bf16.mxu0 0
  %608 = vmatpush2.bf16.msra.mxu0 0
  %609 = vmatprep.mubr.bf16.mxu0 0
  %610 = vmatmul.mubr.bf16.gmra.mxu0 %v571
  %v611 = vpop.f32.mrf.mxu0
  %v612 = vadd.f32 %v70, %v611
  %v613 = vpop.f32.mrf.mxu0
  %v614 = vadd.f32 %v74, %v613
  %v615 = vpop.f32.mrf.mxu0
  %v616 = vpop.f32.mrf.mxu0
  %617 = vdwg.mxu0
  %618 = vmatprep.subr.bf16.mxu0 0
  %619 = vmatpush1.bf16.msra.mxu0 %v185
  %620 = vmatprep.subr.bf16.mxu0 0
  %621 = vmatpush1.bf16.msra.mxu0 %v182
  %622 = vmatprep.subr.bf16.mxu0 0
  %623 = vmatpush1.bf16.msra.mxu0 %v179
  %624 = vmatprep.subr.bf16.mxu0 0
  %625 = vmatpush1.bf16.msra.mxu0 %v176
  %626 = vmatprep.subr.bf16.mxu0 0
  %627 = vmatpush1.bf16.msra.mxu0 %v173
  %628 = vmatprep.subr.bf16.mxu0 0
  %629 = vmatpush1.bf16.msra.mxu0 %v170
  %630 = vmatprep.subr.bf16.mxu0 0
  %631 = vmatpush1.bf16.msra.mxu0 %v167
  %632 = vmatprep.subr.bf16.mxu0 0
  %633 = vmatpush1.bf16.msra.mxu0 %v164
  %634 = vmatprep.subr.bf16.mxu0 0
  %635 = vmatpush2.bf16.msra.mxu0 0
  %636 = vmatprep.subr.bf16.mxu0 0
  %637 = vmatpush2.bf16.msra.mxu0 0
  %638 = vmatprep.subr.bf16.mxu0 0
  %639 = vmatpush2.bf16.msra.mxu0 0
  %640 = vmatprep.subr.bf16.mxu0 0
  %641 = vmatpush2.bf16.msra.mxu0 0
  %642 = vmatprep.subr.bf16.mxu0 0
  %643 = vmatpush2.bf16.msra.mxu0 0
  %644 = vmatprep.subr.bf16.mxu0 0
  %645 = vmatpush2.bf16.msra.mxu0 0
  %646 = vmatprep.subr.bf16.mxu0 0
  %647 = vmatpush2.bf16.msra.mxu0 0
  %648 = vmatprep.subr.bf16.mxu0 0
  %649 = vmatpush2.bf16.msra.mxu0 0
  %650 = vmatprep.mubr.bf16.mxu0 0
  %651 = vmatmul.mubr.bf16.gmra.mxu0 %v571
  %v652 = vpop.f32.mrf.mxu0
  %v653 = vadd.f32 %v78, %v652
  %v654 = vpop.f32.mrf.mxu0
  %v655 = vpop.f32.mrf.mxu0
  %v656 = vpop.f32.mrf.mxu0
  %657 = vdwg.mxu0
  %v658 = vunpack.c.l.bf16 %v575
  %v659 = vadd.f32 %v658, %v612
  %v660 = vxor.u32 %v659, 2147483648
  %v661 = vmul.f32 %v660, 1.442695
  %v662 = vpow.pop %v661
  %v663 = vadd.f32 %v662, 1.0
  %v664 = vrcp.pop %v663
  %v665 = vmul.f32 1.0, %v664
  %v667 = vrot.slane %v575, 4
  %v669 = vunpack.c.l.bf16 %v667
  %v670 = vadd.f32 %v669, %v614
  %v671 = vxor.u32 %v670, 2147483648
  %v672 = vmul.f32 %v671, 1.442695
  %v673 = vpow.pop %v672
  %v674 = vadd.f32 %v673, 1.0
  %v675 = vrcp.pop %v674
  %v676 = vmul.f32 1.0, %v675
  %v677 = vmul.f32 %v665, %v653
  %v678 = vunpack.c.l.bf16 %v576
  %v679 = vadd.f32 %v678, %v677
  %v680 = vtanh.pop %v679
  %v681 = vsub.f32 1.0, %v676
  %v682 = vmul.f32 %v681, %v680
  %v683 = vmul.f32 %v676, %v570
  %v684 = vadd.f32 %v682, %v683
  %s685 = sadd.s32 %s61, 3
  %v686 = vstv %s685
  %vm687 = vcmp.gt.s32.totalorder %v60, %v686
  %v688 = vsel %vm687, 1, 0
  %689 = vset.pattern.permute.xlu0 0
  %690 = vperm.xlu0 %689, %v688
  %v691 = vpop.permute.xlu0 %690
  %vm692 = vcmp.eq.s32.totalorder %v691, 1
  %v693 = vsel %vm692, %v684, %v570
  %v694 = vpack.c.bf16 %v693, %v693
  %s695 = scalar_lea.vmem %s5, 12
  %696 = vst [vmem:[%s695] sm:$0xf] %v694
  %s697 = scalar_lea.vmem %s0, 48
  %v698 = vld [vmem:[%s697] sm:$0xff]
  %v699 = vld [vmem:[%s697 + $0x8] sm:$0xf]
  %700 = vmatprep.subr.bf16.mxu0 %v184
  %701 = vmatpush1.bf16.msra.mxu0 %v183
  %702 = vmatprep.subr.bf16.mxu0 %v181
  %703 = vmatpush1.bf16.msra.mxu0 %v180
  %704 = vmatprep.subr.bf16.mxu0 %v178
  %705 = vmatpush1.bf16.msra.mxu0 %v177
  %706 = vmatprep.subr.bf16.mxu0 %v175
  %707 = vmatpush1.bf16.msra.mxu0 %v174
  %708 = vmatprep.subr.bf16.mxu0 %v172
  %709 = vmatpush1.bf16.msra.mxu0 %v171
  %710 = vmatprep.subr.bf16.mxu0 %v169
  %711 = vmatpush1.bf16.msra.mxu0 %v168
  %712 = vmatprep.subr.bf16.mxu0 %v166
  %713 = vmatpush1.bf16.msra.mxu0 %v165
  %714 = vmatprep.subr.bf16.mxu0 %v163
  %715 = vmatpush1.bf16.msra.mxu0 %v162
  %716 = vmatprep.subr.bf16.mxu0 0
  %717 = vmatpush2.bf16.msra.mxu0 0
  %718 = vmatprep.subr.bf16.mxu0 0
  %719 = vmatpush2.bf16.msra.mxu0 0
  %720 = vmatprep.subr.bf16.mxu0 0
  %721 = vmatpush2.bf16.msra.mxu0 0
  %722 = vmatprep.subr.bf16.mxu0 0
  %723 = vmatpush2.bf16.msra.mxu0 0
  %724 = vmatprep.subr.bf16.mxu0 0
  %725 = vmatpush2.bf16.msra.mxu0 0
  %726 = vmatprep.subr.bf16.mxu0 0
  %727 = vmatpush2.bf16.msra.mxu0 0
  %728 = vmatprep.subr.bf16.mxu0 0
  %729 = vmatpush2.bf16.msra.mxu0 0
  %730 = vmatprep.subr.bf16.mxu0 0
  %731 = vmatpush2.bf16.msra.mxu0 0
  %732 = vmatprep.mubr.bf16.mxu0 0
  %733 = vmatmul.mubr.bf16.gmra.mxu0 %v694
  %v734 = vpop.f32.mrf.mxu0
  %v735 = vadd.f32 %v70, %v734
  %v736 = vpop.f32.mrf.mxu0
  %v737 = vadd.f32 %v74, %v736
  %v738 = vpop.f32.mrf.mxu0
  %v739 = vpop.f32.mrf.mxu0
  %740 = vdwg.mxu0
  %741 = vmatprep.subr.bf16.mxu0 0
  %742 = vmatpush1.bf16.msra.mxu0 %v185
  %743 = vmatprep.subr.bf16.mxu0 0
  %744 = vmatpush1.bf16.msra.mxu0 %v182
  %745 = vmatprep.subr.bf16.mxu0 0
  %746 = vmatpush1.bf16.msra.mxu0 %v179
  %747 = vmatprep.subr.bf16.mxu0 0
  %748 = vmatpush1.bf16.msra.mxu0 %v176
  %749 = vmatprep.subr.bf16.mxu0 0
  %750 = vmatpush1.bf16.msra.mxu0 %v173
  %751 = vmatprep.subr.bf16.mxu0 0
  %752 = vmatpush1.bf16.msra.mxu0 %v170
  %753 = vmatprep.subr.bf16.mxu0 0
  %754 = vmatpush1.bf16.msra.mxu0 %v167
  %755 = vmatprep.subr.bf16.mxu0 0
  %756 = vmatpush1.bf16.msra.mxu0 %v164
  %757 = vmatprep.subr.bf16.mxu0 0
  %758 = vmatpush2.bf16.msra.mxu0 0
  %759 = vmatprep.subr.bf16.mxu0 0
  %760 = vmatpush2.bf16.msra.mxu0 0
  %761 = vmatprep.subr.bf16.mxu0 0
  %762 = vmatpush2.bf16.msra.mxu0 0
  %763 = vmatprep.subr.bf16.mxu0 0
  %764 = vmatpush2.bf16.msra.mxu0 0
  %765 = vmatprep.subr.bf16.mxu0 0
  %766 = vmatpush2.bf16.msra.mxu0 0
  %767 = vmatprep.subr.bf16.mxu0 0
  %768 = vmatpush2.bf16.msra.mxu0 0
  %769 = vmatprep.subr.bf16.mxu0 0
  %770 = vmatpush2.bf16.msra.mxu0 0
  %771 = vmatprep.subr.bf16.mxu0 0
  %772 = vmatpush2.bf16.msra.mxu0 0
  %773 = vmatprep.mubr.bf16.mxu0 0
  %774 = vmatmul.mubr.bf16.gmra.mxu0 %v694
  %v775 = vpop.f32.mrf.mxu0
  %v776 = vadd.f32 %v78, %v775
  %v777 = vpop.f32.mrf.mxu0
  %v778 = vpop.f32.mrf.mxu0
  %v779 = vpop.f32.mrf.mxu0
  %780 = vdwg.mxu0
  %v781 = vunpack.c.l.bf16 %v698
  %v782 = vadd.f32 %v781, %v735
  %v783 = vxor.u32 %v782, 2147483648
  %v784 = vmul.f32 %v783, 1.442695
  %v785 = vpow.pop %v784
  %v786 = vadd.f32 %v785, 1.0
  %v787 = vrcp.pop %v786
  %v788 = vmul.f32 1.0, %v787
  %v790 = vrot.slane %v698, 4
  %v792 = vunpack.c.l.bf16 %v790
  %v793 = vadd.f32 %v792, %v737
  %v794 = vxor.u32 %v793, 2147483648
  %v795 = vmul.f32 %v794, 1.442695
  %v796 = vpow.pop %v795
  %v797 = vadd.f32 %v796, 1.0
  %v798 = vrcp.pop %v797
  %v799 = vmul.f32 1.0, %v798
  %v800 = vmul.f32 %v788, %v776
  %v801 = vunpack.c.l.bf16 %v699
  %v802 = vadd.f32 %v801, %v800
  %v803 = vtanh.pop %v802
  %v804 = vsub.f32 1.0, %v799
  %v805 = vmul.f32 %v804, %v803
  %v806 = vmul.f32 %v799, %v693
  %v807 = vadd.f32 %v805, %v806
  %s808 = sadd.s32 %s61, 4
  %v809 = vstv %s808
  %vm810 = vcmp.gt.s32.totalorder %v60, %v809
  %v811 = vsel %vm810, 1, 0
  %812 = vset.pattern.permute.xlu0 0
  %813 = vperm.xlu0 %812, %v811
  %v814 = vpop.permute.xlu0 %813
  %vm815 = vcmp.eq.s32.totalorder %v814, 1
  %v816 = vsel %vm815, %v807, %v693
  %v817 = vpack.c.bf16 %v816, %v816
  %s818 = scalar_lea.vmem %s5, 16
  %819 = vst [vmem:[%s818] sm:$0xf] %v817
  %s820 = scalar_lea.vmem %s0, 60
  %v821 = vld [vmem:[%s820] sm:$0xff]
  %v822 = vld [vmem:[%s820 + $0x8] sm:$0xf]
  %823 = vmatprep.subr.bf16.mxu0 %v184
  %824 = vmatpush1.bf16.msra.mxu0 %v183
  %825 = vmatprep.subr.bf16.mxu0 %v181
  %826 = vmatpush1.bf16.msra.mxu0 %v180
  %827 = vmatprep.subr.bf16.mxu0 %v178
  %828 = vmatpush1.bf16.msra.mxu0 %v177
  %829 = vmatprep.subr.bf16.mxu0 %v175
  %830 = vmatpush1.bf16.msra.mxu0 %v174
  %831 = vmatprep.subr.bf16.mxu0 %v172
  %832 = vmatpush1.bf16.msra.mxu0 %v171
  %833 = vmatprep.subr.bf16.mxu0 %v169
  %834 = vmatpush1.bf16.msra.mxu0 %v168
  %835 = vmatprep.subr.bf16.mxu0 %v166
  %836 = vmatpush1.bf16.msra.mxu0 %v165
  %837 = vmatprep.subr.bf16.mxu0 %v163
  %838 = vmatpush1.bf16.msra.mxu0 %v162
  %839 = vmatprep.subr.bf16.mxu0 0
  %840 = vmatpush2.bf16.msra.mxu0 0
  %841 = vmatprep.subr.bf16.mxu0 0
  %842 = vmatpush2.bf16.msra.mxu0 0
  %843 = vmatprep.subr.bf16.mxu0 0
  %844 = vmatpush2.bf16.msra.mxu0 0
  %845 = vmatprep.subr.bf16.mxu0 0
  %846 = vmatpush2.bf16.msra.mxu0 0
  %847 = vmatprep.subr.bf16.mxu0 0
  %848 = vmatpush2.bf16.msra.mxu0 0
  %849 = vmatprep.subr.bf16.mxu0 0
  %850 = vmatpush2.bf16.msra.mxu0 0
  %851 = vmatprep.subr.bf16.mxu0 0
  %852 = vmatpush2.bf16.msra.mxu0 0
  %853 = vmatprep.subr.bf16.mxu0 0
  %854 = vmatpush2.bf16.msra.mxu0 0
  %855 = vmatprep.mubr.bf16.mxu0 0
  %856 = vmatmul.mubr.bf16.gmra.mxu0 %v817
  %v857 = vpop.f32.mrf.mxu0
  %v858 = vadd.f32 %v70, %v857
  %v859 = vpop.f32.mrf.mxu0
  %v860 = vadd.f32 %v74, %v859
  %v861 = vpop.f32.mrf.mxu0
  %v862 = vpop.f32.mrf.mxu0
  %863 = vdwg.mxu0
  %864 = vmatprep.subr.bf16.mxu0 0
  %865 = vmatpush1.bf16.msra.mxu0 %v185
  %866 = vmatprep.subr.bf16.mxu0 0
  %867 = vmatpush1.bf16.msra.mxu0 %v182
  %868 = vmatprep.subr.bf16.mxu0 0
  %869 = vmatpush1.bf16.msra.mxu0 %v179
  %870 = vmatprep.subr.bf16.mxu0 0
  %871 = vmatpush1.bf16.msra.mxu0 %v176
  %872 = vmatprep.subr.bf16.mxu0 0
  %873 = vmatpush1.bf16.msra.mxu0 %v173
  %874 = vmatprep.subr.bf16.mxu0 0
  %875 = vmatpush1.bf16.msra.mxu0 %v170
  %876 = vmatprep.subr.bf16.mxu0 0
  %877 = vmatpush1.bf16.msra.mxu0 %v167
  %878 = vmatprep.subr.bf16.mxu0 0
  %879 = vmatpush1.bf16.msra.mxu0 %v164
  %880 = vmatprep.subr.bf16.mxu0 0
  %881 = vmatpush2.bf16.msra.mxu0 0
  %882 = vmatprep.subr.bf16.mxu0 0
  %883 = vmatpush2.bf16.msra.mxu0 0
  %884 = vmatprep.subr.bf16.mxu0 0
  %885 = vmatpush2.bf16.msra.mxu0 0
  %886 = vmatprep.subr.bf16.mxu0 0
  %887 = vmatpush2.bf16.msra.mxu0 0
  %888 = vmatprep.subr.bf16.mxu0 0
  %889 = vmatpush2.bf16.msra.mxu0 0
  %890 = vmatprep.subr.bf16.mxu0 0
  %891 = vmatpush2.bf16.msra.mxu0 0
  %892 = vmatprep.subr.bf16.mxu0 0
  %893 = vmatpush2.bf16.msra.mxu0 0
  %894 = vmatprep.subr.bf16.mxu0 0
  %895 = vmatpush2.bf16.msra.mxu0 0
  %896 = vmatprep.mubr.bf16.mxu0 0
  %897 = vmatmul.mubr.bf16.gmra.mxu0 %v817
  %v898 = vpop.f32.mrf.mxu0
  %v899 = vadd.f32 %v78, %v898
  %v900 = vpop.f32.mrf.mxu0
  %v901 = vpop.f32.mrf.mxu0
  %v902 = vpop.f32.mrf.mxu0
  %903 = vdwg.mxu0
  %v904 = vunpack.c.l.bf16 %v821
  %v905 = vadd.f32 %v904, %v858
  %v906 = vxor.u32 %v905, 2147483648
  %v907 = vmul.f32 %v906, 1.442695
  %v908 = vpow.pop %v907
  %v909 = vadd.f32 %v908, 1.0
  %v910 = vrcp.pop %v909
  %v911 = vmul.f32 1.0, %v910
  %v913 = vrot.slane %v821, 4
  %v915 = vunpack.c.l.bf16 %v913
  %v916 = vadd.f32 %v915, %v860
  %v917 = vxor.u32 %v916, 2147483648
  %v918 = vmul.f32 %v917, 1.442695
  %v919 = vpow.pop %v918
  %v920 = vadd.f32 %v919, 1.0
  %v921 = vrcp.pop %v920
  %v922 = vmul.f32 1.0, %v921
  %v923 = vmul.f32 %v911, %v899
  %v924 = vunpack.c.l.bf16 %v822
  %v925 = vadd.f32 %v924, %v923
  %v926 = vtanh.pop %v925
  %v927 = vsub.f32 1.0, %v922
  %v928 = vmul.f32 %v927, %v926
  %v929 = vmul.f32 %v922, %v816
  %v930 = vadd.f32 %v928, %v929
  %s931 = sadd.s32 %s61, 5
  %v932 = vstv %s931
  %vm933 = vcmp.gt.s32.totalorder %v60, %v932
  %v934 = vsel %vm933, 1, 0
  %935 = vset.pattern.permute.xlu0 0
  %936 = vperm.xlu0 %935, %v934
  %v937 = vpop.permute.xlu0 %936
  %vm938 = vcmp.eq.s32.totalorder %v937, 1
  %v939 = vsel %vm938, %v930, %v816
  %v940 = vpack.c.bf16 %v939, %v939
  %s941 = scalar_lea.vmem %s5, 20
  %942 = vst [vmem:[%s941] sm:$0xf] %v940
  %s943 = scalar_lea.vmem %s0, 72
  %v944 = vld [vmem:[%s943] sm:$0xff]
  %v945 = vld [vmem:[%s943 + $0x8] sm:$0xf]
  %946 = vmatprep.subr.bf16.mxu0 %v184
  %947 = vmatpush1.bf16.msra.mxu0 %v183
  %948 = vmatprep.subr.bf16.mxu0 %v181
  %949 = vmatpush1.bf16.msra.mxu0 %v180
  %950 = vmatprep.subr.bf16.mxu0 %v178
  %951 = vmatpush1.bf16.msra.mxu0 %v177
  %952 = vmatprep.subr.bf16.mxu0 %v175
  %953 = vmatpush1.bf16.msra.mxu0 %v174
  %954 = vmatprep.subr.bf16.mxu0 %v172
  %955 = vmatpush1.bf16.msra.mxu0 %v171
  %956 = vmatprep.subr.bf16.mxu0 %v169
  %957 = vmatpush1.bf16.msra.mxu0 %v168
  %958 = vmatprep.subr.bf16.mxu0 %v166
  %959 = vmatpush1.bf16.msra.mxu0 %v165
  %960 = vmatprep.subr.bf16.mxu0 %v163
  %961 = vmatpush1.bf16.msra.mxu0 %v162
  %962 = vmatprep.subr.bf16.mxu0 0
  %963 = vmatpush2.bf16.msra.mxu0 0
  %964 = vmatprep.subr.bf16.mxu0 0
  %965 = vmatpush2.bf16.msra.mxu0 0
  %966 = vmatprep.subr.bf16.mxu0 0
  %967 = vmatpush2.bf16.msra.mxu0 0
  %968 = vmatprep.subr.bf16.mxu0 0
  %969 = vmatpush2.bf16.msra.mxu0 0
  %970 = vmatprep.subr.bf16.mxu0 0
  %971 = vmatpush2.bf16.msra.mxu0 0
  %972 = vmatprep.subr.bf16.mxu0 0
  %973 = vmatpush2.bf16.msra.mxu0 0
  %974 = vmatprep.subr.bf16.mxu0 0
  %975 = vmatpush2.bf16.msra.mxu0 0
  %976 = vmatprep.subr.bf16.mxu0 0
  %977 = vmatpush2.bf16.msra.mxu0 0
  %978 = vmatprep.mubr.bf16.mxu0 0
  %979 = vmatmul.mubr.bf16.gmra.mxu0 %v940
  %v980 = vpop.f32.mrf.mxu0
  %v981 = vadd.f32 %v70, %v980
  %v982 = vpop.f32.mrf.mxu0
  %v983 = vadd.f32 %v74, %v982
  %v984 = vpop.f32.mrf.mxu0
  %v985 = vpop.f32.mrf.mxu0
  %986 = vdwg.mxu0
  %987 = vmatprep.subr.bf16.mxu0 0
  %988 = vmatpush1.bf16.msra.mxu0 %v185
  %989 = vmatprep.subr.bf16.mxu0 0
  %990 = vmatpush1.bf16.msra.mxu0 %v182
  %991 = vmatprep.subr.bf16.mxu0 0
  %992 = vmatpush1.bf16.msra.mxu0 %v179
  %993 = vmatprep.subr.bf16.mxu0 0
  %994 = vmatpush1.bf16.msra.mxu0 %v176
  %995 = vmatprep.subr.bf16.mxu0 0
  %996 = vmatpush1.bf16.msra.mxu0 %v173
  %997 = vmatprep.subr.bf16.mxu0 0
  %998 = vmatpush1.bf16.msra.mxu0 %v170
  %999 = vmatprep.subr.bf16.mxu0 0
  %1000 = vmatpush1.bf16.msra.mxu0 %v167
  %1001 = vmatprep.subr.bf16.mxu0 0
  %1002 = vmatpush1.bf16.msra.mxu0 %v164
  %1003 = vmatprep.subr.bf16.mxu0 0
  %1004 = vmatpush2.bf16.msra.mxu0 0
  %1005 = vmatprep.subr.bf16.mxu0 0
  %1006 = vmatpush2.bf16.msra.mxu0 0
  %1007 = vmatprep.subr.bf16.mxu0 0
  %1008 = vmatpush2.bf16.msra.mxu0 0
  %1009 = vmatprep.subr.bf16.mxu0 0
  %1010 = vmatpush2.bf16.msra.mxu0 0
  %1011 = vmatprep.subr.bf16.mxu0 0
  %1012 = vmatpush2.bf16.msra.mxu0 0
  %1013 = vmatprep.subr.bf16.mxu0 0
  %1014 = vmatpush2.bf16.msra.mxu0 0
  %1015 = vmatprep.subr.bf16.mxu0 0
  %1016 = vmatpush2.bf16.msra.mxu0 0
  %1017 = vmatprep.subr.bf16.mxu0 0
  %1018 = vmatpush2.bf16.msra.mxu0 0
  %1019 = vmatprep.mubr.bf16.mxu0 0
  %1020 = vmatmul.mubr.bf16.gmra.mxu0 %v940
  %v1021 = vpop.f32.mrf.mxu0
  %v1022 = vadd.f32 %v78, %v1021
  %v1023 = vpop.f32.mrf.mxu0
  %v1024 = vpop.f32.mrf.mxu0
  %v1025 = vpop.f32.mrf.mxu0
  %1026 = vdwg.mxu0
  %v1027 = vunpack.c.l.bf16 %v944
  %v1028 = vadd.f32 %v1027, %v981
  %v1029 = vxor.u32 %v1028, 2147483648
  %v1030 = vmul.f32 %v1029, 1.442695
  %v1031 = vpow.pop %v1030
  %v1032 = vadd.f32 %v1031, 1.0
  %v1033 = vrcp.pop %v1032
  %v1034 = vmul.f32 1.0, %v1033
  %v1036 = vrot.slane %v944, 4
  %v1038 = vunpack.c.l.bf16 %v1036
  %v1039 = vadd.f32 %v1038, %v983
  %v1040 = vxor.u32 %v1039, 2147483648
  %v1041 = vmul.f32 %v1040, 1.442695
  %v1042 = vpow.pop %v1041
  %v1043 = vadd.f32 %v1042, 1.0
  %v1044 = vrcp.pop %v1043
  %v1045 = vmul.f32 1.0, %v1044
  %v1046 = vmul.f32 %v1034, %v1022
  %v1047 = vunpack.c.l.bf16 %v945
  %v1048 = vadd.f32 %v1047, %v1046
  %v1049 = vtanh.pop %v1048
  %v1050 = vsub.f32 1.0, %v1045
  %v1051 = vmul.f32 %v1050, %v1049
  %v1052 = vmul.f32 %v1045, %v939
  %v1053 = vadd.f32 %v1051, %v1052
  %s1054 = sadd.s32 %s61, 6
  %v1055 = vstv %s1054
  %vm1056 = vcmp.gt.s32.totalorder %v60, %v1055
  %v1057 = vsel %vm1056, 1, 0
  %1058 = vset.pattern.permute.xlu0 0
  %1059 = vperm.xlu0 %1058, %v1057
  %v1060 = vpop.permute.xlu0 %1059
  %vm1061 = vcmp.eq.s32.totalorder %v1060, 1
  %v1062 = vsel %vm1061, %v1053, %v939
  %v1063 = vpack.c.bf16 %v1062, %v1062
  %s1064 = scalar_lea.vmem %s5, 24
  %1065 = vst [vmem:[%s1064] sm:$0xf] %v1063
  %s1066 = scalar_lea.vmem %s0, 84
  %v1067 = vld [vmem:[%s1066] sm:$0xff]
  %v1068 = vld [vmem:[%s1066 + $0x8] sm:$0xf]
  %1069 = vmatprep.subr.bf16.mxu0 %v184
  %1070 = vmatpush1.bf16.msra.mxu0 %v183
  %1071 = vmatprep.subr.bf16.mxu0 %v181
  %1072 = vmatpush1.bf16.msra.mxu0 %v180
  %1073 = vmatprep.subr.bf16.mxu0 %v178
  %1074 = vmatpush1.bf16.msra.mxu0 %v177
  %1075 = vmatprep.subr.bf16.mxu0 %v175
  %1076 = vmatpush1.bf16.msra.mxu0 %v174
  %1077 = vmatprep.subr.bf16.mxu0 %v172
  %1078 = vmatpush1.bf16.msra.mxu0 %v171
  %1079 = vmatprep.subr.bf16.mxu0 %v169
  %1080 = vmatpush1.bf16.msra.mxu0 %v168
  %1081 = vmatprep.subr.bf16.mxu0 %v166
  %1082 = vmatpush1.bf16.msra.mxu0 %v165
  %1083 = vmatprep.subr.bf16.mxu0 %v163
  %1084 = vmatpush1.bf16.msra.mxu0 %v162
  %1085 = vmatprep.subr.bf16.mxu0 0
  %1086 = vmatpush2.bf16.msra.mxu0 0
  %1087 = vmatprep.subr.bf16.mxu0 0
  %1088 = vmatpush2.bf16.msra.mxu0 0
  %1089 = vmatprep.subr.bf16.mxu0 0
  %1090 = vmatpush2.bf16.msra.mxu0 0
  %1091 = vmatprep.subr.bf16.mxu0 0
  %1092 = vmatpush2.bf16.msra.mxu0 0
  %1093 = vmatprep.subr.bf16.mxu0 0
  %1094 = vmatpush2.bf16.msra.mxu0 0
  %1095 = vmatprep.subr.bf16.mxu0 0
  %1096 = vmatpush2.bf16.msra.mxu0 0
  %1097 = vmatprep.subr.bf16.mxu0 0
  %1098 = vmatpush2.bf16.msra.mxu0 0
  %1099 = vmatprep.subr.bf16.mxu0 0
  %1100 = vmatpush2.bf16.msra.mxu0 0
  %1101 = vmatprep.mubr.bf16.mxu0 0
  %1102 = vmatmul.mubr.bf16.gmra.mxu0 %v1063
  %v1103 = vpop.f32.mrf.mxu0
  %v1104 = vadd.f32 %v70, %v1103
  %v1105 = vpop.f32.mrf.mxu0
  %v1106 = vadd.f32 %v74, %v1105
  %v1107 = vpop.f32.mrf.mxu0
  %v1108 = vpop.f32.mrf.mxu0
  %1109 = vdwg.mxu0
  %1110 = vmatprep.subr.bf16.mxu0 0
  %1111 = vmatpush1.bf16.msra.mxu0 %v185
  %1112 = vmatprep.subr.bf16.mxu0 0
  %1113 = vmatpush1.bf16.msra.mxu0 %v182
  %1114 = vmatprep.subr.bf16.mxu0 0
  %1115 = vmatpush1.bf16.msra.mxu0 %v179
  %1116 = vmatprep.subr.bf16.mxu0 0
  %1117 = vmatpush1.bf16.msra.mxu0 %v176
  %1118 = vmatprep.subr.bf16.mxu0 0
  %1119 = vmatpush1.bf16.msra.mxu0 %v173
  %1120 = vmatprep.subr.bf16.mxu0 0
  %1121 = vmatpush1.bf16.msra.mxu0 %v170
  %1122 = vmatprep.subr.bf16.mxu0 0
  %1123 = vmatpush1.bf16.msra.mxu0 %v167
  %1124 = vmatprep.subr.bf16.mxu0 0
  %1125 = vmatpush1.bf16.msra.mxu0 %v164
  %1126 = vmatprep.subr.bf16.mxu0 0
  %1127 = vmatpush2.bf16.msra.mxu0 0
  %1128 = vmatprep.subr.bf16.mxu0 0
  %1129 = vmatpush2.bf16.msra.mxu0 0
  %1130 = vmatprep.subr.bf16.mxu0 0
  %1131 = vmatpush2.bf16.msra.mxu0 0
  %1132 = vmatprep.subr.bf16.mxu0 0
  %1133 = vmatpush2.bf16.msra.mxu0 0
  %1134 = vmatprep.subr.bf16.mxu0 0
  %1135 = vmatpush2.bf16.msra.mxu0 0
  %1136 = vmatprep.subr.bf16.mxu0 0
  %1137 = vmatpush2.bf16.msra.mxu0 0
  %1138 = vmatprep.subr.bf16.mxu0 0
  %1139 = vmatpush2.bf16.msra.mxu0 0
  %1140 = vmatprep.subr.bf16.mxu0 0
  %1141 = vmatpush2.bf16.msra.mxu0 0
  %1142 = vmatprep.mubr.bf16.mxu0 0
  %1143 = vmatmul.mubr.bf16.gmra.mxu0 %v1063
  %v1144 = vpop.f32.mrf.mxu0
  %v1145 = vadd.f32 %v78, %v1144
  %v1146 = vpop.f32.mrf.mxu0
  %v1147 = vpop.f32.mrf.mxu0
  %v1148 = vpop.f32.mrf.mxu0
  %1149 = vdwg.mxu0
  %v1150 = vunpack.c.l.bf16 %v1067
  %v1151 = vadd.f32 %v1150, %v1104
  %v1152 = vxor.u32 %v1151, 2147483648
  %v1153 = vmul.f32 %v1152, 1.442695
  %v1154 = vpow.pop %v1153
  %v1155 = vadd.f32 %v1154, 1.0
  %v1156 = vrcp.pop %v1155
  %v1157 = vmul.f32 1.0, %v1156
  %v1159 = vrot.slane %v1067, 4
  %v1161 = vunpack.c.l.bf16 %v1159
  %v1162 = vadd.f32 %v1161, %v1106
  %v1163 = vxor.u32 %v1162, 2147483648
  %v1164 = vmul.f32 %v1163, 1.442695
  %v1165 = vpow.pop %v1164
  %v1166 = vadd.f32 %v1165, 1.0
  %v1167 = vrcp.pop %v1166
  %v1168 = vmul.f32 1.0, %v1167
  %v1169 = vmul.f32 %v1157, %v1145
  %v1170 = vunpack.c.l.bf16 %v1068
  %v1171 = vadd.f32 %v1170, %v1169
  %v1172 = vtanh.pop %v1171
  %v1173 = vsub.f32 1.0, %v1168
  %v1174 = vmul.f32 %v1173, %v1172
  %v1175 = vmul.f32 %v1168, %v1062
  %v1176 = vadd.f32 %v1174, %v1175
  %s1177 = sadd.s32 %s61, 7
  %v1178 = vstv %s1177
  %vm1179 = vcmp.gt.s32.totalorder %v60, %v1178
  %v1180 = vsel %vm1179, 1, 0
  %1181 = vset.pattern.permute.xlu0 0
  %1182 = vperm.xlu0 %1181, %v1180
  %v1183 = vpop.permute.xlu0 %1182
  %vm1184 = vcmp.eq.s32.totalorder %v1183, 1
  %v1185 = vsel %vm1184, %v1176, %v1062
  %v1186 = vpack.c.bf16 %v1185, %v1185
  %s1187 = scalar_lea.vmem %s5, 28
  %1188 = vst [vmem:[%s1187] sm:$0xf] %v1186
  %1189 = vst [vmem:[#allocation2] sm:$0xff] %v1185
  // Predicated region
  $region26: #{diallv_forward.17} parent=0 // pred_check
    _
  $region27: #{diallv_forward.17} parent=0 // pred_check_branch
    %1191 = sbr.rel (0) target = $region29
  $region28: #{diallv_forward.17} parent=0 // pred_region
    _
  $region29: #{diallv_forward.17} parent=0 // pred_fallthru
    _
  // Predicated region
  $region30: #{diallv_forward.17} parent=0 // pred_check
    _
  $region31: #{diallv_forward.17} parent=0 // pred_check_branch
    %1193 = sbr.rel (0) target = $region33
  $region32: #{diallv_forward.17} parent=0 // pred_region
    _
  $region33: #{diallv_forward.17} parent=0 // pred_fallthru
    _

</llo_original>
